<compile_context>
chip_gen: v6e
topology: v6e:2x2x1
jax: 0.10.0
libtpu: 0.0.40
codegen_flags: <defaults>
</compile_context>

<pallas_src>
import jax
import jax.numpy as jnp
from jax import lax
from jax.experimental import pallas as pl
from jax.experimental.pallas import tpu as pltpu


# ---------------------------------------------------------------------------
# Fused forward kernel
# ---------------------------------------------------------------------------
def _fused_lenet_kernel(p1_ref, w1_ref, b1_ref, w2_ref, b2_ref,
                        fw1_ref, fb1_ref, fw2_ref, fb2_ref, ow_ref, ob_ref,
                        out_ref, h1p_ref, h2_ref):
    """Whole-network forward, fully VMEM-resident.

    p1_ref : (4*N*12*16, 128) conv1 im2col, rows (pool_tap, n, pi, pj16),
                              K padded 25 -> 128, pj padded 12 -> 16.
    w*_ref : packed / zero-padded weights (see pack_params).
    out_ref: (N, 128)         logits in lanes 0..9.
    h1p_ref: (N, 12, 16, 128) pooled conv1 activations (VMEM scratch).
    h2_ref : (N, 8, 8, 128)   conv2 activations (VMEM scratch).
    """
    f32 = jnp.float32
    N = out_ref.shape[0]
    blk = N * 12 * 16                       # rows per pool-tap block of p1

    # ---- conv1: 4 tap-block GEMMs, maxpool1 as block max, bias + ReLU -----
    w1 = w1_ref[...]
    m = None
    for b in range(4):
        g = jnp.dot(p1_ref[b * blk:(b + 1) * blk, :], w1,
                    preferred_element_type=f32)
        m = g if m is None else jnp.maximum(m, g)
    # relu(max_k(x_k) + b) == max_k(relu(x_k + b)) (same bias, monotone ops)
    pooled = jnp.maximum(m + b1_ref[...], 0.0)          # (N*192, 128)

    # scatter pooled rows (n, i, j16) into the 4-D scratch (tile-aligned rows)
    for n in range(N):
        for i in range(12):
            r0 = (n * 12 + i) * 16
            h1p_ref[n, i] = pooled[r0:r0 + 16, :]

    # ---- conv2: 25 per-tap GEMMs batched over N, bias + ReLU --------------
    acc2 = jnp.zeros((N * 64, 128), f32)
    for t in range(25):
        kh, kw = t // 5, t % 5
        slab = h1p_ref[:, kh:kh + 8, kw:kw + 8, :].reshape(N * 64, 128)
        acc2 = acc2 + jnp.dot(slab, w2_ref[t], preferred_element_type=f32)
    h2 = jnp.maximum(acc2 + b2_ref[...], 0.0)           # rows (n, oi, oj)
    for n in range(N):
        for oi in range(8):
            r0 = n * 64 + oi * 8
            h2_ref[n, oi] = h2[r0:r0 + 8, :]

    # ---- maxpool2 fused into fc1 (flatten absorbed in packed fc1 weights) --
    acc1 = jnp.zeros((N, 128), f32)
    for pi in range(4):
        rm = jnp.maximum(h2_ref[:, 2 * pi, :, :],
                         h2_ref[:, 2 * pi + 1, :, :])   # (N, 8, 128)
        for pj in range(4):
            q = jnp.maximum(rm[:, 2 * pj, :], rm[:, 2 * pj + 1, :])  # (N,128)
            acc1 = acc1 + jnp.dot(q, fw1_ref[pi * 4 + pj],
                                  preferred_element_type=f32)
    f1 = jnp.maximum(acc1 + fb1_ref[...], 0.0)

    # ---- fc2 + out (batched) ----------------------------------------------
    f2 = jnp.maximum(
        jnp.dot(f1, fw2_ref[...], preferred_element_type=f32) + fb2_ref[...],
        0.0)
    out_ref[...] = (jnp.dot(f2, ow_ref[...], preferred_element_type=f32)
                    + ob_ref[...])


# ---------------------------------------------------------------------------
# One-time weight packing (hoisted out of the per-call path)
# ---------------------------------------------------------------------------
def pack_params(params):
    w1, b1, w2, b2, fw1, fb1, fw2, fb2, ow, ob = params
    f32 = jnp.float32

    # conv1 (6,1,5,5) -> (K=128, C=128), rows = kh*5+kw, cols = cout
    w1m = jnp.transpose(w1[:, 0, :, :], (1, 2, 0)).reshape(25, 6)
    w1p = jnp.zeros((128, 128), f32).at[:25, :6].set(w1m.astype(f32))
    b1p = jnp.zeros((1, 128), f32).at[0, :6].set(b1.astype(f32))

    # conv2 (12,6,5,5) -> (25 taps, Cin=128, Cout=128)
    w2m = jnp.transpose(w2, (2, 3, 1, 0)).reshape(25, 6, 12)
    w2p = jnp.zeros((25, 128, 128), f32).at[:, :6, :12].set(w2m.astype(f32))
    b2p = jnp.zeros((1, 128), f32).at[0, :12].set(b2.astype(f32))

    # fc1 (120, 192), torch flatten index c*16 + (pi*4+pj)
    #   -> (16 spatial positions, Cin=128, Cout=128)
    fw1m = jnp.transpose(fw1.reshape(120, 12, 16), (2, 1, 0))  # [s, c, o]
    fw1p = jnp.zeros((16, 128, 128), f32).at[:, :12, :120].set(fw1m.astype(f32))
    fb1p = jnp.zeros((1, 128), f32).at[0, :120].set(fb1.astype(f32))

    # fc2 (60,120) -> (128,128) [in, out]
    fw2p = jnp.zeros((128, 128), f32).at[:120, :60].set(fw2.T.astype(f32))
    fb2p = jnp.zeros((1, 128), f32).at[0, :60].set(fb2.astype(f32))

    # out (10,60) -> (128,128)
    owp = jnp.zeros((128, 128), f32).at[:60, :10].set(ow.T.astype(f32))
    obp = jnp.zeros((1, 128), f32).at[0, :10].set(ob.astype(f32))

    return (w1p, b1p, w2p, b2p, fw1p, fb1p, fw2p, fb2p, owp, obp)


# ---------------------------------------------------------------------------
# Forward pass (single pallas_call; only XLA glue is the conv1 im2col)
# ---------------------------------------------------------------------------
def network_forward(x_nchw, packed):
    N = x_nchw.shape[0]
    x = x_nchw[:, 0, :, :].astype(jnp.float32)                  # (N,28,28)

    # conv1 im2col with pool-friendly row order (tap, n, pi, pj), pj padded
    # 12 -> 16 (so all in-kernel row slabs are 8-sublane aligned), K 25 -> 128.
    cols = [x[:, kh:kh + 24, kw:kw + 24] for kh in range(5) for kw in range(5)]
    p = jnp.stack(cols, axis=-1)                                # (N,24,24,25)
    p = p.reshape(N, 12, 2, 12, 2, 25).transpose(2, 4, 0, 1, 3, 5)
    p = jnp.pad(p, ((0, 0), (0, 0), (0, 0), (0, 0), (0, 4), (0, 103)))
    p1 = p.reshape(4 * N * 12 * 16, 128)                        # (4N*192,128)

    out = pl.pallas_call(
        _fused_lenet_kernel,
        out_shape=jax.ShapeDtypeStruct((N, 128), jnp.float32),
        scratch_shapes=[
            pltpu.VMEM((N, 12, 16, 128), jnp.float32),   # pooled conv1 acts
            pltpu.VMEM((N, 8, 8, 128), jnp.float32),     # conv2 acts
        ],
    )(p1, *packed)
    return out[:, :10]


# ---------------------------------------------------------------------------
# Pure-JAX (XLA) reference with identical semantics, for verification
# ---------------------------------------------------------------------------
def reference_forward(x, params):
    (w1, b1, w2, b2, fw1, fb1, fw2, fb2, ow, ob) = params
    dn = ("NCHW", "OIHW", "NCHW")
    t = lax.conv_general_dilated(x, w1, (1, 1), "VALID", dimension_numbers=dn)
    t = jax.nn.relu(t + b1[None, :, None, None])
    t = lax.reduce_window(t, -jnp.inf, lax.max, (1, 1, 2, 2), (1, 1, 2, 2), "VALID")
    t = lax.conv_general_dilated(t, w2, (1, 1), "VALID", dimension_numbers=dn)
    t = jax.nn.relu(t + b2[None, :, None, None])
    t = lax.reduce_window(t, -jnp.inf, lax.max, (1, 1, 2, 2), (1, 1, 2, 2), "VALID")
    t = t.reshape(t.shape[0], -1)
    t = jax.nn.relu(t @ fw1.T + fb1)
    t = jax.nn.relu(t @ fw2.T + fb2)
    return t @ ow.T + ob


# ---------------------------------------------------------------------------
# Deterministic parameter init (PyTorch layouts: conv OIHW, linear (out,in))
# ---------------------------------------------------------------------------
def init_params(key):
    ks = jax.random.split(key, 10)

    def u(k, shape, fan_in):
        bound = 1.0 / jnp.sqrt(jnp.float32(fan_in))
        return jax.random.uniform(k, shape, jnp.float32, -bound, bound)

    w1 = u(ks[0], (6, 1, 5, 5), 1 * 5 * 5)
    b1 = u(ks[1], (6,), 1 * 5 * 5)
    w2 = u(ks[2], (12, 6, 5, 5), 6 * 5 * 5)
    b2 = u(ks[3], (12,), 6 * 5 * 5)
    fw1 = u(ks[4], (120, 192), 192)
    fb1 = u(ks[5], (120,), 192)
    fw2 = u(ks[6], (60, 120), 120)
    fb2 = u(ks[7], (60,), 120)
    ow = u(ks[8], (10, 60), 60)
    ob = u(ks[9], (10,), 60)
    return (w1, b1, w2, b2, fw1, fb1, fw2, fb2, ow, ob)


if __name__ == "__main__":
    key = jax.random.PRNGKey(0)
    kx, kp = jax.random.split(key)
    # Input shape dictated by the module (fc1 expects 12*4*4 => 28x28 input).
    x = jax.random.normal(kx, (2, 1, 28, 28), jnp.float32)
    params = init_params(kp)

    packed = pack_params(params)           # one-time weight packing (hoisted)
    fwd = jax.jit(network_forward)
    out = jax.block_until_ready(fwd(x, packed))
    assert out.shape == (2, 10), out.shape

    ref = reference_forward(x, params)
    if not bool(jnp.allclose(out, ref, atol=2e-4, rtol=2e-4)):
        raise AssertionError("Pallas forward does not match XLA reference")

    print("KERNEL_OK")
</pallas_src>

<mosaic_0001>
module attributes {stable_mosaic.version = 11 : i64} {
  func.func @_fused_lenet_kernel(%arg0: memref<1536x128xf32, #tpu.memory_space<vmem>>, %arg1: memref<128x128xf32, #tpu.memory_space<vmem>>, %arg2: memref<1x128xf32, #tpu.memory_space<vmem>>, %arg3: memref<25x128x128xf32, #tpu.memory_space<vmem>>, %arg4: memref<1x128xf32, #tpu.memory_space<vmem>>, %arg5: memref<16x128x128xf32, #tpu.memory_space<vmem>>, %arg6: memref<1x128xf32, #tpu.memory_space<vmem>>, %arg7: memref<128x128xf32, #tpu.memory_space<vmem>>, %arg8: memref<1x128xf32, #tpu.memory_space<vmem>>, %arg9: memref<128x128xf32, #tpu.memory_space<vmem>>, %arg10: memref<1x128xf32, #tpu.memory_space<vmem>>, %arg11: memref<2x128xf32, #tpu.memory_space<vmem>>, %arg12: memref<2x12x16x128xf32, #tpu.memory_space<vmem>>, %arg13: memref<2x8x8x128xf32, #tpu.memory_space<vmem>>) attributes {dimension_semantics = [], scalar_prefetch = 0 : i64, scratch_operands = 2 : i64, tpu.core_type = #tpu.core_type<tc>} {
    %c0 = arith.constant 0 : index
    %c0_0 = arith.constant 0 : index
    %0 = vector.load %arg1[%c0, %c0_0] : memref<128x128xf32, #tpu.memory_space<vmem>>, vector<128x128xf32>
    %c0_1 = arith.constant 0 : index
    %c0_2 = arith.constant 0 : index
    %1 = vector.load %arg0[%c0_1, %c0_2] : memref<1536x128xf32, #tpu.memory_space<vmem>>, vector<384x128xf32>
    %cst = arith.constant dense<0.000000e+00> : vector<384x128xf32>
    %2 = tpu.matmul %1, %0, %cst {dimension_numbers = #tpu.dot_dimension_numbers<[1], [0], [0], [1], [0, 0, 1, 1], [], []>} : vector<384x128xf32>, vector<128x128xf32>, vector<384x128xf32> -> vector<384x128xf32>
    %c384 = arith.constant 384 : index
    %c0_3 = arith.constant 0 : index
    %3 = vector.load %arg0[%c384, %c0_3] : memref<1536x128xf32, #tpu.memory_space<vmem>>, vector<384x128xf32>
    %cst_4 = arith.constant dense<0.000000e+00> : vector<384x128xf32>
    %4 = tpu.matmul %3, %0, %cst_4 {dimension_numbers = #tpu.dot_dimension_numbers<[1], [0], [0], [1], [0, 0, 1, 1], [], []>} : vector<384x128xf32>, vector<128x128xf32>, vector<384x128xf32> -> vector<384x128xf32>
    %5 = arith.maximumf %2, %4 : vector<384x128xf32>
    %c768 = arith.constant 768 : index
    %c0_5 = arith.constant 0 : index
    %6 = vector.load %arg0[%c768, %c0_5] : memref<1536x128xf32, #tpu.memory_space<vmem>>, vector<384x128xf32>
    %cst_6 = arith.constant dense<0.000000e+00> : vector<384x128xf32>
    %7 = tpu.matmul %6, %0, %cst_6 {dimension_numbers = #tpu.dot_dimension_numbers<[1], [0], [0], [1], [0, 0, 1, 1], [], []>} : vector<384x128xf32>, vector<128x128xf32>, vector<384x128xf32> -> vector<384x128xf32>
    %8 = arith.maximumf %5, %7 : vector<384x128xf32>
    %c1152 = arith.constant 1152 : index
    %c0_7 = arith.constant 0 : index
    %9 = vector.load %arg0[%c1152, %c0_7] : memref<1536x128xf32, #tpu.memory_space<vmem>>, vector<384x128xf32>
    %cst_8 = arith.constant dense<0.000000e+00> : vector<384x128xf32>
    %10 = tpu.matmul %9, %0, %cst_8 {dimension_numbers = #tpu.dot_dimension_numbers<[1], [0], [0], [1], [0, 0, 1, 1], [], []>} : vector<384x128xf32>, vector<128x128xf32>, vector<384x128xf32> -> vector<384x128xf32>
    %11 = arith.maximumf %8, %10 : vector<384x128xf32>
    %c0_9 = arith.constant 0 : index
    %c0_10 = arith.constant 0 : index
    %12 = vector.load %arg2[%c0_9, %c0_10] : memref<1x128xf32, #tpu.memory_space<vmem>>, vector<1x128xf32>
    %13 = vector.broadcast %12 : vector<1x128xf32> to vector<384x128xf32>
    %14 = arith.addf %11, %13 : vector<384x128xf32>
    %cst_11 = arith.constant 0.000000e+00 : f32
    %15 = vector.broadcast %cst_11 : f32 to vector<384x128xf32>
    %16 = arith.maximumf %14, %15 : vector<384x128xf32>
    %17 = vector.extract_strided_slice %16 {offsets = [0, 0], sizes = [16, 128], strides = [1, 1]} : vector<384x128xf32> to vector<16x128xf32>
    %c0_12 = arith.constant 0 : index
    %c0_13 = arith.constant 0 : index
    %c0_14 = arith.constant 0 : index
    %c0_15 = arith.constant 0 : index
    %18 = vector.load %arg12[%c0_12, %c0_13, %c0_14, %c0_15] : memref<2x12x16x128xf32, #tpu.memory_space<vmem>>, vector<1x1x16x128xf32>
    %19 = vector.shape_cast %18 : vector<1x1x16x128xf32> to vector<16x128xf32>
    %20 = vector.shape_cast %17 : vector<16x128xf32> to vector<1x1x16x128xf32>
    tpu.vector_store %arg12[%c0_12, %c0_13, %c0_14, %c0_15], %20 {strides = array<i32>} : memref<2x12x16x128xf32, #tpu.memory_space<vmem>>, vector<1x1x16x128xf32>,
    %21 = vector.extract_strided_slice %16 {offsets = [16, 0], sizes = [16, 128], strides = [1, 1]} : vector<384x128xf32> to vector<16x128xf32>
    %c0_16 = arith.constant 0 : index
    %c1 = arith.constant 1 : index
    %c0_17 = arith.constant 0 : index
    %c0_18 = arith.constant 0 : index
    %22 = vector.load %arg12[%c0_16, %c1, %c0_17, %c0_18] : memref<2x12x16x128xf32, #tpu.memory_space<vmem>>, vector<1x1x16x128xf32>
    %23 = vector.shape_cast %22 : vector<1x1x16x128xf32> to vector<16x128xf32>
    %24 = vector.shape_cast %21 : vector<16x128xf32> to vector<1x1x16x128xf32>
    tpu.vector_store %arg12[%c0_16, %c1, %c0_17, %c0_18], %24 {strides = array<i32>} : memref<2x12x16x128xf32, #tpu.memory_space<vmem>>, vector<1x1x16x128xf32>,
    %25 = vector.extract_strided_slice %16 {offsets = [32, 0], sizes = [16, 128], strides = [1, 1]} : vector<384x128xf32> to vector<16x128xf32>
    %c0_19 = arith.constant 0 : index
    %c2 = arith.constant 2 : index
    %c0_20 = arith.constant 0 : index
    %c0_21 = arith.constant 0 : index
    %26 = vector.load %arg12[%c0_19, %c2, %c0_20, %c0_21] : memref<2x12x16x128xf32, #tpu.memory_space<vmem>>, vector<1x1x16x128xf32>
    %27 = vector.shape_cast %26 : vector<1x1x16x128xf32> to vector<16x128xf32>
    %28 = vector.shape_cast %25 : vector<16x128xf32> to vector<1x1x16x128xf32>
    tpu.vector_store %arg12[%c0_19, %c2, %c0_20, %c0_21], %28 {strides = array<i32>} : memref<2x12x16x128xf32, #tpu.memory_space<vmem>>, vector<1x1x16x128xf32>,
    %29 = vector.extract_strided_slice %16 {offsets = [48, 0], sizes = [16, 128], strides = [1, 1]} : vector<384x128xf32> to vector<16x128xf32>
    %c0_22 = arith.constant 0 : index
    %c3 = arith.constant 3 : index
    %c0_23 = arith.constant 0 : index
    %c0_24 = arith.constant 0 : index
    %30 = vector.load %arg12[%c0_22, %c3, %c0_23, %c0_24] : memref<2x12x16x128xf32, #tpu.memory_space<vmem>>, vector<1x1x16x128xf32>
    %31 = vector.shape_cast %30 : vector<1x1x16x128xf32> to vector<16x128xf32>
    %32 = vector.shape_cast %29 : vector<16x128xf32> to vector<1x1x16x128xf32>
    tpu.vector_store %arg12[%c0_22, %c3, %c0_23, %c0_24], %32 {strides = array<i32>} : memref<2x12x16x128xf32, #tpu.memory_space<vmem>>, vector<1x1x16x128xf32>,
    %33 = vector.extract_strided_slice %16 {offsets = [64, 0], sizes = [16, 128], strides = [1, 1]} : vector<384x128xf32> to vector<16x128xf32>
    %c0_25 = arith.constant 0 : index
    %c4 = arith.constant 4 : index
    %c0_26 = arith.constant 0 : index
    %c0_27 = arith.constant 0 : index
    %34 = vector.load %arg12[%c0_25, %c4, %c0_26, %c0_27] : memref<2x12x16x128xf32, #tpu.memory_space<vmem>>, vector<1x1x16x128xf32>
    %35 = vector.shape_cast %34 : vector<1x1x16x128xf32> to vector<16x128xf32>
    %36 = vector.shape_cast %33 : vector<16x128xf32> to vector<1x1x16x128xf32>
    tpu.vector_store %arg12[%c0_25, %c4, %c0_26, %c0_27], %36 {strides = array<i32>} : memref<2x12x16x128xf32, #tpu.memory_space<vmem>>, vector<1x1x16x128xf32>,
    %37 = vector.extract_strided_slice %16 {offsets = [80, 0], sizes = [16, 128], strides = [1, 1]} : vector<384x128xf32> to vector<16x128xf32>
    %c0_28 = arith.constant 0 : index
    %c5 = arith.constant 5 : index
    %c0_29 = arith.constant 0 : index
    %c0_30 = arith.constant 0 : index
    %38 = vector.load %arg12[%c0_28, %c5, %c0_29, %c0_30] : memref<2x12x16x128xf32, #tpu.memory_space<vmem>>, vector<1x1x16x128xf32>
    %39 = vector.shape_cast %38 : vector<1x1x16x128xf32> to vector<16x128xf32>
    %40 = vector.shape_cast %37 : vector<16x128xf32> to vector<1x1x16x128xf32>
    tpu.vector_store %arg12[%c0_28, %c5, %c0_29, %c0_30], %40 {strides = array<i32>} : memref<2x12x16x128xf32, #tpu.memory_space<vmem>>, vector<1x1x16x128xf32>,
    %41 = vector.extract_strided_slice %16 {offsets = [96, 0], sizes = [16, 128], strides = [1, 1]} : vector<384x128xf32> to vector<16x128xf32>
    %c0_31 = arith.constant 0 : index
    %c6 = arith.constant 6 : index
    %c0_32 = arith.constant 0 : index
    %c0_33 = arith.constant 0 : index
    %42 = vector.load %arg12[%c0_31, %c6, %c0_32, %c0_33] : memref<2x12x16x128xf32, #tpu.memory_space<vmem>>, vector<1x1x16x128xf32>
    %43 = vector.shape_cast %42 : vector<1x1x16x128xf32> to vector<16x128xf32>
    %44 = vector.shape_cast %41 : vector<16x128xf32> to vector<1x1x16x128xf32>
    tpu.vector_store %arg12[%c0_31, %c6, %c0_32, %c0_33], %44 {strides = array<i32>} : memref<2x12x16x128xf32, #tpu.memory_space<vmem>>, vector<1x1x16x128xf32>,
    %45 = vector.extract_strided_slice %16 {offsets = [112, 0], sizes = [16, 128], strides = [1, 1]} : vector<384x128xf32> to vector<16x128xf32>
    %c0_34 = arith.constant 0 : index
    %c7 = arith.constant 7 : index
    %c0_35 = arith.constant 0 : index
    %c0_36 = arith.constant 0 : index
    %46 = vector.load %arg12[%c0_34, %c7, %c0_35, %c0_36] : memref<2x12x16x128xf32, #tpu.memory_space<vmem>>, vector<1x1x16x128xf32>
    %47 = vector.shape_cast %46 : vector<1x1x16x128xf32> to vector<16x128xf32>
    %48 = vector.shape_cast %45 : vector<16x128xf32> to vector<1x1x16x128xf32>
    tpu.vector_store %arg12[%c0_34, %c7, %c0_35, %c0_36], %48 {strides = array<i32>} : memref<2x12x16x128xf32, #tpu.memory_space<vmem>>, vector<1x1x16x128xf32>,
    %49 = vector.extract_strided_slice %16 {offsets = [128, 0], sizes = [16, 128], strides = [1, 1]} : vector<384x128xf32> to vector<16x128xf32>
    %c0_37 = arith.constant 0 : index
    %c8 = arith.constant 8 : index
    %c0_38 = arith.constant 0 : index
    %c0_39 = arith.constant 0 : index
    %50 = vector.load %arg12[%c0_37, %c8, %c0_38, %c0_39] : memref<2x12x16x128xf32, #tpu.memory_space<vmem>>, vector<1x1x16x128xf32>
    %51 = vector.shape_cast %50 : vector<1x1x16x128xf32> to vector<16x128xf32>
    %52 = vector.shape_cast %49 : vector<16x128xf32> to vector<1x1x16x128xf32>
    tpu.vector_store %arg12[%c0_37, %c8, %c0_38, %c0_39], %52 {strides = array<i32>} : memref<2x12x16x128xf32, #tpu.memory_space<vmem>>, vector<1x1x16x128xf32>,
    %53 = vector.extract_strided_slice %16 {offsets = [144, 0], sizes = [16, 128], strides = [1, 1]} : vector<384x128xf32> to vector<16x128xf32>
    %c0_40 = arith.constant 0 : index
    %c9 = arith.constant 9 : index
    %c0_41 = arith.constant 0 : index
    %c0_42 = arith.constant 0 : index
    %54 = vector.load %arg12[%c0_40, %c9, %c0_41, %c0_42] : memref<2x12x16x128xf32, #tpu.memory_space<vmem>>, vector<1x1x16x128xf32>
    %55 = vector.shape_cast %54 : vector<1x1x16x128xf32> to vector<16x128xf32>
    %56 = vector.shape_cast %53 : vector<16x128xf32> to vector<1x1x16x128xf32>
    tpu.vector_store %arg12[%c0_40, %c9, %c0_41, %c0_42], %56 {strides = array<i32>} : memref<2x12x16x128xf32, #tpu.memory_space<vmem>>, vector<1x1x16x128xf32>,
    %57 = vector.extract_strided_slice %16 {offsets = [160, 0], sizes = [16, 128], strides = [1, 1]} : vector<384x128xf32> to vector<16x128xf32>
    %c0_43 = arith.constant 0 : index
    %c10 = arith.constant 10 : index
    %c0_44 = arith.constant 0 : index
    %c0_45 = arith.constant 0 : index
    %58 = vector.load %arg12[%c0_43, %c10, %c0_44, %c0_45] : memref<2x12x16x128xf32, #tpu.memory_space<vmem>>, vector<1x1x16x128xf32>
    %59 = vector.shape_cast %58 : vector<1x1x16x128xf32> to vector<16x128xf32>
    %60 = vector.shape_cast %57 : vector<16x128xf32> to vector<1x1x16x128xf32>
    tpu.vector_store %arg12[%c0_43, %c10, %c0_44, %c0_45], %60 {strides = array<i32>} : memref<2x12x16x128xf32, #tpu.memory_space<vmem>>, vector<1x1x16x128xf32>,
    %61 = vector.extract_strided_slice %16 {offsets = [176, 0], sizes = [16, 128], strides = [1, 1]} : vector<384x128xf32> to vector<16x128xf32>
    %c0_46 = arith.constant 0 : index
    %c11 = arith.constant 11 : index
    %c0_47 = arith.constant 0 : index
    %c0_48 = arith.constant 0 : index
    %62 = vector.load %arg12[%c0_46, %c11, %c0_47, %c0_48] : memref<2x12x16x128xf32, #tpu.memory_space<vmem>>, vector<1x1x16x128xf32>
    %63 = vector.shape_cast %62 : vector<1x1x16x128xf32> to vector<16x128xf32>
    %64 = vector.shape_cast %61 : vector<16x128xf32> to vector<1x1x16x128xf32>
    tpu.vector_store %arg12[%c0_46, %c11, %c0_47, %c0_48], %64 {strides = array<i32>} : memref<2x12x16x128xf32, #tpu.memory_space<vmem>>, vector<1x1x16x128xf32>,
    %65 = vector.extract_strided_slice %16 {offsets = [192, 0], sizes = [16, 128], strides = [1, 1]} : vector<384x128xf32> to vector<16x128xf32>
    %c1_49 = arith.constant 1 : index
    %c0_50 = arith.constant 0 : index
    %c0_51 = arith.constant 0 : index
    %c0_52 = arith.constant 0 : index
    %66 = vector.load %arg12[%c1_49, %c0_50, %c0_51, %c0_52] : memref<2x12x16x128xf32, #tpu.memory_space<vmem>>, vector<1x1x16x128xf32>
    %67 = vector.shape_cast %66 : vector<1x1x16x128xf32> to vector<16x128xf32>
    %68 = vector.shape_cast %65 : vector<16x128xf32> to vector<1x1x16x128xf32>
    tpu.vector_store %arg12[%c1_49, %c0_50, %c0_51, %c0_52], %68 {strides = array<i32>} : memref<2x12x16x128xf32, #tpu.memory_space<vmem>>, vector<1x1x16x128xf32>,
    %69 = vector.extract_strided_slice %16 {offsets = [208, 0], sizes = [16, 128], strides = [1, 1]} : vector<384x128xf32> to vector<16x128xf32>
    %c1_53 = arith.constant 1 : index
    %c1_54 = arith.constant 1 : index
    %c0_55 = arith.constant 0 : index
    %c0_56 = arith.constant 0 : index
    %70 = vector.load %arg12[%c1_53, %c1_54, %c0_55, %c0_56] : memref<2x12x16x128xf32, #tpu.memory_space<vmem>>, vector<1x1x16x128xf32>
    %71 = vector.shape_cast %70 : vector<1x1x16x128xf32> to vector<16x128xf32>
    %72 = vector.shape_cast %69 : vector<16x128xf32> to vector<1x1x16x128xf32>
    tpu.vector_store %arg12[%c1_53, %c1_54, %c0_55, %c0_56], %72 {strides = array<i32>} : memref<2x12x16x128xf32, #tpu.memory_space<vmem>>, vector<1x1x16x128xf32>,
    %73 = vector.extract_strided_slice %16 {offsets = [224, 0], sizes = [16, 128], strides = [1, 1]} : vector<384x128xf32> to vector<16x128xf32>
    %c1_57 = arith.constant 1 : index
    %c2_58 = arith.constant 2 : index
    %c0_59 = arith.constant 0 : index
    %c0_60 = arith.constant 0 : index
    %74 = vector.load %arg12[%c1_57, %c2_58, %c0_59, %c0_60] : memref<2x12x16x128xf32, #tpu.memory_space<vmem>>, vector<1x1x16x128xf32>
    %75 = vector.shape_cast %74 : vector<1x1x16x128xf32> to vector<16x128xf32>
    %76 = vector.shape_cast %73 : vector<16x128xf32> to vector<1x1x16x128xf32>
    tpu.vector_store %arg12[%c1_57, %c2_58, %c0_59, %c0_60], %76 {strides = array<i32>} : memref<2x12x16x128xf32, #tpu.memory_space<vmem>>, vector<1x1x16x128xf32>,
    %77 = vector.extract_strided_slice %16 {offsets = [240, 0], sizes = [16, 128], strides = [1, 1]} : vector<384x128xf32> to vector<16x128xf32>
    %c1_61 = arith.constant 1 : index
    %c3_62 = arith.constant 3 : index
    %c0_63 = arith.constant 0 : index
    %c0_64 = arith.constant 0 : index
    %78 = vector.load %arg12[%c1_61, %c3_62, %c0_63, %c0_64] : memref<2x12x16x128xf32, #tpu.memory_space<vmem>>, vector<1x1x16x128xf32>
    %79 = vector.shape_cast %78 : vector<1x1x16x128xf32> to vector<16x128xf32>
    %80 = vector.shape_cast %77 : vector<16x128xf32> to vector<1x1x16x128xf32>
    tpu.vector_store %arg12[%c1_61, %c3_62, %c0_63, %c0_64], %80 {strides = array<i32>} : memref<2x12x16x128xf32, #tpu.memory_space<vmem>>, vector<1x1x16x128xf32>,
    %81 = vector.extract_strided_slice %16 {offsets = [256, 0], sizes = [16, 128], strides = [1, 1]} : vector<384x128xf32> to vector<16x128xf32>
    %c1_65 = arith.constant 1 : index
    %c4_66 = arith.constant 4 : index
    %c0_67 = arith.constant 0 : index
    %c0_68 = arith.constant 0 : index
    %82 = vector.load %arg12[%c1_65, %c4_66, %c0_67, %c0_68] : memref<2x12x16x128xf32, #tpu.memory_space<vmem>>, vector<1x1x16x128xf32>
    %83 = vector.shape_cast %82 : vector<1x1x16x128xf32> to vector<16x128xf32>
    %84 = vector.shape_cast %81 : vector<16x128xf32> to vector<1x1x16x128xf32>
    tpu.vector_store %arg12[%c1_65, %c4_66, %c0_67, %c0_68], %84 {strides = array<i32>} : memref<2x12x16x128xf32, #tpu.memory_space<vmem>>, vector<1x1x16x128xf32>,
    %85 = vector.extract_strided_slice %16 {offsets = [272, 0], sizes = [16, 128], strides = [1, 1]} : vector<384x128xf32> to vector<16x128xf32>
    %c1_69 = arith.constant 1 : index
    %c5_70 = arith.constant 5 : index
    %c0_71 = arith.constant 0 : index
    %c0_72 = arith.constant 0 : index
    %86 = vector.load %arg12[%c1_69, %c5_70, %c0_71, %c0_72] : memref<2x12x16x128xf32, #tpu.memory_space<vmem>>, vector<1x1x16x128xf32>
    %87 = vector.shape_cast %86 : vector<1x1x16x128xf32> to vector<16x128xf32>
    %88 = vector.shape_cast %85 : vector<16x128xf32> to vector<1x1x16x128xf32>
    tpu.vector_store %arg12[%c1_69, %c5_70, %c0_71, %c0_72], %88 {strides = array<i32>} : memref<2x12x16x128xf32, #tpu.memory_space<vmem>>, vector<1x1x16x128xf32>,
    %89 = vector.extract_strided_slice %16 {offsets = [288, 0], sizes = [16, 128], strides = [1, 1]} : vector<384x128xf32> to vector<16x128xf32>
    %c1_73 = arith.constant 1 : index
    %c6_74 = arith.constant 6 : index
    %c0_75 = arith.constant 0 : index
    %c0_76 = arith.constant 0 : index
    %90 = vector.load %arg12[%c1_73, %c6_74, %c0_75, %c0_76] : memref<2x12x16x128xf32, #tpu.memory_space<vmem>>, vector<1x1x16x128xf32>
    %91 = vector.shape_cast %90 : vector<1x1x16x128xf32> to vector<16x128xf32>
    %92 = vector.shape_cast %89 : vector<16x128xf32> to vector<1x1x16x128xf32>
    tpu.vector_store %arg12[%c1_73, %c6_74, %c0_75, %c0_76], %92 {strides = array<i32>} : memref<2x12x16x128xf32, #tpu.memory_space<vmem>>, vector<1x1x16x128xf32>,
    %93 = vector.extract_strided_slice %16 {offsets = [304, 0], sizes = [16, 128], strides = [1, 1]} : vector<384x128xf32> to vector<16x128xf32>
    %c1_77 = arith.constant 1 : index
    %c7_78 = arith.constant 7 : index
    %c0_79 = arith.constant 0 : index
    %c0_80 = arith.constant 0 : index
    %94 = vector.load %arg12[%c1_77, %c7_78, %c0_79, %c0_80] : memref<2x12x16x128xf32, #tpu.memory_space<vmem>>, vector<1x1x16x128xf32>
    %95 = vector.shape_cast %94 : vector<1x1x16x128xf32> to vector<16x128xf32>
    %96 = vector.shape_cast %93 : vector<16x128xf32> to vector<1x1x16x128xf32>
    tpu.vector_store %arg12[%c1_77, %c7_78, %c0_79, %c0_80], %96 {strides = array<i32>} : memref<2x12x16x128xf32, #tpu.memory_space<vmem>>, vector<1x1x16x128xf32>,
    %97 = vector.extract_strided_slice %16 {offsets = [320, 0], sizes = [16, 128], strides = [1, 1]} : vector<384x128xf32> to vector<16x128xf32>
    %c1_81 = arith.constant 1 : index
    %c8_82 = arith.constant 8 : index
    %c0_83 = arith.constant 0 : index
    %c0_84 = arith.constant 0 : index
    %98 = vector.load %arg12[%c1_81, %c8_82, %c0_83, %c0_84] : memref<2x12x16x128xf32, #tpu.memory_space<vmem>>, vector<1x1x16x128xf32>
    %99 = vector.shape_cast %98 : vector<1x1x16x128xf32> to vector<16x128xf32>
    %100 = vector.shape_cast %97 : vector<16x128xf32> to vector<1x1x16x128xf32>
    tpu.vector_store %arg12[%c1_81, %c8_82, %c0_83, %c0_84], %100 {strides = array<i32>} : memref<2x12x16x128xf32, #tpu.memory_space<vmem>>, vector<1x1x16x128xf32>,
    %101 = vector.extract_strided_slice %16 {offsets = [336, 0], sizes = [16, 128], strides = [1, 1]} : vector<384x128xf32> to vector<16x128xf32>
    %c1_85 = arith.constant 1 : index
    %c9_86 = arith.constant 9 : index
    %c0_87 = arith.constant 0 : index
    %c0_88 = arith.constant 0 : index
    %102 = vector.load %arg12[%c1_85, %c9_86, %c0_87, %c0_88] : memref<2x12x16x128xf32, #tpu.memory_space<vmem>>, vector<1x1x16x128xf32>
    %103 = vector.shape_cast %102 : vector<1x1x16x128xf32> to vector<16x128xf32>
    %104 = vector.shape_cast %101 : vector<16x128xf32> to vector<1x1x16x128xf32>
    tpu.vector_store %arg12[%c1_85, %c9_86, %c0_87, %c0_88], %104 {strides = array<i32>} : memref<2x12x16x128xf32, #tpu.memory_space<vmem>>, vector<1x1x16x128xf32>,
    %105 = vector.extract_strided_slice %16 {offsets = [352, 0], sizes = [16, 128], strides = [1, 1]} : vector<384x128xf32> to vector<16x128xf32>
    %c1_89 = arith.constant 1 : index
    %c10_90 = arith.constant 10 : index
    %c0_91 = arith.constant 0 : index
    %c0_92 = arith.constant 0 : index
    %106 = vector.load %arg12[%c1_89, %c10_90, %c0_91, %c0_92] : memref<2x12x16x128xf32, #tpu.memory_space<vmem>>, vector<1x1x16x128xf32>
    %107 = vector.shape_cast %106 : vector<1x1x16x128xf32> to vector<16x128xf32>
    %108 = vector.shape_cast %105 : vector<16x128xf32> to vector<1x1x16x128xf32>
    tpu.vector_store %arg12[%c1_89, %c10_90, %c0_91, %c0_92], %108 {strides = array<i32>} : memref<2x12x16x128xf32, #tpu.memory_space<vmem>>, vector<1x1x16x128xf32>,
    %109 = vector.extract_strided_slice %16 {offsets = [368, 0], sizes = [16, 128], strides = [1, 1]} : vector<384x128xf32> to vector<16x128xf32>
    %c1_93 = arith.constant 1 : index
    %c11_94 = arith.constant 11 : index
    %c0_95 = arith.constant 0 : index
    %c0_96 = arith.constant 0 : index
    %110 = vector.load %arg12[%c1_93, %c11_94, %c0_95, %c0_96] : memref<2x12x16x128xf32, #tpu.memory_space<vmem>>, vector<1x1x16x128xf32>
    %111 = vector.shape_cast %110 : vector<1x1x16x128xf32> to vector<16x128xf32>
    %112 = vector.shape_cast %109 : vector<16x128xf32> to vector<1x1x16x128xf32>
    tpu.vector_store %arg12[%c1_93, %c11_94, %c0_95, %c0_96], %112 {strides = array<i32>} : memref<2x12x16x128xf32, #tpu.memory_space<vmem>>, vector<1x1x16x128xf32>,
    %cst_97 = arith.constant 0.000000e+00 : f32
    %113 = vector.broadcast %cst_97 : f32 to vector<128x128xf32>
    %c0_98 = arith.constant 0 : index
    %c0_99 = arith.constant 0 : index
    %c0_100 = arith.constant 0 : index
    %c0_101 = arith.constant 0 : index
    %114 = vector.load %arg12[%c0_98, %c0_99, %c0_100, %c0_101] : memref<2x12x16x128xf32, #tpu.memory_space<vmem>>, vector<2x8x8x128xf32>
    %115 = vector.shape_cast %114 : vector<2x8x8x128xf32> to vector<128x128xf32>
    %c0_102 = arith.constant 0 : index
    %c0_103 = arith.constant 0 : index
    %c0_104 = arith.constant 0 : index
    %116 = vector.load %arg3[%c0_102, %c0_103, %c0_104] : memref<25x128x128xf32, #tpu.memory_space<vmem>>, vector<1x128x128xf32>
    %117 = vector.shape_cast %116 : vector<1x128x128xf32> to vector<128x128xf32>
    %cst_105 = arith.constant dense<0.000000e+00> : vector<128x128xf32>
    %118 = tpu.matmul %115, %117, %cst_105 {dimension_numbers = #tpu.dot_dimension_numbers<[1], [0], [0], [1], [0, 0, 1, 1], [], []>} : vector<128x128xf32>, vector<128x128xf32>, vector<128x128xf32> -> vector<128x128xf32>
    %119 = arith.addf %113, %118 : vector<128x128xf32>
    %c0_106 = arith.constant 0 : index
    %c0_107 = arith.constant 0 : index
    %c1_108 = arith.constant 1 : index
    %c0_109 = arith.constant 0 : index
    %120 = vector.load %arg12[%c0_106, %c0_107, %c1_108, %c0_109] : memref<2x12x16x128xf32, #tpu.memory_space<vmem>>, vector<2x8x8x128xf32>
    %121 = vector.shape_cast %120 : vector<2x8x8x128xf32> to vector<128x128xf32>
    %c1_110 = arith.constant 1 : index
    %c0_111 = arith.constant 0 : index
    %c0_112 = arith.constant 0 : index
    %122 = vector.load %arg3[%c1_110, %c0_111, %c0_112] : memref<25x128x128xf32, #tpu.memory_space<vmem>>, vector<1x128x128xf32>
    %123 = vector.shape_cast %122 : vector<1x128x128xf32> to vector<128x128xf32>
    %cst_113 = arith.constant dense<0.000000e+00> : vector<128x128xf32>
    %124 = tpu.matmul %121, %123, %cst_113 {dimension_numbers = #tpu.dot_dimension_numbers<[1], [0], [0], [1], [0, 0, 1, 1], [], []>} : vector<128x128xf32>, vector<128x128xf32>, vector<128x128xf32> -> vector<128x128xf32>
    %125 = arith.addf %119, %124 : vector<128x128xf32>
    %c0_114 = arith.constant 0 : index
    %c0_115 = arith.constant 0 : index
    %c2_116 = arith.constant 2 : index
    %c0_117 = arith.constant 0 : index
    %126 = vector.load %arg12[%c0_114, %c0_115, %c2_116, %c0_117] : memref<2x12x16x128xf32, #tpu.memory_space<vmem>>, vector<2x8x8x128xf32>
    %127 = vector.shape_cast %126 : vector<2x8x8x128xf32> to vector<128x128xf32>
    %c2_118 = arith.constant 2 : index
    %c0_119 = arith.constant 0 : index
    %c0_120 = arith.constant 0 : index
    %128 = vector.load %arg3[%c2_118, %c0_119, %c0_120] : memref<25x128x128xf32, #tpu.memory_space<vmem>>, vector<1x128x128xf32>
    %129 = vector.shape_cast %128 : vector<1x128x128xf32> to vector<128x128xf32>
    %cst_121 = arith.constant dense<0.000000e+00> : vector<128x128xf32>
    %130 = tpu.matmul %127, %129, %cst_121 {dimension_numbers = #tpu.dot_dimension_numbers<[1], [0], [0], [1], [0, 0, 1, 1], [], []>} : vector<128x128xf32>, vector<128x128xf32>, vector<128x128xf32> -> vector<128x128xf32>
    %131 = arith.addf %125, %130 : vector<128x128xf32>
    %c0_122 = arith.constant 0 : index
    %c0_123 = arith.constant 0 : index
    %c3_124 = arith.constant 3 : index
    %c0_125 = arith.constant 0 : index
    %132 = vector.load %arg12[%c0_122, %c0_123, %c3_124, %c0_125] : memref<2x12x16x128xf32, #tpu.memory_space<vmem>>, vector<2x8x8x128xf32>
    %133 = vector.shape_cast %132 : vector<2x8x8x128xf32> to vector<128x128xf32>
    %c3_126 = arith.constant 3 : index
    %c0_127 = arith.constant 0 : index
    %c0_128 = arith.constant 0 : index
    %134 = vector.load %arg3[%c3_126, %c0_127, %c0_128] : memref<25x128x128xf32, #tpu.memory_space<vmem>>, vector<1x128x128xf32>
    %135 = vector.shape_cast %134 : vector<1x128x128xf32> to vector<128x128xf32>
    %cst_129 = arith.constant dense<0.000000e+00> : vector<128x128xf32>
    %136 = tpu.matmul %133, %135, %cst_129 {dimension_numbers = #tpu.dot_dimension_numbers<[1], [0], [0], [1], [0, 0, 1, 1], [], []>} : vector<128x128xf32>, vector<128x128xf32>, vector<128x128xf32> -> vector<128x128xf32>
    %137 = arith.addf %131, %136 : vector<128x128xf32>
    %c0_130 = arith.constant 0 : index
    %c0_131 = arith.constant 0 : index
    %c4_132 = arith.constant 4 : index
    %c0_133 = arith.constant 0 : index
    %138 = vector.load %arg12[%c0_130, %c0_131, %c4_132, %c0_133] : memref<2x12x16x128xf32, #tpu.memory_space<vmem>>, vector<2x8x8x128xf32>
    %139 = vector.shape_cast %138 : vector<2x8x8x128xf32> to vector<128x128xf32>
    %c4_134 = arith.constant 4 : index
    %c0_135 = arith.constant 0 : index
    %c0_136 = arith.constant 0 : index
    %140 = vector.load %arg3[%c4_134, %c0_135, %c0_136] : memref<25x128x128xf32, #tpu.memory_space<vmem>>, vector<1x128x128xf32>
    %141 = vector.shape_cast %140 : vector<1x128x128xf32> to vector<128x128xf32>
    %cst_137 = arith.constant dense<0.000000e+00> : vector<128x128xf32>
    %142 = tpu.matmul %139, %141, %cst_137 {dimension_numbers = #tpu.dot_dimension_numbers<[1], [0], [0], [1], [0, 0, 1, 1], [], []>} : vector<128x128xf32>, vector<128x128xf32>, vector<128x128xf32> -> vector<128x128xf32>
    %143 = arith.addf %137, %142 : vector<128x128xf32>
    %c0_138 = arith.constant 0 : index
    %c1_139 = arith.constant 1 : index
    %c0_140 = arith.constant 0 : index
    %c0_141 = arith.constant 0 : index
    %144 = vector.load %arg12[%c0_138, %c1_139, %c0_140, %c0_141] : memref<2x12x16x128xf32, #tpu.memory_space<vmem>>, vector<2x8x8x128xf32>
    %145 = vector.shape_cast %144 : vector<2x8x8x128xf32> to vector<128x128xf32>
    %c5_142 = arith.constant 5 : index
    %c0_143 = arith.constant 0 : index
    %c0_144 = arith.constant 0 : index
    %146 = vector.load %arg3[%c5_142, %c0_143, %c0_144] : memref<25x128x128xf32, #tpu.memory_space<vmem>>, vector<1x128x128xf32>
    %147 = vector.shape_cast %146 : vector<1x128x128xf32> to vector<128x128xf32>
    %cst_145 = arith.constant dense<0.000000e+00> : vector<128x128xf32>
    %148 = tpu.matmul %145, %147, %cst_145 {dimension_numbers = #tpu.dot_dimension_numbers<[1], [0], [0], [1], [0, 0, 1, 1], [], []>} : vector<128x128xf32>, vector<128x128xf32>, vector<128x128xf32> -> vector<128x128xf32>
    %149 = arith.addf %143, %148 : vector<128x128xf32>
    %c0_146 = arith.constant 0 : index
    %c1_147 = arith.constant 1 : index
    %c1_148 = arith.constant 1 : index
    %c0_149 = arith.constant 0 : index
    %150 = vector.load %arg12[%c0_146, %c1_147, %c1_148, %c0_149] : memref<2x12x16x128xf32, #tpu.memory_space<vmem>>, vector<2x8x8x128xf32>
    %151 = vector.shape_cast %150 : vector<2x8x8x128xf32> to vector<128x128xf32>
    %c6_150 = arith.constant 6 : index
    %c0_151 = arith.constant 0 : index
    %c0_152 = arith.constant 0 : index
    %152 = vector.load %arg3[%c6_150, %c0_151, %c0_152] : memref<25x128x128xf32, #tpu.memory_space<vmem>>, vector<1x128x128xf32>
    %153 = vector.shape_cast %152 : vector<1x128x128xf32> to vector<128x128xf32>
    %cst_153 = arith.constant dense<0.000000e+00> : vector<128x128xf32>
    %154 = tpu.matmul %151, %153, %cst_153 {dimension_numbers = #tpu.dot_dimension_numbers<[1], [0], [0], [1], [0, 0, 1, 1], [], []>} : vector<128x128xf32>, vector<128x128xf32>, vector<128x128xf32> -> vector<128x128xf32>
    %155 = arith.addf %149, %154 : vector<128x128xf32>
    %c0_154 = arith.constant 0 : index
    %c1_155 = arith.constant 1 : index
    %c2_156 = arith.constant 2 : index
    %c0_157 = arith.constant 0 : index
    %156 = vector.load %arg12[%c0_154, %c1_155, %c2_156, %c0_157] : memref<2x12x16x128xf32, #tpu.memory_space<vmem>>, vector<2x8x8x128xf32>
    %157 = vector.shape_cast %156 : vector<2x8x8x128xf32> to vector<128x128xf32>
    %c7_158 = arith.constant 7 : index
    %c0_159 = arith.constant 0 : index
    %c0_160 = arith.constant 0 : index
    %158 = vector.load %arg3[%c7_158, %c0_159, %c0_160] : memref<25x128x128xf32, #tpu.memory_space<vmem>>, vector<1x128x128xf32>
    %159 = vector.shape_cast %158 : vector<1x128x128xf32> to vector<128x128xf32>
    %cst_161 = arith.constant dense<0.000000e+00> : vector<128x128xf32>
    %160 = tpu.matmul %157, %159, %cst_161 {dimension_numbers = #tpu.dot_dimension_numbers<[1], [0], [0], [1], [0, 0, 1, 1], [], []>} : vector<128x128xf32>, vector<128x128xf32>, vector<128x128xf32> -> vector<128x128xf32>
    %161 = arith.addf %155, %160 : vector<128x128xf32>
    %c0_162 = arith.constant 0 : index
    %c1_163 = arith.constant 1 : index
    %c3_164 = arith.constant 3 : index
    %c0_165 = arith.constant 0 : index
    %162 = vector.load %arg12[%c0_162, %c1_163, %c3_164, %c0_165] : memref<2x12x16x128xf32, #tpu.memory_space<vmem>>, vector<2x8x8x128xf32>
    %163 = vector.shape_cast %162 : vector<2x8x8x128xf32> to vector<128x128xf32>
    %c8_166 = arith.constant 8 : index
    %c0_167 = arith.constant 0 : index
    %c0_168 = arith.constant 0 : index
    %164 = vector.load %arg3[%c8_166, %c0_167, %c0_168] : memref<25x128x128xf32, #tpu.memory_space<vmem>>, vector<1x128x128xf32>
    %165 = vector.shape_cast %164 : vector<1x128x128xf32> to vector<128x128xf32>
    %cst_169 = arith.constant dense<0.000000e+00> : vector<128x128xf32>
    %166 = tpu.matmul %163, %165, %cst_169 {dimension_numbers = #tpu.dot_dimension_numbers<[1], [0], [0], [1], [0, 0, 1, 1], [], []>} : vector<128x128xf32>, vector<128x128xf32>, vector<128x128xf32> -> vector<128x128xf32>
    %167 = arith.addf %161, %166 : vector<128x128xf32>
    %c0_170 = arith.constant 0 : index
    %c1_171 = arith.constant 1 : index
    %c4_172 = arith.constant 4 : index
    %c0_173 = arith.constant 0 : index
    %168 = vector.load %arg12[%c0_170, %c1_171, %c4_172, %c0_173] : memref<2x12x16x128xf32, #tpu.memory_space<vmem>>, vector<2x8x8x128xf32>
    %169 = vector.shape_cast %168 : vector<2x8x8x128xf32> to vector<128x128xf32>
    %c9_174 = arith.constant 9 : index
    %c0_175 = arith.constant 0 : index
    %c0_176 = arith.constant 0 : index
    %170 = vector.load %arg3[%c9_174, %c0_175, %c0_176] : memref<25x128x128xf32, #tpu.memory_space<vmem>>, vector<1x128x128xf32>
    %171 = vector.shape_cast %170 : vector<1x128x128xf32> to vector<128x128xf32>
    %cst_177 = arith.constant dense<0.000000e+00> : vector<128x128xf32>
    %172 = tpu.matmul %169, %171, %cst_177 {dimension_numbers = #tpu.dot_dimension_numbers<[1], [0], [0], [1], [0, 0, 1, 1], [], []>} : vector<128x128xf32>, vector<128x128xf32>, vector<128x128xf32> -> vector<128x128xf32>
    %173 = arith.addf %167, %172 : vector<128x128xf32>
    %c0_178 = arith.constant 0 : index
    %c2_179 = arith.constant 2 : index
    %c0_180 = arith.constant 0 : index
    %c0_181 = arith.constant 0 : index
    %174 = vector.load %arg12[%c0_178, %c2_179, %c0_180, %c0_181] : memref<2x12x16x128xf32, #tpu.memory_space<vmem>>, vector<2x8x8x128xf32>
    %175 = vector.shape_cast %174 : vector<2x8x8x128xf32> to vector<128x128xf32>
    %c10_182 = arith.constant 10 : index
    %c0_183 = arith.constant 0 : index
    %c0_184 = arith.constant 0 : index
    %176 = vector.load %arg3[%c10_182, %c0_183, %c0_184] : memref<25x128x128xf32, #tpu.memory_space<vmem>>, vector<1x128x128xf32>
    %177 = vector.shape_cast %176 : vector<1x128x128xf32> to vector<128x128xf32>
    %cst_185 = arith.constant dense<0.000000e+00> : vector<128x128xf32>
    %178 = tpu.matmul %175, %177, %cst_185 {dimension_numbers = #tpu.dot_dimension_numbers<[1], [0], [0], [1], [0, 0, 1, 1], [], []>} : vector<128x128xf32>, vector<128x128xf32>, vector<128x128xf32> -> vector<128x128xf32>
    %179 = arith.addf %173, %178 : vector<128x128xf32>
    %c0_186 = arith.constant 0 : index
    %c2_187 = arith.constant 2 : index
    %c1_188 = arith.constant 1 : index
    %c0_189 = arith.constant 0 : index
    %180 = vector.load %arg12[%c0_186, %c2_187, %c1_188, %c0_189] : memref<2x12x16x128xf32, #tpu.memory_space<vmem>>, vector<2x8x8x128xf32>
    %181 = vector.shape_cast %180 : vector<2x8x8x128xf32> to vector<128x128xf32>
    %c11_190 = arith.constant 11 : index
    %c0_191 = arith.constant 0 : index
    %c0_192 = arith.constant 0 : index
    %182 = vector.load %arg3[%c11_190, %c0_191, %c0_192] : memref<25x128x128xf32, #tpu.memory_space<vmem>>, vector<1x128x128xf32>
    %183 = vector.shape_cast %182 : vector<1x128x128xf32> to vector<128x128xf32>
    %cst_193 = arith.constant dense<0.000000e+00> : vector<128x128xf32>
    %184 = tpu.matmul %181, %183, %cst_193 {dimension_numbers = #tpu.dot_dimension_numbers<[1], [0], [0], [1], [0, 0, 1, 1], [], []>} : vector<128x128xf32>, vector<128x128xf32>, vector<128x128xf32> -> vector<128x128xf32>
    %185 = arith.addf %179, %184 : vector<128x128xf32>
    %c0_194 = arith.constant 0 : index
    %c2_195 = arith.constant 2 : index
    %c2_196 = arith.constant 2 : index
    %c0_197 = arith.constant 0 : index
    %186 = vector.load %arg12[%c0_194, %c2_195, %c2_196, %c0_197] : memref<2x12x16x128xf32, #tpu.memory_space<vmem>>, vector<2x8x8x128xf32>
    %187 = vector.shape_cast %186 : vector<2x8x8x128xf32> to vector<128x128xf32>
    %c12 = arith.constant 12 : index
    %c0_198 = arith.constant 0 : index
    %c0_199 = arith.constant 0 : index
    %188 = vector.load %arg3[%c12, %c0_198, %c0_199] : memref<25x128x128xf32, #tpu.memory_space<vmem>>, vector<1x128x128xf32>
    %189 = vector.shape_cast %188 : vector<1x128x128xf32> to vector<128x128xf32>
    %cst_200 = arith.constant dense<0.000000e+00> : vector<128x128xf32>
    %190 = tpu.matmul %187, %189, %cst_200 {dimension_numbers = #tpu.dot_dimension_numbers<[1], [0], [0], [1], [0, 0, 1, 1], [], []>} : vector<128x128xf32>, vector<128x128xf32>, vector<128x128xf32> -> vector<128x128xf32>
    %191 = arith.addf %185, %190 : vector<128x128xf32>
    %c0_201 = arith.constant 0 : index
    %c2_202 = arith.constant 2 : index
    %c3_203 = arith.constant 3 : index
    %c0_204 = arith.constant 0 : index
    %192 = vector.load %arg12[%c0_201, %c2_202, %c3_203, %c0_204] : memref<2x12x16x128xf32, #tpu.memory_space<vmem>>, vector<2x8x8x128xf32>
    %193 = vector.shape_cast %192 : vector<2x8x8x128xf32> to vector<128x128xf32>
    %c13 = arith.constant 13 : index
    %c0_205 = arith.constant 0 : index
    %c0_206 = arith.constant 0 : index
    %194 = vector.load %arg3[%c13, %c0_205, %c0_206] : memref<25x128x128xf32, #tpu.memory_space<vmem>>, vector<1x128x128xf32>
    %195 = vector.shape_cast %194 : vector<1x128x128xf32> to vector<128x128xf32>
    %cst_207 = arith.constant dense<0.000000e+00> : vector<128x128xf32>
    %196 = tpu.matmul %193, %195, %cst_207 {dimension_numbers = #tpu.dot_dimension_numbers<[1], [0], [0], [1], [0, 0, 1, 1], [], []>} : vector<128x128xf32>, vector<128x128xf32>, vector<128x128xf32> -> vector<128x128xf32>
    %197 = arith.addf %191, %196 : vector<128x128xf32>
    %c0_208 = arith.constant 0 : index
    %c2_209 = arith.constant 2 : index
    %c4_210 = arith.constant 4 : index
    %c0_211 = arith.constant 0 : index
    %198 = vector.load %arg12[%c0_208, %c2_209, %c4_210, %c0_211] : memref<2x12x16x128xf32, #tpu.memory_space<vmem>>, vector<2x8x8x128xf32>
    %199 = vector.shape_cast %198 : vector<2x8x8x128xf32> to vector<128x128xf32>
    %c14 = arith.constant 14 : index
    %c0_212 = arith.constant 0 : index
    %c0_213 = arith.constant 0 : index
    %200 = vector.load %arg3[%c14, %c0_212, %c0_213] : memref<25x128x128xf32, #tpu.memory_space<vmem>>, vector<1x128x128xf32>
    %201 = vector.shape_cast %200 : vector<1x128x128xf32> to vector<128x128xf32>
    %cst_214 = arith.constant dense<0.000000e+00> : vector<128x128xf32>
    %202 = tpu.matmul %199, %201, %cst_214 {dimension_numbers = #tpu.dot_dimension_numbers<[1], [0], [0], [1], [0, 0, 1, 1], [], []>} : vector<128x128xf32>, vector<128x128xf32>, vector<128x128xf32> -> vector<128x128xf32>
    %203 = arith.addf %197, %202 : vector<128x128xf32>
    %c0_215 = arith.constant 0 : index
    %c3_216 = arith.constant 3 : index
    %c0_217 = arith.constant 0 : index
    %c0_218 = arith.constant 0 : index
    %204 = vector.load %arg12[%c0_215, %c3_216, %c0_217, %c0_218] : memref<2x12x16x128xf32, #tpu.memory_space<vmem>>, vector<2x8x8x128xf32>
    %205 = vector.shape_cast %204 : vector<2x8x8x128xf32> to vector<128x128xf32>
    %c15 = arith.constant 15 : index
    %c0_219 = arith.constant 0 : index
    %c0_220 = arith.constant 0 : index
    %206 = vector.load %arg3[%c15, %c0_219, %c0_220] : memref<25x128x128xf32, #tpu.memory_space<vmem>>, vector<1x128x128xf32>
    %207 = vector.shape_cast %206 : vector<1x128x128xf32> to vector<128x128xf32>
    %cst_221 = arith.constant dense<0.000000e+00> : vector<128x128xf32>
    %208 = tpu.matmul %205, %207, %cst_221 {dimension_numbers = #tpu.dot_dimension_numbers<[1], [0], [0], [1], [0, 0, 1, 1], [], []>} : vector<128x128xf32>, vector<128x128xf32>, vector<128x128xf32> -> vector<128x128xf32>
    %209 = arith.addf %203, %208 : vector<128x128xf32>
    %c0_222 = arith.constant 0 : index
    %c3_223 = arith.constant 3 : index
    %c1_224 = arith.constant 1 : index
    %c0_225 = arith.constant 0 : index
    %210 = vector.load %arg12[%c0_222, %c3_223, %c1_224, %c0_225] : memref<2x12x16x128xf32, #tpu.memory_space<vmem>>, vector<2x8x8x128xf32>
    %211 = vector.shape_cast %210 : vector<2x8x8x128xf32> to vector<128x128xf32>
    %c16 = arith.constant 16 : index
    %c0_226 = arith.constant 0 : index
    %c0_227 = arith.constant 0 : index
    %212 = vector.load %arg3[%c16, %c0_226, %c0_227] : memref<25x128x128xf32, #tpu.memory_space<vmem>>, vector<1x128x128xf32>
    %213 = vector.shape_cast %212 : vector<1x128x128xf32> to vector<128x128xf32>
    %cst_228 = arith.constant dense<0.000000e+00> : vector<128x128xf32>
    %214 = tpu.matmul %211, %213, %cst_228 {dimension_numbers = #tpu.dot_dimension_numbers<[1], [0], [0], [1], [0, 0, 1, 1], [], []>} : vector<128x128xf32>, vector<128x128xf32>, vector<128x128xf32> -> vector<128x128xf32>
    %215 = arith.addf %209, %214 : vector<128x128xf32>
    %c0_229 = arith.constant 0 : index
    %c3_230 = arith.constant 3 : index
    %c2_231 = arith.constant 2 : index
    %c0_232 = arith.constant 0 : index
    %216 = vector.load %arg12[%c0_229, %c3_230, %c2_231, %c0_232] : memref<2x12x16x128xf32, #tpu.memory_space<vmem>>, vector<2x8x8x128xf32>
    %217 = vector.shape_cast %216 : vector<2x8x8x128xf32> to vector<128x128xf32>
    %c17 = arith.constant 17 : index
    %c0_233 = arith.constant 0 : index
    %c0_234 = arith.constant 0 : index
    %218 = vector.load %arg3[%c17, %c0_233, %c0_234] : memref<25x128x128xf32, #tpu.memory_space<vmem>>, vector<1x128x128xf32>
    %219 = vector.shape_cast %218 : vector<1x128x128xf32> to vector<128x128xf32>
    %cst_235 = arith.constant dense<0.000000e+00> : vector<128x128xf32>
    %220 = tpu.matmul %217, %219, %cst_235 {dimension_numbers = #tpu.dot_dimension_numbers<[1], [0], [0], [1], [0, 0, 1, 1], [], []>} : vector<128x128xf32>, vector<128x128xf32>, vector<128x128xf32> -> vector<128x128xf32>
    %221 = arith.addf %215, %220 : vector<128x128xf32>
    %c0_236 = arith.constant 0 : index
    %c3_237 = arith.constant 3 : index
    %c3_238 = arith.constant 3 : index
    %c0_239 = arith.constant 0 : index
    %222 = vector.load %arg12[%c0_236, %c3_237, %c3_238, %c0_239] : memref<2x12x16x128xf32, #tpu.memory_space<vmem>>, vector<2x8x8x128xf32>
    %223 = vector.shape_cast %222 : vector<2x8x8x128xf32> to vector<128x128xf32>
    %c18 = arith.constant 18 : index
    %c0_240 = arith.constant 0 : index
    %c0_241 = arith.constant 0 : index
    %224 = vector.load %arg3[%c18, %c0_240, %c0_241] : memref<25x128x128xf32, #tpu.memory_space<vmem>>, vector<1x128x128xf32>
    %225 = vector.shape_cast %224 : vector<1x128x128xf32> to vector<128x128xf32>
    %cst_242 = arith.constant dense<0.000000e+00> : vector<128x128xf32>
    %226 = tpu.matmul %223, %225, %cst_242 {dimension_numbers = #tpu.dot_dimension_numbers<[1], [0], [0], [1], [0, 0, 1, 1], [], []>} : vector<128x128xf32>, vector<128x128xf32>, vector<128x128xf32> -> vector<128x128xf32>
    %227 = arith.addf %221, %226 : vector<128x128xf32>
    %c0_243 = arith.constant 0 : index
    %c3_244 = arith.constant 3 : index
    %c4_245 = arith.constant 4 : index
    %c0_246 = arith.constant 0 : index
    %228 = vector.load %arg12[%c0_243, %c3_244, %c4_245, %c0_246] : memref<2x12x16x128xf32, #tpu.memory_space<vmem>>, vector<2x8x8x128xf32>
    %229 = vector.shape_cast %228 : vector<2x8x8x128xf32> to vector<128x128xf32>
    %c19 = arith.constant 19 : index
    %c0_247 = arith.constant 0 : index
    %c0_248 = arith.constant 0 : index
    %230 = vector.load %arg3[%c19, %c0_247, %c0_248] : memref<25x128x128xf32, #tpu.memory_space<vmem>>, vector<1x128x128xf32>
    %231 = vector.shape_cast %230 : vector<1x128x128xf32> to vector<128x128xf32>
    %cst_249 = arith.constant dense<0.000000e+00> : vector<128x128xf32>
    %232 = tpu.matmul %229, %231, %cst_249 {dimension_numbers = #tpu.dot_dimension_numbers<[1], [0], [0], [1], [0, 0, 1, 1], [], []>} : vector<128x128xf32>, vector<128x128xf32>, vector<128x128xf32> -> vector<128x128xf32>
    %233 = arith.addf %227, %232 : vector<128x128xf32>
    %c0_250 = arith.constant 0 : index
    %c4_251 = arith.constant 4 : index
    %c0_252 = arith.constant 0 : index
    %c0_253 = arith.constant 0 : index
    %234 = vector.load %arg12[%c0_250, %c4_251, %c0_252, %c0_253] : memref<2x12x16x128xf32, #tpu.memory_space<vmem>>, vector<2x8x8x128xf32>
    %235 = vector.shape_cast %234 : vector<2x8x8x128xf32> to vector<128x128xf32>
    %c20 = arith.constant 20 : index
    %c0_254 = arith.constant 0 : index
    %c0_255 = arith.constant 0 : index
    %236 = vector.load %arg3[%c20, %c0_254, %c0_255] : memref<25x128x128xf32, #tpu.memory_space<vmem>>, vector<1x128x128xf32>
    %237 = vector.shape_cast %236 : vector<1x128x128xf32> to vector<128x128xf32>
    %cst_256 = arith.constant dense<0.000000e+00> : vector<128x128xf32>
    %238 = tpu.matmul %235, %237, %cst_256 {dimension_numbers = #tpu.dot_dimension_numbers<[1], [0], [0], [1], [0, 0, 1, 1], [], []>} : vector<128x128xf32>, vector<128x128xf32>, vector<128x128xf32> -> vector<128x128xf32>
    %239 = arith.addf %233, %238 : vector<128x128xf32>
    %c0_257 = arith.constant 0 : index
    %c4_258 = arith.constant 4 : index
    %c1_259 = arith.constant 1 : index
    %c0_260 = arith.constant 0 : index
    %240 = vector.load %arg12[%c0_257, %c4_258, %c1_259, %c0_260] : memref<2x12x16x128xf32, #tpu.memory_space<vmem>>, vector<2x8x8x128xf32>
    %241 = vector.shape_cast %240 : vector<2x8x8x128xf32> to vector<128x128xf32>
    %c21 = arith.constant 21 : index
    %c0_261 = arith.constant 0 : index
    %c0_262 = arith.constant 0 : index
    %242 = vector.load %arg3[%c21, %c0_261, %c0_262] : memref<25x128x128xf32, #tpu.memory_space<vmem>>, vector<1x128x128xf32>
    %243 = vector.shape_cast %242 : vector<1x128x128xf32> to vector<128x128xf32>
    %cst_263 = arith.constant dense<0.000000e+00> : vector<128x128xf32>
    %244 = tpu.matmul %241, %243, %cst_263 {dimension_numbers = #tpu.dot_dimension_numbers<[1], [0], [0], [1], [0, 0, 1, 1], [], []>} : vector<128x128xf32>, vector<128x128xf32>, vector<128x128xf32> -> vector<128x128xf32>
    %245 = arith.addf %239, %244 : vector<128x128xf32>
    %c0_264 = arith.constant 0 : index
    %c4_265 = arith.constant 4 : index
    %c2_266 = arith.constant 2 : index
    %c0_267 = arith.constant 0 : index
    %246 = vector.load %arg12[%c0_264, %c4_265, %c2_266, %c0_267] : memref<2x12x16x128xf32, #tpu.memory_space<vmem>>, vector<2x8x8x128xf32>
    %247 = vector.shape_cast %246 : vector<2x8x8x128xf32> to vector<128x128xf32>
    %c22 = arith.constant 22 : index
    %c0_268 = arith.constant 0 : index
    %c0_269 = arith.constant 0 : index
    %248 = vector.load %arg3[%c22, %c0_268, %c0_269] : memref<25x128x128xf32, #tpu.memory_space<vmem>>, vector<1x128x128xf32>
    %249 = vector.shape_cast %248 : vector<1x128x128xf32> to vector<128x128xf32>
    %cst_270 = arith.constant dense<0.000000e+00> : vector<128x128xf32>
    %250 = tpu.matmul %247, %249, %cst_270 {dimension_numbers = #tpu.dot_dimension_numbers<[1], [0], [0], [1], [0, 0, 1, 1], [], []>} : vector<128x128xf32>, vector<128x128xf32>, vector<128x128xf32> -> vector<128x128xf32>
    %251 = arith.addf %245, %250 : vector<128x128xf32>
    %c0_271 = arith.constant 0 : index
    %c4_272 = arith.constant 4 : index
    %c3_273 = arith.constant 3 : index
    %c0_274 = arith.constant 0 : index
    %252 = vector.load %arg12[%c0_271, %c4_272, %c3_273, %c0_274] : memref<2x12x16x128xf32, #tpu.memory_space<vmem>>, vector<2x8x8x128xf32>
    %253 = vector.shape_cast %252 : vector<2x8x8x128xf32> to vector<128x128xf32>
    %c23 = arith.constant 23 : index
    %c0_275 = arith.constant 0 : index
    %c0_276 = arith.constant 0 : index
    %254 = vector.load %arg3[%c23, %c0_275, %c0_276] : memref<25x128x128xf32, #tpu.memory_space<vmem>>, vector<1x128x128xf32>
    %255 = vector.shape_cast %254 : vector<1x128x128xf32> to vector<128x128xf32>
    %cst_277 = arith.constant dense<0.000000e+00> : vector<128x128xf32>
    %256 = tpu.matmul %253, %255, %cst_277 {dimension_numbers = #tpu.dot_dimension_numbers<[1], [0], [0], [1], [0, 0, 1, 1], [], []>} : vector<128x128xf32>, vector<128x128xf32>, vector<128x128xf32> -> vector<128x128xf32>
    %257 = arith.addf %251, %256 : vector<128x128xf32>
    %c0_278 = arith.constant 0 : index
    %c4_279 = arith.constant 4 : index
    %c4_280 = arith.constant 4 : index
    %c0_281 = arith.constant 0 : index
    %258 = vector.load %arg12[%c0_278, %c4_279, %c4_280, %c0_281] : memref<2x12x16x128xf32, #tpu.memory_space<vmem>>, vector<2x8x8x128xf32>
    %259 = vector.shape_cast %258 : vector<2x8x8x128xf32> to vector<128x128xf32>
    %c24 = arith.constant 24 : index
    %c0_282 = arith.constant 0 : index
    %c0_283 = arith.constant 0 : index
    %260 = vector.load %arg3[%c24, %c0_282, %c0_283] : memref<25x128x128xf32, #tpu.memory_space<vmem>>, vector<1x128x128xf32>
    %261 = vector.shape_cast %260 : vector<1x128x128xf32> to vector<128x128xf32>
    %cst_284 = arith.constant dense<0.000000e+00> : vector<128x128xf32>
    %262 = tpu.matmul %259, %261, %cst_284 {dimension_numbers = #tpu.dot_dimension_numbers<[1], [0], [0], [1], [0, 0, 1, 1], [], []>} : vector<128x128xf32>, vector<128x128xf32>, vector<128x128xf32> -> vector<128x128xf32>
    %263 = arith.addf %257, %262 : vector<128x128xf32>
    %c0_285 = arith.constant 0 : index
    %c0_286 = arith.constant 0 : index
    %264 = vector.load %arg4[%c0_285, %c0_286] : memref<1x128xf32, #tpu.memory_space<vmem>>, vector<1x128xf32>
    %265 = vector.broadcast %264 : vector<1x128xf32> to vector<128x128xf32>
    %266 = arith.addf %263, %265 : vector<128x128xf32>
    %cst_287 = arith.constant 0.000000e+00 : f32
    %267 = vector.broadcast %cst_287 : f32 to vector<128x128xf32>
    %268 = arith.maximumf %266, %267 : vector<128x128xf32>
    %269 = vector.extract_strided_slice %268 {offsets = [0, 0], sizes = [8, 128], strides = [1, 1]} : vector<128x128xf32> to vector<8x128xf32>
    %c0_288 = arith.constant 0 : index
    %c0_289 = arith.constant 0 : index
    %c0_290 = arith.constant 0 : index
    %c0_291 = arith.constant 0 : index
    %270 = vector.load %arg13[%c0_288, %c0_289, %c0_290, %c0_291] : memref<2x8x8x128xf32, #tpu.memory_space<vmem>>, vector<1x1x8x128xf32>
    %271 = vector.shape_cast %270 : vector<1x1x8x128xf32> to vector<8x128xf32>
    %272 = vector.shape_cast %269 : vector<8x128xf32> to vector<1x1x8x128xf32>
    tpu.vector_store %arg13[%c0_288, %c0_289, %c0_290, %c0_291], %272 {strides = array<i32>} : memref<2x8x8x128xf32, #tpu.memory_space<vmem>>, vector<1x1x8x128xf32>,
    %273 = vector.extract_strided_slice %268 {offsets = [8, 0], sizes = [8, 128], strides = [1, 1]} : vector<128x128xf32> to vector<8x128xf32>
    %c0_292 = arith.constant 0 : index
    %c1_293 = arith.constant 1 : index
    %c0_294 = arith.constant 0 : index
    %c0_295 = arith.constant 0 : index
    %274 = vector.load %arg13[%c0_292, %c1_293, %c0_294, %c0_295] : memref<2x8x8x128xf32, #tpu.memory_space<vmem>>, vector<1x1x8x128xf32>
    %275 = vector.shape_cast %274 : vector<1x1x8x128xf32> to vector<8x128xf32>
    %276 = vector.shape_cast %273 : vector<8x128xf32> to vector<1x1x8x128xf32>
    tpu.vector_store %arg13[%c0_292, %c1_293, %c0_294, %c0_295], %276 {strides = array<i32>} : memref<2x8x8x128xf32, #tpu.memory_space<vmem>>, vector<1x1x8x128xf32>,
    %277 = vector.extract_strided_slice %268 {offsets = [16, 0], sizes = [8, 128], strides = [1, 1]} : vector<128x128xf32> to vector<8x128xf32>
    %c0_296 = arith.constant 0 : index
    %c2_297 = arith.constant 2 : index
    %c0_298 = arith.constant 0 : index
    %c0_299 = arith.constant 0 : index
    %278 = vector.load %arg13[%c0_296, %c2_297, %c0_298, %c0_299] : memref<2x8x8x128xf32, #tpu.memory_space<vmem>>, vector<1x1x8x128xf32>
    %279 = vector.shape_cast %278 : vector<1x1x8x128xf32> to vector<8x128xf32>
    %280 = vector.shape_cast %277 : vector<8x128xf32> to vector<1x1x8x128xf32>
    tpu.vector_store %arg13[%c0_296, %c2_297, %c0_298, %c0_299], %280 {strides = array<i32>} : memref<2x8x8x128xf32, #tpu.memory_space<vmem>>, vector<1x1x8x128xf32>,
    %281 = vector.extract_strided_slice %268 {offsets = [24, 0], sizes = [8, 128], strides = [1, 1]} : vector<128x128xf32> to vector<8x128xf32>
    %c0_300 = arith.constant 0 : index
    %c3_301 = arith.constant 3 : index
    %c0_302 = arith.constant 0 : index
    %c0_303 = arith.constant 0 : index
    %282 = vector.load %arg13[%c0_300, %c3_301, %c0_302, %c0_303] : memref<2x8x8x128xf32, #tpu.memory_space<vmem>>, vector<1x1x8x128xf32>
    %283 = vector.shape_cast %282 : vector<1x1x8x128xf32> to vector<8x128xf32>
    %284 = vector.shape_cast %281 : vector<8x128xf32> to vector<1x1x8x128xf32>
    tpu.vector_store %arg13[%c0_300, %c3_301, %c0_302, %c0_303], %284 {strides = array<i32>} : memref<2x8x8x128xf32, #tpu.memory_space<vmem>>, vector<1x1x8x128xf32>,
    %285 = vector.extract_strided_slice %268 {offsets = [32, 0], sizes = [8, 128], strides = [1, 1]} : vector<128x128xf32> to vector<8x128xf32>
    %c0_304 = arith.constant 0 : index
    %c4_305 = arith.constant 4 : index
    %c0_306 = arith.constant 0 : index
    %c0_307 = arith.constant 0 : index
    %286 = vector.load %arg13[%c0_304, %c4_305, %c0_306, %c0_307] : memref<2x8x8x128xf32, #tpu.memory_space<vmem>>, vector<1x1x8x128xf32>
    %287 = vector.shape_cast %286 : vector<1x1x8x128xf32> to vector<8x128xf32>
    %288 = vector.shape_cast %285 : vector<8x128xf32> to vector<1x1x8x128xf32>
    tpu.vector_store %arg13[%c0_304, %c4_305, %c0_306, %c0_307], %288 {strides = array<i32>} : memref<2x8x8x128xf32, #tpu.memory_space<vmem>>, vector<1x1x8x128xf32>,
    %289 = vector.extract_strided_slice %268 {offsets = [40, 0], sizes = [8, 128], strides = [1, 1]} : vector<128x128xf32> to vector<8x128xf32>
    %c0_308 = arith.constant 0 : index
    %c5_309 = arith.constant 5 : index
    %c0_310 = arith.constant 0 : index
    %c0_311 = arith.constant 0 : index
    %290 = vector.load %arg13[%c0_308, %c5_309, %c0_310, %c0_311] : memref<2x8x8x128xf32, #tpu.memory_space<vmem>>, vector<1x1x8x128xf32>
    %291 = vector.shape_cast %290 : vector<1x1x8x128xf32> to vector<8x128xf32>
    %292 = vector.shape_cast %289 : vector<8x128xf32> to vector<1x1x8x128xf32>
    tpu.vector_store %arg13[%c0_308, %c5_309, %c0_310, %c0_311], %292 {strides = array<i32>} : memref<2x8x8x128xf32, #tpu.memory_space<vmem>>, vector<1x1x8x128xf32>,
    %293 = vector.extract_strided_slice %268 {offsets = [48, 0], sizes = [8, 128], strides = [1, 1]} : vector<128x128xf32> to vector<8x128xf32>
    %c0_312 = arith.constant 0 : index
    %c6_313 = arith.constant 6 : index
    %c0_314 = arith.constant 0 : index
    %c0_315 = arith.constant 0 : index
    %294 = vector.load %arg13[%c0_312, %c6_313, %c0_314, %c0_315] : memref<2x8x8x128xf32, #tpu.memory_space<vmem>>, vector<1x1x8x128xf32>
    %295 = vector.shape_cast %294 : vector<1x1x8x128xf32> to vector<8x128xf32>
    %296 = vector.shape_cast %293 : vector<8x128xf32> to vector<1x1x8x128xf32>
    tpu.vector_store %arg13[%c0_312, %c6_313, %c0_314, %c0_315], %296 {strides = array<i32>} : memref<2x8x8x128xf32, #tpu.memory_space<vmem>>, vector<1x1x8x128xf32>,
    %297 = vector.extract_strided_slice %268 {offsets = [56, 0], sizes = [8, 128], strides = [1, 1]} : vector<128x128xf32> to vector<8x128xf32>
    %c0_316 = arith.constant 0 : index
    %c7_317 = arith.constant 7 : index
    %c0_318 = arith.constant 0 : index
    %c0_319 = arith.constant 0 : index
    %298 = vector.load %arg13[%c0_316, %c7_317, %c0_318, %c0_319] : memref<2x8x8x128xf32, #tpu.memory_space<vmem>>, vector<1x1x8x128xf32>
    %299 = vector.shape_cast %298 : vector<1x1x8x128xf32> to vector<8x128xf32>
    %300 = vector.shape_cast %297 : vector<8x128xf32> to vector<1x1x8x128xf32>
    tpu.vector_store %arg13[%c0_316, %c7_317, %c0_318, %c0_319], %300 {strides = array<i32>} : memref<2x8x8x128xf32, #tpu.memory_space<vmem>>, vector<1x1x8x128xf32>,
    %301 = vector.extract_strided_slice %268 {offsets = [64, 0], sizes = [8, 128], strides = [1, 1]} : vector<128x128xf32> to vector<8x128xf32>
    %c1_320 = arith.constant 1 : index
    %c0_321 = arith.constant 0 : index
    %c0_322 = arith.constant 0 : index
    %c0_323 = arith.constant 0 : index
    %302 = vector.load %arg13[%c1_320, %c0_321, %c0_322, %c0_323] : memref<2x8x8x128xf32, #tpu.memory_space<vmem>>, vector<1x1x8x128xf32>
    %303 = vector.shape_cast %302 : vector<1x1x8x128xf32> to vector<8x128xf32>
    %304 = vector.shape_cast %301 : vector<8x128xf32> to vector<1x1x8x128xf32>
    tpu.vector_store %arg13[%c1_320, %c0_321, %c0_322, %c0_323], %304 {strides = array<i32>} : memref<2x8x8x128xf32, #tpu.memory_space<vmem>>, vector<1x1x8x128xf32>,
    %305 = vector.extract_strided_slice %268 {offsets = [72, 0], sizes = [8, 128], strides = [1, 1]} : vector<128x128xf32> to vector<8x128xf32>
    %c1_324 = arith.constant 1 : index
    %c1_325 = arith.constant 1 : index
    %c0_326 = arith.constant 0 : index
    %c0_327 = arith.constant 0 : index
    %306 = vector.load %arg13[%c1_324, %c1_325, %c0_326, %c0_327] : memref<2x8x8x128xf32, #tpu.memory_space<vmem>>, vector<1x1x8x128xf32>
    %307 = vector.shape_cast %306 : vector<1x1x8x128xf32> to vector<8x128xf32>
    %308 = vector.shape_cast %305 : vector<8x128xf32> to vector<1x1x8x128xf32>
    tpu.vector_store %arg13[%c1_324, %c1_325, %c0_326, %c0_327], %308 {strides = array<i32>} : memref<2x8x8x128xf32, #tpu.memory_space<vmem>>, vector<1x1x8x128xf32>,
    %309 = vector.extract_strided_slice %268 {offsets = [80, 0], sizes = [8, 128], strides = [1, 1]} : vector<128x128xf32> to vector<8x128xf32>
    %c1_328 = arith.constant 1 : index
    %c2_329 = arith.constant 2 : index
    %c0_330 = arith.constant 0 : index
    %c0_331 = arith.constant 0 : index
    %310 = vector.load %arg13[%c1_328, %c2_329, %c0_330, %c0_331] : memref<2x8x8x128xf32, #tpu.memory_space<vmem>>, vector<1x1x8x128xf32>
    %311 = vector.shape_cast %310 : vector<1x1x8x128xf32> to vector<8x128xf32>
    %312 = vector.shape_cast %309 : vector<8x128xf32> to vector<1x1x8x128xf32>
    tpu.vector_store %arg13[%c1_328, %c2_329, %c0_330, %c0_331], %312 {strides = array<i32>} : memref<2x8x8x128xf32, #tpu.memory_space<vmem>>, vector<1x1x8x128xf32>,
    %313 = vector.extract_strided_slice %268 {offsets = [88, 0], sizes = [8, 128], strides = [1, 1]} : vector<128x128xf32> to vector<8x128xf32>
    %c1_332 = arith.constant 1 : index
    %c3_333 = arith.constant 3 : index
    %c0_334 = arith.constant 0 : index
    %c0_335 = arith.constant 0 : index
    %314 = vector.load %arg13[%c1_332, %c3_333, %c0_334, %c0_335] : memref<2x8x8x128xf32, #tpu.memory_space<vmem>>, vector<1x1x8x128xf32>
    %315 = vector.shape_cast %314 : vector<1x1x8x128xf32> to vector<8x128xf32>
    %316 = vector.shape_cast %313 : vector<8x128xf32> to vector<1x1x8x128xf32>
    tpu.vector_store %arg13[%c1_332, %c3_333, %c0_334, %c0_335], %316 {strides = array<i32>} : memref<2x8x8x128xf32, #tpu.memory_space<vmem>>, vector<1x1x8x128xf32>,
    %317 = vector.extract_strided_slice %268 {offsets = [96, 0], sizes = [8, 128], strides = [1, 1]} : vector<128x128xf32> to vector<8x128xf32>
    %c1_336 = arith.constant 1 : index
    %c4_337 = arith.constant 4 : index
    %c0_338 = arith.constant 0 : index
    %c0_339 = arith.constant 0 : index
    %318 = vector.load %arg13[%c1_336, %c4_337, %c0_338, %c0_339] : memref<2x8x8x128xf32, #tpu.memory_space<vmem>>, vector<1x1x8x128xf32>
    %319 = vector.shape_cast %318 : vector<1x1x8x128xf32> to vector<8x128xf32>
    %320 = vector.shape_cast %317 : vector<8x128xf32> to vector<1x1x8x128xf32>
    tpu.vector_store %arg13[%c1_336, %c4_337, %c0_338, %c0_339], %320 {strides = array<i32>} : memref<2x8x8x128xf32, #tpu.memory_space<vmem>>, vector<1x1x8x128xf32>,
    %321 = vector.extract_strided_slice %268 {offsets = [104, 0], sizes = [8, 128], strides = [1, 1]} : vector<128x128xf32> to vector<8x128xf32>
    %c1_340 = arith.constant 1 : index
    %c5_341 = arith.constant 5 : index
    %c0_342 = arith.constant 0 : index
    %c0_343 = arith.constant 0 : index
    %322 = vector.load %arg13[%c1_340, %c5_341, %c0_342, %c0_343] : memref<2x8x8x128xf32, #tpu.memory_space<vmem>>, vector<1x1x8x128xf32>
    %323 = vector.shape_cast %322 : vector<1x1x8x128xf32> to vector<8x128xf32>
    %324 = vector.shape_cast %321 : vector<8x128xf32> to vector<1x1x8x128xf32>
    tpu.vector_store %arg13[%c1_340, %c5_341, %c0_342, %c0_343], %324 {strides = array<i32>} : memref<2x8x8x128xf32, #tpu.memory_space<vmem>>, vector<1x1x8x128xf32>,
    %325 = vector.extract_strided_slice %268 {offsets = [112, 0], sizes = [8, 128], strides = [1, 1]} : vector<128x128xf32> to vector<8x128xf32>
    %c1_344 = arith.constant 1 : index
    %c6_345 = arith.constant 6 : index
    %c0_346 = arith.constant 0 : index
    %c0_347 = arith.constant 0 : index
    %326 = vector.load %arg13[%c1_344, %c6_345, %c0_346, %c0_347] : memref<2x8x8x128xf32, #tpu.memory_space<vmem>>, vector<1x1x8x128xf32>
    %327 = vector.shape_cast %326 : vector<1x1x8x128xf32> to vector<8x128xf32>
    %328 = vector.shape_cast %325 : vector<8x128xf32> to vector<1x1x8x128xf32>
    tpu.vector_store %arg13[%c1_344, %c6_345, %c0_346, %c0_347], %328 {strides = array<i32>} : memref<2x8x8x128xf32, #tpu.memory_space<vmem>>, vector<1x1x8x128xf32>,
    %329 = vector.extract_strided_slice %268 {offsets = [120, 0], sizes = [8, 128], strides = [1, 1]} : vector<128x128xf32> to vector<8x128xf32>
    %c1_348 = arith.constant 1 : index
    %c7_349 = arith.constant 7 : index
    %c0_350 = arith.constant 0 : index
    %c0_351 = arith.constant 0 : index
    %330 = vector.load %arg13[%c1_348, %c7_349, %c0_350, %c0_351] : memref<2x8x8x128xf32, #tpu.memory_space<vmem>>, vector<1x1x8x128xf32>
    %331 = vector.shape_cast %330 : vector<1x1x8x128xf32> to vector<8x128xf32>
    %332 = vector.shape_cast %329 : vector<8x128xf32> to vector<1x1x8x128xf32>
    tpu.vector_store %arg13[%c1_348, %c7_349, %c0_350, %c0_351], %332 {strides = array<i32>} : memref<2x8x8x128xf32, #tpu.memory_space<vmem>>, vector<1x1x8x128xf32>,
    %cst_352 = arith.constant 0.000000e+00 : f32
    %333 = vector.broadcast %cst_352 : f32 to vector<2x128xf32>
    %c0_353 = arith.constant 0 : index
    %c0_354 = arith.constant 0 : index
    %c0_355 = arith.constant 0 : index
    %c0_356 = arith.constant 0 : index
    %334 = vector.load %arg13[%c0_353, %c0_354, %c0_355, %c0_356] : memref<2x8x8x128xf32, #tpu.memory_space<vmem>>, vector<2x1x8x128xf32>
    %335 = vector.shape_cast %334 : vector<2x1x8x128xf32> to vector<2x8x128xf32>
    %c0_357 = arith.constant 0 : index
    %c1_358 = arith.constant 1 : index
    %c0_359 = arith.constant 0 : index
    %c0_360 = arith.constant 0 : index
    %336 = vector.load %arg13[%c0_357, %c1_358, %c0_359, %c0_360] : memref<2x8x8x128xf32, #tpu.memory_space<vmem>>, vector<2x1x8x128xf32>
    %337 = vector.shape_cast %336 : vector<2x1x8x128xf32> to vector<2x8x128xf32>
    %338 = arith.maximumf %335, %337 : vector<2x8x128xf32>
    %339 = vector.extract_strided_slice %338 {offsets = [0, 0, 0], sizes = [2, 1, 128], strides = [1, 1, 1]} : vector<2x8x128xf32> to vector<2x1x128xf32>
    %340 = vector.shape_cast %339 : vector<2x1x128xf32> to vector<2x128xf32>
    %341 = vector.extract_strided_slice %338 {offsets = [0, 1, 0], sizes = [2, 1, 128], strides = [1, 1, 1]} : vector<2x8x128xf32> to vector<2x1x128xf32>
    %342 = vector.shape_cast %341 : vector<2x1x128xf32> to vector<2x128xf32>
    %343 = arith.maximumf %340, %342 : vector<2x128xf32>
    %c0_361 = arith.constant 0 : index
    %c0_362 = arith.constant 0 : index
    %c0_363 = arith.constant 0 : index
    %344 = vector.load %arg5[%c0_361, %c0_362, %c0_363] : memref<16x128x128xf32, #tpu.memory_space<vmem>>, vector<1x128x128xf32>
    %345 = vector.shape_cast %344 : vector<1x128x128xf32> to vector<128x128xf32>
    %cst_364 = arith.constant dense<0.000000e+00> : vector<2x128xf32>
    %346 = tpu.matmul %343, %345, %cst_364 {dimension_numbers = #tpu.dot_dimension_numbers<[1], [0], [0], [1], [0, 0, 1, 1], [], []>} : vector<2x128xf32>, vector<128x128xf32>, vector<2x128xf32> -> vector<2x128xf32>
    %347 = arith.addf %333, %346 : vector<2x128xf32>
    %348 = vector.extract_strided_slice %338 {offsets = [0, 2, 0], sizes = [2, 1, 128], strides = [1, 1, 1]} : vector<2x8x128xf32> to vector<2x1x128xf32>
    %349 = vector.shape_cast %348 : vector<2x1x128xf32> to vector<2x128xf32>
    %350 = vector.extract_strided_slice %338 {offsets = [0, 3, 0], sizes = [2, 1, 128], strides = [1, 1, 1]} : vector<2x8x128xf32> to vector<2x1x128xf32>
    %351 = vector.shape_cast %350 : vector<2x1x128xf32> to vector<2x128xf32>
    %352 = arith.maximumf %349, %351 : vector<2x128xf32>
    %c1_365 = arith.constant 1 : index
    %c0_366 = arith.constant 0 : index
    %c0_367 = arith.constant 0 : index
    %353 = vector.load %arg5[%c1_365, %c0_366, %c0_367] : memref<16x128x128xf32, #tpu.memory_space<vmem>>, vector<1x128x128xf32>
    %354 = vector.shape_cast %353 : vector<1x128x128xf32> to vector<128x128xf32>
    %cst_368 = arith.constant dense<0.000000e+00> : vector<2x128xf32>
    %355 = tpu.matmul %352, %354, %cst_368 {dimension_numbers = #tpu.dot_dimension_numbers<[1], [0], [0], [1], [0, 0, 1, 1], [], []>} : vector<2x128xf32>, vector<128x128xf32>, vector<2x128xf32> -> vector<2x128xf32>
    %356 = arith.addf %347, %355 : vector<2x128xf32>
    %357 = vector.extract_strided_slice %338 {offsets = [0, 4, 0], sizes = [2, 1, 128], strides = [1, 1, 1]} : vector<2x8x128xf32> to vector<2x1x128xf32>
    %358 = vector.shape_cast %357 : vector<2x1x128xf32> to vector<2x128xf32>
    %359 = vector.extract_strided_slice %338 {offsets = [0, 5, 0], sizes = [2, 1, 128], strides = [1, 1, 1]} : vector<2x8x128xf32> to vector<2x1x128xf32>
    %360 = vector.shape_cast %359 : vector<2x1x128xf32> to vector<2x128xf32>
    %361 = arith.maximumf %358, %360 : vector<2x128xf32>
    %c2_369 = arith.constant 2 : index
    %c0_370 = arith.constant 0 : index
    %c0_371 = arith.constant 0 : index
    %362 = vector.load %arg5[%c2_369, %c0_370, %c0_371] : memref<16x128x128xf32, #tpu.memory_space<vmem>>, vector<1x128x128xf32>
    %363 = vector.shape_cast %362 : vector<1x128x128xf32> to vector<128x128xf32>
    %cst_372 = arith.constant dense<0.000000e+00> : vector<2x128xf32>
    %364 = tpu.matmul %361, %363, %cst_372 {dimension_numbers = #tpu.dot_dimension_numbers<[1], [0], [0], [1], [0, 0, 1, 1], [], []>} : vector<2x128xf32>, vector<128x128xf32>, vector<2x128xf32> -> vector<2x128xf32>
    %365 = arith.addf %356, %364 : vector<2x128xf32>
    %366 = vector.extract_strided_slice %338 {offsets = [0, 6, 0], sizes = [2, 1, 128], strides = [1, 1, 1]} : vector<2x8x128xf32> to vector<2x1x128xf32>
    %367 = vector.shape_cast %366 : vector<2x1x128xf32> to vector<2x128xf32>
    %368 = vector.extract_strided_slice %338 {offsets = [0, 7, 0], sizes = [2, 1, 128], strides = [1, 1, 1]} : vector<2x8x128xf32> to vector<2x1x128xf32>
    %369 = vector.shape_cast %368 : vector<2x1x128xf32> to vector<2x128xf32>
    %370 = arith.maximumf %367, %369 : vector<2x128xf32>
    %c3_373 = arith.constant 3 : index
    %c0_374 = arith.constant 0 : index
    %c0_375 = arith.constant 0 : index
    %371 = vector.load %arg5[%c3_373, %c0_374, %c0_375] : memref<16x128x128xf32, #tpu.memory_space<vmem>>, vector<1x128x128xf32>
    %372 = vector.shape_cast %371 : vector<1x128x128xf32> to vector<128x128xf32>
    %cst_376 = arith.constant dense<0.000000e+00> : vector<2x128xf32>
    %373 = tpu.matmul %370, %372, %cst_376 {dimension_numbers = #tpu.dot_dimension_numbers<[1], [0], [0], [1], [0, 0, 1, 1], [], []>} : vector<2x128xf32>, vector<128x128xf32>, vector<2x128xf32> -> vector<2x128xf32>
    %374 = arith.addf %365, %373 : vector<2x128xf32>
    %c0_377 = arith.constant 0 : index
    %c2_378 = arith.constant 2 : index
    %c0_379 = arith.constant 0 : index
    %c0_380 = arith.constant 0 : index
    %375 = vector.load %arg13[%c0_377, %c2_378, %c0_379, %c0_380] : memref<2x8x8x128xf32, #tpu.memory_space<vmem>>, vector<2x1x8x128xf32>
    %376 = vector.shape_cast %375 : vector<2x1x8x128xf32> to vector<2x8x128xf32>
    %c0_381 = arith.constant 0 : index
    %c3_382 = arith.constant 3 : index
    %c0_383 = arith.constant 0 : index
    %c0_384 = arith.constant 0 : index
    %377 = vector.load %arg13[%c0_381, %c3_382, %c0_383, %c0_384] : memref<2x8x8x128xf32, #tpu.memory_space<vmem>>, vector<2x1x8x128xf32>
    %378 = vector.shape_cast %377 : vector<2x1x8x128xf32> to vector<2x8x128xf32>
    %379 = arith.maximumf %376, %378 : vector<2x8x128xf32>
    %380 = vector.extract_strided_slice %379 {offsets = [0, 0, 0], sizes = [2, 1, 128], strides = [1, 1, 1]} : vector<2x8x128xf32> to vector<2x1x128xf32>
    %381 = vector.shape_cast %380 : vector<2x1x128xf32> to vector<2x128xf32>
    %382 = vector.extract_strided_slice %379 {offsets = [0, 1, 0], sizes = [2, 1, 128], strides = [1, 1, 1]} : vector<2x8x128xf32> to vector<2x1x128xf32>
    %383 = vector.shape_cast %382 : vector<2x1x128xf32> to vector<2x128xf32>
    %384 = arith.maximumf %381, %383 : vector<2x128xf32>
    %c4_385 = arith.constant 4 : index
    %c0_386 = arith.constant 0 : index
    %c0_387 = arith.constant 0 : index
    %385 = vector.load %arg5[%c4_385, %c0_386, %c0_387] : memref<16x128x128xf32, #tpu.memory_space<vmem>>, vector<1x128x128xf32>
    %386 = vector.shape_cast %385 : vector<1x128x128xf32> to vector<128x128xf32>
    %cst_388 = arith.constant dense<0.000000e+00> : vector<2x128xf32>
    %387 = tpu.matmul %384, %386, %cst_388 {dimension_numbers = #tpu.dot_dimension_numbers<[1], [0], [0], [1], [0, 0, 1, 1], [], []>} : vector<2x128xf32>, vector<128x128xf32>, vector<2x128xf32> -> vector<2x128xf32>
    %388 = arith.addf %374, %387 : vector<2x128xf32>
    %389 = vector.extract_strided_slice %379 {offsets = [0, 2, 0], sizes = [2, 1, 128], strides = [1, 1, 1]} : vector<2x8x128xf32> to vector<2x1x128xf32>
    %390 = vector.shape_cast %389 : vector<2x1x128xf32> to vector<2x128xf32>
    %391 = vector.extract_strided_slice %379 {offsets = [0, 3, 0], sizes = [2, 1, 128], strides = [1, 1, 1]} : vector<2x8x128xf32> to vector<2x1x128xf32>
    %392 = vector.shape_cast %391 : vector<2x1x128xf32> to vector<2x128xf32>
    %393 = arith.maximumf %390, %392 : vector<2x128xf32>
    %c5_389 = arith.constant 5 : index
    %c0_390 = arith.constant 0 : index
    %c0_391 = arith.constant 0 : index
    %394 = vector.load %arg5[%c5_389, %c0_390, %c0_391] : memref<16x128x128xf32, #tpu.memory_space<vmem>>, vector<1x128x128xf32>
    %395 = vector.shape_cast %394 : vector<1x128x128xf32> to vector<128x128xf32>
    %cst_392 = arith.constant dense<0.000000e+00> : vector<2x128xf32>
    %396 = tpu.matmul %393, %395, %cst_392 {dimension_numbers = #tpu.dot_dimension_numbers<[1], [0], [0], [1], [0, 0, 1, 1], [], []>} : vector<2x128xf32>, vector<128x128xf32>, vector<2x128xf32> -> vector<2x128xf32>
    %397 = arith.addf %388, %396 : vector<2x128xf32>
    %398 = vector.extract_strided_slice %379 {offsets = [0, 4, 0], sizes = [2, 1, 128], strides = [1, 1, 1]} : vector<2x8x128xf32> to vector<2x1x128xf32>
    %399 = vector.shape_cast %398 : vector<2x1x128xf32> to vector<2x128xf32>
    %400 = vector.extract_strided_slice %379 {offsets = [0, 5, 0], sizes = [2, 1, 128], strides = [1, 1, 1]} : vector<2x8x128xf32> to vector<2x1x128xf32>
    %401 = vector.shape_cast %400 : vector<2x1x128xf32> to vector<2x128xf32>
    %402 = arith.maximumf %399, %401 : vector<2x128xf32>
    %c6_393 = arith.constant 6 : index
    %c0_394 = arith.constant 0 : index
    %c0_395 = arith.constant 0 : index
    %403 = vector.load %arg5[%c6_393, %c0_394, %c0_395] : memref<16x128x128xf32, #tpu.memory_space<vmem>>, vector<1x128x128xf32>
    %404 = vector.shape_cast %403 : vector<1x128x128xf32> to vector<128x128xf32>
    %cst_396 = arith.constant dense<0.000000e+00> : vector<2x128xf32>
    %405 = tpu.matmul %402, %404, %cst_396 {dimension_numbers = #tpu.dot_dimension_numbers<[1], [0], [0], [1], [0, 0, 1, 1], [], []>} : vector<2x128xf32>, vector<128x128xf32>, vector<2x128xf32> -> vector<2x128xf32>
    %406 = arith.addf %397, %405 : vector<2x128xf32>
    %407 = vector.extract_strided_slice %379 {offsets = [0, 6, 0], sizes = [2, 1, 128], strides = [1, 1, 1]} : vector<2x8x128xf32> to vector<2x1x128xf32>
    %408 = vector.shape_cast %407 : vector<2x1x128xf32> to vector<2x128xf32>
    %409 = vector.extract_strided_slice %379 {offsets = [0, 7, 0], sizes = [2, 1, 128], strides = [1, 1, 1]} : vector<2x8x128xf32> to vector<2x1x128xf32>
    %410 = vector.shape_cast %409 : vector<2x1x128xf32> to vector<2x128xf32>
    %411 = arith.maximumf %408, %410 : vector<2x128xf32>
    %c7_397 = arith.constant 7 : index
    %c0_398 = arith.constant 0 : index
    %c0_399 = arith.constant 0 : index
    %412 = vector.load %arg5[%c7_397, %c0_398, %c0_399] : memref<16x128x128xf32, #tpu.memory_space<vmem>>, vector<1x128x128xf32>
    %413 = vector.shape_cast %412 : vector<1x128x128xf32> to vector<128x128xf32>
    %cst_400 = arith.constant dense<0.000000e+00> : vector<2x128xf32>
    %414 = tpu.matmul %411, %413, %cst_400 {dimension_numbers = #tpu.dot_dimension_numbers<[1], [0], [0], [1], [0, 0, 1, 1], [], []>} : vector<2x128xf32>, vector<128x128xf32>, vector<2x128xf32> -> vector<2x128xf32>
    %415 = arith.addf %406, %414 : vector<2x128xf32>
    %c0_401 = arith.constant 0 : index
    %c4_402 = arith.constant 4 : index
    %c0_403 = arith.constant 0 : index
    %c0_404 = arith.constant 0 : index
    %416 = vector.load %arg13[%c0_401, %c4_402, %c0_403, %c0_404] : memref<2x8x8x128xf32, #tpu.memory_space<vmem>>, vector<2x1x8x128xf32>
    %417 = vector.shape_cast %416 : vector<2x1x8x128xf32> to vector<2x8x128xf32>
    %c0_405 = arith.constant 0 : index
    %c5_406 = arith.constant 5 : index
    %c0_407 = arith.constant 0 : index
    %c0_408 = arith.constant 0 : index
    %418 = vector.load %arg13[%c0_405, %c5_406, %c0_407, %c0_408] : memref<2x8x8x128xf32, #tpu.memory_space<vmem>>, vector<2x1x8x128xf32>
    %419 = vector.shape_cast %418 : vector<2x1x8x128xf32> to vector<2x8x128xf32>
    %420 = arith.maximumf %417, %419 : vector<2x8x128xf32>
    %421 = vector.extract_strided_slice %420 {offsets = [0, 0, 0], sizes = [2, 1, 128], strides = [1, 1, 1]} : vector<2x8x128xf32> to vector<2x1x128xf32>
    %422 = vector.shape_cast %421 : vector<2x1x128xf32> to vector<2x128xf32>
    %423 = vector.extract_strided_slice %420 {offsets = [0, 1, 0], sizes = [2, 1, 128], strides = [1, 1, 1]} : vector<2x8x128xf32> to vector<2x1x128xf32>
    %424 = vector.shape_cast %423 : vector<2x1x128xf32> to vector<2x128xf32>
    %425 = arith.maximumf %422, %424 : vector<2x128xf32>
    %c8_409 = arith.constant 8 : index
    %c0_410 = arith.constant 0 : index
    %c0_411 = arith.constant 0 : index
    %426 = vector.load %arg5[%c8_409, %c0_410, %c0_411] : memref<16x128x128xf32, #tpu.memory_space<vmem>>, vector<1x128x128xf32>
    %427 = vector.shape_cast %426 : vector<1x128x128xf32> to vector<128x128xf32>
    %cst_412 = arith.constant dense<0.000000e+00> : vector<2x128xf32>
    %428 = tpu.matmul %425, %427, %cst_412 {dimension_numbers = #tpu.dot_dimension_numbers<[1], [0], [0], [1], [0, 0, 1, 1], [], []>} : vector<2x128xf32>, vector<128x128xf32>, vector<2x128xf32> -> vector<2x128xf32>
    %429 = arith.addf %415, %428 : vector<2x128xf32>
    %430 = vector.extract_strided_slice %420 {offsets = [0, 2, 0], sizes = [2, 1, 128], strides = [1, 1, 1]} : vector<2x8x128xf32> to vector<2x1x128xf32>
    %431 = vector.shape_cast %430 : vector<2x1x128xf32> to vector<2x128xf32>
    %432 = vector.extract_strided_slice %420 {offsets = [0, 3, 0], sizes = [2, 1, 128], strides = [1, 1, 1]} : vector<2x8x128xf32> to vector<2x1x128xf32>
    %433 = vector.shape_cast %432 : vector<2x1x128xf32> to vector<2x128xf32>
    %434 = arith.maximumf %431, %433 : vector<2x128xf32>
    %c9_413 = arith.constant 9 : index
    %c0_414 = arith.constant 0 : index
    %c0_415 = arith.constant 0 : index
    %435 = vector.load %arg5[%c9_413, %c0_414, %c0_415] : memref<16x128x128xf32, #tpu.memory_space<vmem>>, vector<1x128x128xf32>
    %436 = vector.shape_cast %435 : vector<1x128x128xf32> to vector<128x128xf32>
    %cst_416 = arith.constant dense<0.000000e+00> : vector<2x128xf32>
    %437 = tpu.matmul %434, %436, %cst_416 {dimension_numbers = #tpu.dot_dimension_numbers<[1], [0], [0], [1], [0, 0, 1, 1], [], []>} : vector<2x128xf32>, vector<128x128xf32>, vector<2x128xf32> -> vector<2x128xf32>
    %438 = arith.addf %429, %437 : vector<2x128xf32>
    %439 = vector.extract_strided_slice %420 {offsets = [0, 4, 0], sizes = [2, 1, 128], strides = [1, 1, 1]} : vector<2x8x128xf32> to vector<2x1x128xf32>
    %440 = vector.shape_cast %439 : vector<2x1x128xf32> to vector<2x128xf32>
    %441 = vector.extract_strided_slice %420 {offsets = [0, 5, 0], sizes = [2, 1, 128], strides = [1, 1, 1]} : vector<2x8x128xf32> to vector<2x1x128xf32>
    %442 = vector.shape_cast %441 : vector<2x1x128xf32> to vector<2x128xf32>
    %443 = arith.maximumf %440, %442 : vector<2x128xf32>
    %c10_417 = arith.constant 10 : index
    %c0_418 = arith.constant 0 : index
    %c0_419 = arith.constant 0 : index
    %444 = vector.load %arg5[%c10_417, %c0_418, %c0_419] : memref<16x128x128xf32, #tpu.memory_space<vmem>>, vector<1x128x128xf32>
    %445 = vector.shape_cast %444 : vector<1x128x128xf32> to vector<128x128xf32>
    %cst_420 = arith.constant dense<0.000000e+00> : vector<2x128xf32>
    %446 = tpu.matmul %443, %445, %cst_420 {dimension_numbers = #tpu.dot_dimension_numbers<[1], [0], [0], [1], [0, 0, 1, 1], [], []>} : vector<2x128xf32>, vector<128x128xf32>, vector<2x128xf32> -> vector<2x128xf32>
    %447 = arith.addf %438, %446 : vector<2x128xf32>
    %448 = vector.extract_strided_slice %420 {offsets = [0, 6, 0], sizes = [2, 1, 128], strides = [1, 1, 1]} : vector<2x8x128xf32> to vector<2x1x128xf32>
    %449 = vector.shape_cast %448 : vector<2x1x128xf32> to vector<2x128xf32>
    %450 = vector.extract_strided_slice %420 {offsets = [0, 7, 0], sizes = [2, 1, 128], strides = [1, 1, 1]} : vector<2x8x128xf32> to vector<2x1x128xf32>
    %451 = vector.shape_cast %450 : vector<2x1x128xf32> to vector<2x128xf32>
    %452 = arith.maximumf %449, %451 : vector<2x128xf32>
    %c11_421 = arith.constant 11 : index
    %c0_422 = arith.constant 0 : index
    %c0_423 = arith.constant 0 : index
    %453 = vector.load %arg5[%c11_421, %c0_422, %c0_423] : memref<16x128x128xf32, #tpu.memory_space<vmem>>, vector<1x128x128xf32>
    %454 = vector.shape_cast %453 : vector<1x128x128xf32> to vector<128x128xf32>
    %cst_424 = arith.constant dense<0.000000e+00> : vector<2x128xf32>
    %455 = tpu.matmul %452, %454, %cst_424 {dimension_numbers = #tpu.dot_dimension_numbers<[1], [0], [0], [1], [0, 0, 1, 1], [], []>} : vector<2x128xf32>, vector<128x128xf32>, vector<2x128xf32> -> vector<2x128xf32>
    %456 = arith.addf %447, %455 : vector<2x128xf32>
    %c0_425 = arith.constant 0 : index
    %c6_426 = arith.constant 6 : index
    %c0_427 = arith.constant 0 : index
    %c0_428 = arith.constant 0 : index
    %457 = vector.load %arg13[%c0_425, %c6_426, %c0_427, %c0_428] : memref<2x8x8x128xf32, #tpu.memory_space<vmem>>, vector<2x1x8x128xf32>
    %458 = vector.shape_cast %457 : vector<2x1x8x128xf32> to vector<2x8x128xf32>
    %c0_429 = arith.constant 0 : index
    %c7_430 = arith.constant 7 : index
    %c0_431 = arith.constant 0 : index
    %c0_432 = arith.constant 0 : index
    %459 = vector.load %arg13[%c0_429, %c7_430, %c0_431, %c0_432] : memref<2x8x8x128xf32, #tpu.memory_space<vmem>>, vector<2x1x8x128xf32>
    %460 = vector.shape_cast %459 : vector<2x1x8x128xf32> to vector<2x8x128xf32>
    %461 = arith.maximumf %458, %460 : vector<2x8x128xf32>
    %462 = vector.extract_strided_slice %461 {offsets = [0, 0, 0], sizes = [2, 1, 128], strides = [1, 1, 1]} : vector<2x8x128xf32> to vector<2x1x128xf32>
    %463 = vector.shape_cast %462 : vector<2x1x128xf32> to vector<2x128xf32>
    %464 = vector.extract_strided_slice %461 {offsets = [0, 1, 0], sizes = [2, 1, 128], strides = [1, 1, 1]} : vector<2x8x128xf32> to vector<2x1x128xf32>
    %465 = vector.shape_cast %464 : vector<2x1x128xf32> to vector<2x128xf32>
    %466 = arith.maximumf %463, %465 : vector<2x128xf32>
    %c12_433 = arith.constant 12 : index
    %c0_434 = arith.constant 0 : index
    %c0_435 = arith.constant 0 : index
    %467 = vector.load %arg5[%c12_433, %c0_434, %c0_435] : memref<16x128x128xf32, #tpu.memory_space<vmem>>, vector<1x128x128xf32>
    %468 = vector.shape_cast %467 : vector<1x128x128xf32> to vector<128x128xf32>
    %cst_436 = arith.constant dense<0.000000e+00> : vector<2x128xf32>
    %469 = tpu.matmul %466, %468, %cst_436 {dimension_numbers = #tpu.dot_dimension_numbers<[1], [0], [0], [1], [0, 0, 1, 1], [], []>} : vector<2x128xf32>, vector<128x128xf32>, vector<2x128xf32> -> vector<2x128xf32>
    %470 = arith.addf %456, %469 : vector<2x128xf32>
    %471 = vector.extract_strided_slice %461 {offsets = [0, 2, 0], sizes = [2, 1, 128], strides = [1, 1, 1]} : vector<2x8x128xf32> to vector<2x1x128xf32>
    %472 = vector.shape_cast %471 : vector<2x1x128xf32> to vector<2x128xf32>
    %473 = vector.extract_strided_slice %461 {offsets = [0, 3, 0], sizes = [2, 1, 128], strides = [1, 1, 1]} : vector<2x8x128xf32> to vector<2x1x128xf32>
    %474 = vector.shape_cast %473 : vector<2x1x128xf32> to vector<2x128xf32>
    %475 = arith.maximumf %472, %474 : vector<2x128xf32>
    %c13_437 = arith.constant 13 : index
    %c0_438 = arith.constant 0 : index
    %c0_439 = arith.constant 0 : index
    %476 = vector.load %arg5[%c13_437, %c0_438, %c0_439] : memref<16x128x128xf32, #tpu.memory_space<vmem>>, vector<1x128x128xf32>
    %477 = vector.shape_cast %476 : vector<1x128x128xf32> to vector<128x128xf32>
    %cst_440 = arith.constant dense<0.000000e+00> : vector<2x128xf32>
    %478 = tpu.matmul %475, %477, %cst_440 {dimension_numbers = #tpu.dot_dimension_numbers<[1], [0], [0], [1], [0, 0, 1, 1], [], []>} : vector<2x128xf32>, vector<128x128xf32>, vector<2x128xf32> -> vector<2x128xf32>
    %479 = arith.addf %470, %478 : vector<2x128xf32>
    %480 = vector.extract_strided_slice %461 {offsets = [0, 4, 0], sizes = [2, 1, 128], strides = [1, 1, 1]} : vector<2x8x128xf32> to vector<2x1x128xf32>
    %481 = vector.shape_cast %480 : vector<2x1x128xf32> to vector<2x128xf32>
    %482 = vector.extract_strided_slice %461 {offsets = [0, 5, 0], sizes = [2, 1, 128], strides = [1, 1, 1]} : vector<2x8x128xf32> to vector<2x1x128xf32>
    %483 = vector.shape_cast %482 : vector<2x1x128xf32> to vector<2x128xf32>
    %484 = arith.maximumf %481, %483 : vector<2x128xf32>
    %c14_441 = arith.constant 14 : index
    %c0_442 = arith.constant 0 : index
    %c0_443 = arith.constant 0 : index
    %485 = vector.load %arg5[%c14_441, %c0_442, %c0_443] : memref<16x128x128xf32, #tpu.memory_space<vmem>>, vector<1x128x128xf32>
    %486 = vector.shape_cast %485 : vector<1x128x128xf32> to vector<128x128xf32>
    %cst_444 = arith.constant dense<0.000000e+00> : vector<2x128xf32>
    %487 = tpu.matmul %484, %486, %cst_444 {dimension_numbers = #tpu.dot_dimension_numbers<[1], [0], [0], [1], [0, 0, 1, 1], [], []>} : vector<2x128xf32>, vector<128x128xf32>, vector<2x128xf32> -> vector<2x128xf32>
    %488 = arith.addf %479, %487 : vector<2x128xf32>
    %489 = vector.extract_strided_slice %461 {offsets = [0, 6, 0], sizes = [2, 1, 128], strides = [1, 1, 1]} : vector<2x8x128xf32> to vector<2x1x128xf32>
    %490 = vector.shape_cast %489 : vector<2x1x128xf32> to vector<2x128xf32>
    %491 = vector.extract_strided_slice %461 {offsets = [0, 7, 0], sizes = [2, 1, 128], strides = [1, 1, 1]} : vector<2x8x128xf32> to vector<2x1x128xf32>
    %492 = vector.shape_cast %491 : vector<2x1x128xf32> to vector<2x128xf32>
    %493 = arith.maximumf %490, %492 : vector<2x128xf32>
    %c15_445 = arith.constant 15 : index
    %c0_446 = arith.constant 0 : index
    %c0_447 = arith.constant 0 : index
    %494 = vector.load %arg5[%c15_445, %c0_446, %c0_447] : memref<16x128x128xf32, #tpu.memory_space<vmem>>, vector<1x128x128xf32>
    %495 = vector.shape_cast %494 : vector<1x128x128xf32> to vector<128x128xf32>
    %cst_448 = arith.constant dense<0.000000e+00> : vector<2x128xf32>
    %496 = tpu.matmul %493, %495, %cst_448 {dimension_numbers = #tpu.dot_dimension_numbers<[1], [0], [0], [1], [0, 0, 1, 1], [], []>} : vector<2x128xf32>, vector<128x128xf32>, vector<2x128xf32> -> vector<2x128xf32>
    %497 = arith.addf %488, %496 : vector<2x128xf32>
    %c0_449 = arith.constant 0 : index
    %c0_450 = arith.constant 0 : index
    %498 = vector.load %arg6[%c0_449, %c0_450] : memref<1x128xf32, #tpu.memory_space<vmem>>, vector<1x128xf32>
    %499 = vector.broadcast %498 : vector<1x128xf32> to vector<2x128xf32>
    %500 = arith.addf %497, %499 : vector<2x128xf32>
    %cst_451 = arith.constant 0.000000e+00 : f32
    %501 = vector.broadcast %cst_451 : f32 to vector<2x128xf32>
    %502 = arith.maximumf %500, %501 : vector<2x128xf32>
    %c0_452 = arith.constant 0 : index
    %c0_453 = arith.constant 0 : index
    %503 = vector.load %arg7[%c0_452, %c0_453] : memref<128x128xf32, #tpu.memory_space<vmem>>, vector<128x128xf32>
    %cst_454 = arith.constant dense<0.000000e+00> : vector<2x128xf32>
    %504 = tpu.matmul %502, %503, %cst_454 {dimension_numbers = #tpu.dot_dimension_numbers<[1], [0], [0], [1], [0, 0, 1, 1], [], []>} : vector<2x128xf32>, vector<128x128xf32>, vector<2x128xf32> -> vector<2x128xf32>
    %c0_455 = arith.constant 0 : index
    %c0_456 = arith.constant 0 : index
    %505 = vector.load %arg8[%c0_455, %c0_456] : memref<1x128xf32, #tpu.memory_space<vmem>>, vector<1x128xf32>
    %506 = vector.broadcast %505 : vector<1x128xf32> to vector<2x128xf32>
    %507 = arith.addf %504, %506 : vector<2x128xf32>
    %cst_457 = arith.constant 0.000000e+00 : f32
    %508 = vector.broadcast %cst_457 : f32 to vector<2x128xf32>
    %509 = arith.maximumf %507, %508 : vector<2x128xf32>
    %c0_458 = arith.constant 0 : index
    %c0_459 = arith.constant 0 : index
    %510 = vector.load %arg9[%c0_458, %c0_459] : memref<128x128xf32, #tpu.memory_space<vmem>>, vector<128x128xf32>
    %cst_460 = arith.constant dense<0.000000e+00> : vector<2x128xf32>
    %511 = tpu.matmul %509, %510, %cst_460 {dimension_numbers = #tpu.dot_dimension_numbers<[1], [0], [0], [1], [0, 0, 1, 1], [], []>} : vector<2x128xf32>, vector<128x128xf32>, vector<2x128xf32> -> vector<2x128xf32>
    %c0_461 = arith.constant 0 : index
    %c0_462 = arith.constant 0 : index
    %512 = vector.load %arg10[%c0_461, %c0_462] : memref<1x128xf32, #tpu.memory_space<vmem>>, vector<1x128xf32>
    %513 = vector.broadcast %512 : vector<1x128xf32> to vector<2x128xf32>
    %514 = arith.addf %511, %513 : vector<2x128xf32>
    %c0_463 = arith.constant 0 : index
    %c0_464 = arith.constant 0 : index
    %515 = vector.load %arg11[%c0_463, %c0_464] : memref<2x128xf32, #tpu.memory_space<vmem>>, vector<2x128xf32>
    tpu.vector_store %arg11[%c0_463, %c0_464], %514 {strides = array<i32>} : memref<2x128xf32, #tpu.memory_space<vmem>>, vector<2x128xf32>,
    return
  }
}

</mosaic_0001>

<llo_original>
// kernel: network_forward.1
$region0: #{network_forward.1}
  #allocation0 [shape = 'u32[]', space=smem, size = 0x4, offset = 0x4, fixed_abs, tag = 'smem constant byte address 0x4 - core index']
  #allocation1 [shape = 'u32[144,128]{1,0:T(1,128)}', space=vmem, size = 0x12000, scoped, tag = 'internal scratch']
  #allocation2 [shape = 'f32[2,12,16,128]{3,2,1,0:T(8,128)}', space=vmem, size = 0x30000, scoped, tag = 'scratch operand']
  #allocation3 [shape = 'f32[2,8,8,128]{3,2,1,0:T(8,128)}', space=vmem, size = 0x10000, scoped, tag = 'scratch operand']
  %s0 = inlined_call_operand.vmem [shape: f32[1536,128], index: 0, kind: input, shape index: {}]
  %s1 = inlined_call_operand.vmem [shape: f32[128,128], index: 1, kind: input, shape index: {}]
  %s2 = inlined_call_operand.vmem [shape: f32[1,128], index: 2, kind: input, shape index: {}]
  %s3 = inlined_call_operand.vmem [shape: f32[25,128,128], index: 3, kind: input, shape index: {}]
  %s4 = inlined_call_operand.vmem [shape: f32[1,128], index: 4, kind: input, shape index: {}]
  %s5 = inlined_call_operand.vmem [shape: f32[16,128,128], index: 5, kind: input, shape index: {}]
  %s6 = inlined_call_operand.vmem [shape: f32[1,128], index: 6, kind: input, shape index: {}]
  %s7 = inlined_call_operand.vmem [shape: f32[128,128], index: 7, kind: input, shape index: {}]
  %s8 = inlined_call_operand.vmem [shape: f32[1,128], index: 8, kind: input, shape index: {}]
  %s9 = inlined_call_operand.vmem [shape: f32[128,128], index: 9, kind: input, shape index: {}]
  %s10 = inlined_call_operand.vmem [shape: f32[1,128], index: 10, kind: input, shape index: {}]
  %s11 = inlined_call_operand.hbm [shape: f32[2,128], index: 11, kind: output, shape index: {}]
  %s12 = sld [smem:[#allocation0]]
  $region54: #{network_forward.1} parent=0
    _
  %s14 = ssub.s32 1, %s12
  %s15 = scalar_select 0, %s14, %s12
  $region1: #{network_forward.1} parent=0
    #allocation4 [shape = 'u8[1024]{0}', space=vmem, size = 0x400, scoped, tag = 'output window, operand 0, single buffered']
    #allocation5 [shape = 's32[1]{0}', space=sflag, size = 0x4, scoped, tag = 'scoped memory for network_forward.1']
    %16 = vsyncpa [#allocation5], 0
    // Predicated region
    $region2: #{network_forward.1} parent=1 // pred_check
      _
    $region3: #{network_forward.1} parent=1 // pred_check_branch
      %18 = sbr.rel (0) target = $region5
    $region4: #{network_forward.1} parent=1 // pred_region
      _
    $region5: #{network_forward.1} parent=1 // pred_fallthru
      _
    // Predicated region
    $region6: #{network_forward.1} parent=1 // pred_check
      _
    $region7: #{network_forward.1} parent=1 // pred_check_branch
      %20 = sbr.rel (0) target = $region9
    $region8: #{network_forward.1} parent=1 // pred_region
      _
    $region9: #{network_forward.1} parent=1 // pred_fallthru
      _
    // Predicated region
    $region10: #{network_forward.1} parent=1 // pred_check
      _
    $region11: #{network_forward.1} parent=1 // pred_check_branch
      %22 = sbr.rel (0) target = $region13
    $region12: #{network_forward.1} parent=1 // pred_region
      _
    $region13: #{network_forward.1} parent=1 // pred_fallthru
      _
    // Predicated region
    $region14: #{network_forward.1} parent=1 // pred_check
      _
    $region15: #{network_forward.1} parent=1 // pred_check_branch
      %24 = sbr.rel (0) target = $region17
    $region16: #{network_forward.1} parent=1 // pred_region
      _
    $region17: #{network_forward.1} parent=1 // pred_fallthru
      _
    // Predicated region
    $region18: #{network_forward.1} parent=1 // pred_check
      _
    $region19: #{network_forward.1} parent=1 // pred_check_branch
      %26 = sbr.rel (0) target = $region21
    $region20: #{network_forward.1} parent=1 // pred_region
      _
    $region21: #{network_forward.1} parent=1 // pred_fallthru
      _
    // Predicated region
    $region22: #{network_forward.1} parent=1 // pred_check
      _
    $region23: #{network_forward.1} parent=1 // pred_check_branch
      %28 = sbr.rel (0) target = $region25
    $region24: #{network_forward.1} parent=1 // pred_region
      _
    $region25: #{network_forward.1} parent=1 // pred_fallthru
      _
    // Predicated region
    $region26: #{network_forward.1} parent=1 // pred_check
      _
    $region27: #{network_forward.1} parent=1 // pred_check_branch
      %30 = sbr.rel (0) target = $region29
    $region28: #{network_forward.1} parent=1 // pred_region
      _
    $region29: #{network_forward.1} parent=1 // pred_fallthru
      _
    // Predicated region
    $region30: #{network_forward.1} parent=1 // pred_check
      _
    $region31: #{network_forward.1} parent=1 // pred_check_branch
      %32 = sbr.rel (0) target = $region33
    $region32: #{network_forward.1} parent=1 // pred_region
      _
    $region33: #{network_forward.1} parent=1 // pred_fallthru
      _
    // Predicated region
    $region34: #{network_forward.1} parent=1 // pred_check
      _
    $region35: #{network_forward.1} parent=1 // pred_check_branch
      %34 = sbr.rel (0) target = $region37
    $region36: #{network_forward.1} parent=1 // pred_region
      _
    $region37: #{network_forward.1} parent=1 // pred_fallthru
      _
    // Predicated region
    $region38: #{network_forward.1} parent=1 // pred_check
      _
    $region39: #{network_forward.1} parent=1 // pred_check_branch
      %36 = sbr.rel (0) target = $region41
    $region40: #{network_forward.1} parent=1 // pred_region
      _
    $region41: #{network_forward.1} parent=1 // pred_fallthru
      _
    // Predicated region
    $region42: #{network_forward.1} parent=1 // pred_check
      _
    $region43: #{network_forward.1} parent=1 // pred_check_branch
      %38 = sbr.rel (0) target = $region45
    $region44: #{network_forward.1} parent=1 // pred_region
      _
    $region45: #{network_forward.1} parent=1 // pred_fallthru
      _
    %v39 = vld [vmem:[%s1] sm:$0xff]
    %v40 = vld [vmem:[%s1 + $0x8] sm:$0xff]
    %v41 = vld [vmem:[%s1 + $0x10] sm:$0xff]
    %v42 = vld [vmem:[%s1 + $0x18] sm:$0xff]
    %v43 = vld [vmem:[%s1 + $0x20] sm:$0xff]
    %v44 = vld [vmem:[%s1 + $0x28] sm:$0xff]
    %v45 = vld [vmem:[%s1 + $0x30] sm:$0xff]
    %v46 = vld [vmem:[%s1 + $0x38] sm:$0xff]
    %v47 = vld [vmem:[%s1 + $0x40] sm:$0xff]
    %v48 = vld [vmem:[%s1 + $0x48] sm:$0xff]
    %v49 = vld [vmem:[%s1 + $0x50] sm:$0xff]
    %v50 = vld [vmem:[%s1 + $0x58] sm:$0xff]
    %v51 = vld [vmem:[%s1 + $0x60] sm:$0xff]
    %v52 = vld [vmem:[%s1 + $0x68] sm:$0xff]
    %v53 = vld [vmem:[%s1 + $0x70] sm:$0xff]
    %v54 = vld [vmem:[%s1 + $0x78] sm:$0xff]
    %v55 = vld [vmem:[%s0] sm:$0xff]
    %v56 = vld [vmem:[%s0 + $0x8] sm:$0xff]
    %v57 = vld [vmem:[%s0 + $0x10] sm:$0xff]
    %v58 = vld [vmem:[%s0 + $0x18] sm:$0xff]
    %v59 = vld [vmem:[%s0 + $0x20] sm:$0xff]
    %v60 = vld [vmem:[%s0 + $0x28] sm:$0xff]
    %v61 = vld [vmem:[%s0 + $0x30] sm:$0xff]
    %v62 = vld [vmem:[%s0 + $0x38] sm:$0xff]
    %v63 = vld [vmem:[%s0 + $0x40] sm:$0xff]
    %v64 = vld [vmem:[%s0 + $0x48] sm:$0xff]
    %v65 = vld [vmem:[%s0 + $0x50] sm:$0xff]
    %v66 = vld [vmem:[%s0 + $0x58] sm:$0xff]
    %v67 = vld [vmem:[%s0 + $0x60] sm:$0xff]
    %v68 = vld [vmem:[%s0 + $0x68] sm:$0xff]
    %v69 = vld [vmem:[%s0 + $0x70] sm:$0xff]
    %v70 = vld [vmem:[%s0 + $0x78] sm:$0xff]
    %v71 = vld [vmem:[%s0 + $0x80] sm:$0xff]
    %v72 = vld [vmem:[%s0 + $0x88] sm:$0xff]
    %v73 = vld [vmem:[%s0 + $0x90] sm:$0xff]
    %v74 = vld [vmem:[%s0 + $0x98] sm:$0xff]
    %v75 = vld [vmem:[%s0 + $0xa0] sm:$0xff]
    %v76 = vld [vmem:[%s0 + $0xa8] sm:$0xff]
    %v77 = vld [vmem:[%s0 + $0xb0] sm:$0xff]
    %v78 = vld [vmem:[%s0 + $0xb8] sm:$0xff]
    %v79 = vld [vmem:[%s0 + $0xc0] sm:$0xff]
    %v80 = vld [vmem:[%s0 + $0xc8] sm:$0xff]
    %v81 = vld [vmem:[%s0 + $0xd0] sm:$0xff]
    %v82 = vld [vmem:[%s0 + $0xd8] sm:$0xff]
    %v83 = vld [vmem:[%s0 + $0xe0] sm:$0xff]
    %v84 = vld [vmem:[%s0 + $0xe8] sm:$0xff]
    %v85 = vld [vmem:[%s0 + $0xf0] sm:$0xff]
    %v86 = vld [vmem:[%s0 + $0xf8] sm:$0xff]
    %v87 = vld [vmem:[%s0 + $0x100] sm:$0xff]
    %v88 = vld [vmem:[%s0 + $0x108] sm:$0xff]
    %v89 = vld [vmem:[%s0 + $0x110] sm:$0xff]
    %v90 = vld [vmem:[%s0 + $0x118] sm:$0xff]
    %v91 = vld [vmem:[%s0 + $0x120] sm:$0xff]
    %v92 = vld [vmem:[%s0 + $0x128] sm:$0xff]
    %v93 = vld [vmem:[%s0 + $0x130] sm:$0xff]
    %v94 = vld [vmem:[%s0 + $0x138] sm:$0xff]
    %v95 = vld [vmem:[%s0 + $0x140] sm:$0xff]
    %v96 = vld [vmem:[%s0 + $0x148] sm:$0xff]
    %v97 = vld [vmem:[%s0 + $0x150] sm:$0xff]
    %v98 = vld [vmem:[%s0 + $0x158] sm:$0xff]
    %v99 = vld [vmem:[%s0 + $0x160] sm:$0xff]
    %v100 = vld [vmem:[%s0 + $0x168] sm:$0xff]
    %v101 = vld [vmem:[%s0 + $0x170] sm:$0xff]
    %v102 = vld [vmem:[%s0 + $0x178] sm:$0xff]
    %103 = vmatprep.subr.mxu0 0.0
    %104 = vmatpush1.msra.mxu0 %v54
    %105 = vmatprep.subr.mxu0 0.0
    %106 = vmatpush1.msra.mxu0 %v53
    %107 = vmatprep.subr.mxu0 0.0
    %108 = vmatpush1.msra.mxu0 %v52
    %109 = vmatprep.subr.mxu0 0.0
    %110 = vmatpush1.msra.mxu0 %v51
    %111 = vmatprep.subr.mxu0 0.0
    %112 = vmatpush1.msra.mxu0 %v50
    %113 = vmatprep.subr.mxu0 0.0
    %114 = vmatpush1.msra.mxu0 %v49
    %115 = vmatprep.subr.mxu0 0.0
    %116 = vmatpush1.msra.mxu0 %v48
    %117 = vmatprep.subr.mxu0 0.0
    %118 = vmatpush1.msra.mxu0 %v47
    %119 = vmatprep.subr.mxu0 0.0
    %120 = vmatpush1.msra.mxu0 %v46
    %121 = vmatprep.subr.mxu0 0.0
    %122 = vmatpush1.msra.mxu0 %v45
    %123 = vmatprep.subr.mxu0 0.0
    %124 = vmatpush1.msra.mxu0 %v44
    %125 = vmatprep.subr.mxu0 0.0
    %126 = vmatpush1.msra.mxu0 %v43
    %127 = vmatprep.subr.mxu0 0.0
    %128 = vmatpush1.msra.mxu0 %v42
    %129 = vmatprep.subr.mxu0 0.0
    %130 = vmatpush1.msra.mxu0 %v41
    %131 = vmatprep.subr.mxu0 0.0
    %132 = vmatpush1.msra.mxu0 %v40
    %133 = vmatprep.subr.mxu0 0.0
    %134 = vmatpush1.msra.mxu0 %v39
    %135 = vmatprep.subr.mxu0 0.0
    %136 = vmatpush2.msra.mxu0 0.0
    %137 = vmatprep.subr.mxu0 0.0
    %138 = vmatpush2.msra.mxu0 0.0
    %139 = vmatprep.subr.mxu0 0.0
    %140 = vmatpush2.msra.mxu0 0.0
    %141 = vmatprep.subr.mxu0 0.0
    %142 = vmatpush2.msra.mxu0 0.0
    %143 = vmatprep.subr.mxu0 0.0
    %144 = vmatpush2.msra.mxu0 0.0
    %145 = vmatprep.subr.mxu0 0.0
    %146 = vmatpush2.msra.mxu0 0.0
    %147 = vmatprep.subr.mxu0 0.0
    %148 = vmatpush2.msra.mxu0 0.0
    %149 = vmatprep.subr.mxu0 0.0
    %150 = vmatpush2.msra.mxu0 0.0
    %151 = vmatprep.subr.mxu0 0.0
    %152 = vmatpush2.msra.mxu0 0.0
    %153 = vmatprep.subr.mxu0 0.0
    %154 = vmatpush2.msra.mxu0 0.0
    %155 = vmatprep.subr.mxu0 0.0
    %156 = vmatpush2.msra.mxu0 0.0
    %157 = vmatprep.subr.mxu0 0.0
    %158 = vmatpush2.msra.mxu0 0.0
    %159 = vmatprep.subr.mxu0 0.0
    %160 = vmatpush2.msra.mxu0 0.0
    %161 = vmatprep.subr.mxu0 0.0
    %162 = vmatpush2.msra.mxu0 0.0
    %163 = vmatprep.subr.mxu0 0.0
    %164 = vmatpush2.msra.mxu0 0.0
    %165 = vmatprep.subr.mxu0 0.0
    %166 = vmatpush2.msra.mxu0 0.0
    %167 = vmatprep.mubr.f32.mxu0 0.0
    %168 = vmatmul.mubr.f32.gmra.mxu0 %v55
    %v169 = vpop.f32.mrf.mxu0
    %v170 = vadd.f32 0.0, %v169
    %v171 = vpop.f32.mrf.mxu0
    %172 = vmatprep.mubr.f32.mxu0 0.0
    %173 = vmatmul.mubr.f32.gmra.mxu0 %v56
    %v174 = vpop.f32.mrf.mxu0
    %v175 = vadd.f32 0.0, %v174
    %v176 = vpop.f32.mrf.mxu0
    %177 = vmatprep.mubr.f32.mxu0 0.0
    %178 = vmatmul.mubr.f32.gmra.mxu0 %v57
    %v179 = vpop.f32.mrf.mxu0
    %v180 = vadd.f32 0.0, %v179
    %v181 = vpop.f32.mrf.mxu0
    %182 = vmatprep.mubr.f32.mxu0 0.0
    %183 = vmatmul.mubr.f32.gmra.mxu0 %v58
    %v184 = vpop.f32.mrf.mxu0
    %v185 = vadd.f32 0.0, %v184
    %v186 = vpop.f32.mrf.mxu0
    %187 = vmatprep.mubr.f32.mxu0 0.0
    %188 = vmatmul.mubr.f32.gmra.mxu0 %v59
    %v189 = vpop.f32.mrf.mxu0
    %v190 = vadd.f32 0.0, %v189
    %v191 = vpop.f32.mrf.mxu0
    %192 = vmatprep.mubr.f32.mxu0 0.0
    %193 = vmatmul.mubr.f32.gmra.mxu0 %v60
    %v194 = vpop.f32.mrf.mxu0
    %v195 = vadd.f32 0.0, %v194
    %v196 = vpop.f32.mrf.mxu0
    %197 = vmatprep.mubr.f32.mxu0 0.0
    %198 = vmatmul.mubr.f32.gmra.mxu0 %v61
    %v199 = vpop.f32.mrf.mxu0
    %v200 = vadd.f32 0.0, %v199
    %v201 = vpop.f32.mrf.mxu0
    %202 = vmatprep.mubr.f32.mxu0 0.0
    %203 = vmatmul.mubr.f32.gmra.mxu0 %v62
    %v204 = vpop.f32.mrf.mxu0
    %v205 = vadd.f32 0.0, %v204
    %v206 = vpop.f32.mrf.mxu0
    %207 = vmatprep.mubr.f32.mxu0 0.0
    %208 = vmatmul.mubr.f32.gmra.mxu0 %v63
    %v209 = vpop.f32.mrf.mxu0
    %v210 = vadd.f32 0.0, %v209
    %v211 = vpop.f32.mrf.mxu0
    %212 = vmatprep.mubr.f32.mxu0 0.0
    %213 = vmatmul.mubr.f32.gmra.mxu0 %v64
    %v214 = vpop.f32.mrf.mxu0
    %v215 = vadd.f32 0.0, %v214
    %v216 = vpop.f32.mrf.mxu0
    %217 = vmatprep.mubr.f32.mxu0 0.0
    %218 = vmatmul.mubr.f32.gmra.mxu0 %v65
    %v219 = vpop.f32.mrf.mxu0
    %v220 = vadd.f32 0.0, %v219
    %v221 = vpop.f32.mrf.mxu0
    %222 = vmatprep.mubr.f32.mxu0 0.0
    %223 = vmatmul.mubr.f32.gmra.mxu0 %v66
    %v224 = vpop.f32.mrf.mxu0
    %v225 = vadd.f32 0.0, %v224
    %v226 = vpop.f32.mrf.mxu0
    %227 = vmatprep.mubr.f32.mxu0 0.0
    %228 = vmatmul.mubr.f32.gmra.mxu0 %v67
    %v229 = vpop.f32.mrf.mxu0
    %v230 = vadd.f32 0.0, %v229
    %v231 = vpop.f32.mrf.mxu0
    %232 = vmatprep.mubr.f32.mxu0 0.0
    %233 = vmatmul.mubr.f32.gmra.mxu0 %v68
    %v234 = vpop.f32.mrf.mxu0
    %v235 = vadd.f32 0.0, %v234
    %v236 = vpop.f32.mrf.mxu0
    %237 = vmatprep.mubr.f32.mxu0 0.0
    %238 = vmatmul.mubr.f32.gmra.mxu0 %v69
    %v239 = vpop.f32.mrf.mxu0
    %v240 = vadd.f32 0.0, %v239
    %v241 = vpop.f32.mrf.mxu0
    %242 = vmatprep.mubr.f32.mxu0 0.0
    %243 = vmatmul.mubr.f32.gmra.mxu0 %v70
    %v244 = vpop.f32.mrf.mxu0
    %v245 = vadd.f32 0.0, %v244
    %v246 = vpop.f32.mrf.mxu0
    %247 = vmatprep.mubr.f32.mxu0 0.0
    %248 = vmatmul.mubr.f32.gmra.mxu0 %v71
    %v249 = vpop.f32.mrf.mxu0
    %v250 = vadd.f32 0.0, %v249
    %v251 = vpop.f32.mrf.mxu0
    %252 = vmatprep.mubr.f32.mxu0 0.0
    %253 = vmatmul.mubr.f32.gmra.mxu0 %v72
    %v254 = vpop.f32.mrf.mxu0
    %v255 = vadd.f32 0.0, %v254
    %v256 = vpop.f32.mrf.mxu0
    %257 = vmatprep.mubr.f32.mxu0 0.0
    %258 = vmatmul.mubr.f32.gmra.mxu0 %v73
    %v259 = vpop.f32.mrf.mxu0
    %v260 = vadd.f32 0.0, %v259
    %v261 = vpop.f32.mrf.mxu0
    %262 = vmatprep.mubr.f32.mxu0 0.0
    %263 = vmatmul.mubr.f32.gmra.mxu0 %v74
    %v264 = vpop.f32.mrf.mxu0
    %v265 = vadd.f32 0.0, %v264
    %v266 = vpop.f32.mrf.mxu0
    %267 = vmatprep.mubr.f32.mxu0 0.0
    %268 = vmatmul.mubr.f32.gmra.mxu0 %v75
    %v269 = vpop.f32.mrf.mxu0
    %v270 = vadd.f32 0.0, %v269
    %v271 = vpop.f32.mrf.mxu0
    %272 = vmatprep.mubr.f32.mxu0 0.0
    %273 = vmatmul.mubr.f32.gmra.mxu0 %v76
    %v274 = vpop.f32.mrf.mxu0
    %v275 = vadd.f32 0.0, %v274
    %v276 = vpop.f32.mrf.mxu0
    %277 = vmatprep.mubr.f32.mxu0 0.0
    %278 = vmatmul.mubr.f32.gmra.mxu0 %v77
    %v279 = vpop.f32.mrf.mxu0
    %v280 = vadd.f32 0.0, %v279
    %v281 = vpop.f32.mrf.mxu0
    %282 = vmatprep.mubr.f32.mxu0 0.0
    %283 = vmatmul.mubr.f32.gmra.mxu0 %v78
    %v284 = vpop.f32.mrf.mxu0
    %v285 = vadd.f32 0.0, %v284
    %v286 = vpop.f32.mrf.mxu0
    %287 = vmatprep.mubr.f32.mxu0 0.0
    %288 = vmatmul.mubr.f32.gmra.mxu0 %v79
    %v289 = vpop.f32.mrf.mxu0
    %v290 = vadd.f32 0.0, %v289
    %v291 = vpop.f32.mrf.mxu0
    %292 = vmatprep.mubr.f32.mxu0 0.0
    %293 = vmatmul.mubr.f32.gmra.mxu0 %v80
    %v294 = vpop.f32.mrf.mxu0
    %v295 = vadd.f32 0.0, %v294
    %v296 = vpop.f32.mrf.mxu0
    %297 = vmatprep.mubr.f32.mxu0 0.0
    %298 = vmatmul.mubr.f32.gmra.mxu0 %v81
    %v299 = vpop.f32.mrf.mxu0
    %v300 = vadd.f32 0.0, %v299
    %v301 = vpop.f32.mrf.mxu0
    %302 = vmatprep.mubr.f32.mxu0 0.0
    %303 = vmatmul.mubr.f32.gmra.mxu0 %v82
    %v304 = vpop.f32.mrf.mxu0
    %v305 = vadd.f32 0.0, %v304
    %v306 = vpop.f32.mrf.mxu0
    %307 = vmatprep.mubr.f32.mxu0 0.0
    %308 = vmatmul.mubr.f32.gmra.mxu0 %v83
    %v309 = vpop.f32.mrf.mxu0
    %v310 = vadd.f32 0.0, %v309
    %v311 = vpop.f32.mrf.mxu0
    %312 = vmatprep.mubr.f32.mxu0 0.0
    %313 = vmatmul.mubr.f32.gmra.mxu0 %v84
    %v314 = vpop.f32.mrf.mxu0
    %v315 = vadd.f32 0.0, %v314
    %v316 = vpop.f32.mrf.mxu0
    %317 = vmatprep.mubr.f32.mxu0 0.0
    %318 = vmatmul.mubr.f32.gmra.mxu0 %v85
    %v319 = vpop.f32.mrf.mxu0
    %v320 = vadd.f32 0.0, %v319
    %v321 = vpop.f32.mrf.mxu0
    %322 = vmatprep.mubr.f32.mxu0 0.0
    %323 = vmatmul.mubr.f32.gmra.mxu0 %v86
    %v324 = vpop.f32.mrf.mxu0
    %v325 = vadd.f32 0.0, %v324
    %v326 = vpop.f32.mrf.mxu0
    %327 = vmatprep.mubr.f32.mxu0 0.0
    %328 = vmatmul.mubr.f32.gmra.mxu0 %v87
    %v329 = vpop.f32.mrf.mxu0
    %v330 = vadd.f32 0.0, %v329
    %v331 = vpop.f32.mrf.mxu0
    %332 = vmatprep.mubr.f32.mxu0 0.0
    %333 = vmatmul.mubr.f32.gmra.mxu0 %v88
    %v334 = vpop.f32.mrf.mxu0
    %v335 = vadd.f32 0.0, %v334
    %v336 = vpop.f32.mrf.mxu0
    %337 = vmatprep.mubr.f32.mxu0 0.0
    %338 = vmatmul.mubr.f32.gmra.mxu0 %v89
    %v339 = vpop.f32.mrf.mxu0
    %v340 = vadd.f32 0.0, %v339
    %v341 = vpop.f32.mrf.mxu0
    %342 = vmatprep.mubr.f32.mxu0 0.0
    %343 = vmatmul.mubr.f32.gmra.mxu0 %v90
    %v344 = vpop.f32.mrf.mxu0
    %v345 = vadd.f32 0.0, %v344
    %v346 = vpop.f32.mrf.mxu0
    %347 = vmatprep.mubr.f32.mxu0 0.0
    %348 = vmatmul.mubr.f32.gmra.mxu0 %v91
    %v349 = vpop.f32.mrf.mxu0
    %v350 = vadd.f32 0.0, %v349
    %v351 = vpop.f32.mrf.mxu0
    %352 = vmatprep.mubr.f32.mxu0 0.0
    %353 = vmatmul.mubr.f32.gmra.mxu0 %v92
    %v354 = vpop.f32.mrf.mxu0
    %v355 = vadd.f32 0.0, %v354
    %v356 = vpop.f32.mrf.mxu0
    %357 = vmatprep.mubr.f32.mxu0 0.0
    %358 = vmatmul.mubr.f32.gmra.mxu0 %v93
    %v359 = vpop.f32.mrf.mxu0
    %v360 = vadd.f32 0.0, %v359
    %v361 = vpop.f32.mrf.mxu0
    %362 = vmatprep.mubr.f32.mxu0 0.0
    %363 = vmatmul.mubr.f32.gmra.mxu0 %v94
    %v364 = vpop.f32.mrf.mxu0
    %v365 = vadd.f32 0.0, %v364
    %v366 = vpop.f32.mrf.mxu0
    %367 = vmatprep.mubr.f32.mxu0 0.0
    %368 = vmatmul.mubr.f32.gmra.mxu0 %v95
    %v369 = vpop.f32.mrf.mxu0
    %v370 = vadd.f32 0.0, %v369
    %v371 = vpop.f32.mrf.mxu0
    %372 = vmatprep.mubr.f32.mxu0 0.0
    %373 = vmatmul.mubr.f32.gmra.mxu0 %v96
    %v374 = vpop.f32.mrf.mxu0
    %v375 = vadd.f32 0.0, %v374
    %v376 = vpop.f32.mrf.mxu0
    %377 = vmatprep.mubr.f32.mxu0 0.0
    %378 = vmatmul.mubr.f32.gmra.mxu0 %v97
    %v379 = vpop.f32.mrf.mxu0
    %v380 = vadd.f32 0.0, %v379
    %v381 = vpop.f32.mrf.mxu0
    %382 = vmatprep.mubr.f32.mxu0 0.0
    %383 = vmatmul.mubr.f32.gmra.mxu0 %v98
    %v384 = vpop.f32.mrf.mxu0
    %v385 = vadd.f32 0.0, %v384
    %v386 = vpop.f32.mrf.mxu0
    %387 = vmatprep.mubr.f32.mxu0 0.0
    %388 = vmatmul.mubr.f32.gmra.mxu0 %v99
    %v389 = vpop.f32.mrf.mxu0
    %v390 = vadd.f32 0.0, %v389
    %v391 = vpop.f32.mrf.mxu0
    %392 = vmatprep.mubr.f32.mxu0 0.0
    %393 = vmatmul.mubr.f32.gmra.mxu0 %v100
    %v394 = vpop.f32.mrf.mxu0
    %v395 = vadd.f32 0.0, %v394
    %v396 = vpop.f32.mrf.mxu0
    %397 = vmatprep.mubr.f32.mxu0 0.0
    %398 = vmatmul.mubr.f32.gmra.mxu0 %v101
    %v399 = vpop.f32.mrf.mxu0
    %v400 = vadd.f32 0.0, %v399
    %v401 = vpop.f32.mrf.mxu0
    %402 = vmatprep.mubr.f32.mxu0 0.0
    %403 = vmatmul.mubr.f32.gmra.mxu0 %v102
    %v404 = vpop.f32.mrf.mxu0
    %v405 = vadd.f32 0.0, %v404
    %v406 = vpop.f32.mrf.mxu0
    %407 = vdwg.mxu0
    %v408 = vld [vmem:[%s0 + $0x180] sm:$0xff]
    %v409 = vld [vmem:[%s0 + $0x188] sm:$0xff]
    %v410 = vld [vmem:[%s0 + $0x190] sm:$0xff]
    %v411 = vld [vmem:[%s0 + $0x198] sm:$0xff]
    %v412 = vld [vmem:[%s0 + $0x1a0] sm:$0xff]
    %v413 = vld [vmem:[%s0 + $0x1a8] sm:$0xff]
    %v414 = vld [vmem:[%s0 + $0x1b0] sm:$0xff]
    %v415 = vld [vmem:[%s0 + $0x1b8] sm:$0xff]
    %v416 = vld [vmem:[%s0 + $0x1c0] sm:$0xff]
    %v417 = vld [vmem:[%s0 + $0x1c8] sm:$0xff]
    %v418 = vld [vmem:[%s0 + $0x1d0] sm:$0xff]
    %v419 = vld [vmem:[%s0 + $0x1d8] sm:$0xff]
    %v420 = vld [vmem:[%s0 + $0x1e0] sm:$0xff]
    %v421 = vld [vmem:[%s0 + $0x1e8] sm:$0xff]
    %v422 = vld [vmem:[%s0 + $0x1f0] sm:$0xff]
    %v423 = vld [vmem:[%s0 + $0x1f8] sm:$0xff]
    %v424 = vld [vmem:[%s0 + $0x200] sm:$0xff]
    %v425 = vld [vmem:[%s0 + $0x208] sm:$0xff]
    %v426 = vld [vmem:[%s0 + $0x210] sm:$0xff]
    %v427 = vld [vmem:[%s0 + $0x218] sm:$0xff]
    %v428 = vld [vmem:[%s0 + $0x220] sm:$0xff]
    %v429 = vld [vmem:[%s0 + $0x228] sm:$0xff]
    %v430 = vld [vmem:[%s0 + $0x230] sm:$0xff]
    %v431 = vld [vmem:[%s0 + $0x238] sm:$0xff]
    %v432 = vld [vmem:[%s0 + $0x240] sm:$0xff]
    %v433 = vld [vmem:[%s0 + $0x248] sm:$0xff]
    %v434 = vld [vmem:[%s0 + $0x250] sm:$0xff]
    %v435 = vld [vmem:[%s0 + $0x258] sm:$0xff]
    %v436 = vld [vmem:[%s0 + $0x260] sm:$0xff]
    %v437 = vld [vmem:[%s0 + $0x268] sm:$0xff]
    %v438 = vld [vmem:[%s0 + $0x270] sm:$0xff]
    %v439 = vld [vmem:[%s0 + $0x278] sm:$0xff]
    %v440 = vld [vmem:[%s0 + $0x280] sm:$0xff]
    %v441 = vld [vmem:[%s0 + $0x288] sm:$0xff]
    %v442 = vld [vmem:[%s0 + $0x290] sm:$0xff]
    %v443 = vld [vmem:[%s0 + $0x298] sm:$0xff]
    %v444 = vld [vmem:[%s0 + $0x2a0] sm:$0xff]
    %v445 = vld [vmem:[%s0 + $0x2a8] sm:$0xff]
    %v446 = vld [vmem:[%s0 + $0x2b0] sm:$0xff]
    %v447 = vld [vmem:[%s0 + $0x2b8] sm:$0xff]
    %v448 = vld [vmem:[%s0 + $0x2c0] sm:$0xff]
    %v449 = vld [vmem:[%s0 + $0x2c8] sm:$0xff]
    %v450 = vld [vmem:[%s0 + $0x2d0] sm:$0xff]
    %v451 = vld [vmem:[%s0 + $0x2d8] sm:$0xff]
    %v452 = vld [vmem:[%s0 + $0x2e0] sm:$0xff]
    %v453 = vld [vmem:[%s0 + $0x2e8] sm:$0xff]
    %v454 = vld [vmem:[%s0 + $0x2f0] sm:$0xff]
    %v455 = vld [vmem:[%s0 + $0x2f8] sm:$0xff]
    %456 = vmatprep.subr.mxu0 0.0
    %457 = vmatpush1.msra.mxu0 %v54
    %458 = vmatprep.subr.mxu0 0.0
    %459 = vmatpush1.msra.mxu0 %v53
    %460 = vmatprep.subr.mxu0 0.0
    %461 = vmatpush1.msra.mxu0 %v52
    %462 = vmatprep.subr.mxu0 0.0
    %463 = vmatpush1.msra.mxu0 %v51
    %464 = vmatprep.subr.mxu0 0.0
    %465 = vmatpush1.msra.mxu0 %v50
    %466 = vmatprep.subr.mxu0 0.0
    %467 = vmatpush1.msra.mxu0 %v49
    %468 = vmatprep.subr.mxu0 0.0
    %469 = vmatpush1.msra.mxu0 %v48
    %470 = vmatprep.subr.mxu0 0.0
    %471 = vmatpush1.msra.mxu0 %v47
    %472 = vmatprep.subr.mxu0 0.0
    %473 = vmatpush1.msra.mxu0 %v46
    %474 = vmatprep.subr.mxu0 0.0
    %475 = vmatpush1.msra.mxu0 %v45
    %476 = vmatprep.subr.mxu0 0.0
    %477 = vmatpush1.msra.mxu0 %v44
    %478 = vmatprep.subr.mxu0 0.0
    %479 = vmatpush1.msra.mxu0 %v43
    %480 = vmatprep.subr.mxu0 0.0
    %481 = vmatpush1.msra.mxu0 %v42
    %482 = vmatprep.subr.mxu0 0.0
    %483 = vmatpush1.msra.mxu0 %v41
    %484 = vmatprep.subr.mxu0 0.0
    %485 = vmatpush1.msra.mxu0 %v40
    %486 = vmatprep.subr.mxu0 0.0
    %487 = vmatpush1.msra.mxu0 %v39
    %488 = vmatprep.subr.mxu0 0.0
    %489 = vmatpush2.msra.mxu0 0.0
    %490 = vmatprep.subr.mxu0 0.0
    %491 = vmatpush2.msra.mxu0 0.0
    %492 = vmatprep.subr.mxu0 0.0
    %493 = vmatpush2.msra.mxu0 0.0
    %494 = vmatprep.subr.mxu0 0.0
    %495 = vmatpush2.msra.mxu0 0.0
    %496 = vmatprep.subr.mxu0 0.0
    %497 = vmatpush2.msra.mxu0 0.0
    %498 = vmatprep.subr.mxu0 0.0
    %499 = vmatpush2.msra.mxu0 0.0
    %500 = vmatprep.subr.mxu0 0.0
    %501 = vmatpush2.msra.mxu0 0.0
    %502 = vmatprep.subr.mxu0 0.0
    %503 = vmatpush2.msra.mxu0 0.0
    %504 = vmatprep.subr.mxu0 0.0
    %505 = vmatpush2.msra.mxu0 0.0
    %506 = vmatprep.subr.mxu0 0.0
    %507 = vmatpush2.msra.mxu0 0.0
    %508 = vmatprep.subr.mxu0 0.0
    %509 = vmatpush2.msra.mxu0 0.0
    %510 = vmatprep.subr.mxu0 0.0
    %511 = vmatpush2.msra.mxu0 0.0
    %512 = vmatprep.subr.mxu0 0.0
    %513 = vmatpush2.msra.mxu0 0.0
    %514 = vmatprep.subr.mxu0 0.0
    %515 = vmatpush2.msra.mxu0 0.0
    %516 = vmatprep.subr.mxu0 0.0
    %517 = vmatpush2.msra.mxu0 0.0
    %518 = vmatprep.subr.mxu0 0.0
    %519 = vmatpush2.msra.mxu0 0.0
    %520 = vmatprep.mubr.f32.mxu0 0.0
    %521 = vmatmul.mubr.f32.gmra.mxu0 %v408
    %v522 = vpop.f32.mrf.mxu0
    %v523 = vadd.f32 0.0, %v522
    %v524 = vpop.f32.mrf.mxu0
    %525 = vmatprep.mubr.f32.mxu0 0.0
    %526 = vmatmul.mubr.f32.gmra.mxu0 %v409
    %v527 = vpop.f32.mrf.mxu0
    %v528 = vadd.f32 0.0, %v527
    %v529 = vpop.f32.mrf.mxu0
    %530 = vmatprep.mubr.f32.mxu0 0.0
    %531 = vmatmul.mubr.f32.gmra.mxu0 %v410
    %v532 = vpop.f32.mrf.mxu0
    %v533 = vadd.f32 0.0, %v532
    %v534 = vpop.f32.mrf.mxu0
    %535 = vmatprep.mubr.f32.mxu0 0.0
    %536 = vmatmul.mubr.f32.gmra.mxu0 %v411
    %v537 = vpop.f32.mrf.mxu0
    %v538 = vadd.f32 0.0, %v537
    %v539 = vpop.f32.mrf.mxu0
    %540 = vmatprep.mubr.f32.mxu0 0.0
    %541 = vmatmul.mubr.f32.gmra.mxu0 %v412
    %v542 = vpop.f32.mrf.mxu0
    %v543 = vadd.f32 0.0, %v542
    %v544 = vpop.f32.mrf.mxu0
    %545 = vmatprep.mubr.f32.mxu0 0.0
    %546 = vmatmul.mubr.f32.gmra.mxu0 %v413
    %v547 = vpop.f32.mrf.mxu0
    %v548 = vadd.f32 0.0, %v547
    %v549 = vpop.f32.mrf.mxu0
    %550 = vmatprep.mubr.f32.mxu0 0.0
    %551 = vmatmul.mubr.f32.gmra.mxu0 %v414
    %v552 = vpop.f32.mrf.mxu0
    %v553 = vadd.f32 0.0, %v552
    %v554 = vpop.f32.mrf.mxu0
    %555 = vmatprep.mubr.f32.mxu0 0.0
    %556 = vmatmul.mubr.f32.gmra.mxu0 %v415
    %v557 = vpop.f32.mrf.mxu0
    %v558 = vadd.f32 0.0, %v557
    %v559 = vpop.f32.mrf.mxu0
    %560 = vmatprep.mubr.f32.mxu0 0.0
    %561 = vmatmul.mubr.f32.gmra.mxu0 %v416
    %v562 = vpop.f32.mrf.mxu0
    %v563 = vadd.f32 0.0, %v562
    %v564 = vpop.f32.mrf.mxu0
    %565 = vmatprep.mubr.f32.mxu0 0.0
    %566 = vmatmul.mubr.f32.gmra.mxu0 %v417
    %v567 = vpop.f32.mrf.mxu0
    %v568 = vadd.f32 0.0, %v567
    %v569 = vpop.f32.mrf.mxu0
    %570 = vmatprep.mubr.f32.mxu0 0.0
    %571 = vmatmul.mubr.f32.gmra.mxu0 %v418
    %v572 = vpop.f32.mrf.mxu0
    %v573 = vadd.f32 0.0, %v572
    %v574 = vpop.f32.mrf.mxu0
    %575 = vmatprep.mubr.f32.mxu0 0.0
    %576 = vmatmul.mubr.f32.gmra.mxu0 %v419
    %v577 = vpop.f32.mrf.mxu0
    %v578 = vadd.f32 0.0, %v577
    %v579 = vpop.f32.mrf.mxu0
    %580 = vmatprep.mubr.f32.mxu0 0.0
    %581 = vmatmul.mubr.f32.gmra.mxu0 %v420
    %v582 = vpop.f32.mrf.mxu0
    %v583 = vadd.f32 0.0, %v582
    %v584 = vpop.f32.mrf.mxu0
    %585 = vmatprep.mubr.f32.mxu0 0.0
    %586 = vmatmul.mubr.f32.gmra.mxu0 %v421
    %v587 = vpop.f32.mrf.mxu0
    %v588 = vadd.f32 0.0, %v587
    %v589 = vpop.f32.mrf.mxu0
    %590 = vmatprep.mubr.f32.mxu0 0.0
    %591 = vmatmul.mubr.f32.gmra.mxu0 %v422
    %v592 = vpop.f32.mrf.mxu0
    %v593 = vadd.f32 0.0, %v592
    %v594 = vpop.f32.mrf.mxu0
    %595 = vmatprep.mubr.f32.mxu0 0.0
    %596 = vmatmul.mubr.f32.gmra.mxu0 %v423
    %v597 = vpop.f32.mrf.mxu0
    %v598 = vadd.f32 0.0, %v597
    %v599 = vpop.f32.mrf.mxu0
    %600 = vmatprep.mubr.f32.mxu0 0.0
    %601 = vmatmul.mubr.f32.gmra.mxu0 %v424
    %v602 = vpop.f32.mrf.mxu0
    %v603 = vadd.f32 0.0, %v602
    %v604 = vpop.f32.mrf.mxu0
    %605 = vmatprep.mubr.f32.mxu0 0.0
    %606 = vmatmul.mubr.f32.gmra.mxu0 %v425
    %v607 = vpop.f32.mrf.mxu0
    %v608 = vadd.f32 0.0, %v607
    %v609 = vpop.f32.mrf.mxu0
    %610 = vmatprep.mubr.f32.mxu0 0.0
    %611 = vmatmul.mubr.f32.gmra.mxu0 %v426
    %v612 = vpop.f32.mrf.mxu0
    %v613 = vadd.f32 0.0, %v612
    %v614 = vpop.f32.mrf.mxu0
    %615 = vmatprep.mubr.f32.mxu0 0.0
    %616 = vmatmul.mubr.f32.gmra.mxu0 %v427
    %v617 = vpop.f32.mrf.mxu0
    %v618 = vadd.f32 0.0, %v617
    %v619 = vpop.f32.mrf.mxu0
    %620 = vmatprep.mubr.f32.mxu0 0.0
    %621 = vmatmul.mubr.f32.gmra.mxu0 %v428
    %v622 = vpop.f32.mrf.mxu0
    %v623 = vadd.f32 0.0, %v622
    %v624 = vpop.f32.mrf.mxu0
    %625 = vmatprep.mubr.f32.mxu0 0.0
    %626 = vmatmul.mubr.f32.gmra.mxu0 %v429
    %v627 = vpop.f32.mrf.mxu0
    %v628 = vadd.f32 0.0, %v627
    %v629 = vpop.f32.mrf.mxu0
    %630 = vmatprep.mubr.f32.mxu0 0.0
    %631 = vmatmul.mubr.f32.gmra.mxu0 %v430
    %v632 = vpop.f32.mrf.mxu0
    %v633 = vadd.f32 0.0, %v632
    %v634 = vpop.f32.mrf.mxu0
    %635 = vmatprep.mubr.f32.mxu0 0.0
    %636 = vmatmul.mubr.f32.gmra.mxu0 %v431
    %v637 = vpop.f32.mrf.mxu0
    %v638 = vadd.f32 0.0, %v637
    %v639 = vpop.f32.mrf.mxu0
    %640 = vmatprep.mubr.f32.mxu0 0.0
    %641 = vmatmul.mubr.f32.gmra.mxu0 %v432
    %v642 = vpop.f32.mrf.mxu0
    %v643 = vadd.f32 0.0, %v642
    %v644 = vpop.f32.mrf.mxu0
    %645 = vmatprep.mubr.f32.mxu0 0.0
    %646 = vmatmul.mubr.f32.gmra.mxu0 %v433
    %v647 = vpop.f32.mrf.mxu0
    %v648 = vadd.f32 0.0, %v647
    %v649 = vpop.f32.mrf.mxu0
    %650 = vmatprep.mubr.f32.mxu0 0.0
    %651 = vmatmul.mubr.f32.gmra.mxu0 %v434
    %v652 = vpop.f32.mrf.mxu0
    %v653 = vadd.f32 0.0, %v652
    %v654 = vpop.f32.mrf.mxu0
    %655 = vmatprep.mubr.f32.mxu0 0.0
    %656 = vmatmul.mubr.f32.gmra.mxu0 %v435
    %v657 = vpop.f32.mrf.mxu0
    %v658 = vadd.f32 0.0, %v657
    %v659 = vpop.f32.mrf.mxu0
    %660 = vmatprep.mubr.f32.mxu0 0.0
    %661 = vmatmul.mubr.f32.gmra.mxu0 %v436
    %v662 = vpop.f32.mrf.mxu0
    %v663 = vadd.f32 0.0, %v662
    %v664 = vpop.f32.mrf.mxu0
    %665 = vmatprep.mubr.f32.mxu0 0.0
    %666 = vmatmul.mubr.f32.gmra.mxu0 %v437
    %v667 = vpop.f32.mrf.mxu0
    %v668 = vadd.f32 0.0, %v667
    %v669 = vpop.f32.mrf.mxu0
    %670 = vmatprep.mubr.f32.mxu0 0.0
    %671 = vmatmul.mubr.f32.gmra.mxu0 %v438
    %v672 = vpop.f32.mrf.mxu0
    %v673 = vadd.f32 0.0, %v672
    %v674 = vpop.f32.mrf.mxu0
    %675 = vmatprep.mubr.f32.mxu0 0.0
    %676 = vmatmul.mubr.f32.gmra.mxu0 %v439
    %v677 = vpop.f32.mrf.mxu0
    %v678 = vadd.f32 0.0, %v677
    %v679 = vpop.f32.mrf.mxu0
    %680 = vmatprep.mubr.f32.mxu0 0.0
    %681 = vmatmul.mubr.f32.gmra.mxu0 %v440
    %v682 = vpop.f32.mrf.mxu0
    %v683 = vadd.f32 0.0, %v682
    %v684 = vpop.f32.mrf.mxu0
    %685 = vmatprep.mubr.f32.mxu0 0.0
    %686 = vmatmul.mubr.f32.gmra.mxu0 %v441
    %v687 = vpop.f32.mrf.mxu0
    %v688 = vadd.f32 0.0, %v687
    %v689 = vpop.f32.mrf.mxu0
    %690 = vmatprep.mubr.f32.mxu0 0.0
    %691 = vmatmul.mubr.f32.gmra.mxu0 %v442
    %v692 = vpop.f32.mrf.mxu0
    %v693 = vadd.f32 0.0, %v692
    %v694 = vpop.f32.mrf.mxu0
    %695 = vmatprep.mubr.f32.mxu0 0.0
    %696 = vmatmul.mubr.f32.gmra.mxu0 %v443
    %v697 = vpop.f32.mrf.mxu0
    %v698 = vadd.f32 0.0, %v697
    %v699 = vpop.f32.mrf.mxu0
    %700 = vmatprep.mubr.f32.mxu0 0.0
    %701 = vmatmul.mubr.f32.gmra.mxu0 %v444
    %v702 = vpop.f32.mrf.mxu0
    %v703 = vadd.f32 0.0, %v702
    %v704 = vpop.f32.mrf.mxu0
    %705 = vmatprep.mubr.f32.mxu0 0.0
    %706 = vmatmul.mubr.f32.gmra.mxu0 %v445
    %v707 = vpop.f32.mrf.mxu0
    %v708 = vadd.f32 0.0, %v707
    %v709 = vpop.f32.mrf.mxu0
    %710 = vmatprep.mubr.f32.mxu0 0.0
    %711 = vmatmul.mubr.f32.gmra.mxu0 %v446
    %v712 = vpop.f32.mrf.mxu0
    %v713 = vadd.f32 0.0, %v712
    %v714 = vpop.f32.mrf.mxu0
    %715 = vmatprep.mubr.f32.mxu0 0.0
    %716 = vmatmul.mubr.f32.gmra.mxu0 %v447
    %v717 = vpop.f32.mrf.mxu0
    %v718 = vadd.f32 0.0, %v717
    %v719 = vpop.f32.mrf.mxu0
    %720 = vmatprep.mubr.f32.mxu0 0.0
    %721 = vmatmul.mubr.f32.gmra.mxu0 %v448
    %v722 = vpop.f32.mrf.mxu0
    %v723 = vadd.f32 0.0, %v722
    %v724 = vpop.f32.mrf.mxu0
    %725 = vmatprep.mubr.f32.mxu0 0.0
    %726 = vmatmul.mubr.f32.gmra.mxu0 %v449
    %v727 = vpop.f32.mrf.mxu0
    %v728 = vadd.f32 0.0, %v727
    %v729 = vpop.f32.mrf.mxu0
    %730 = vmatprep.mubr.f32.mxu0 0.0
    %731 = vmatmul.mubr.f32.gmra.mxu0 %v450
    %v732 = vpop.f32.mrf.mxu0
    %v733 = vadd.f32 0.0, %v732
    %v734 = vpop.f32.mrf.mxu0
    %735 = vmatprep.mubr.f32.mxu0 0.0
    %736 = vmatmul.mubr.f32.gmra.mxu0 %v451
    %v737 = vpop.f32.mrf.mxu0
    %v738 = vadd.f32 0.0, %v737
    %v739 = vpop.f32.mrf.mxu0
    %740 = vmatprep.mubr.f32.mxu0 0.0
    %741 = vmatmul.mubr.f32.gmra.mxu0 %v452
    %v742 = vpop.f32.mrf.mxu0
    %v743 = vadd.f32 0.0, %v742
    %v744 = vpop.f32.mrf.mxu0
    %745 = vmatprep.mubr.f32.mxu0 0.0
    %746 = vmatmul.mubr.f32.gmra.mxu0 %v453
    %v747 = vpop.f32.mrf.mxu0
    %v748 = vadd.f32 0.0, %v747
    %v749 = vpop.f32.mrf.mxu0
    %750 = vmatprep.mubr.f32.mxu0 0.0
    %751 = vmatmul.mubr.f32.gmra.mxu0 %v454
    %v752 = vpop.f32.mrf.mxu0
    %v753 = vadd.f32 0.0, %v752
    %v754 = vpop.f32.mrf.mxu0
    %755 = vmatprep.mubr.f32.mxu0 0.0
    %756 = vmatmul.mubr.f32.gmra.mxu0 %v455
    %v757 = vpop.f32.mrf.mxu0
    %v758 = vadd.f32 0.0, %v757
    %v759 = vpop.f32.mrf.mxu0
    %760 = vdwg.mxu0
    %v761 = vmax.f32 %v170, %v523
    %v762 = vmax.f32 %v175, %v528
    %v763 = vmax.f32 %v180, %v533
    %v764 = vmax.f32 %v185, %v538
    %v765 = vmax.f32 %v190, %v543
    %v766 = vmax.f32 %v195, %v548
    %v767 = vmax.f32 %v200, %v553
    %v768 = vmax.f32 %v205, %v558
    %v769 = vmax.f32 %v210, %v563
    %v770 = vmax.f32 %v215, %v568
    %v771 = vmax.f32 %v220, %v573
    %v772 = vmax.f32 %v225, %v578
    %v773 = vmax.f32 %v230, %v583
    %v774 = vmax.f32 %v235, %v588
    %v775 = vmax.f32 %v240, %v593
    %v776 = vmax.f32 %v245, %v598
    %v777 = vmax.f32 %v250, %v603
    %v778 = vmax.f32 %v255, %v608
    %v779 = vmax.f32 %v260, %v613
    %v780 = vmax.f32 %v265, %v618
    %v781 = vmax.f32 %v270, %v623
    %v782 = vmax.f32 %v275, %v628
    %v783 = vmax.f32 %v280, %v633
    %v784 = vmax.f32 %v285, %v638
    %v785 = vmax.f32 %v290, %v643
    %v786 = vmax.f32 %v295, %v648
    %v787 = vmax.f32 %v300, %v653
    %v788 = vmax.f32 %v305, %v658
    %v789 = vmax.f32 %v310, %v663
    %v790 = vmax.f32 %v315, %v668
    %v791 = vmax.f32 %v320, %v673
    %v792 = vmax.f32 %v325, %v678
    %v793 = vmax.f32 %v330, %v683
    %v794 = vmax.f32 %v335, %v688
    %v795 = vmax.f32 %v340, %v693
    %v796 = vmax.f32 %v345, %v698
    %v797 = vmax.f32 %v350, %v703
    %v798 = vmax.f32 %v355, %v708
    %v799 = vmax.f32 %v360, %v713
    %v800 = vmax.f32 %v365, %v718
    %v801 = vmax.f32 %v370, %v723
    %v802 = vmax.f32 %v375, %v728
    %v803 = vmax.f32 %v380, %v733
    %v804 = vmax.f32 %v385, %v738
    %v805 = vmax.f32 %v390, %v743
    %v806 = vmax.f32 %v395, %v748
    %v807 = vmax.f32 %v400, %v753
    %v808 = vmax.f32 %v405, %v758
    %v809 = vld [vmem:[%s0 + $0x300] sm:$0xff]
    %v810 = vld [vmem:[%s0 + $0x308] sm:$0xff]
    %v811 = vld [vmem:[%s0 + $0x310] sm:$0xff]
    %v812 = vld [vmem:[%s0 + $0x318] sm:$0xff]
    %v813 = vld [vmem:[%s0 + $0x320] sm:$0xff]
    %v814 = vld [vmem:[%s0 + $0x328] sm:$0xff]
    %v815 = vld [vmem:[%s0 + $0x330] sm:$0xff]
    %v816 = vld [vmem:[%s0 + $0x338] sm:$0xff]
    %v817 = vld [vmem:[%s0 + $0x340] sm:$0xff]
    %v818 = vld [vmem:[%s0 + $0x348] sm:$0xff]
    %v819 = vld [vmem:[%s0 + $0x350] sm:$0xff]
    %v820 = vld [vmem:[%s0 + $0x358] sm:$0xff]
    %v821 = vld [vmem:[%s0 + $0x360] sm:$0xff]
    %v822 = vld [vmem:[%s0 + $0x368] sm:$0xff]
    %v823 = vld [vmem:[%s0 + $0x370] sm:$0xff]
    %v824 = vld [vmem:[%s0 + $0x378] sm:$0xff]
    %v825 = vld [vmem:[%s0 + $0x380] sm:$0xff]
    %v826 = vld [vmem:[%s0 + $0x388] sm:$0xff]
    %v827 = vld [vmem:[%s0 + $0x390] sm:$0xff]
    %v828 = vld [vmem:[%s0 + $0x398] sm:$0xff]
    %v829 = vld [vmem:[%s0 + $0x3a0] sm:$0xff]
    %v830 = vld [vmem:[%s0 + $0x3a8] sm:$0xff]
    %v831 = vld [vmem:[%s0 + $0x3b0] sm:$0xff]
    %v832 = vld [vmem:[%s0 + $0x3b8] sm:$0xff]
    %v833 = vld [vmem:[%s0 + $0x3c0] sm:$0xff]
    %v834 = vld [vmem:[%s0 + $0x3c8] sm:$0xff]
    %v835 = vld [vmem:[%s0 + $0x3d0] sm:$0xff]
    %v836 = vld [vmem:[%s0 + $0x3d8] sm:$0xff]
    %v837 = vld [vmem:[%s0 + $0x3e0] sm:$0xff]
    %v838 = vld [vmem:[%s0 + $0x3e8] sm:$0xff]
    %v839 = vld [vmem:[%s0 + $0x3f0] sm:$0xff]
    %v840 = vld [vmem:[%s0 + $0x3f8] sm:$0xff]
    %v841 = vld [vmem:[%s0 + $0x400] sm:$0xff]
    %v842 = vld [vmem:[%s0 + $0x408] sm:$0xff]
    %v843 = vld [vmem:[%s0 + $0x410] sm:$0xff]
    %v844 = vld [vmem:[%s0 + $0x418] sm:$0xff]
    %v845 = vld [vmem:[%s0 + $0x420] sm:$0xff]
    %v846 = vld [vmem:[%s0 + $0x428] sm:$0xff]
    %v847 = vld [vmem:[%s0 + $0x430] sm:$0xff]
    %v848 = vld [vmem:[%s0 + $0x438] sm:$0xff]
    %v849 = vld [vmem:[%s0 + $0x440] sm:$0xff]
    %v850 = vld [vmem:[%s0 + $0x448] sm:$0xff]
    %v851 = vld [vmem:[%s0 + $0x450] sm:$0xff]
    %v852 = vld [vmem:[%s0 + $0x458] sm:$0xff]
    %v853 = vld [vmem:[%s0 + $0x460] sm:$0xff]
    %v854 = vld [vmem:[%s0 + $0x468] sm:$0xff]
    %v855 = vld [vmem:[%s0 + $0x470] sm:$0xff]
    %v856 = vld [vmem:[%s0 + $0x478] sm:$0xff]
    %857 = vmatprep.subr.mxu0 0.0
    %858 = vmatpush1.msra.mxu0 %v54
    %859 = vmatprep.subr.mxu0 0.0
    %860 = vmatpush1.msra.mxu0 %v53
    %861 = vmatprep.subr.mxu0 0.0
    %862 = vmatpush1.msra.mxu0 %v52
    %863 = vmatprep.subr.mxu0 0.0
    %864 = vmatpush1.msra.mxu0 %v51
    %865 = vmatprep.subr.mxu0 0.0
    %866 = vmatpush1.msra.mxu0 %v50
    %867 = vmatprep.subr.mxu0 0.0
    %868 = vmatpush1.msra.mxu0 %v49
    %869 = vmatprep.subr.mxu0 0.0
    %870 = vmatpush1.msra.mxu0 %v48
    %871 = vmatprep.subr.mxu0 0.0
    %872 = vmatpush1.msra.mxu0 %v47
    %873 = vmatprep.subr.mxu0 0.0
    %874 = vmatpush1.msra.mxu0 %v46
    %875 = vmatprep.subr.mxu0 0.0
    %876 = vmatpush1.msra.mxu0 %v45
    %877 = vmatprep.subr.mxu0 0.0
    %878 = vmatpush1.msra.mxu0 %v44
    %879 = vmatprep.subr.mxu0 0.0
    %880 = vmatpush1.msra.mxu0 %v43
    %881 = vmatprep.subr.mxu0 0.0
    %882 = vmatpush1.msra.mxu0 %v42
    %883 = vmatprep.subr.mxu0 0.0
    %884 = vmatpush1.msra.mxu0 %v41
    %885 = vmatprep.subr.mxu0 0.0
    %886 = vmatpush1.msra.mxu0 %v40
    %887 = vmatprep.subr.mxu0 0.0
    %888 = vmatpush1.msra.mxu0 %v39
    %889 = vmatprep.subr.mxu0 0.0
    %890 = vmatpush2.msra.mxu0 0.0
    %891 = vmatprep.subr.mxu0 0.0
    %892 = vmatpush2.msra.mxu0 0.0
    %893 = vmatprep.subr.mxu0 0.0
    %894 = vmatpush2.msra.mxu0 0.0
    %895 = vmatprep.subr.mxu0 0.0
    %896 = vmatpush2.msra.mxu0 0.0
    %897 = vmatprep.subr.mxu0 0.0
    %898 = vmatpush2.msra.mxu0 0.0
    %899 = vmatprep.subr.mxu0 0.0
    %900 = vmatpush2.msra.mxu0 0.0
    %901 = vmatprep.subr.mxu0 0.0
    %902 = vmatpush2.msra.mxu0 0.0
    %903 = vmatprep.subr.mxu0 0.0
    %904 = vmatpush2.msra.mxu0 0.0
    %905 = vmatprep.subr.mxu0 0.0
    %906 = vmatpush2.msra.mxu0 0.0
    %907 = vmatprep.subr.mxu0 0.0
    %908 = vmatpush2.msra.mxu0 0.0
    %909 = vmatprep.subr.mxu0 0.0
    %910 = vmatpush2.msra.mxu0 0.0
    %911 = vmatprep.subr.mxu0 0.0
    %912 = vmatpush2.msra.mxu0 0.0
    %913 = vmatprep.subr.mxu0 0.0
    %914 = vmatpush2.msra.mxu0 0.0
    %915 = vmatprep.subr.mxu0 0.0
    %916 = vmatpush2.msra.mxu0 0.0
    %917 = vmatprep.subr.mxu0 0.0
    %918 = vmatpush2.msra.mxu0 0.0
    %919 = vmatprep.subr.mxu0 0.0
    %920 = vmatpush2.msra.mxu0 0.0
    %921 = vmatprep.mubr.f32.mxu0 0.0
    %922 = vmatmul.mubr.f32.gmra.mxu0 %v809
    %v923 = vpop.f32.mrf.mxu0
    %v924 = vadd.f32 0.0, %v923
    %v925 = vpop.f32.mrf.mxu0
    %926 = vmatprep.mubr.f32.mxu0 0.0
    %927 = vmatmul.mubr.f32.gmra.mxu0 %v810
    %v928 = vpop.f32.mrf.mxu0
    %v929 = vadd.f32 0.0, %v928
    %v930 = vpop.f32.mrf.mxu0
    %931 = vmatprep.mubr.f32.mxu0 0.0
    %932 = vmatmul.mubr.f32.gmra.mxu0 %v811
    %v933 = vpop.f32.mrf.mxu0
    %v934 = vadd.f32 0.0, %v933
    %v935 = vpop.f32.mrf.mxu0
    %936 = vmatprep.mubr.f32.mxu0 0.0
    %937 = vmatmul.mubr.f32.gmra.mxu0 %v812
    %v938 = vpop.f32.mrf.mxu0
    %v939 = vadd.f32 0.0, %v938
    %v940 = vpop.f32.mrf.mxu0
    %941 = vmatprep.mubr.f32.mxu0 0.0
    %942 = vmatmul.mubr.f32.gmra.mxu0 %v813
    %v943 = vpop.f32.mrf.mxu0
    %v944 = vadd.f32 0.0, %v943
    %v945 = vpop.f32.mrf.mxu0
    %946 = vmatprep.mubr.f32.mxu0 0.0
    %947 = vmatmul.mubr.f32.gmra.mxu0 %v814
    %v948 = vpop.f32.mrf.mxu0
    %v949 = vadd.f32 0.0, %v948
    %v950 = vpop.f32.mrf.mxu0
    %951 = vmatprep.mubr.f32.mxu0 0.0
    %952 = vmatmul.mubr.f32.gmra.mxu0 %v815
    %v953 = vpop.f32.mrf.mxu0
    %v954 = vadd.f32 0.0, %v953
    %v955 = vpop.f32.mrf.mxu0
    %956 = vmatprep.mubr.f32.mxu0 0.0
    %957 = vmatmul.mubr.f32.gmra.mxu0 %v816
    %v958 = vpop.f32.mrf.mxu0
    %v959 = vadd.f32 0.0, %v958
    %v960 = vpop.f32.mrf.mxu0
    %961 = vmatprep.mubr.f32.mxu0 0.0
    %962 = vmatmul.mubr.f32.gmra.mxu0 %v817
    %v963 = vpop.f32.mrf.mxu0
    %v964 = vadd.f32 0.0, %v963
    %v965 = vpop.f32.mrf.mxu0
    %966 = vmatprep.mubr.f32.mxu0 0.0
    %967 = vmatmul.mubr.f32.gmra.mxu0 %v818
    %v968 = vpop.f32.mrf.mxu0
    %v969 = vadd.f32 0.0, %v968
    %v970 = vpop.f32.mrf.mxu0
    %971 = vmatprep.mubr.f32.mxu0 0.0
    %972 = vmatmul.mubr.f32.gmra.mxu0 %v819
    %v973 = vpop.f32.mrf.mxu0
    %v974 = vadd.f32 0.0, %v973
    %v975 = vpop.f32.mrf.mxu0
    %976 = vmatprep.mubr.f32.mxu0 0.0
    %977 = vmatmul.mubr.f32.gmra.mxu0 %v820
    %v978 = vpop.f32.mrf.mxu0
    %v979 = vadd.f32 0.0, %v978
    %v980 = vpop.f32.mrf.mxu0
    %981 = vmatprep.mubr.f32.mxu0 0.0
    %982 = vmatmul.mubr.f32.gmra.mxu0 %v821
    %v983 = vpop.f32.mrf.mxu0
    %v984 = vadd.f32 0.0, %v983
    %v985 = vpop.f32.mrf.mxu0
    %986 = vmatprep.mubr.f32.mxu0 0.0
    %987 = vmatmul.mubr.f32.gmra.mxu0 %v822
    %v988 = vpop.f32.mrf.mxu0
    %v989 = vadd.f32 0.0, %v988
    %v990 = vpop.f32.mrf.mxu0
    %991 = vmatprep.mubr.f32.mxu0 0.0
    %992 = vmatmul.mubr.f32.gmra.mxu0 %v823
    %v993 = vpop.f32.mrf.mxu0
    %v994 = vadd.f32 0.0, %v993
    %v995 = vpop.f32.mrf.mxu0
    %996 = vmatprep.mubr.f32.mxu0 0.0
    %997 = vmatmul.mubr.f32.gmra.mxu0 %v824
    %v998 = vpop.f32.mrf.mxu0
    %v999 = vadd.f32 0.0, %v998
    %v1000 = vpop.f32.mrf.mxu0
    %1001 = vmatprep.mubr.f32.mxu0 0.0
    %1002 = vmatmul.mubr.f32.gmra.mxu0 %v825
    %v1003 = vpop.f32.mrf.mxu0
    %v1004 = vadd.f32 0.0, %v1003
    %v1005 = vpop.f32.mrf.mxu0
    %1006 = vmatprep.mubr.f32.mxu0 0.0
    %1007 = vmatmul.mubr.f32.gmra.mxu0 %v826
    %v1008 = vpop.f32.mrf.mxu0
    %v1009 = vadd.f32 0.0, %v1008
    %v1010 = vpop.f32.mrf.mxu0
    %1011 = vmatprep.mubr.f32.mxu0 0.0
    %1012 = vmatmul.mubr.f32.gmra.mxu0 %v827
    %v1013 = vpop.f32.mrf.mxu0
    %v1014 = vadd.f32 0.0, %v1013
    %v1015 = vpop.f32.mrf.mxu0
    %1016 = vmatprep.mubr.f32.mxu0 0.0
    %1017 = vmatmul.mubr.f32.gmra.mxu0 %v828
    %v1018 = vpop.f32.mrf.mxu0
    %v1019 = vadd.f32 0.0, %v1018
    %v1020 = vpop.f32.mrf.mxu0
    %1021 = vmatprep.mubr.f32.mxu0 0.0
    %1022 = vmatmul.mubr.f32.gmra.mxu0 %v829
    %v1023 = vpop.f32.mrf.mxu0
    %v1024 = vadd.f32 0.0, %v1023
    %v1025 = vpop.f32.mrf.mxu0
    %1026 = vmatprep.mubr.f32.mxu0 0.0
    %1027 = vmatmul.mubr.f32.gmra.mxu0 %v830
    %v1028 = vpop.f32.mrf.mxu0
    %v1029 = vadd.f32 0.0, %v1028
    %v1030 = vpop.f32.mrf.mxu0
    %1031 = vmatprep.mubr.f32.mxu0 0.0
    %1032 = vmatmul.mubr.f32.gmra.mxu0 %v831
    %v1033 = vpop.f32.mrf.mxu0
    %v1034 = vadd.f32 0.0, %v1033
    %v1035 = vpop.f32.mrf.mxu0
    %1036 = vmatprep.mubr.f32.mxu0 0.0
    %1037 = vmatmul.mubr.f32.gmra.mxu0 %v832
    %v1038 = vpop.f32.mrf.mxu0
    %v1039 = vadd.f32 0.0, %v1038
    %v1040 = vpop.f32.mrf.mxu0
    %1041 = vmatprep.mubr.f32.mxu0 0.0
    %1042 = vmatmul.mubr.f32.gmra.mxu0 %v833
    %v1043 = vpop.f32.mrf.mxu0
    %v1044 = vadd.f32 0.0, %v1043
    %v1045 = vpop.f32.mrf.mxu0
    %1046 = vmatprep.mubr.f32.mxu0 0.0
    %1047 = vmatmul.mubr.f32.gmra.mxu0 %v834
    %v1048 = vpop.f32.mrf.mxu0
    %v1049 = vadd.f32 0.0, %v1048
    %v1050 = vpop.f32.mrf.mxu0
    %1051 = vmatprep.mubr.f32.mxu0 0.0
    %1052 = vmatmul.mubr.f32.gmra.mxu0 %v835
    %v1053 = vpop.f32.mrf.mxu0
    %v1054 = vadd.f32 0.0, %v1053
    %v1055 = vpop.f32.mrf.mxu0
    %1056 = vmatprep.mubr.f32.mxu0 0.0
    %1057 = vmatmul.mubr.f32.gmra.mxu0 %v836
    %v1058 = vpop.f32.mrf.mxu0
    %v1059 = vadd.f32 0.0, %v1058
    %v1060 = vpop.f32.mrf.mxu0
    %1061 = vmatprep.mubr.f32.mxu0 0.0
    %1062 = vmatmul.mubr.f32.gmra.mxu0 %v837
    %v1063 = vpop.f32.mrf.mxu0
    %v1064 = vadd.f32 0.0, %v1063
    %v1065 = vpop.f32.mrf.mxu0
    %1066 = vmatprep.mubr.f32.mxu0 0.0
    %1067 = vmatmul.mubr.f32.gmra.mxu0 %v838
    %v1068 = vpop.f32.mrf.mxu0
    %v1069 = vadd.f32 0.0, %v1068
    %v1070 = vpop.f32.mrf.mxu0
    %1071 = vmatprep.mubr.f32.mxu0 0.0
    %1072 = vmatmul.mubr.f32.gmra.mxu0 %v839
    %v1073 = vpop.f32.mrf.mxu0
    %v1074 = vadd.f32 0.0, %v1073
    %v1075 = vpop.f32.mrf.mxu0
    %1076 = vmatprep.mubr.f32.mxu0 0.0
    %1077 = vmatmul.mubr.f32.gmra.mxu0 %v840
    %v1078 = vpop.f32.mrf.mxu0
    %v1079 = vadd.f32 0.0, %v1078
    %v1080 = vpop.f32.mrf.mxu0
    %1081 = vmatprep.mubr.f32.mxu0 0.0
    %1082 = vmatmul.mubr.f32.gmra.mxu0 %v841
    %v1083 = vpop.f32.mrf.mxu0
    %v1084 = vadd.f32 0.0, %v1083
    %v1085 = vpop.f32.mrf.mxu0
    %1086 = vmatprep.mubr.f32.mxu0 0.0
    %1087 = vmatmul.mubr.f32.gmra.mxu0 %v842
    %v1088 = vpop.f32.mrf.mxu0
    %v1089 = vadd.f32 0.0, %v1088
    %v1090 = vpop.f32.mrf.mxu0
    %1091 = vmatprep.mubr.f32.mxu0 0.0
    %1092 = vmatmul.mubr.f32.gmra.mxu0 %v843
    %v1093 = vpop.f32.mrf.mxu0
    %v1094 = vadd.f32 0.0, %v1093
    %v1095 = vpop.f32.mrf.mxu0
    %1096 = vmatprep.mubr.f32.mxu0 0.0
    %1097 = vmatmul.mubr.f32.gmra.mxu0 %v844
    %v1098 = vpop.f32.mrf.mxu0
    %v1099 = vadd.f32 0.0, %v1098
    %v1100 = vpop.f32.mrf.mxu0
    %1101 = vmatprep.mubr.f32.mxu0 0.0
    %1102 = vmatmul.mubr.f32.gmra.mxu0 %v845
    %v1103 = vpop.f32.mrf.mxu0
    %v1104 = vadd.f32 0.0, %v1103
    %v1105 = vpop.f32.mrf.mxu0
    %1106 = vmatprep.mubr.f32.mxu0 0.0
    %1107 = vmatmul.mubr.f32.gmra.mxu0 %v846
    %v1108 = vpop.f32.mrf.mxu0
    %v1109 = vadd.f32 0.0, %v1108
    %v1110 = vpop.f32.mrf.mxu0
    %1111 = vmatprep.mubr.f32.mxu0 0.0
    %1112 = vmatmul.mubr.f32.gmra.mxu0 %v847
    %v1113 = vpop.f32.mrf.mxu0
    %v1114 = vadd.f32 0.0, %v1113
    %v1115 = vpop.f32.mrf.mxu0
    %1116 = vmatprep.mubr.f32.mxu0 0.0
    %1117 = vmatmul.mubr.f32.gmra.mxu0 %v848
    %v1118 = vpop.f32.mrf.mxu0
    %v1119 = vadd.f32 0.0, %v1118
    %v1120 = vpop.f32.mrf.mxu0
    %1121 = vmatprep.mubr.f32.mxu0 0.0
    %1122 = vmatmul.mubr.f32.gmra.mxu0 %v849
    %v1123 = vpop.f32.mrf.mxu0
    %v1124 = vadd.f32 0.0, %v1123
    %v1125 = vpop.f32.mrf.mxu0
    %1126 = vmatprep.mubr.f32.mxu0 0.0
    %1127 = vmatmul.mubr.f32.gmra.mxu0 %v850
    %v1128 = vpop.f32.mrf.mxu0
    %v1129 = vadd.f32 0.0, %v1128
    %v1130 = vpop.f32.mrf.mxu0
    %1131 = vmatprep.mubr.f32.mxu0 0.0
    %1132 = vmatmul.mubr.f32.gmra.mxu0 %v851
    %v1133 = vpop.f32.mrf.mxu0
    %v1134 = vadd.f32 0.0, %v1133
    %v1135 = vpop.f32.mrf.mxu0
    %1136 = vmatprep.mubr.f32.mxu0 0.0
    %1137 = vmatmul.mubr.f32.gmra.mxu0 %v852
    %v1138 = vpop.f32.mrf.mxu0
    %v1139 = vadd.f32 0.0, %v1138
    %v1140 = vpop.f32.mrf.mxu0
    %1141 = vmatprep.mubr.f32.mxu0 0.0
    %1142 = vmatmul.mubr.f32.gmra.mxu0 %v853
    %v1143 = vpop.f32.mrf.mxu0
    %v1144 = vadd.f32 0.0, %v1143
    %v1145 = vpop.f32.mrf.mxu0
    %1146 = vmatprep.mubr.f32.mxu0 0.0
    %1147 = vmatmul.mubr.f32.gmra.mxu0 %v854
    %v1148 = vpop.f32.mrf.mxu0
    %v1149 = vadd.f32 0.0, %v1148
    %v1150 = vpop.f32.mrf.mxu0
    %1151 = vmatprep.mubr.f32.mxu0 0.0
    %1152 = vmatmul.mubr.f32.gmra.mxu0 %v855
    %v1153 = vpop.f32.mrf.mxu0
    %v1154 = vadd.f32 0.0, %v1153
    %v1155 = vpop.f32.mrf.mxu0
    %1156 = vmatprep.mubr.f32.mxu0 0.0
    %1157 = vmatmul.mubr.f32.gmra.mxu0 %v856
    %v1158 = vpop.f32.mrf.mxu0
    %v1159 = vadd.f32 0.0, %v1158
    %v1160 = vpop.f32.mrf.mxu0
    %1161 = vdwg.mxu0
    %v1162 = vmax.f32 %v761, %v924
    %v1163 = vmax.f32 %v762, %v929
    %v1164 = vmax.f32 %v763, %v934
    %v1165 = vmax.f32 %v764, %v939
    %v1166 = vmax.f32 %v765, %v944
    %v1167 = vmax.f32 %v766, %v949
    %v1168 = vmax.f32 %v767, %v954
    %v1169 = vmax.f32 %v768, %v959
    %v1170 = vmax.f32 %v769, %v964
    %v1171 = vmax.f32 %v770, %v969
    %v1172 = vmax.f32 %v771, %v974
    %v1173 = vmax.f32 %v772, %v979
    %v1174 = vmax.f32 %v773, %v984
    %v1175 = vmax.f32 %v774, %v989
    %v1176 = vmax.f32 %v775, %v994
    %v1177 = vmax.f32 %v776, %v999
    %v1178 = vmax.f32 %v777, %v1004
    %v1179 = vmax.f32 %v778, %v1009
    %v1180 = vmax.f32 %v779, %v1014
    %v1181 = vmax.f32 %v780, %v1019
    %v1182 = vmax.f32 %v781, %v1024
    %v1183 = vmax.f32 %v782, %v1029
    %v1184 = vmax.f32 %v783, %v1034
    %v1185 = vmax.f32 %v784, %v1039
    %v1186 = vmax.f32 %v785, %v1044
    %v1187 = vmax.f32 %v786, %v1049
    %v1188 = vmax.f32 %v787, %v1054
    %v1189 = vmax.f32 %v788, %v1059
    %v1190 = vmax.f32 %v789, %v1064
    %v1191 = vmax.f32 %v790, %v1069
    %v1192 = vmax.f32 %v791, %v1074
    %v1193 = vmax.f32 %v792, %v1079
    %v1194 = vmax.f32 %v793, %v1084
    %v1195 = vmax.f32 %v794, %v1089
    %v1196 = vmax.f32 %v795, %v1094
    %v1197 = vmax.f32 %v796, %v1099
    %v1198 = vmax.f32 %v797, %v1104
    %v1199 = vmax.f32 %v798, %v1109
    %v1200 = vmax.f32 %v799, %v1114
    %v1201 = vmax.f32 %v800, %v1119
    %v1202 = vmax.f32 %v801, %v1124
    %v1203 = vmax.f32 %v802, %v1129
    %v1204 = vmax.f32 %v803, %v1134
    %v1205 = vmax.f32 %v804, %v1139
    %v1206 = vmax.f32 %v805, %v1144
    %v1207 = vmax.f32 %v806, %v1149
    %v1208 = vmax.f32 %v807, %v1154
    %v1209 = vmax.f32 %v808, %v1159
    %v1210 = vld [vmem:[%s0 + $0x480] sm:$0xff]
    %v1211 = vld [vmem:[%s0 + $0x488] sm:$0xff]
    %v1212 = vld [vmem:[%s0 + $0x490] sm:$0xff]
    %v1213 = vld [vmem:[%s0 + $0x498] sm:$0xff]
    %v1214 = vld [vmem:[%s0 + $0x4a0] sm:$0xff]
    %v1215 = vld [vmem:[%s0 + $0x4a8] sm:$0xff]
    %v1216 = vld [vmem:[%s0 + $0x4b0] sm:$0xff]
    %v1217 = vld [vmem:[%s0 + $0x4b8] sm:$0xff]
    %v1218 = vld [vmem:[%s0 + $0x4c0] sm:$0xff]
    %v1219 = vld [vmem:[%s0 + $0x4c8] sm:$0xff]
    %v1220 = vld [vmem:[%s0 + $0x4d0] sm:$0xff]
    %v1221 = vld [vmem:[%s0 + $0x4d8] sm:$0xff]
    %v1222 = vld [vmem:[%s0 + $0x4e0] sm:$0xff]
    %v1223 = vld [vmem:[%s0 + $0x4e8] sm:$0xff]
    %v1224 = vld [vmem:[%s0 + $0x4f0] sm:$0xff]
    %v1225 = vld [vmem:[%s0 + $0x4f8] sm:$0xff]
    %v1226 = vld [vmem:[%s0 + $0x500] sm:$0xff]
    %v1227 = vld [vmem:[%s0 + $0x508] sm:$0xff]
    %v1228 = vld [vmem:[%s0 + $0x510] sm:$0xff]
    %v1229 = vld [vmem:[%s0 + $0x518] sm:$0xff]
    %v1230 = vld [vmem:[%s0 + $0x520] sm:$0xff]
    %v1231 = vld [vmem:[%s0 + $0x528] sm:$0xff]
    %v1232 = vld [vmem:[%s0 + $0x530] sm:$0xff]
    %v1233 = vld [vmem:[%s0 + $0x538] sm:$0xff]
    %v1234 = vld [vmem:[%s0 + $0x540] sm:$0xff]
    %v1235 = vld [vmem:[%s0 + $0x548] sm:$0xff]
    %v1236 = vld [vmem:[%s0 + $0x550] sm:$0xff]
    %v1237 = vld [vmem:[%s0 + $0x558] sm:$0xff]
    %v1238 = vld [vmem:[%s0 + $0x560] sm:$0xff]
    %v1239 = vld [vmem:[%s0 + $0x568] sm:$0xff]
    %v1240 = vld [vmem:[%s0 + $0x570] sm:$0xff]
    %v1241 = vld [vmem:[%s0 + $0x578] sm:$0xff]
    %v1242 = vld [vmem:[%s0 + $0x580] sm:$0xff]
    %v1243 = vld [vmem:[%s0 + $0x588] sm:$0xff]
    %v1244 = vld [vmem:[%s0 + $0x590] sm:$0xff]
    %v1245 = vld [vmem:[%s0 + $0x598] sm:$0xff]
    %v1246 = vld [vmem:[%s0 + $0x5a0] sm:$0xff]
    %v1247 = vld [vmem:[%s0 + $0x5a8] sm:$0xff]
    %v1248 = vld [vmem:[%s0 + $0x5b0] sm:$0xff]
    %v1249 = vld [vmem:[%s0 + $0x5b8] sm:$0xff]
    %v1250 = vld [vmem:[%s0 + $0x5c0] sm:$0xff]
    %v1251 = vld [vmem:[%s0 + $0x5c8] sm:$0xff]
    %v1252 = vld [vmem:[%s0 + $0x5d0] sm:$0xff]
    %v1253 = vld [vmem:[%s0 + $0x5d8] sm:$0xff]
    %v1254 = vld [vmem:[%s0 + $0x5e0] sm:$0xff]
    %v1255 = vld [vmem:[%s0 + $0x5e8] sm:$0xff]
    %v1256 = vld [vmem:[%s0 + $0x5f0] sm:$0xff]
    %v1257 = vld [vmem:[%s0 + $0x5f8] sm:$0xff]
    %1258 = vmatprep.subr.mxu0 0.0
    %1259 = vmatpush1.msra.mxu0 %v54
    %1260 = vmatprep.subr.mxu0 0.0
    %1261 = vmatpush1.msra.mxu0 %v53
    %1262 = vmatprep.subr.mxu0 0.0
    %1263 = vmatpush1.msra.mxu0 %v52
    %1264 = vmatprep.subr.mxu0 0.0
    %1265 = vmatpush1.msra.mxu0 %v51
    %1266 = vmatprep.subr.mxu0 0.0
    %1267 = vmatpush1.msra.mxu0 %v50
    %1268 = vmatprep.subr.mxu0 0.0
    %1269 = vmatpush1.msra.mxu0 %v49
    %1270 = vmatprep.subr.mxu0 0.0
    %1271 = vmatpush1.msra.mxu0 %v48
    %1272 = vmatprep.subr.mxu0 0.0
    %1273 = vmatpush1.msra.mxu0 %v47
    %1274 = vmatprep.subr.mxu0 0.0
    %1275 = vmatpush1.msra.mxu0 %v46
    %1276 = vmatprep.subr.mxu0 0.0
    %1277 = vmatpush1.msra.mxu0 %v45
    %1278 = vmatprep.subr.mxu0 0.0
    %1279 = vmatpush1.msra.mxu0 %v44
    %1280 = vmatprep.subr.mxu0 0.0
    %1281 = vmatpush1.msra.mxu0 %v43
    %1282 = vmatprep.subr.mxu0 0.0
    %1283 = vmatpush1.msra.mxu0 %v42
    %1284 = vmatprep.subr.mxu0 0.0
    %1285 = vmatpush1.msra.mxu0 %v41
    %1286 = vmatprep.subr.mxu0 0.0
    %1287 = vmatpush1.msra.mxu0 %v40
    %1288 = vmatprep.subr.mxu0 0.0
    %1289 = vmatpush1.msra.mxu0 %v39
    %1290 = vmatprep.subr.mxu0 0.0
    %1291 = vmatpush2.msra.mxu0 0.0
    %1292 = vmatprep.subr.mxu0 0.0
    %1293 = vmatpush2.msra.mxu0 0.0
    %1294 = vmatprep.subr.mxu0 0.0
    %1295 = vmatpush2.msra.mxu0 0.0
    %1296 = vmatprep.subr.mxu0 0.0
    %1297 = vmatpush2.msra.mxu0 0.0
    %1298 = vmatprep.subr.mxu0 0.0
    %1299 = vmatpush2.msra.mxu0 0.0
    %1300 = vmatprep.subr.mxu0 0.0
    %1301 = vmatpush2.msra.mxu0 0.0
    %1302 = vmatprep.subr.mxu0 0.0
    %1303 = vmatpush2.msra.mxu0 0.0
    %1304 = vmatprep.subr.mxu0 0.0
    %1305 = vmatpush2.msra.mxu0 0.0
    %1306 = vmatprep.subr.mxu0 0.0
    %1307 = vmatpush2.msra.mxu0 0.0
    %1308 = vmatprep.subr.mxu0 0.0
    %1309 = vmatpush2.msra.mxu0 0.0
    %1310 = vmatprep.subr.mxu0 0.0
    %1311 = vmatpush2.msra.mxu0 0.0
    %1312 = vmatprep.subr.mxu0 0.0
    %1313 = vmatpush2.msra.mxu0 0.0
    %1314 = vmatprep.subr.mxu0 0.0
    %1315 = vmatpush2.msra.mxu0 0.0
    %1316 = vmatprep.subr.mxu0 0.0
    %1317 = vmatpush2.msra.mxu0 0.0
    %1318 = vmatprep.subr.mxu0 0.0
    %1319 = vmatpush2.msra.mxu0 0.0
    %1320 = vmatprep.subr.mxu0 0.0
    %1321 = vmatpush2.msra.mxu0 0.0
    %1322 = vmatprep.mubr.f32.mxu0 0.0
    %1323 = vmatmul.mubr.f32.gmra.mxu0 %v1210
    %v1324 = vpop.f32.mrf.mxu0
    %v1325 = vadd.f32 0.0, %v1324
    %v1326 = vpop.f32.mrf.mxu0
    %1327 = vmatprep.mubr.f32.mxu0 0.0
    %1328 = vmatmul.mubr.f32.gmra.mxu0 %v1211
    %v1329 = vpop.f32.mrf.mxu0
    %v1330 = vadd.f32 0.0, %v1329
    %v1331 = vpop.f32.mrf.mxu0
    %1332 = vmatprep.mubr.f32.mxu0 0.0
    %1333 = vmatmul.mubr.f32.gmra.mxu0 %v1212
    %v1334 = vpop.f32.mrf.mxu0
    %v1335 = vadd.f32 0.0, %v1334
    %v1336 = vpop.f32.mrf.mxu0
    %1337 = vmatprep.mubr.f32.mxu0 0.0
    %1338 = vmatmul.mubr.f32.gmra.mxu0 %v1213
    %v1339 = vpop.f32.mrf.mxu0
    %v1340 = vadd.f32 0.0, %v1339
    %v1341 = vpop.f32.mrf.mxu0
    %1342 = vmatprep.mubr.f32.mxu0 0.0
    %1343 = vmatmul.mubr.f32.gmra.mxu0 %v1214
    %v1344 = vpop.f32.mrf.mxu0
    %v1345 = vadd.f32 0.0, %v1344
    %v1346 = vpop.f32.mrf.mxu0
    %1347 = vmatprep.mubr.f32.mxu0 0.0
    %1348 = vmatmul.mubr.f32.gmra.mxu0 %v1215
    %v1349 = vpop.f32.mrf.mxu0
    %v1350 = vadd.f32 0.0, %v1349
    %v1351 = vpop.f32.mrf.mxu0
    %1352 = vmatprep.mubr.f32.mxu0 0.0
    %1353 = vmatmul.mubr.f32.gmra.mxu0 %v1216
    %v1354 = vpop.f32.mrf.mxu0
    %v1355 = vadd.f32 0.0, %v1354
    %v1356 = vpop.f32.mrf.mxu0
    %1357 = vmatprep.mubr.f32.mxu0 0.0
    %1358 = vmatmul.mubr.f32.gmra.mxu0 %v1217
    %v1359 = vpop.f32.mrf.mxu0
    %v1360 = vadd.f32 0.0, %v1359
    %v1361 = vpop.f32.mrf.mxu0
    %1362 = vmatprep.mubr.f32.mxu0 0.0
    %1363 = vmatmul.mubr.f32.gmra.mxu0 %v1218
    %v1364 = vpop.f32.mrf.mxu0
    %v1365 = vadd.f32 0.0, %v1364
    %v1366 = vpop.f32.mrf.mxu0
    %1367 = vmatprep.mubr.f32.mxu0 0.0
    %1368 = vmatmul.mubr.f32.gmra.mxu0 %v1219
    %v1369 = vpop.f32.mrf.mxu0
    %v1370 = vadd.f32 0.0, %v1369
    %v1371 = vpop.f32.mrf.mxu0
    %1372 = vmatprep.mubr.f32.mxu0 0.0
    %1373 = vmatmul.mubr.f32.gmra.mxu0 %v1220
    %v1374 = vpop.f32.mrf.mxu0
    %v1375 = vadd.f32 0.0, %v1374
    %v1376 = vpop.f32.mrf.mxu0
    %1377 = vmatprep.mubr.f32.mxu0 0.0
    %1378 = vmatmul.mubr.f32.gmra.mxu0 %v1221
    %v1379 = vpop.f32.mrf.mxu0
    %v1380 = vadd.f32 0.0, %v1379
    %v1381 = vpop.f32.mrf.mxu0
    %1382 = vmatprep.mubr.f32.mxu0 0.0
    %1383 = vmatmul.mubr.f32.gmra.mxu0 %v1222
    %v1384 = vpop.f32.mrf.mxu0
    %v1385 = vadd.f32 0.0, %v1384
    %v1386 = vpop.f32.mrf.mxu0
    %1387 = vmatprep.mubr.f32.mxu0 0.0
    %1388 = vmatmul.mubr.f32.gmra.mxu0 %v1223
    %v1389 = vpop.f32.mrf.mxu0
    %v1390 = vadd.f32 0.0, %v1389
    %v1391 = vpop.f32.mrf.mxu0
    %1392 = vmatprep.mubr.f32.mxu0 0.0
    %1393 = vmatmul.mubr.f32.gmra.mxu0 %v1224
    %v1394 = vpop.f32.mrf.mxu0
    %v1395 = vadd.f32 0.0, %v1394
    %v1396 = vpop.f32.mrf.mxu0
    %1397 = vmatprep.mubr.f32.mxu0 0.0
    %1398 = vmatmul.mubr.f32.gmra.mxu0 %v1225
    %v1399 = vpop.f32.mrf.mxu0
    %v1400 = vadd.f32 0.0, %v1399
    %v1401 = vpop.f32.mrf.mxu0
    %1402 = vmatprep.mubr.f32.mxu0 0.0
    %1403 = vmatmul.mubr.f32.gmra.mxu0 %v1226
    %v1404 = vpop.f32.mrf.mxu0
    %v1405 = vadd.f32 0.0, %v1404
    %v1406 = vpop.f32.mrf.mxu0
    %1407 = vmatprep.mubr.f32.mxu0 0.0
    %1408 = vmatmul.mubr.f32.gmra.mxu0 %v1227
    %v1409 = vpop.f32.mrf.mxu0
    %v1410 = vadd.f32 0.0, %v1409
    %v1411 = vpop.f32.mrf.mxu0
    %1412 = vmatprep.mubr.f32.mxu0 0.0
    %1413 = vmatmul.mubr.f32.gmra.mxu0 %v1228
    %v1414 = vpop.f32.mrf.mxu0
    %v1415 = vadd.f32 0.0, %v1414
    %v1416 = vpop.f32.mrf.mxu0
    %1417 = vmatprep.mubr.f32.mxu0 0.0
    %1418 = vmatmul.mubr.f32.gmra.mxu0 %v1229
    %v1419 = vpop.f32.mrf.mxu0
    %v1420 = vadd.f32 0.0, %v1419
    %v1421 = vpop.f32.mrf.mxu0
    %1422 = vmatprep.mubr.f32.mxu0 0.0
    %1423 = vmatmul.mubr.f32.gmra.mxu0 %v1230
    %v1424 = vpop.f32.mrf.mxu0
    %v1425 = vadd.f32 0.0, %v1424
    %v1426 = vpop.f32.mrf.mxu0
    %1427 = vmatprep.mubr.f32.mxu0 0.0
    %1428 = vmatmul.mubr.f32.gmra.mxu0 %v1231
    %v1429 = vpop.f32.mrf.mxu0
    %v1430 = vadd.f32 0.0, %v1429
    %v1431 = vpop.f32.mrf.mxu0
    %1432 = vmatprep.mubr.f32.mxu0 0.0
    %1433 = vmatmul.mubr.f32.gmra.mxu0 %v1232
    %v1434 = vpop.f32.mrf.mxu0
    %v1435 = vadd.f32 0.0, %v1434
    %v1436 = vpop.f32.mrf.mxu0
    %1437 = vmatprep.mubr.f32.mxu0 0.0
    %1438 = vmatmul.mubr.f32.gmra.mxu0 %v1233
    %v1439 = vpop.f32.mrf.mxu0
    %v1440 = vadd.f32 0.0, %v1439
    %v1441 = vpop.f32.mrf.mxu0
    %1442 = vmatprep.mubr.f32.mxu0 0.0
    %1443 = vmatmul.mubr.f32.gmra.mxu0 %v1234
    %v1444 = vpop.f32.mrf.mxu0
    %v1445 = vadd.f32 0.0, %v1444
    %v1446 = vpop.f32.mrf.mxu0
    %1447 = vmatprep.mubr.f32.mxu0 0.0
    %1448 = vmatmul.mubr.f32.gmra.mxu0 %v1235
    %v1449 = vpop.f32.mrf.mxu0
    %v1450 = vadd.f32 0.0, %v1449
    %v1451 = vpop.f32.mrf.mxu0
    %1452 = vmatprep.mubr.f32.mxu0 0.0
    %1453 = vmatmul.mubr.f32.gmra.mxu0 %v1236
    %v1454 = vpop.f32.mrf.mxu0
    %v1455 = vadd.f32 0.0, %v1454
    %v1456 = vpop.f32.mrf.mxu0
    %1457 = vmatprep.mubr.f32.mxu0 0.0
    %1458 = vmatmul.mubr.f32.gmra.mxu0 %v1237
    %v1459 = vpop.f32.mrf.mxu0
    %v1460 = vadd.f32 0.0, %v1459
    %v1461 = vpop.f32.mrf.mxu0
    %1462 = vmatprep.mubr.f32.mxu0 0.0
    %1463 = vmatmul.mubr.f32.gmra.mxu0 %v1238
    %v1464 = vpop.f32.mrf.mxu0
    %v1465 = vadd.f32 0.0, %v1464
    %v1466 = vpop.f32.mrf.mxu0
    %1467 = vmatprep.mubr.f32.mxu0 0.0
    %1468 = vmatmul.mubr.f32.gmra.mxu0 %v1239
    %v1469 = vpop.f32.mrf.mxu0
    %v1470 = vadd.f32 0.0, %v1469
    %v1471 = vpop.f32.mrf.mxu0
    %1472 = vmatprep.mubr.f32.mxu0 0.0
    %1473 = vmatmul.mubr.f32.gmra.mxu0 %v1240
    %v1474 = vpop.f32.mrf.mxu0
    %v1475 = vadd.f32 0.0, %v1474
    %v1476 = vpop.f32.mrf.mxu0
    %1477 = vmatprep.mubr.f32.mxu0 0.0
    %1478 = vmatmul.mubr.f32.gmra.mxu0 %v1241
    %v1479 = vpop.f32.mrf.mxu0
    %v1480 = vadd.f32 0.0, %v1479
    %v1481 = vpop.f32.mrf.mxu0
    %1482 = vmatprep.mubr.f32.mxu0 0.0
    %1483 = vmatmul.mubr.f32.gmra.mxu0 %v1242
    %v1484 = vpop.f32.mrf.mxu0
    %v1485 = vadd.f32 0.0, %v1484
    %v1486 = vpop.f32.mrf.mxu0
    %1487 = vmatprep.mubr.f32.mxu0 0.0
    %1488 = vmatmul.mubr.f32.gmra.mxu0 %v1243
    %v1489 = vpop.f32.mrf.mxu0
    %v1490 = vadd.f32 0.0, %v1489
    %v1491 = vpop.f32.mrf.mxu0
    %1492 = vmatprep.mubr.f32.mxu0 0.0
    %1493 = vmatmul.mubr.f32.gmra.mxu0 %v1244
    %v1494 = vpop.f32.mrf.mxu0
    %v1495 = vadd.f32 0.0, %v1494
    %v1496 = vpop.f32.mrf.mxu0
    %1497 = vmatprep.mubr.f32.mxu0 0.0
    %1498 = vmatmul.mubr.f32.gmra.mxu0 %v1245
    %v1499 = vpop.f32.mrf.mxu0
    %v1500 = vadd.f32 0.0, %v1499
    %v1501 = vpop.f32.mrf.mxu0
    %1502 = vmatprep.mubr.f32.mxu0 0.0
    %1503 = vmatmul.mubr.f32.gmra.mxu0 %v1246
    %v1504 = vpop.f32.mrf.mxu0
    %v1505 = vadd.f32 0.0, %v1504
    %v1506 = vpop.f32.mrf.mxu0
    %1507 = vmatprep.mubr.f32.mxu0 0.0
    %1508 = vmatmul.mubr.f32.gmra.mxu0 %v1247
    %v1509 = vpop.f32.mrf.mxu0
    %v1510 = vadd.f32 0.0, %v1509
    %v1511 = vpop.f32.mrf.mxu0
    %1512 = vmatprep.mubr.f32.mxu0 0.0
    %1513 = vmatmul.mubr.f32.gmra.mxu0 %v1248
    %v1514 = vpop.f32.mrf.mxu0
    %v1515 = vadd.f32 0.0, %v1514
    %v1516 = vpop.f32.mrf.mxu0
    %1517 = vmatprep.mubr.f32.mxu0 0.0
    %1518 = vmatmul.mubr.f32.gmra.mxu0 %v1249
    %v1519 = vpop.f32.mrf.mxu0
    %v1520 = vadd.f32 0.0, %v1519
    %v1521 = vpop.f32.mrf.mxu0
    %1522 = vmatprep.mubr.f32.mxu0 0.0
    %1523 = vmatmul.mubr.f32.gmra.mxu0 %v1250
    %v1524 = vpop.f32.mrf.mxu0
    %v1525 = vadd.f32 0.0, %v1524
    %v1526 = vpop.f32.mrf.mxu0
    %1527 = vmatprep.mubr.f32.mxu0 0.0
    %1528 = vmatmul.mubr.f32.gmra.mxu0 %v1251
    %v1529 = vpop.f32.mrf.mxu0
    %v1530 = vadd.f32 0.0, %v1529
    %v1531 = vpop.f32.mrf.mxu0
    %1532 = vmatprep.mubr.f32.mxu0 0.0
    %1533 = vmatmul.mubr.f32.gmra.mxu0 %v1252
    %v1534 = vpop.f32.mrf.mxu0
    %v1535 = vadd.f32 0.0, %v1534
    %v1536 = vpop.f32.mrf.mxu0
    %1537 = vmatprep.mubr.f32.mxu0 0.0
    %1538 = vmatmul.mubr.f32.gmra.mxu0 %v1253
    %v1539 = vpop.f32.mrf.mxu0
    %v1540 = vadd.f32 0.0, %v1539
    %v1541 = vpop.f32.mrf.mxu0
    %1542 = vmatprep.mubr.f32.mxu0 0.0
    %1543 = vmatmul.mubr.f32.gmra.mxu0 %v1254
    %v1544 = vpop.f32.mrf.mxu0
    %v1545 = vadd.f32 0.0, %v1544
    %v1546 = vpop.f32.mrf.mxu0
    %1547 = vmatprep.mubr.f32.mxu0 0.0
    %1548 = vmatmul.mubr.f32.gmra.mxu0 %v1255
    %v1549 = vpop.f32.mrf.mxu0
    %v1550 = vadd.f32 0.0, %v1549
    %v1551 = vpop.f32.mrf.mxu0
    %1552 = vmatprep.mubr.f32.mxu0 0.0
    %1553 = vmatmul.mubr.f32.gmra.mxu0 %v1256
    %v1554 = vpop.f32.mrf.mxu0
    %v1555 = vadd.f32 0.0, %v1554
    %v1556 = vpop.f32.mrf.mxu0
    %1557 = vmatprep.mubr.f32.mxu0 0.0
    %1558 = vmatmul.mubr.f32.gmra.mxu0 %v1257
    %v1559 = vpop.f32.mrf.mxu0
    %v1560 = vadd.f32 0.0, %v1559
    %v1561 = vpop.f32.mrf.mxu0
    %1562 = vdwg.mxu0
    %v1563 = vmax.f32 %v1162, %v1325
    %v1564 = vmax.f32 %v1163, %v1330
    %v1565 = vmax.f32 %v1164, %v1335
    %v1566 = vmax.f32 %v1165, %v1340
    %v1567 = vmax.f32 %v1166, %v1345
    %v1568 = vmax.f32 %v1167, %v1350
    %v1569 = vmax.f32 %v1168, %v1355
    %v1570 = vmax.f32 %v1169, %v1360
    %v1571 = vmax.f32 %v1170, %v1365
    %v1572 = vmax.f32 %v1171, %v1370
    %v1573 = vmax.f32 %v1172, %v1375
    %v1574 = vmax.f32 %v1173, %v1380
    %v1575 = vmax.f32 %v1174, %v1385
    %v1576 = vmax.f32 %v1175, %v1390
    %v1577 = vmax.f32 %v1176, %v1395
    %v1578 = vmax.f32 %v1177, %v1400
    %v1579 = vmax.f32 %v1178, %v1405
    %v1580 = vmax.f32 %v1179, %v1410
    %v1581 = vmax.f32 %v1180, %v1415
    %v1582 = vmax.f32 %v1181, %v1420
    %v1583 = vmax.f32 %v1182, %v1425
    %v1584 = vmax.f32 %v1183, %v1430
    %v1585 = vmax.f32 %v1184, %v1435
    %v1586 = vmax.f32 %v1185, %v1440
    %v1587 = vmax.f32 %v1186, %v1445
    %v1588 = vmax.f32 %v1187, %v1450
    %v1589 = vmax.f32 %v1188, %v1455
    %v1590 = vmax.f32 %v1189, %v1460
    %v1591 = vmax.f32 %v1190, %v1465
    %v1592 = vmax.f32 %v1191, %v1470
    %v1593 = vmax.f32 %v1192, %v1475
    %v1594 = vmax.f32 %v1193, %v1480
    %v1595 = vmax.f32 %v1194, %v1485
    %v1596 = vmax.f32 %v1195, %v1490
    %v1597 = vmax.f32 %v1196, %v1495
    %v1598 = vmax.f32 %v1197, %v1500
    %v1599 = vmax.f32 %v1198, %v1505
    %v1600 = vmax.f32 %v1199, %v1510
    %v1601 = vmax.f32 %v1200, %v1515
    %v1602 = vmax.f32 %v1201, %v1520
    %v1603 = vmax.f32 %v1202, %v1525
    %v1604 = vmax.f32 %v1203, %v1530
    %v1605 = vmax.f32 %v1204, %v1535
    %v1606 = vmax.f32 %v1205, %v1540
    %v1607 = vmax.f32 %v1206, %v1545
    %v1608 = vmax.f32 %v1207, %v1550
    %v1609 = vmax.f32 %v1208, %v1555
    %v1610 = vmax.f32 %v1209, %v1560
    %v1611 = vld [vmem:[%s2] sm:$0x1]
    %v1613 = vlaneseq
    %v1614 = vshrl.u32 %v1613, 7
    %v1615 = vsub.s32 0, %v1614
    %v1616 = vrot.slane %v1611, %v1615
    %v1618 = vadd.f32 %v1563, %v1616
    %v1619 = vadd.f32 %v1564, %v1616
    %v1620 = vadd.f32 %v1565, %v1616
    %v1621 = vadd.f32 %v1566, %v1616
    %v1622 = vadd.f32 %v1567, %v1616
    %v1623 = vadd.f32 %v1568, %v1616
    %v1624 = vadd.f32 %v1569, %v1616
    %v1625 = vadd.f32 %v1570, %v1616
    %v1626 = vadd.f32 %v1571, %v1616
    %v1627 = vadd.f32 %v1572, %v1616
    %v1628 = vadd.f32 %v1573, %v1616
    %v1629 = vadd.f32 %v1574, %v1616
    %v1630 = vadd.f32 %v1575, %v1616
    %v1631 = vadd.f32 %v1576, %v1616
    %v1632 = vadd.f32 %v1577, %v1616
    %v1633 = vadd.f32 %v1578, %v1616
    %v1634 = vadd.f32 %v1579, %v1616
    %v1635 = vadd.f32 %v1580, %v1616
    %v1636 = vadd.f32 %v1581, %v1616
    %v1637 = vadd.f32 %v1582, %v1616
    %v1638 = vadd.f32 %v1583, %v1616
    %v1639 = vadd.f32 %v1584, %v1616
    %v1640 = vadd.f32 %v1585, %v1616
    %v1641 = vadd.f32 %v1586, %v1616
    %v1642 = vadd.f32 %v1587, %v1616
    %v1643 = vadd.f32 %v1588, %v1616
    %v1644 = vadd.f32 %v1589, %v1616
    %v1645 = vadd.f32 %v1590, %v1616
    %v1646 = vadd.f32 %v1591, %v1616
    %v1647 = vadd.f32 %v1592, %v1616
    %v1648 = vadd.f32 %v1593, %v1616
    %v1649 = vadd.f32 %v1594, %v1616
    %v1650 = vadd.f32 %v1595, %v1616
    %v1651 = vadd.f32 %v1596, %v1616
    %v1652 = vadd.f32 %v1597, %v1616
    %v1653 = vadd.f32 %v1598, %v1616
    %v1654 = vadd.f32 %v1599, %v1616
    %v1655 = vadd.f32 %v1600, %v1616
    %v1656 = vadd.f32 %v1601, %v1616
    %v1657 = vadd.f32 %v1602, %v1616
    %v1658 = vadd.f32 %v1603, %v1616
    %v1659 = vadd.f32 %v1604, %v1616
    %v1660 = vadd.f32 %v1605, %v1616
    %v1661 = vadd.f32 %v1606, %v1616
    %v1662 = vadd.f32 %v1607, %v1616
    %v1663 = vadd.f32 %v1608, %v1616
    %v1664 = vadd.f32 %v1609, %v1616
    %v1665 = vadd.f32 %v1610, %v1616
    %v1666 = vmax.f32 %v1618, 0.0
    %v1667 = vmax.f32 %v1619, 0.0
    %v1668 = vmax.f32 %v1620, 0.0
    %v1669 = vmax.f32 %v1621, 0.0
    %v1670 = vmax.f32 %v1622, 0.0
    %v1671 = vmax.f32 %v1623, 0.0
    %v1672 = vmax.f32 %v1624, 0.0
    %v1673 = vmax.f32 %v1625, 0.0
    %v1674 = vmax.f32 %v1626, 0.0
    %v1675 = vmax.f32 %v1627, 0.0
    %v1676 = vmax.f32 %v1628, 0.0
    %v1677 = vmax.f32 %v1629, 0.0
    %v1678 = vmax.f32 %v1630, 0.0
    %v1679 = vmax.f32 %v1631, 0.0
    %v1680 = vmax.f32 %v1632, 0.0
    %v1681 = vmax.f32 %v1633, 0.0
    %v1682 = vmax.f32 %v1634, 0.0
    %v1683 = vmax.f32 %v1635, 0.0
    %v1684 = vmax.f32 %v1636, 0.0
    %v1685 = vmax.f32 %v1637, 0.0
    %v1686 = vmax.f32 %v1638, 0.0
    %v1687 = vmax.f32 %v1639, 0.0
    %v1688 = vmax.f32 %v1640, 0.0
    %v1689 = vmax.f32 %v1641, 0.0
    %v1690 = vmax.f32 %v1642, 0.0
    %v1691 = vmax.f32 %v1643, 0.0
    %v1692 = vmax.f32 %v1644, 0.0
    %v1693 = vmax.f32 %v1645, 0.0
    %v1694 = vmax.f32 %v1646, 0.0
    %v1695 = vmax.f32 %v1647, 0.0
    %v1696 = vmax.f32 %v1648, 0.0
    %v1697 = vmax.f32 %v1649, 0.0
    %v1698 = vmax.f32 %v1650, 0.0
    %v1699 = vmax.f32 %v1651, 0.0
    %v1700 = vmax.f32 %v1652, 0.0
    %v1701 = vmax.f32 %v1653, 0.0
    %v1702 = vmax.f32 %v1654, 0.0
    %v1703 = vmax.f32 %v1655, 0.0
    %v1704 = vmax.f32 %v1656, 0.0
    %v1705 = vmax.f32 %v1657, 0.0
    %v1706 = vmax.f32 %v1658, 0.0
    %v1707 = vmax.f32 %v1659, 0.0
    %v1708 = vmax.f32 %v1660, 0.0
    %v1709 = vmax.f32 %v1661, 0.0
    %v1710 = vmax.f32 %v1662, 0.0
    %v1711 = vmax.f32 %v1663, 0.0
    %v1712 = vmax.f32 %v1664, 0.0
    %v1713 = vmax.f32 %v1665, 0.0
    %1714 = vst [vmem:[#allocation2] sm:$0xff] %v1666
    %1715 = vst [vmem:[#allocation2 + $0x8] sm:$0xff] %v1667
    %s1716 = scalar_lea.vmem [#allocation2], 16
    %1717 = vst [vmem:[%s1716] sm:$0xff] %v1668
    %1718 = vst [vmem:[%s1716 + $0x8] sm:$0xff] %v1669
    %s1719 = scalar_lea.vmem [#allocation2], 32
    %1720 = vst [vmem:[%s1719] sm:$0xff] %v1670
    %1721 = vst [vmem:[%s1719 + $0x8] sm:$0xff] %v1671
    %s1722 = scalar_lea.vmem [#allocation2], 48
    %1723 = vst [vmem:[%s1722] sm:$0xff] %v1672
    %1724 = vst [vmem:[%s1722 + $0x8] sm:$0xff] %v1673
    %s1725 = scalar_lea.vmem [#allocation2], 64
    %1726 = vst [vmem:[%s1725] sm:$0xff] %v1674
    %1727 = vst [vmem:[%s1725 + $0x8] sm:$0xff] %v1675
    %s1728 = scalar_lea.vmem [#allocation2], 80
    %1729 = vst [vmem:[%s1728] sm:$0xff] %v1676
    %1730 = vst [vmem:[%s1728 + $0x8] sm:$0xff] %v1677
    %s1731 = scalar_lea.vmem [#allocation2], 96
    %1732 = vst [vmem:[%s1731] sm:$0xff] %v1678
    %1733 = vst [vmem:[%s1731 + $0x8] sm:$0xff] %v1679
    %s1734 = scalar_lea.vmem [#allocation2], 112
    %1735 = vst [vmem:[%s1734] sm:$0xff] %v1680
    %1736 = vst [vmem:[%s1734 + $0x8] sm:$0xff] %v1681
    %s1737 = scalar_lea.vmem [#allocation2], 128
    %1738 = vst [vmem:[%s1737] sm:$0xff] %v1682
    %1739 = vst [vmem:[%s1737 + $0x8] sm:$0xff] %v1683
    %s1740 = scalar_lea.vmem [#allocation2], 144
    %1741 = vst [vmem:[%s1740] sm:$0xff] %v1684
    %1742 = vst [vmem:[%s1740 + $0x8] sm:$0xff] %v1685
    %s1743 = scalar_lea.vmem [#allocation2], 160
    %1744 = vst [vmem:[%s1743] sm:$0xff] %v1686
    %1745 = vst [vmem:[%s1743 + $0x8] sm:$0xff] %v1687
    %s1746 = scalar_lea.vmem [#allocation2], 176
    %1747 = vst [vmem:[%s1746] sm:$0xff] %v1688
    %1748 = vst [vmem:[%s1746 + $0x8] sm:$0xff] %v1689
    %s1749 = scalar_lea.vmem [#allocation2], 192
    %1750 = vst [vmem:[%s1749] sm:$0xff] %v1690
    %1751 = vst [vmem:[%s1749 + $0x8] sm:$0xff] %v1691
    %s1752 = scalar_lea.vmem [#allocation2], 208
    %1753 = vst [vmem:[%s1752] sm:$0xff] %v1692
    %1754 = vst [vmem:[%s1752 + $0x8] sm:$0xff] %v1693
    %s1755 = scalar_lea.vmem [#allocation2], 224
    %1756 = vst [vmem:[%s1755] sm:$0xff] %v1694
    %1757 = vst [vmem:[%s1755 + $0x8] sm:$0xff] %v1695
    %s1758 = scalar_lea.vmem [#allocation2], 240
    %1759 = vst [vmem:[%s1758] sm:$0xff] %v1696
    %1760 = vst [vmem:[%s1758 + $0x8] sm:$0xff] %v1697
    %s1761 = scalar_lea.vmem [#allocation2], 256
    %1762 = vst [vmem:[%s1761] sm:$0xff] %v1698
    %1763 = vst [vmem:[%s1761 + $0x8] sm:$0xff] %v1699
    %s1764 = scalar_lea.vmem [#allocation2], 272
    %1765 = vst [vmem:[%s1764] sm:$0xff] %v1700
    %1766 = vst [vmem:[%s1764 + $0x8] sm:$0xff] %v1701
    %s1767 = scalar_lea.vmem [#allocation2], 288
    %1768 = vst [vmem:[%s1767] sm:$0xff] %v1702
    %1769 = vst [vmem:[%s1767 + $0x8] sm:$0xff] %v1703
    %s1770 = scalar_lea.vmem [#allocation2], 304
    %1771 = vst [vmem:[%s1770] sm:$0xff] %v1704
    %1772 = vst [vmem:[%s1770 + $0x8] sm:$0xff] %v1705
    %s1773 = scalar_lea.vmem [#allocation2], 320
    %1774 = vst [vmem:[%s1773] sm:$0xff] %v1706
    %1775 = vst [vmem:[%s1773 + $0x8] sm:$0xff] %v1707
    %s1776 = scalar_lea.vmem [#allocation2], 336
    %1777 = vst [vmem:[%s1776] sm:$0xff] %v1708
    %1778 = vst [vmem:[%s1776 + $0x8] sm:$0xff] %v1709
    %s1779 = scalar_lea.vmem [#allocation2], 352
    %1780 = vst [vmem:[%s1779] sm:$0xff] %v1710
    %1781 = vst [vmem:[%s1779 + $0x8] sm:$0xff] %v1711
    %s1782 = scalar_lea.vmem [#allocation2], 368
    %1783 = vst [vmem:[%s1782] sm:$0xff] %v1712
    %1784 = vst [vmem:[%s1782 + $0x8] sm:$0xff] %v1713
    %v1785 = vld [vmem:[#allocation2] sm:$0xff]
    %v1786 = vld [vmem:[#allocation2 + $0x10] sm:$0xff]
    %v1787 = vld [vmem:[#allocation2 + $0x20] sm:$0xff]
    %v1788 = vld [vmem:[#allocation2 + $0x30] sm:$0xff]
    %v1789 = vld [vmem:[#allocation2 + $0x40] sm:$0xff]
    %v1790 = vld [vmem:[#allocation2 + $0x50] sm:$0xff]
    %v1791 = vld [vmem:[#allocation2 + $0x60] sm:$0xff]
    %v1792 = vld [vmem:[#allocation2 + $0x70] sm:$0xff]
    %v1793 = vld [vmem:[#allocation2 + $0xc0] sm:$0xff]
    %v1794 = vld [vmem:[#allocation2 + $0xd0] sm:$0xff]
    %v1795 = vld [vmem:[#allocation2 + $0xe0] sm:$0xff]
    %v1796 = vld [vmem:[#allocation2 + $0xf0] sm:$0xff]
    %v1797 = vld [vmem:[#allocation2 + $0x100] sm:$0xff]
    %v1798 = vld [vmem:[#allocation2 + $0x110] sm:$0xff]
    %v1799 = vld [vmem:[#allocation2 + $0x120] sm:$0xff]
    %v1800 = vld [vmem:[#allocation2 + $0x130] sm:$0xff]
    %v1801 = vld [vmem:[%s3] sm:$0xff]
    %v1802 = vld [vmem:[%s3 + $0x8] sm:$0xff]
    %v1803 = vld [vmem:[%s3 + $0x10] sm:$0xff]
    %v1804 = vld [vmem:[%s3 + $0x18] sm:$0xff]
    %v1805 = vld [vmem:[%s3 + $0x20] sm:$0xff]
    %v1806 = vld [vmem:[%s3 + $0x28] sm:$0xff]
    %v1807 = vld [vmem:[%s3 + $0x30] sm:$0xff]
    %v1808 = vld [vmem:[%s3 + $0x38] sm:$0xff]
    %v1809 = vld [vmem:[%s3 + $0x40] sm:$0xff]
    %v1810 = vld [vmem:[%s3 + $0x48] sm:$0xff]
    %v1811 = vld [vmem:[%s3 + $0x50] sm:$0xff]
    %v1812 = vld [vmem:[%s3 + $0x58] sm:$0xff]
    %v1813 = vld [vmem:[%s3 + $0x60] sm:$0xff]
    %v1814 = vld [vmem:[%s3 + $0x68] sm:$0xff]
    %v1815 = vld [vmem:[%s3 + $0x70] sm:$0xff]
    %v1816 = vld [vmem:[%s3 + $0x78] sm:$0xff]
    %v1817 = vld [vmem:[#allocation2 + $0x1] sm:$0xff]
    %v1818 = vld [vmem:[#allocation2 + $0x11] sm:$0xff]
    %v1819 = vld [vmem:[#allocation2 + $0x21] sm:$0xff]
    %v1820 = vld [vmem:[#allocation2 + $0x31] sm:$0xff]
    %v1821 = vld [vmem:[#allocation2 + $0x41] sm:$0xff]
    %v1822 = vld [vmem:[#allocation2 + $0x51] sm:$0xff]
    %v1823 = vld [vmem:[#allocation2 + $0x61] sm:$0xff]
    %v1824 = vld [vmem:[#allocation2 + $0x71] sm:$0xff]
    %v1825 = vld [vmem:[#allocation2 + $0xc1] sm:$0xff]
    %v1826 = vld [vmem:[#allocation2 + $0xd1] sm:$0xff]
    %v1827 = vld [vmem:[#allocation2 + $0xe1] sm:$0xff]
    %v1828 = vld [vmem:[#allocation2 + $0xf1] sm:$0xff]
    %v1829 = vld [vmem:[#allocation2 + $0x101] sm:$0xff]
    %v1830 = vld [vmem:[#allocation2 + $0x111] sm:$0xff]
    %v1831 = vld [vmem:[#allocation2 + $0x121] sm:$0xff]
    %v1832 = vld [vmem:[#allocation2 + $0x131] sm:$0xff]
    %s1833 = scalar_lea.vmem %s3, 128
    %v1834 = vld [vmem:[%s1833] sm:$0xff]
    %v1835 = vld [vmem:[%s1833 + $0x8] sm:$0xff]
    %v1836 = vld [vmem:[%s1833 + $0x10] sm:$0xff]
    %v1837 = vld [vmem:[%s1833 + $0x18] sm:$0xff]
    %v1838 = vld [vmem:[%s1833 + $0x20] sm:$0xff]
    %v1839 = vld [vmem:[%s1833 + $0x28] sm:$0xff]
    %v1840 = vld [vmem:[%s1833 + $0x30] sm:$0xff]
    %v1841 = vld [vmem:[%s1833 + $0x38] sm:$0xff]
    %v1842 = vld [vmem:[%s1833 + $0x40] sm:$0xff]
    %v1843 = vld [vmem:[%s1833 + $0x48] sm:$0xff]
    %v1844 = vld [vmem:[%s1833 + $0x50] sm:$0xff]
    %v1845 = vld [vmem:[%s1833 + $0x58] sm:$0xff]
    %v1846 = vld [vmem:[%s1833 + $0x60] sm:$0xff]
    %v1847 = vld [vmem:[%s1833 + $0x68] sm:$0xff]
    %v1848 = vld [vmem:[%s1833 + $0x70] sm:$0xff]
    %v1849 = vld [vmem:[%s1833 + $0x78] sm:$0xff]
    %1850 = vmatprep.subr.mxu0 0.0
    %1851 = vmatpush1.msra.mxu0 %v1849
    %1852 = vmatprep.subr.mxu0 0.0
    %1853 = vmatpush1.msra.mxu0 %v1848
    %1854 = vmatprep.subr.mxu0 0.0
    %1855 = vmatpush1.msra.mxu0 %v1847
    %1856 = vmatprep.subr.mxu0 0.0
    %1857 = vmatpush1.msra.mxu0 %v1846
    %1858 = vmatprep.subr.mxu0 0.0
    %1859 = vmatpush1.msra.mxu0 %v1845
    %1860 = vmatprep.subr.mxu0 0.0
    %1861 = vmatpush1.msra.mxu0 %v1844
    %1862 = vmatprep.subr.mxu0 0.0
    %1863 = vmatpush1.msra.mxu0 %v1843
    %1864 = vmatprep.subr.mxu0 0.0
    %1865 = vmatpush1.msra.mxu0 %v1842
    %1866 = vmatprep.subr.mxu0 0.0
    %1867 = vmatpush1.msra.mxu0 %v1841
    %1868 = vmatprep.subr.mxu0 0.0
    %1869 = vmatpush1.msra.mxu0 %v1840
    %1870 = vmatprep.subr.mxu0 0.0
    %1871 = vmatpush1.msra.mxu0 %v1839
    %1872 = vmatprep.subr.mxu0 0.0
    %1873 = vmatpush1.msra.mxu0 %v1838
    %1874 = vmatprep.subr.mxu0 0.0
    %1875 = vmatpush1.msra.mxu0 %v1837
    %1876 = vmatprep.subr.mxu0 0.0
    %1877 = vmatpush1.msra.mxu0 %v1836
    %1878 = vmatprep.subr.mxu0 0.0
    %1879 = vmatpush1.msra.mxu0 %v1835
    %1880 = vmatprep.subr.mxu0 0.0
    %1881 = vmatpush1.msra.mxu0 %v1834
    %1882 = vmatprep.subr.mxu0 0.0
    %1883 = vmatpush2.msra.mxu0 0.0
    %1884 = vmatprep.subr.mxu0 0.0
    %1885 = vmatpush2.msra.mxu0 0.0
    %1886 = vmatprep.subr.mxu0 0.0
    %1887 = vmatpush2.msra.mxu0 0.0
    %1888 = vmatprep.subr.mxu0 0.0
    %1889 = vmatpush2.msra.mxu0 0.0
    %1890 = vmatprep.subr.mxu0 0.0
    %1891 = vmatpush2.msra.mxu0 0.0
    %1892 = vmatprep.subr.mxu0 0.0
    %1893 = vmatpush2.msra.mxu0 0.0
    %1894 = vmatprep.subr.mxu0 0.0
    %1895 = vmatpush2.msra.mxu0 0.0
    %1896 = vmatprep.subr.mxu0 0.0
    %1897 = vmatpush2.msra.mxu0 0.0
    %1898 = vmatprep.subr.mxu0 0.0
    %1899 = vmatpush2.msra.mxu0 0.0
    %1900 = vmatprep.subr.mxu0 0.0
    %1901 = vmatpush2.msra.mxu0 0.0
    %1902 = vmatprep.subr.mxu0 0.0
    %1903 = vmatpush2.msra.mxu0 0.0
    %1904 = vmatprep.subr.mxu0 0.0
    %1905 = vmatpush2.msra.mxu0 0.0
    %1906 = vmatprep.subr.mxu0 0.0
    %1907 = vmatpush2.msra.mxu0 0.0
    %1908 = vmatprep.subr.mxu0 0.0
    %1909 = vmatpush2.msra.mxu0 0.0
    %1910 = vmatprep.subr.mxu0 0.0
    %1911 = vmatpush2.msra.mxu0 0.0
    %1912 = vmatprep.subr.mxu0 0.0
    %1913 = vmatpush2.msra.mxu0 0.0
    %1914 = vmatprep.mubr.f32.mxu0 0.0
    %1915 = vmatmul.mubr.f32.gmra.mxu0 %v1817
    %v1916 = vpop.f32.mrf.mxu0
    %v1917 = vadd.f32 0.0, %v1916
    %v1918 = vpop.f32.mrf.mxu0
    %1919 = vmatprep.mubr.f32.mxu0 0.0
    %1920 = vmatmul.mubr.f32.gmra.mxu0 %v1818
    %v1921 = vpop.f32.mrf.mxu0
    %v1922 = vadd.f32 0.0, %v1921
    %v1923 = vpop.f32.mrf.mxu0
    %1924 = vmatprep.mubr.f32.mxu0 0.0
    %1925 = vmatmul.mubr.f32.gmra.mxu0 %v1819
    %v1926 = vpop.f32.mrf.mxu0
    %v1927 = vadd.f32 0.0, %v1926
    %v1928 = vpop.f32.mrf.mxu0
    %1929 = vmatprep.mubr.f32.mxu0 0.0
    %1930 = vmatmul.mubr.f32.gmra.mxu0 %v1820
    %v1931 = vpop.f32.mrf.mxu0
    %v1932 = vadd.f32 0.0, %v1931
    %v1933 = vpop.f32.mrf.mxu0
    %1934 = vmatprep.mubr.f32.mxu0 0.0
    %1935 = vmatmul.mubr.f32.gmra.mxu0 %v1821
    %v1936 = vpop.f32.mrf.mxu0
    %v1937 = vadd.f32 0.0, %v1936
    %v1938 = vpop.f32.mrf.mxu0
    %1939 = vmatprep.mubr.f32.mxu0 0.0
    %1940 = vmatmul.mubr.f32.gmra.mxu0 %v1822
    %v1941 = vpop.f32.mrf.mxu0
    %v1942 = vadd.f32 0.0, %v1941
    %v1943 = vpop.f32.mrf.mxu0
    %1944 = vmatprep.mubr.f32.mxu0 0.0
    %1945 = vmatmul.mubr.f32.gmra.mxu0 %v1823
    %v1946 = vpop.f32.mrf.mxu0
    %v1947 = vadd.f32 0.0, %v1946
    %v1948 = vpop.f32.mrf.mxu0
    %1949 = vmatprep.mubr.f32.mxu0 0.0
    %1950 = vmatmul.mubr.f32.gmra.mxu0 %v1824
    %v1951 = vpop.f32.mrf.mxu0
    %v1952 = vadd.f32 0.0, %v1951
    %v1953 = vpop.f32.mrf.mxu0
    %1954 = vmatprep.mubr.f32.mxu0 0.0
    %1955 = vmatmul.mubr.f32.gmra.mxu0 %v1825
    %v1956 = vpop.f32.mrf.mxu0
    %v1957 = vadd.f32 0.0, %v1956
    %v1958 = vpop.f32.mrf.mxu0
    %1959 = vmatprep.mubr.f32.mxu0 0.0
    %1960 = vmatmul.mubr.f32.gmra.mxu0 %v1826
    %v1961 = vpop.f32.mrf.mxu0
    %v1962 = vadd.f32 0.0, %v1961
    %v1963 = vpop.f32.mrf.mxu0
    %1964 = vmatprep.mubr.f32.mxu0 0.0
    %1965 = vmatmul.mubr.f32.gmra.mxu0 %v1827
    %v1966 = vpop.f32.mrf.mxu0
    %v1967 = vadd.f32 0.0, %v1966
    %v1968 = vpop.f32.mrf.mxu0
    %1969 = vmatprep.mubr.f32.mxu0 0.0
    %1970 = vmatmul.mubr.f32.gmra.mxu0 %v1828
    %v1971 = vpop.f32.mrf.mxu0
    %v1972 = vadd.f32 0.0, %v1971
    %v1973 = vpop.f32.mrf.mxu0
    %1974 = vmatprep.mubr.f32.mxu0 0.0
    %1975 = vmatmul.mubr.f32.gmra.mxu0 %v1829
    %v1976 = vpop.f32.mrf.mxu0
    %v1977 = vadd.f32 0.0, %v1976
    %v1978 = vpop.f32.mrf.mxu0
    %1979 = vmatprep.mubr.f32.mxu0 0.0
    %1980 = vmatmul.mubr.f32.gmra.mxu0 %v1830
    %v1981 = vpop.f32.mrf.mxu0
    %v1982 = vadd.f32 0.0, %v1981
    %v1983 = vpop.f32.mrf.mxu0
    %1984 = vmatprep.mubr.f32.mxu0 0.0
    %1985 = vmatmul.mubr.f32.gmra.mxu0 %v1831
    %v1986 = vpop.f32.mrf.mxu0
    %v1987 = vadd.f32 0.0, %v1986
    %v1988 = vpop.f32.mrf.mxu0
    %1989 = vmatprep.mubr.f32.mxu0 0.0
    %1990 = vmatmul.mubr.f32.gmra.mxu0 %v1832
    %v1991 = vpop.f32.mrf.mxu0
    %v1992 = vadd.f32 0.0, %v1991
    %v1993 = vpop.f32.mrf.mxu0
    %1994 = vdwg.mxu0
    %1995 = vmatprep.subr.mxu0 0.0
    %1996 = vmatpush1.msra.mxu0 %v1816
    %1997 = vmatprep.subr.mxu0 0.0
    %1998 = vmatpush1.msra.mxu0 %v1815
    %1999 = vmatprep.subr.mxu0 0.0
    %2000 = vmatpush1.msra.mxu0 %v1814
    %2001 = vmatprep.subr.mxu0 0.0
    %2002 = vmatpush1.msra.mxu0 %v1813
    %2003 = vmatprep.subr.mxu0 0.0
    %2004 = vmatpush1.msra.mxu0 %v1812
    %2005 = vmatprep.subr.mxu0 0.0
    %2006 = vmatpush1.msra.mxu0 %v1811
    %2007 = vmatprep.subr.mxu0 0.0
    %2008 = vmatpush1.msra.mxu0 %v1810
    %2009 = vmatprep.subr.mxu0 0.0
    %2010 = vmatpush1.msra.mxu0 %v1809
    %2011 = vmatprep.subr.mxu0 0.0
    %2012 = vmatpush1.msra.mxu0 %v1808
    %2013 = vmatprep.subr.mxu0 0.0
    %2014 = vmatpush1.msra.mxu0 %v1807
    %2015 = vmatprep.subr.mxu0 0.0
    %2016 = vmatpush1.msra.mxu0 %v1806
    %2017 = vmatprep.subr.mxu0 0.0
    %2018 = vmatpush1.msra.mxu0 %v1805
    %2019 = vmatprep.subr.mxu0 0.0
    %2020 = vmatpush1.msra.mxu0 %v1804
    %2021 = vmatprep.subr.mxu0 0.0
    %2022 = vmatpush1.msra.mxu0 %v1803
    %2023 = vmatprep.subr.mxu0 0.0
    %2024 = vmatpush1.msra.mxu0 %v1802
    %2025 = vmatprep.subr.mxu0 0.0
    %2026 = vmatpush1.msra.mxu0 %v1801
    %2027 = vmatprep.subr.mxu0 0.0
    %2028 = vmatpush2.msra.mxu0 0.0
    %2029 = vmatprep.subr.mxu0 0.0
    %2030 = vmatpush2.msra.mxu0 0.0
    %2031 = vmatprep.subr.mxu0 0.0
    %2032 = vmatpush2.msra.mxu0 0.0
    %2033 = vmatprep.subr.mxu0 0.0
    %2034 = vmatpush2.msra.mxu0 0.0
    %2035 = vmatprep.subr.mxu0 0.0
    %2036 = vmatpush2.msra.mxu0 0.0
    %2037 = vmatprep.subr.mxu0 0.0
    %2038 = vmatpush2.msra.mxu0 0.0
    %2039 = vmatprep.subr.mxu0 0.0
    %2040 = vmatpush2.msra.mxu0 0.0
    %2041 = vmatprep.subr.mxu0 0.0
    %2042 = vmatpush2.msra.mxu0 0.0
    %2043 = vmatprep.subr.mxu0 0.0
    %2044 = vmatpush2.msra.mxu0 0.0
    %2045 = vmatprep.subr.mxu0 0.0
    %2046 = vmatpush2.msra.mxu0 0.0
    %2047 = vmatprep.subr.mxu0 0.0
    %2048 = vmatpush2.msra.mxu0 0.0
    %2049 = vmatprep.subr.mxu0 0.0
    %2050 = vmatpush2.msra.mxu0 0.0
    %2051 = vmatprep.subr.mxu0 0.0
    %2052 = vmatpush2.msra.mxu0 0.0
    %2053 = vmatprep.subr.mxu0 0.0
    %2054 = vmatpush2.msra.mxu0 0.0
    %2055 = vmatprep.subr.mxu0 0.0
    %2056 = vmatpush2.msra.mxu0 0.0
    %2057 = vmatprep.subr.mxu0 0.0
    %2058 = vmatpush2.msra.mxu0 0.0
    %2059 = vmatprep.mubr.f32.mxu0 0.0
    %2060 = vmatmul.mubr.f32.gmra.mxu0 %v1785
    %v2061 = vpop.f32.mrf.mxu0
    %v2062 = vadd.f32 %v1917, %v2061
    %v2063 = vpop.f32.mrf.mxu0
    %2064 = vmatprep.mubr.f32.mxu0 0.0
    %2065 = vmatmul.mubr.f32.gmra.mxu0 %v1786
    %v2066 = vpop.f32.mrf.mxu0
    %v2067 = vadd.f32 %v1922, %v2066
    %v2068 = vpop.f32.mrf.mxu0
    %2069 = vmatprep.mubr.f32.mxu0 0.0
    %2070 = vmatmul.mubr.f32.gmra.mxu0 %v1787
    %v2071 = vpop.f32.mrf.mxu0
    %v2072 = vadd.f32 %v1927, %v2071
    %v2073 = vpop.f32.mrf.mxu0
    %2074 = vmatprep.mubr.f32.mxu0 0.0
    %2075 = vmatmul.mubr.f32.gmra.mxu0 %v1788
    %v2076 = vpop.f32.mrf.mxu0
    %v2077 = vadd.f32 %v1932, %v2076
    %v2078 = vpop.f32.mrf.mxu0
    %2079 = vmatprep.mubr.f32.mxu0 0.0
    %2080 = vmatmul.mubr.f32.gmra.mxu0 %v1789
    %v2081 = vpop.f32.mrf.mxu0
    %v2082 = vadd.f32 %v1937, %v2081
    %v2083 = vpop.f32.mrf.mxu0
    %2084 = vmatprep.mubr.f32.mxu0 0.0
    %2085 = vmatmul.mubr.f32.gmra.mxu0 %v1790
    %v2086 = vpop.f32.mrf.mxu0
    %v2087 = vadd.f32 %v1942, %v2086
    %v2088 = vpop.f32.mrf.mxu0
    %2089 = vmatprep.mubr.f32.mxu0 0.0
    %2090 = vmatmul.mubr.f32.gmra.mxu0 %v1791
    %v2091 = vpop.f32.mrf.mxu0
    %v2092 = vadd.f32 %v1947, %v2091
    %v2093 = vpop.f32.mrf.mxu0
    %2094 = vmatprep.mubr.f32.mxu0 0.0
    %2095 = vmatmul.mubr.f32.gmra.mxu0 %v1792
    %v2096 = vpop.f32.mrf.mxu0
    %v2097 = vadd.f32 %v1952, %v2096
    %v2098 = vpop.f32.mrf.mxu0
    %2099 = vmatprep.mubr.f32.mxu0 0.0
    %2100 = vmatmul.mubr.f32.gmra.mxu0 %v1793
    %v2101 = vpop.f32.mrf.mxu0
    %v2102 = vadd.f32 %v1957, %v2101
    %v2103 = vpop.f32.mrf.mxu0
    %2104 = vmatprep.mubr.f32.mxu0 0.0
    %2105 = vmatmul.mubr.f32.gmra.mxu0 %v1794
    %v2106 = vpop.f32.mrf.mxu0
    %v2107 = vadd.f32 %v1962, %v2106
    %v2108 = vpop.f32.mrf.mxu0
    %2109 = vmatprep.mubr.f32.mxu0 0.0
    %2110 = vmatmul.mubr.f32.gmra.mxu0 %v1795
    %v2111 = vpop.f32.mrf.mxu0
    %v2112 = vadd.f32 %v1967, %v2111
    %v2113 = vpop.f32.mrf.mxu0
    %2114 = vmatprep.mubr.f32.mxu0 0.0
    %2115 = vmatmul.mubr.f32.gmra.mxu0 %v1796
    %v2116 = vpop.f32.mrf.mxu0
    %v2117 = vadd.f32 %v1972, %v2116
    %v2118 = vpop.f32.mrf.mxu0
    %2119 = vmatprep.mubr.f32.mxu0 0.0
    %2120 = vmatmul.mubr.f32.gmra.mxu0 %v1797
    %v2121 = vpop.f32.mrf.mxu0
    %v2122 = vadd.f32 %v1977, %v2121
    %v2123 = vpop.f32.mrf.mxu0
    %2124 = vmatprep.mubr.f32.mxu0 0.0
    %2125 = vmatmul.mubr.f32.gmra.mxu0 %v1798
    %v2126 = vpop.f32.mrf.mxu0
    %v2127 = vadd.f32 %v1982, %v2126
    %v2128 = vpop.f32.mrf.mxu0
    %2129 = vmatprep.mubr.f32.mxu0 0.0
    %2130 = vmatmul.mubr.f32.gmra.mxu0 %v1799
    %v2131 = vpop.f32.mrf.mxu0
    %v2132 = vadd.f32 %v1987, %v2131
    %v2133 = vpop.f32.mrf.mxu0
    %2134 = vmatprep.mubr.f32.mxu0 0.0
    %2135 = vmatmul.mubr.f32.gmra.mxu0 %v1800
    %v2136 = vpop.f32.mrf.mxu0
    %v2137 = vadd.f32 %v1992, %v2136
    %v2138 = vpop.f32.mrf.mxu0
    %2139 = vdwg.mxu0
    %v2140 = vld [vmem:[#allocation2 + $0x2] sm:$0xff]
    %v2141 = vld [vmem:[#allocation2 + $0x12] sm:$0xff]
    %v2142 = vld [vmem:[#allocation2 + $0x22] sm:$0xff]
    %v2143 = vld [vmem:[#allocation2 + $0x32] sm:$0xff]
    %v2144 = vld [vmem:[#allocation2 + $0x42] sm:$0xff]
    %v2145 = vld [vmem:[#allocation2 + $0x52] sm:$0xff]
    %v2146 = vld [vmem:[#allocation2 + $0x62] sm:$0xff]
    %v2147 = vld [vmem:[#allocation2 + $0x72] sm:$0xff]
    %v2148 = vld [vmem:[#allocation2 + $0xc2] sm:$0xff]
    %v2149 = vld [vmem:[#allocation2 + $0xd2] sm:$0xff]
    %v2150 = vld [vmem:[#allocation2 + $0xe2] sm:$0xff]
    %v2151 = vld [vmem:[#allocation2 + $0xf2] sm:$0xff]
    %v2152 = vld [vmem:[#allocation2 + $0x102] sm:$0xff]
    %v2153 = vld [vmem:[#allocation2 + $0x112] sm:$0xff]
    %v2154 = vld [vmem:[#allocation2 + $0x122] sm:$0xff]
    %v2155 = vld [vmem:[#allocation2 + $0x132] sm:$0xff]
    %s2156 = scalar_lea.vmem %s3, 256
    %v2157 = vld [vmem:[%s2156] sm:$0xff]
    %v2158 = vld [vmem:[%s2156 + $0x8] sm:$0xff]
    %v2159 = vld [vmem:[%s2156 + $0x10] sm:$0xff]
    %v2160 = vld [vmem:[%s2156 + $0x18] sm:$0xff]
    %v2161 = vld [vmem:[%s2156 + $0x20] sm:$0xff]
    %v2162 = vld [vmem:[%s2156 + $0x28] sm:$0xff]
    %v2163 = vld [vmem:[%s2156 + $0x30] sm:$0xff]
    %v2164 = vld [vmem:[%s2156 + $0x38] sm:$0xff]
    %v2165 = vld [vmem:[%s2156 + $0x40] sm:$0xff]
    %v2166 = vld [vmem:[%s2156 + $0x48] sm:$0xff]
    %v2167 = vld [vmem:[%s2156 + $0x50] sm:$0xff]
    %v2168 = vld [vmem:[%s2156 + $0x58] sm:$0xff]
    %v2169 = vld [vmem:[%s2156 + $0x60] sm:$0xff]
    %v2170 = vld [vmem:[%s2156 + $0x68] sm:$0xff]
    %v2171 = vld [vmem:[%s2156 + $0x70] sm:$0xff]
    %v2172 = vld [vmem:[%s2156 + $0x78] sm:$0xff]
    %2173 = vmatprep.subr.mxu0 0.0
    %2174 = vmatpush1.msra.mxu0 %v2172
    %2175 = vmatprep.subr.mxu0 0.0
    %2176 = vmatpush1.msra.mxu0 %v2171
    %2177 = vmatprep.subr.mxu0 0.0
    %2178 = vmatpush1.msra.mxu0 %v2170
    %2179 = vmatprep.subr.mxu0 0.0
    %2180 = vmatpush1.msra.mxu0 %v2169
    %2181 = vmatprep.subr.mxu0 0.0
    %2182 = vmatpush1.msra.mxu0 %v2168
    %2183 = vmatprep.subr.mxu0 0.0
    %2184 = vmatpush1.msra.mxu0 %v2167
    %2185 = vmatprep.subr.mxu0 0.0
    %2186 = vmatpush1.msra.mxu0 %v2166
    %2187 = vmatprep.subr.mxu0 0.0
    %2188 = vmatpush1.msra.mxu0 %v2165
    %2189 = vmatprep.subr.mxu0 0.0
    %2190 = vmatpush1.msra.mxu0 %v2164
    %2191 = vmatprep.subr.mxu0 0.0
    %2192 = vmatpush1.msra.mxu0 %v2163
    %2193 = vmatprep.subr.mxu0 0.0
    %2194 = vmatpush1.msra.mxu0 %v2162
    %2195 = vmatprep.subr.mxu0 0.0
    %2196 = vmatpush1.msra.mxu0 %v2161
    %2197 = vmatprep.subr.mxu0 0.0
    %2198 = vmatpush1.msra.mxu0 %v2160
    %2199 = vmatprep.subr.mxu0 0.0
    %2200 = vmatpush1.msra.mxu0 %v2159
    %2201 = vmatprep.subr.mxu0 0.0
    %2202 = vmatpush1.msra.mxu0 %v2158
    %2203 = vmatprep.subr.mxu0 0.0
    %2204 = vmatpush1.msra.mxu0 %v2157
    %2205 = vmatprep.subr.mxu0 0.0
    %2206 = vmatpush2.msra.mxu0 0.0
    %2207 = vmatprep.subr.mxu0 0.0
    %2208 = vmatpush2.msra.mxu0 0.0
    %2209 = vmatprep.subr.mxu0 0.0
    %2210 = vmatpush2.msra.mxu0 0.0
    %2211 = vmatprep.subr.mxu0 0.0
    %2212 = vmatpush2.msra.mxu0 0.0
    %2213 = vmatprep.subr.mxu0 0.0
    %2214 = vmatpush2.msra.mxu0 0.0
    %2215 = vmatprep.subr.mxu0 0.0
    %2216 = vmatpush2.msra.mxu0 0.0
    %2217 = vmatprep.subr.mxu0 0.0
    %2218 = vmatpush2.msra.mxu0 0.0
    %2219 = vmatprep.subr.mxu0 0.0
    %2220 = vmatpush2.msra.mxu0 0.0
    %2221 = vmatprep.subr.mxu0 0.0
    %2222 = vmatpush2.msra.mxu0 0.0
    %2223 = vmatprep.subr.mxu0 0.0
    %2224 = vmatpush2.msra.mxu0 0.0
    %2225 = vmatprep.subr.mxu0 0.0
    %2226 = vmatpush2.msra.mxu0 0.0
    %2227 = vmatprep.subr.mxu0 0.0
    %2228 = vmatpush2.msra.mxu0 0.0
    %2229 = vmatprep.subr.mxu0 0.0
    %2230 = vmatpush2.msra.mxu0 0.0
    %2231 = vmatprep.subr.mxu0 0.0
    %2232 = vmatpush2.msra.mxu0 0.0
    %2233 = vmatprep.subr.mxu0 0.0
    %2234 = vmatpush2.msra.mxu0 0.0
    %2235 = vmatprep.subr.mxu0 0.0
    %2236 = vmatpush2.msra.mxu0 0.0
    %2237 = vmatprep.mubr.f32.mxu0 0.0
    %2238 = vmatmul.mubr.f32.gmra.mxu0 %v2140
    %v2239 = vpop.f32.mrf.mxu0
    %v2240 = vadd.f32 0.0, %v2239
    %v2241 = vpop.f32.mrf.mxu0
    %2242 = vmatprep.mubr.f32.mxu0 0.0
    %2243 = vmatmul.mubr.f32.gmra.mxu0 %v2141
    %v2244 = vpop.f32.mrf.mxu0
    %v2245 = vadd.f32 0.0, %v2244
    %v2246 = vpop.f32.mrf.mxu0
    %2247 = vmatprep.mubr.f32.mxu0 0.0
    %2248 = vmatmul.mubr.f32.gmra.mxu0 %v2142
    %v2249 = vpop.f32.mrf.mxu0
    %v2250 = vadd.f32 0.0, %v2249
    %v2251 = vpop.f32.mrf.mxu0
    %2252 = vmatprep.mubr.f32.mxu0 0.0
    %2253 = vmatmul.mubr.f32.gmra.mxu0 %v2143
    %v2254 = vpop.f32.mrf.mxu0
    %v2255 = vadd.f32 0.0, %v2254
    %v2256 = vpop.f32.mrf.mxu0
    %2257 = vmatprep.mubr.f32.mxu0 0.0
    %2258 = vmatmul.mubr.f32.gmra.mxu0 %v2144
    %v2259 = vpop.f32.mrf.mxu0
    %v2260 = vadd.f32 0.0, %v2259
    %v2261 = vpop.f32.mrf.mxu0
    %2262 = vmatprep.mubr.f32.mxu0 0.0
    %2263 = vmatmul.mubr.f32.gmra.mxu0 %v2145
    %v2264 = vpop.f32.mrf.mxu0
    %v2265 = vadd.f32 0.0, %v2264
    %v2266 = vpop.f32.mrf.mxu0
    %2267 = vmatprep.mubr.f32.mxu0 0.0
    %2268 = vmatmul.mubr.f32.gmra.mxu0 %v2146
    %v2269 = vpop.f32.mrf.mxu0
    %v2270 = vadd.f32 0.0, %v2269
    %v2271 = vpop.f32.mrf.mxu0
    %2272 = vmatprep.mubr.f32.mxu0 0.0
    %2273 = vmatmul.mubr.f32.gmra.mxu0 %v2147
    %v2274 = vpop.f32.mrf.mxu0
    %v2275 = vadd.f32 0.0, %v2274
    %v2276 = vpop.f32.mrf.mxu0
    %2277 = vmatprep.mubr.f32.mxu0 0.0
    %2278 = vmatmul.mubr.f32.gmra.mxu0 %v2148
    %v2279 = vpop.f32.mrf.mxu0
    %v2280 = vadd.f32 0.0, %v2279
    %v2281 = vpop.f32.mrf.mxu0
    %2282 = vmatprep.mubr.f32.mxu0 0.0
    %2283 = vmatmul.mubr.f32.gmra.mxu0 %v2149
    %v2284 = vpop.f32.mrf.mxu0
    %v2285 = vadd.f32 0.0, %v2284
    %v2286 = vpop.f32.mrf.mxu0
    %2287 = vmatprep.mubr.f32.mxu0 0.0
    %2288 = vmatmul.mubr.f32.gmra.mxu0 %v2150
    %v2289 = vpop.f32.mrf.mxu0
    %v2290 = vadd.f32 0.0, %v2289
    %v2291 = vpop.f32.mrf.mxu0
    %2292 = vmatprep.mubr.f32.mxu0 0.0
    %2293 = vmatmul.mubr.f32.gmra.mxu0 %v2151
    %v2294 = vpop.f32.mrf.mxu0
    %v2295 = vadd.f32 0.0, %v2294
    %v2296 = vpop.f32.mrf.mxu0
    %2297 = vmatprep.mubr.f32.mxu0 0.0
    %2298 = vmatmul.mubr.f32.gmra.mxu0 %v2152
    %v2299 = vpop.f32.mrf.mxu0
    %v2300 = vadd.f32 0.0, %v2299
    %v2301 = vpop.f32.mrf.mxu0
    %2302 = vmatprep.mubr.f32.mxu0 0.0
    %2303 = vmatmul.mubr.f32.gmra.mxu0 %v2153
    %v2304 = vpop.f32.mrf.mxu0
    %v2305 = vadd.f32 0.0, %v2304
    %v2306 = vpop.f32.mrf.mxu0
    %2307 = vmatprep.mubr.f32.mxu0 0.0
    %2308 = vmatmul.mubr.f32.gmra.mxu0 %v2154
    %v2309 = vpop.f32.mrf.mxu0
    %v2310 = vadd.f32 0.0, %v2309
    %v2311 = vpop.f32.mrf.mxu0
    %2312 = vmatprep.mubr.f32.mxu0 0.0
    %2313 = vmatmul.mubr.f32.gmra.mxu0 %v2155
    %v2314 = vpop.f32.mrf.mxu0
    %v2315 = vadd.f32 0.0, %v2314
    %v2316 = vpop.f32.mrf.mxu0
    %2317 = vdwg.mxu0
    %v2318 = vadd.f32 %v2062, %v2240
    %v2319 = vadd.f32 %v2067, %v2245
    %v2320 = vadd.f32 %v2072, %v2250
    %v2321 = vadd.f32 %v2077, %v2255
    %v2322 = vadd.f32 %v2082, %v2260
    %v2323 = vadd.f32 %v2087, %v2265
    %v2324 = vadd.f32 %v2092, %v2270
    %v2325 = vadd.f32 %v2097, %v2275
    %v2326 = vadd.f32 %v2102, %v2280
    %v2327 = vadd.f32 %v2107, %v2285
    %v2328 = vadd.f32 %v2112, %v2290
    %v2329 = vadd.f32 %v2117, %v2295
    %v2330 = vadd.f32 %v2122, %v2300
    %v2331 = vadd.f32 %v2127, %v2305
    %v2332 = vadd.f32 %v2132, %v2310
    %v2333 = vadd.f32 %v2137, %v2315
    %v2334 = vld [vmem:[#allocation2 + $0x3] sm:$0xff]
    %v2335 = vld [vmem:[#allocation2 + $0x13] sm:$0xff]
    %v2336 = vld [vmem:[#allocation2 + $0x23] sm:$0xff]
    %v2337 = vld [vmem:[#allocation2 + $0x33] sm:$0xff]
    %v2338 = vld [vmem:[#allocation2 + $0x43] sm:$0xff]
    %v2339 = vld [vmem:[#allocation2 + $0x53] sm:$0xff]
    %v2340 = vld [vmem:[#allocation2 + $0x63] sm:$0xff]
    %v2341 = vld [vmem:[#allocation2 + $0x73] sm:$0xff]
    %v2342 = vld [vmem:[#allocation2 + $0xc3] sm:$0xff]
    %v2343 = vld [vmem:[#allocation2 + $0xd3] sm:$0xff]
    %v2344 = vld [vmem:[#allocation2 + $0xe3] sm:$0xff]
    %v2345 = vld [vmem:[#allocation2 + $0xf3] sm:$0xff]
    %v2346 = vld [vmem:[#allocation2 + $0x103] sm:$0xff]
    %v2347 = vld [vmem:[#allocation2 + $0x113] sm:$0xff]
    %v2348 = vld [vmem:[#allocation2 + $0x123] sm:$0xff]
    %v2349 = vld [vmem:[#allocation2 + $0x133] sm:$0xff]
    %s2350 = scalar_lea.vmem %s3, 384
    %v2351 = vld [vmem:[%s2350] sm:$0xff]
    %v2352 = vld [vmem:[%s2350 + $0x8] sm:$0xff]
    %v2353 = vld [vmem:[%s2350 + $0x10] sm:$0xff]
    %v2354 = vld [vmem:[%s2350 + $0x18] sm:$0xff]
    %v2355 = vld [vmem:[%s2350 + $0x20] sm:$0xff]
    %v2356 = vld [vmem:[%s2350 + $0x28] sm:$0xff]
    %v2357 = vld [vmem:[%s2350 + $0x30] sm:$0xff]
    %v2358 = vld [vmem:[%s2350 + $0x38] sm:$0xff]
    %v2359 = vld [vmem:[%s2350 + $0x40] sm:$0xff]
    %v2360 = vld [vmem:[%s2350 + $0x48] sm:$0xff]
    %v2361 = vld [vmem:[%s2350 + $0x50] sm:$0xff]
    %v2362 = vld [vmem:[%s2350 + $0x58] sm:$0xff]
    %v2363 = vld [vmem:[%s2350 + $0x60] sm:$0xff]
    %v2364 = vld [vmem:[%s2350 + $0x68] sm:$0xff]
    %v2365 = vld [vmem:[%s2350 + $0x70] sm:$0xff]
    %v2366 = vld [vmem:[%s2350 + $0x78] sm:$0xff]
    %2367 = vmatprep.subr.mxu0 0.0
    %2368 = vmatpush1.msra.mxu0 %v2366
    %2369 = vmatprep.subr.mxu0 0.0
    %2370 = vmatpush1.msra.mxu0 %v2365
    %2371 = vmatprep.subr.mxu0 0.0
    %2372 = vmatpush1.msra.mxu0 %v2364
    %2373 = vmatprep.subr.mxu0 0.0
    %2374 = vmatpush1.msra.mxu0 %v2363
    %2375 = vmatprep.subr.mxu0 0.0
    %2376 = vmatpush1.msra.mxu0 %v2362
    %2377 = vmatprep.subr.mxu0 0.0
    %2378 = vmatpush1.msra.mxu0 %v2361
    %2379 = vmatprep.subr.mxu0 0.0
    %2380 = vmatpush1.msra.mxu0 %v2360
    %2381 = vmatprep.subr.mxu0 0.0
    %2382 = vmatpush1.msra.mxu0 %v2359
    %2383 = vmatprep.subr.mxu0 0.0
    %2384 = vmatpush1.msra.mxu0 %v2358
    %2385 = vmatprep.subr.mxu0 0.0
    %2386 = vmatpush1.msra.mxu0 %v2357
    %2387 = vmatprep.subr.mxu0 0.0
    %2388 = vmatpush1.msra.mxu0 %v2356
    %2389 = vmatprep.subr.mxu0 0.0
    %2390 = vmatpush1.msra.mxu0 %v2355
    %2391 = vmatprep.subr.mxu0 0.0
    %2392 = vmatpush1.msra.mxu0 %v2354
    %2393 = vmatprep.subr.mxu0 0.0
    %2394 = vmatpush1.msra.mxu0 %v2353
    %2395 = vmatprep.subr.mxu0 0.0
    %2396 = vmatpush1.msra.mxu0 %v2352
    %2397 = vmatprep.subr.mxu0 0.0
    %2398 = vmatpush1.msra.mxu0 %v2351
    %2399 = vmatprep.subr.mxu0 0.0
    %2400 = vmatpush2.msra.mxu0 0.0
    %2401 = vmatprep.subr.mxu0 0.0
    %2402 = vmatpush2.msra.mxu0 0.0
    %2403 = vmatprep.subr.mxu0 0.0
    %2404 = vmatpush2.msra.mxu0 0.0
    %2405 = vmatprep.subr.mxu0 0.0
    %2406 = vmatpush2.msra.mxu0 0.0
    %2407 = vmatprep.subr.mxu0 0.0
    %2408 = vmatpush2.msra.mxu0 0.0
    %2409 = vmatprep.subr.mxu0 0.0
    %2410 = vmatpush2.msra.mxu0 0.0
    %2411 = vmatprep.subr.mxu0 0.0
    %2412 = vmatpush2.msra.mxu0 0.0
    %2413 = vmatprep.subr.mxu0 0.0
    %2414 = vmatpush2.msra.mxu0 0.0
    %2415 = vmatprep.subr.mxu0 0.0
    %2416 = vmatpush2.msra.mxu0 0.0
    %2417 = vmatprep.subr.mxu0 0.0
    %2418 = vmatpush2.msra.mxu0 0.0
    %2419 = vmatprep.subr.mxu0 0.0
    %2420 = vmatpush2.msra.mxu0 0.0
    %2421 = vmatprep.subr.mxu0 0.0
    %2422 = vmatpush2.msra.mxu0 0.0
    %2423 = vmatprep.subr.mxu0 0.0
    %2424 = vmatpush2.msra.mxu0 0.0
    %2425 = vmatprep.subr.mxu0 0.0
    %2426 = vmatpush2.msra.mxu0 0.0
    %2427 = vmatprep.subr.mxu0 0.0
    %2428 = vmatpush2.msra.mxu0 0.0
    %2429 = vmatprep.subr.mxu0 0.0
    %2430 = vmatpush2.msra.mxu0 0.0
    %2431 = vmatprep.mubr.f32.mxu0 0.0
    %2432 = vmatmul.mubr.f32.gmra.mxu0 %v2334
    %v2433 = vpop.f32.mrf.mxu0
    %v2434 = vadd.f32 0.0, %v2433
    %v2435 = vpop.f32.mrf.mxu0
    %2436 = vmatprep.mubr.f32.mxu0 0.0
    %2437 = vmatmul.mubr.f32.gmra.mxu0 %v2335
    %v2438 = vpop.f32.mrf.mxu0
    %v2439 = vadd.f32 0.0, %v2438
    %v2440 = vpop.f32.mrf.mxu0
    %2441 = vmatprep.mubr.f32.mxu0 0.0
    %2442 = vmatmul.mubr.f32.gmra.mxu0 %v2336
    %v2443 = vpop.f32.mrf.mxu0
    %v2444 = vadd.f32 0.0, %v2443
    %v2445 = vpop.f32.mrf.mxu0
    %2446 = vmatprep.mubr.f32.mxu0 0.0
    %2447 = vmatmul.mubr.f32.gmra.mxu0 %v2337
    %v2448 = vpop.f32.mrf.mxu0
    %v2449 = vadd.f32 0.0, %v2448
    %v2450 = vpop.f32.mrf.mxu0
    %2451 = vmatprep.mubr.f32.mxu0 0.0
    %2452 = vmatmul.mubr.f32.gmra.mxu0 %v2338
    %v2453 = vpop.f32.mrf.mxu0
    %v2454 = vadd.f32 0.0, %v2453
    %v2455 = vpop.f32.mrf.mxu0
    %2456 = vmatprep.mubr.f32.mxu0 0.0
    %2457 = vmatmul.mubr.f32.gmra.mxu0 %v2339
    %v2458 = vpop.f32.mrf.mxu0
    %v2459 = vadd.f32 0.0, %v2458
    %v2460 = vpop.f32.mrf.mxu0
    %2461 = vmatprep.mubr.f32.mxu0 0.0
    %2462 = vmatmul.mubr.f32.gmra.mxu0 %v2340
    %v2463 = vpop.f32.mrf.mxu0
    %v2464 = vadd.f32 0.0, %v2463
    %v2465 = vpop.f32.mrf.mxu0
    %2466 = vmatprep.mubr.f32.mxu0 0.0
    %2467 = vmatmul.mubr.f32.gmra.mxu0 %v2341
    %v2468 = vpop.f32.mrf.mxu0
    %v2469 = vadd.f32 0.0, %v2468
    %v2470 = vpop.f32.mrf.mxu0
    %2471 = vmatprep.mubr.f32.mxu0 0.0
    %2472 = vmatmul.mubr.f32.gmra.mxu0 %v2342
    %v2473 = vpop.f32.mrf.mxu0
    %v2474 = vadd.f32 0.0, %v2473
    %v2475 = vpop.f32.mrf.mxu0
    %2476 = vmatprep.mubr.f32.mxu0 0.0
    %2477 = vmatmul.mubr.f32.gmra.mxu0 %v2343
    %v2478 = vpop.f32.mrf.mxu0
    %v2479 = vadd.f32 0.0, %v2478
    %v2480 = vpop.f32.mrf.mxu0
    %2481 = vmatprep.mubr.f32.mxu0 0.0
    %2482 = vmatmul.mubr.f32.gmra.mxu0 %v2344
    %v2483 = vpop.f32.mrf.mxu0
    %v2484 = vadd.f32 0.0, %v2483
    %v2485 = vpop.f32.mrf.mxu0
    %2486 = vmatprep.mubr.f32.mxu0 0.0
    %2487 = vmatmul.mubr.f32.gmra.mxu0 %v2345
    %v2488 = vpop.f32.mrf.mxu0
    %v2489 = vadd.f32 0.0, %v2488
    %v2490 = vpop.f32.mrf.mxu0
    %2491 = vmatprep.mubr.f32.mxu0 0.0
    %2492 = vmatmul.mubr.f32.gmra.mxu0 %v2346
    %v2493 = vpop.f32.mrf.mxu0
    %v2494 = vadd.f32 0.0, %v2493
    %v2495 = vpop.f32.mrf.mxu0
    %2496 = vmatprep.mubr.f32.mxu0 0.0
    %2497 = vmatmul.mubr.f32.gmra.mxu0 %v2347
    %v2498 = vpop.f32.mrf.mxu0
    %v2499 = vadd.f32 0.0, %v2498
    %v2500 = vpop.f32.mrf.mxu0
    %2501 = vmatprep.mubr.f32.mxu0 0.0
    %2502 = vmatmul.mubr.f32.gmra.mxu0 %v2348
    %v2503 = vpop.f32.mrf.mxu0
    %v2504 = vadd.f32 0.0, %v2503
    %v2505 = vpop.f32.mrf.mxu0
    %2506 = vmatprep.mubr.f32.mxu0 0.0
    %2507 = vmatmul.mubr.f32.gmra.mxu0 %v2349
    %v2508 = vpop.f32.mrf.mxu0
    %v2509 = vadd.f32 0.0, %v2508
    %v2510 = vpop.f32.mrf.mxu0
    %2511 = vdwg.mxu0
    %v2512 = vadd.f32 %v2318, %v2434
    %v2513 = vadd.f32 %v2319, %v2439
    %v2514 = vadd.f32 %v2320, %v2444
    %v2515 = vadd.f32 %v2321, %v2449
    %v2516 = vadd.f32 %v2322, %v2454
    %v2517 = vadd.f32 %v2323, %v2459
    %v2518 = vadd.f32 %v2324, %v2464
    %v2519 = vadd.f32 %v2325, %v2469
    %v2520 = vadd.f32 %v2326, %v2474
    %v2521 = vadd.f32 %v2327, %v2479
    %v2522 = vadd.f32 %v2328, %v2484
    %v2523 = vadd.f32 %v2329, %v2489
    %v2524 = vadd.f32 %v2330, %v2494
    %v2525 = vadd.f32 %v2331, %v2499
    %v2526 = vadd.f32 %v2332, %v2504
    %v2527 = vadd.f32 %v2333, %v2509
    %v2528 = vld [vmem:[#allocation2 + $0x4] sm:$0xff]
    %v2529 = vld [vmem:[#allocation2 + $0x14] sm:$0xff]
    %v2530 = vld [vmem:[#allocation2 + $0x24] sm:$0xff]
    %v2531 = vld [vmem:[#allocation2 + $0x34] sm:$0xff]
    %v2532 = vld [vmem:[#allocation2 + $0x44] sm:$0xff]
    %v2533 = vld [vmem:[#allocation2 + $0x54] sm:$0xff]
    %v2534 = vld [vmem:[#allocation2 + $0x64] sm:$0xff]
    %v2535 = vld [vmem:[#allocation2 + $0x74] sm:$0xff]
    %v2536 = vld [vmem:[#allocation2 + $0xc4] sm:$0xff]
    %v2537 = vld [vmem:[#allocation2 + $0xd4] sm:$0xff]
    %v2538 = vld [vmem:[#allocation2 + $0xe4] sm:$0xff]
    %v2539 = vld [vmem:[#allocation2 + $0xf4] sm:$0xff]
    %v2540 = vld [vmem:[#allocation2 + $0x104] sm:$0xff]
    %v2541 = vld [vmem:[#allocation2 + $0x114] sm:$0xff]
    %v2542 = vld [vmem:[#allocation2 + $0x124] sm:$0xff]
    %v2543 = vld [vmem:[#allocation2 + $0x134] sm:$0xff]
    %s2544 = scalar_lea.vmem %s3, 512
    %v2545 = vld [vmem:[%s2544] sm:$0xff]
    %v2546 = vld [vmem:[%s2544 + $0x8] sm:$0xff]
    %v2547 = vld [vmem:[%s2544 + $0x10] sm:$0xff]
    %v2548 = vld [vmem:[%s2544 + $0x18] sm:$0xff]
    %v2549 = vld [vmem:[%s2544 + $0x20] sm:$0xff]
    %v2550 = vld [vmem:[%s2544 + $0x28] sm:$0xff]
    %v2551 = vld [vmem:[%s2544 + $0x30] sm:$0xff]
    %v2552 = vld [vmem:[%s2544 + $0x38] sm:$0xff]
    %v2553 = vld [vmem:[%s2544 + $0x40] sm:$0xff]
    %v2554 = vld [vmem:[%s2544 + $0x48] sm:$0xff]
    %v2555 = vld [vmem:[%s2544 + $0x50] sm:$0xff]
    %v2556 = vld [vmem:[%s2544 + $0x58] sm:$0xff]
    %v2557 = vld [vmem:[%s2544 + $0x60] sm:$0xff]
    %v2558 = vld [vmem:[%s2544 + $0x68] sm:$0xff]
    %v2559 = vld [vmem:[%s2544 + $0x70] sm:$0xff]
    %v2560 = vld [vmem:[%s2544 + $0x78] sm:$0xff]
    %2561 = vmatprep.subr.mxu0 0.0
    %2562 = vmatpush1.msra.mxu0 %v2560
    %2563 = vmatprep.subr.mxu0 0.0
    %2564 = vmatpush1.msra.mxu0 %v2559
    %2565 = vmatprep.subr.mxu0 0.0
    %2566 = vmatpush1.msra.mxu0 %v2558
    %2567 = vmatprep.subr.mxu0 0.0
    %2568 = vmatpush1.msra.mxu0 %v2557
    %2569 = vmatprep.subr.mxu0 0.0
    %2570 = vmatpush1.msra.mxu0 %v2556
    %2571 = vmatprep.subr.mxu0 0.0
    %2572 = vmatpush1.msra.mxu0 %v2555
    %2573 = vmatprep.subr.mxu0 0.0
    %2574 = vmatpush1.msra.mxu0 %v2554
    %2575 = vmatprep.subr.mxu0 0.0
    %2576 = vmatpush1.msra.mxu0 %v2553
    %2577 = vmatprep.subr.mxu0 0.0
    %2578 = vmatpush1.msra.mxu0 %v2552
    %2579 = vmatprep.subr.mxu0 0.0
    %2580 = vmatpush1.msra.mxu0 %v2551
    %2581 = vmatprep.subr.mxu0 0.0
    %2582 = vmatpush1.msra.mxu0 %v2550
    %2583 = vmatprep.subr.mxu0 0.0
    %2584 = vmatpush1.msra.mxu0 %v2549
    %2585 = vmatprep.subr.mxu0 0.0
    %2586 = vmatpush1.msra.mxu0 %v2548
    %2587 = vmatprep.subr.mxu0 0.0
    %2588 = vmatpush1.msra.mxu0 %v2547
    %2589 = vmatprep.subr.mxu0 0.0
    %2590 = vmatpush1.msra.mxu0 %v2546
    %2591 = vmatprep.subr.mxu0 0.0
    %2592 = vmatpush1.msra.mxu0 %v2545
    %2593 = vmatprep.subr.mxu0 0.0
    %2594 = vmatpush2.msra.mxu0 0.0
    %2595 = vmatprep.subr.mxu0 0.0
    %2596 = vmatpush2.msra.mxu0 0.0
    %2597 = vmatprep.subr.mxu0 0.0
    %2598 = vmatpush2.msra.mxu0 0.0
    %2599 = vmatprep.subr.mxu0 0.0
    %2600 = vmatpush2.msra.mxu0 0.0
    %2601 = vmatprep.subr.mxu0 0.0
    %2602 = vmatpush2.msra.mxu0 0.0
    %2603 = vmatprep.subr.mxu0 0.0
    %2604 = vmatpush2.msra.mxu0 0.0
    %2605 = vmatprep.subr.mxu0 0.0
    %2606 = vmatpush2.msra.mxu0 0.0
    %2607 = vmatprep.subr.mxu0 0.0
    %2608 = vmatpush2.msra.mxu0 0.0
    %2609 = vmatprep.subr.mxu0 0.0
    %2610 = vmatpush2.msra.mxu0 0.0
    %2611 = vmatprep.subr.mxu0 0.0
    %2612 = vmatpush2.msra.mxu0 0.0
    %2613 = vmatprep.subr.mxu0 0.0
    %2614 = vmatpush2.msra.mxu0 0.0
    %2615 = vmatprep.subr.mxu0 0.0
    %2616 = vmatpush2.msra.mxu0 0.0
    %2617 = vmatprep.subr.mxu0 0.0
    %2618 = vmatpush2.msra.mxu0 0.0
    %2619 = vmatprep.subr.mxu0 0.0
    %2620 = vmatpush2.msra.mxu0 0.0
    %2621 = vmatprep.subr.mxu0 0.0
    %2622 = vmatpush2.msra.mxu0 0.0
    %2623 = vmatprep.subr.mxu0 0.0
    %2624 = vmatpush2.msra.mxu0 0.0
    %2625 = vmatprep.mubr.f32.mxu0 0.0
    %2626 = vmatmul.mubr.f32.gmra.mxu0 %v2528
    %v2627 = vpop.f32.mrf.mxu0
    %v2628 = vadd.f32 0.0, %v2627
    %v2629 = vpop.f32.mrf.mxu0
    %2630 = vmatprep.mubr.f32.mxu0 0.0
    %2631 = vmatmul.mubr.f32.gmra.mxu0 %v2529
    %v2632 = vpop.f32.mrf.mxu0
    %v2633 = vadd.f32 0.0, %v2632
    %v2634 = vpop.f32.mrf.mxu0
    %2635 = vmatprep.mubr.f32.mxu0 0.0
    %2636 = vmatmul.mubr.f32.gmra.mxu0 %v2530
    %v2637 = vpop.f32.mrf.mxu0
    %v2638 = vadd.f32 0.0, %v2637
    %v2639 = vpop.f32.mrf.mxu0
    %2640 = vmatprep.mubr.f32.mxu0 0.0
    %2641 = vmatmul.mubr.f32.gmra.mxu0 %v2531
    %v2642 = vpop.f32.mrf.mxu0
    %v2643 = vadd.f32 0.0, %v2642
    %v2644 = vpop.f32.mrf.mxu0
    %2645 = vmatprep.mubr.f32.mxu0 0.0
    %2646 = vmatmul.mubr.f32.gmra.mxu0 %v2532
    %v2647 = vpop.f32.mrf.mxu0
    %v2648 = vadd.f32 0.0, %v2647
    %v2649 = vpop.f32.mrf.mxu0
    %2650 = vmatprep.mubr.f32.mxu0 0.0
    %2651 = vmatmul.mubr.f32.gmra.mxu0 %v2533
    %v2652 = vpop.f32.mrf.mxu0
    %v2653 = vadd.f32 0.0, %v2652
    %v2654 = vpop.f32.mrf.mxu0
    %2655 = vmatprep.mubr.f32.mxu0 0.0
    %2656 = vmatmul.mubr.f32.gmra.mxu0 %v2534
    %v2657 = vpop.f32.mrf.mxu0
    %v2658 = vadd.f32 0.0, %v2657
    %v2659 = vpop.f32.mrf.mxu0
    %2660 = vmatprep.mubr.f32.mxu0 0.0
    %2661 = vmatmul.mubr.f32.gmra.mxu0 %v2535
    %v2662 = vpop.f32.mrf.mxu0
    %v2663 = vadd.f32 0.0, %v2662
    %v2664 = vpop.f32.mrf.mxu0
    %2665 = vmatprep.mubr.f32.mxu0 0.0
    %2666 = vmatmul.mubr.f32.gmra.mxu0 %v2536
    %v2667 = vpop.f32.mrf.mxu0
    %v2668 = vadd.f32 0.0, %v2667
    %v2669 = vpop.f32.mrf.mxu0
    %2670 = vmatprep.mubr.f32.mxu0 0.0
    %2671 = vmatmul.mubr.f32.gmra.mxu0 %v2537
    %v2672 = vpop.f32.mrf.mxu0
    %v2673 = vadd.f32 0.0, %v2672
    %v2674 = vpop.f32.mrf.mxu0
    %2675 = vmatprep.mubr.f32.mxu0 0.0
    %2676 = vmatmul.mubr.f32.gmra.mxu0 %v2538
    %v2677 = vpop.f32.mrf.mxu0
    %v2678 = vadd.f32 0.0, %v2677
    %v2679 = vpop.f32.mrf.mxu0
    %2680 = vmatprep.mubr.f32.mxu0 0.0
    %2681 = vmatmul.mubr.f32.gmra.mxu0 %v2539
    %v2682 = vpop.f32.mrf.mxu0
    %v2683 = vadd.f32 0.0, %v2682
    %v2684 = vpop.f32.mrf.mxu0
    %2685 = vmatprep.mubr.f32.mxu0 0.0
    %2686 = vmatmul.mubr.f32.gmra.mxu0 %v2540
    %v2687 = vpop.f32.mrf.mxu0
    %v2688 = vadd.f32 0.0, %v2687
    %v2689 = vpop.f32.mrf.mxu0
    %2690 = vmatprep.mubr.f32.mxu0 0.0
    %2691 = vmatmul.mubr.f32.gmra.mxu0 %v2541
    %v2692 = vpop.f32.mrf.mxu0
    %v2693 = vadd.f32 0.0, %v2692
    %v2694 = vpop.f32.mrf.mxu0
    %2695 = vmatprep.mubr.f32.mxu0 0.0
    %2696 = vmatmul.mubr.f32.gmra.mxu0 %v2542
    %v2697 = vpop.f32.mrf.mxu0
    %v2698 = vadd.f32 0.0, %v2697
    %v2699 = vpop.f32.mrf.mxu0
    %2700 = vmatprep.mubr.f32.mxu0 0.0
    %2701 = vmatmul.mubr.f32.gmra.mxu0 %v2543
    %v2702 = vpop.f32.mrf.mxu0
    %v2703 = vadd.f32 0.0, %v2702
    %v2704 = vpop.f32.mrf.mxu0
    %2705 = vdwg.mxu0
    %v2706 = vadd.f32 %v2512, %v2628
    %v2707 = vadd.f32 %v2513, %v2633
    %v2708 = vadd.f32 %v2514, %v2638
    %v2709 = vadd.f32 %v2515, %v2643
    %v2710 = vadd.f32 %v2516, %v2648
    %v2711 = vadd.f32 %v2517, %v2653
    %v2712 = vadd.f32 %v2518, %v2658
    %v2713 = vadd.f32 %v2519, %v2663
    %v2714 = vadd.f32 %v2520, %v2668
    %v2715 = vadd.f32 %v2521, %v2673
    %v2716 = vadd.f32 %v2522, %v2678
    %v2717 = vadd.f32 %v2523, %v2683
    %v2718 = vadd.f32 %v2524, %v2688
    %v2719 = vadd.f32 %v2525, %v2693
    %v2720 = vadd.f32 %v2526, %v2698
    %v2721 = vadd.f32 %v2527, %v2703
    %v2722 = vld [vmem:[%s1716] sm:$0xff]
    %v2723 = vld [vmem:[%s1716 + $0x10] sm:$0xff]
    %v2724 = vld [vmem:[%s1716 + $0x20] sm:$0xff]
    %v2725 = vld [vmem:[%s1716 + $0x30] sm:$0xff]
    %v2726 = vld [vmem:[%s1716 + $0x40] sm:$0xff]
    %v2727 = vld [vmem:[%s1716 + $0x50] sm:$0xff]
    %v2728 = vld [vmem:[%s1716 + $0x60] sm:$0xff]
    %v2729 = vld [vmem:[%s1716 + $0x70] sm:$0xff]
    %v2730 = vld [vmem:[%s1716 + $0xc0] sm:$0xff]
    %v2731 = vld [vmem:[%s1716 + $0xd0] sm:$0xff]
    %v2732 = vld [vmem:[%s1716 + $0xe0] sm:$0xff]
    %v2733 = vld [vmem:[%s1716 + $0xf0] sm:$0xff]
    %v2734 = vld [vmem:[%s1716 + $0x100] sm:$0xff]
    %v2735 = vld [vmem:[%s1716 + $0x110] sm:$0xff]
    %v2736 = vld [vmem:[%s1716 + $0x120] sm:$0xff]
    %v2737 = vld [vmem:[%s1716 + $0x130] sm:$0xff]
    %s2738 = scalar_lea.vmem %s3, 640
    %v2739 = vld [vmem:[%s2738] sm:$0xff]
    %v2740 = vld [vmem:[%s2738 + $0x8] sm:$0xff]
    %v2741 = vld [vmem:[%s2738 + $0x10] sm:$0xff]
    %v2742 = vld [vmem:[%s2738 + $0x18] sm:$0xff]
    %v2743 = vld [vmem:[%s2738 + $0x20] sm:$0xff]
    %v2744 = vld [vmem:[%s2738 + $0x28] sm:$0xff]
    %v2745 = vld [vmem:[%s2738 + $0x30] sm:$0xff]
    %v2746 = vld [vmem:[%s2738 + $0x38] sm:$0xff]
    %v2747 = vld [vmem:[%s2738 + $0x40] sm:$0xff]
    %v2748 = vld [vmem:[%s2738 + $0x48] sm:$0xff]
    %v2749 = vld [vmem:[%s2738 + $0x50] sm:$0xff]
    %v2750 = vld [vmem:[%s2738 + $0x58] sm:$0xff]
    %v2751 = vld [vmem:[%s2738 + $0x60] sm:$0xff]
    %v2752 = vld [vmem:[%s2738 + $0x68] sm:$0xff]
    %v2753 = vld [vmem:[%s2738 + $0x70] sm:$0xff]
    %v2754 = vld [vmem:[%s2738 + $0x78] sm:$0xff]
    %2755 = vmatprep.subr.mxu0 0.0
    %2756 = vmatpush1.msra.mxu0 %v2754
    %2757 = vmatprep.subr.mxu0 0.0
    %2758 = vmatpush1.msra.mxu0 %v2753
    %2759 = vmatprep.subr.mxu0 0.0
    %2760 = vmatpush1.msra.mxu0 %v2752
    %2761 = vmatprep.subr.mxu0 0.0
    %2762 = vmatpush1.msra.mxu0 %v2751
    %2763 = vmatprep.subr.mxu0 0.0
    %2764 = vmatpush1.msra.mxu0 %v2750
    %2765 = vmatprep.subr.mxu0 0.0
    %2766 = vmatpush1.msra.mxu0 %v2749
    %2767 = vmatprep.subr.mxu0 0.0
    %2768 = vmatpush1.msra.mxu0 %v2748
    %2769 = vmatprep.subr.mxu0 0.0
    %2770 = vmatpush1.msra.mxu0 %v2747
    %2771 = vmatprep.subr.mxu0 0.0
    %2772 = vmatpush1.msra.mxu0 %v2746
    %2773 = vmatprep.subr.mxu0 0.0
    %2774 = vmatpush1.msra.mxu0 %v2745
    %2775 = vmatprep.subr.mxu0 0.0
    %2776 = vmatpush1.msra.mxu0 %v2744
    %2777 = vmatprep.subr.mxu0 0.0
    %2778 = vmatpush1.msra.mxu0 %v2743
    %2779 = vmatprep.subr.mxu0 0.0
    %2780 = vmatpush1.msra.mxu0 %v2742
    %2781 = vmatprep.subr.mxu0 0.0
    %2782 = vmatpush1.msra.mxu0 %v2741
    %2783 = vmatprep.subr.mxu0 0.0
    %2784 = vmatpush1.msra.mxu0 %v2740
    %2785 = vmatprep.subr.mxu0 0.0
    %2786 = vmatpush1.msra.mxu0 %v2739
    %2787 = vmatprep.subr.mxu0 0.0
    %2788 = vmatpush2.msra.mxu0 0.0
    %2789 = vmatprep.subr.mxu0 0.0
    %2790 = vmatpush2.msra.mxu0 0.0
    %2791 = vmatprep.subr.mxu0 0.0
    %2792 = vmatpush2.msra.mxu0 0.0
    %2793 = vmatprep.subr.mxu0 0.0
    %2794 = vmatpush2.msra.mxu0 0.0
    %2795 = vmatprep.subr.mxu0 0.0
    %2796 = vmatpush2.msra.mxu0 0.0
    %2797 = vmatprep.subr.mxu0 0.0
    %2798 = vmatpush2.msra.mxu0 0.0
    %2799 = vmatprep.subr.mxu0 0.0
    %2800 = vmatpush2.msra.mxu0 0.0
    %2801 = vmatprep.subr.mxu0 0.0
    %2802 = vmatpush2.msra.mxu0 0.0
    %2803 = vmatprep.subr.mxu0 0.0
    %2804 = vmatpush2.msra.mxu0 0.0
    %2805 = vmatprep.subr.mxu0 0.0
    %2806 = vmatpush2.msra.mxu0 0.0
    %2807 = vmatprep.subr.mxu0 0.0
    %2808 = vmatpush2.msra.mxu0 0.0
    %2809 = vmatprep.subr.mxu0 0.0
    %2810 = vmatpush2.msra.mxu0 0.0
    %2811 = vmatprep.subr.mxu0 0.0
    %2812 = vmatpush2.msra.mxu0 0.0
    %2813 = vmatprep.subr.mxu0 0.0
    %2814 = vmatpush2.msra.mxu0 0.0
    %2815 = vmatprep.subr.mxu0 0.0
    %2816 = vmatpush2.msra.mxu0 0.0
    %2817 = vmatprep.subr.mxu0 0.0
    %2818 = vmatpush2.msra.mxu0 0.0
    %2819 = vmatprep.mubr.f32.mxu0 0.0
    %2820 = vmatmul.mubr.f32.gmra.mxu0 %v2722
    %v2821 = vpop.f32.mrf.mxu0
    %v2822 = vadd.f32 0.0, %v2821
    %v2823 = vpop.f32.mrf.mxu0
    %2824 = vmatprep.mubr.f32.mxu0 0.0
    %2825 = vmatmul.mubr.f32.gmra.mxu0 %v2723
    %v2826 = vpop.f32.mrf.mxu0
    %v2827 = vadd.f32 0.0, %v2826
    %v2828 = vpop.f32.mrf.mxu0
    %2829 = vmatprep.mubr.f32.mxu0 0.0
    %2830 = vmatmul.mubr.f32.gmra.mxu0 %v2724
    %v2831 = vpop.f32.mrf.mxu0
    %v2832 = vadd.f32 0.0, %v2831
    %v2833 = vpop.f32.mrf.mxu0
    %2834 = vmatprep.mubr.f32.mxu0 0.0
    %2835 = vmatmul.mubr.f32.gmra.mxu0 %v2725
    %v2836 = vpop.f32.mrf.mxu0
    %v2837 = vadd.f32 0.0, %v2836
    %v2838 = vpop.f32.mrf.mxu0
    %2839 = vmatprep.mubr.f32.mxu0 0.0
    %2840 = vmatmul.mubr.f32.gmra.mxu0 %v2726
    %v2841 = vpop.f32.mrf.mxu0
    %v2842 = vadd.f32 0.0, %v2841
    %v2843 = vpop.f32.mrf.mxu0
    %2844 = vmatprep.mubr.f32.mxu0 0.0
    %2845 = vmatmul.mubr.f32.gmra.mxu0 %v2727
    %v2846 = vpop.f32.mrf.mxu0
    %v2847 = vadd.f32 0.0, %v2846
    %v2848 = vpop.f32.mrf.mxu0
    %2849 = vmatprep.mubr.f32.mxu0 0.0
    %2850 = vmatmul.mubr.f32.gmra.mxu0 %v2728
    %v2851 = vpop.f32.mrf.mxu0
    %v2852 = vadd.f32 0.0, %v2851
    %v2853 = vpop.f32.mrf.mxu0
    %2854 = vmatprep.mubr.f32.mxu0 0.0
    %2855 = vmatmul.mubr.f32.gmra.mxu0 %v2729
    %v2856 = vpop.f32.mrf.mxu0
    %v2857 = vadd.f32 0.0, %v2856
    %v2858 = vpop.f32.mrf.mxu0
    %2859 = vmatprep.mubr.f32.mxu0 0.0
    %2860 = vmatmul.mubr.f32.gmra.mxu0 %v2730
    %v2861 = vpop.f32.mrf.mxu0
    %v2862 = vadd.f32 0.0, %v2861
    %v2863 = vpop.f32.mrf.mxu0
    %2864 = vmatprep.mubr.f32.mxu0 0.0
    %2865 = vmatmul.mubr.f32.gmra.mxu0 %v2731
    %v2866 = vpop.f32.mrf.mxu0
    %v2867 = vadd.f32 0.0, %v2866
    %v2868 = vpop.f32.mrf.mxu0
    %2869 = vmatprep.mubr.f32.mxu0 0.0
    %2870 = vmatmul.mubr.f32.gmra.mxu0 %v2732
    %v2871 = vpop.f32.mrf.mxu0
    %v2872 = vadd.f32 0.0, %v2871
    %v2873 = vpop.f32.mrf.mxu0
    %2874 = vmatprep.mubr.f32.mxu0 0.0
    %2875 = vmatmul.mubr.f32.gmra.mxu0 %v2733
    %v2876 = vpop.f32.mrf.mxu0
    %v2877 = vadd.f32 0.0, %v2876
    %v2878 = vpop.f32.mrf.mxu0
    %2879 = vmatprep.mubr.f32.mxu0 0.0
    %2880 = vmatmul.mubr.f32.gmra.mxu0 %v2734
    %v2881 = vpop.f32.mrf.mxu0
    %v2882 = vadd.f32 0.0, %v2881
    %v2883 = vpop.f32.mrf.mxu0
    %2884 = vmatprep.mubr.f32.mxu0 0.0
    %2885 = vmatmul.mubr.f32.gmra.mxu0 %v2735
    %v2886 = vpop.f32.mrf.mxu0
    %v2887 = vadd.f32 0.0, %v2886
    %v2888 = vpop.f32.mrf.mxu0
    %2889 = vmatprep.mubr.f32.mxu0 0.0
    %2890 = vmatmul.mubr.f32.gmra.mxu0 %v2736
    %v2891 = vpop.f32.mrf.mxu0
    %v2892 = vadd.f32 0.0, %v2891
    %v2893 = vpop.f32.mrf.mxu0
    %2894 = vmatprep.mubr.f32.mxu0 0.0
    %2895 = vmatmul.mubr.f32.gmra.mxu0 %v2737
    %v2896 = vpop.f32.mrf.mxu0
    %v2897 = vadd.f32 0.0, %v2896
    %v2898 = vpop.f32.mrf.mxu0
    %2899 = vdwg.mxu0
    %v2900 = vadd.f32 %v2706, %v2822
    %v2901 = vadd.f32 %v2707, %v2827
    %v2902 = vadd.f32 %v2708, %v2832
    %v2903 = vadd.f32 %v2709, %v2837
    %v2904 = vadd.f32 %v2710, %v2842
    %v2905 = vadd.f32 %v2711, %v2847
    %v2906 = vadd.f32 %v2712, %v2852
    %v2907 = vadd.f32 %v2713, %v2857
    %v2908 = vadd.f32 %v2714, %v2862
    %v2909 = vadd.f32 %v2715, %v2867
    %v2910 = vadd.f32 %v2716, %v2872
    %v2911 = vadd.f32 %v2717, %v2877
    %v2912 = vadd.f32 %v2718, %v2882
    %v2913 = vadd.f32 %v2719, %v2887
    %v2914 = vadd.f32 %v2720, %v2892
    %v2915 = vadd.f32 %v2721, %v2897
    %v2916 = vld [vmem:[%s1716 + $0x1] sm:$0xff]
    %v2917 = vld [vmem:[%s1716 + $0x11] sm:$0xff]
    %v2918 = vld [vmem:[%s1716 + $0x21] sm:$0xff]
    %v2919 = vld [vmem:[%s1716 + $0x31] sm:$0xff]
    %v2920 = vld [vmem:[%s1716 + $0x41] sm:$0xff]
    %v2921 = vld [vmem:[%s1716 + $0x51] sm:$0xff]
    %v2922 = vld [vmem:[%s1716 + $0x61] sm:$0xff]
    %v2923 = vld [vmem:[%s1716 + $0x71] sm:$0xff]
    %v2924 = vld [vmem:[%s1716 + $0xc1] sm:$0xff]
    %v2925 = vld [vmem:[%s1716 + $0xd1] sm:$0xff]
    %v2926 = vld [vmem:[%s1716 + $0xe1] sm:$0xff]
    %v2927 = vld [vmem:[%s1716 + $0xf1] sm:$0xff]
    %v2928 = vld [vmem:[%s1716 + $0x101] sm:$0xff]
    %v2929 = vld [vmem:[%s1716 + $0x111] sm:$0xff]
    %v2930 = vld [vmem:[%s1716 + $0x121] sm:$0xff]
    %v2931 = vld [vmem:[%s1716 + $0x131] sm:$0xff]
    %s2932 = scalar_lea.vmem %s3, 768
    %v2933 = vld [vmem:[%s2932] sm:$0xff]
    %v2934 = vld [vmem:[%s2932 + $0x8] sm:$0xff]
    %v2935 = vld [vmem:[%s2932 + $0x10] sm:$0xff]
    %v2936 = vld [vmem:[%s2932 + $0x18] sm:$0xff]
    %v2937 = vld [vmem:[%s2932 + $0x20] sm:$0xff]
    %v2938 = vld [vmem:[%s2932 + $0x28] sm:$0xff]
    %v2939 = vld [vmem:[%s2932 + $0x30] sm:$0xff]
    %v2940 = vld [vmem:[%s2932 + $0x38] sm:$0xff]
    %v2941 = vld [vmem:[%s2932 + $0x40] sm:$0xff]
    %v2942 = vld [vmem:[%s2932 + $0x48] sm:$0xff]
    %v2943 = vld [vmem:[%s2932 + $0x50] sm:$0xff]
    %v2944 = vld [vmem:[%s2932 + $0x58] sm:$0xff]
    %v2945 = vld [vmem:[%s2932 + $0x60] sm:$0xff]
    %v2946 = vld [vmem:[%s2932 + $0x68] sm:$0xff]
    %v2947 = vld [vmem:[%s2932 + $0x70] sm:$0xff]
    %v2948 = vld [vmem:[%s2932 + $0x78] sm:$0xff]
    %2949 = vmatprep.subr.mxu0 0.0
    %2950 = vmatpush1.msra.mxu0 %v2948
    %2951 = vmatprep.subr.mxu0 0.0
    %2952 = vmatpush1.msra.mxu0 %v2947
    %2953 = vmatprep.subr.mxu0 0.0
    %2954 = vmatpush1.msra.mxu0 %v2946
    %2955 = vmatprep.subr.mxu0 0.0
    %2956 = vmatpush1.msra.mxu0 %v2945
    %2957 = vmatprep.subr.mxu0 0.0
    %2958 = vmatpush1.msra.mxu0 %v2944
    %2959 = vmatprep.subr.mxu0 0.0
    %2960 = vmatpush1.msra.mxu0 %v2943
    %2961 = vmatprep.subr.mxu0 0.0
    %2962 = vmatpush1.msra.mxu0 %v2942
    %2963 = vmatprep.subr.mxu0 0.0
    %2964 = vmatpush1.msra.mxu0 %v2941
    %2965 = vmatprep.subr.mxu0 0.0
    %2966 = vmatpush1.msra.mxu0 %v2940
    %2967 = vmatprep.subr.mxu0 0.0
    %2968 = vmatpush1.msra.mxu0 %v2939
    %2969 = vmatprep.subr.mxu0 0.0
    %2970 = vmatpush1.msra.mxu0 %v2938
    %2971 = vmatprep.subr.mxu0 0.0
    %2972 = vmatpush1.msra.mxu0 %v2937
    %2973 = vmatprep.subr.mxu0 0.0
    %2974 = vmatpush1.msra.mxu0 %v2936
    %2975 = vmatprep.subr.mxu0 0.0
    %2976 = vmatpush1.msra.mxu0 %v2935
    %2977 = vmatprep.subr.mxu0 0.0
    %2978 = vmatpush1.msra.mxu0 %v2934
    %2979 = vmatprep.subr.mxu0 0.0
    %2980 = vmatpush1.msra.mxu0 %v2933
    %2981 = vmatprep.subr.mxu0 0.0
    %2982 = vmatpush2.msra.mxu0 0.0
    %2983 = vmatprep.subr.mxu0 0.0
    %2984 = vmatpush2.msra.mxu0 0.0
    %2985 = vmatprep.subr.mxu0 0.0
    %2986 = vmatpush2.msra.mxu0 0.0
    %2987 = vmatprep.subr.mxu0 0.0
    %2988 = vmatpush2.msra.mxu0 0.0
    %2989 = vmatprep.subr.mxu0 0.0
    %2990 = vmatpush2.msra.mxu0 0.0
    %2991 = vmatprep.subr.mxu0 0.0
    %2992 = vmatpush2.msra.mxu0 0.0
    %2993 = vmatprep.subr.mxu0 0.0
    %2994 = vmatpush2.msra.mxu0 0.0
    %2995 = vmatprep.subr.mxu0 0.0
    %2996 = vmatpush2.msra.mxu0 0.0
    %2997 = vmatprep.subr.mxu0 0.0
    %2998 = vmatpush2.msra.mxu0 0.0
    %2999 = vmatprep.subr.mxu0 0.0
    %3000 = vmatpush2.msra.mxu0 0.0
    %3001 = vmatprep.subr.mxu0 0.0
    %3002 = vmatpush2.msra.mxu0 0.0
    %3003 = vmatprep.subr.mxu0 0.0
    %3004 = vmatpush2.msra.mxu0 0.0
    %3005 = vmatprep.subr.mxu0 0.0
    %3006 = vmatpush2.msra.mxu0 0.0
    %3007 = vmatprep.subr.mxu0 0.0
    %3008 = vmatpush2.msra.mxu0 0.0
    %3009 = vmatprep.subr.mxu0 0.0
    %3010 = vmatpush2.msra.mxu0 0.0
    %3011 = vmatprep.subr.mxu0 0.0
    %3012 = vmatpush2.msra.mxu0 0.0
    %3013 = vmatprep.mubr.f32.mxu0 0.0
    %3014 = vmatmul.mubr.f32.gmra.mxu0 %v2916
    %v3015 = vpop.f32.mrf.mxu0
    %v3016 = vadd.f32 0.0, %v3015
    %v3017 = vpop.f32.mrf.mxu0
    %3018 = vmatprep.mubr.f32.mxu0 0.0
    %3019 = vmatmul.mubr.f32.gmra.mxu0 %v2917
    %v3020 = vpop.f32.mrf.mxu0
    %v3021 = vadd.f32 0.0, %v3020
    %v3022 = vpop.f32.mrf.mxu0
    %3023 = vmatprep.mubr.f32.mxu0 0.0
    %3024 = vmatmul.mubr.f32.gmra.mxu0 %v2918
    %v3025 = vpop.f32.mrf.mxu0
    %v3026 = vadd.f32 0.0, %v3025
    %v3027 = vpop.f32.mrf.mxu0
    %3028 = vmatprep.mubr.f32.mxu0 0.0
    %3029 = vmatmul.mubr.f32.gmra.mxu0 %v2919
    %v3030 = vpop.f32.mrf.mxu0
    %v3031 = vadd.f32 0.0, %v3030
    %v3032 = vpop.f32.mrf.mxu0
    %3033 = vmatprep.mubr.f32.mxu0 0.0
    %3034 = vmatmul.mubr.f32.gmra.mxu0 %v2920
    %v3035 = vpop.f32.mrf.mxu0
    %v3036 = vadd.f32 0.0, %v3035
    %v3037 = vpop.f32.mrf.mxu0
    %3038 = vmatprep.mubr.f32.mxu0 0.0
    %3039 = vmatmul.mubr.f32.gmra.mxu0 %v2921
    %v3040 = vpop.f32.mrf.mxu0
    %v3041 = vadd.f32 0.0, %v3040
    %v3042 = vpop.f32.mrf.mxu0
    %3043 = vmatprep.mubr.f32.mxu0 0.0
    %3044 = vmatmul.mubr.f32.gmra.mxu0 %v2922
    %v3045 = vpop.f32.mrf.mxu0
    %v3046 = vadd.f32 0.0, %v3045
    %v3047 = vpop.f32.mrf.mxu0
    %3048 = vmatprep.mubr.f32.mxu0 0.0
    %3049 = vmatmul.mubr.f32.gmra.mxu0 %v2923
    %v3050 = vpop.f32.mrf.mxu0
    %v3051 = vadd.f32 0.0, %v3050
    %v3052 = vpop.f32.mrf.mxu0
    %3053 = vmatprep.mubr.f32.mxu0 0.0
    %3054 = vmatmul.mubr.f32.gmra.mxu0 %v2924
    %v3055 = vpop.f32.mrf.mxu0
    %v3056 = vadd.f32 0.0, %v3055
    %v3057 = vpop.f32.mrf.mxu0
    %3058 = vmatprep.mubr.f32.mxu0 0.0
    %3059 = vmatmul.mubr.f32.gmra.mxu0 %v2925
    %v3060 = vpop.f32.mrf.mxu0
    %v3061 = vadd.f32 0.0, %v3060
    %v3062 = vpop.f32.mrf.mxu0
    %3063 = vmatprep.mubr.f32.mxu0 0.0
    %3064 = vmatmul.mubr.f32.gmra.mxu0 %v2926
    %v3065 = vpop.f32.mrf.mxu0
    %v3066 = vadd.f32 0.0, %v3065
    %v3067 = vpop.f32.mrf.mxu0
    %3068 = vmatprep.mubr.f32.mxu0 0.0
    %3069 = vmatmul.mubr.f32.gmra.mxu0 %v2927
    %v3070 = vpop.f32.mrf.mxu0
    %v3071 = vadd.f32 0.0, %v3070
    %v3072 = vpop.f32.mrf.mxu0
    %3073 = vmatprep.mubr.f32.mxu0 0.0
    %3074 = vmatmul.mubr.f32.gmra.mxu0 %v2928
    %v3075 = vpop.f32.mrf.mxu0
    %v3076 = vadd.f32 0.0, %v3075
    %v3077 = vpop.f32.mrf.mxu0
    %3078 = vmatprep.mubr.f32.mxu0 0.0
    %3079 = vmatmul.mubr.f32.gmra.mxu0 %v2929
    %v3080 = vpop.f32.mrf.mxu0
    %v3081 = vadd.f32 0.0, %v3080
    %v3082 = vpop.f32.mrf.mxu0
    %3083 = vmatprep.mubr.f32.mxu0 0.0
    %3084 = vmatmul.mubr.f32.gmra.mxu0 %v2930
    %v3085 = vpop.f32.mrf.mxu0
    %v3086 = vadd.f32 0.0, %v3085
    %v3087 = vpop.f32.mrf.mxu0
    %3088 = vmatprep.mubr.f32.mxu0 0.0
    %3089 = vmatmul.mubr.f32.gmra.mxu0 %v2931
    %v3090 = vpop.f32.mrf.mxu0
    %v3091 = vadd.f32 0.0, %v3090
    %v3092 = vpop.f32.mrf.mxu0
    %3093 = vdwg.mxu0
    %v3094 = vadd.f32 %v2900, %v3016
    %v3095 = vadd.f32 %v2901, %v3021
    %v3096 = vadd.f32 %v2902, %v3026
    %v3097 = vadd.f32 %v2903, %v3031
    %v3098 = vadd.f32 %v2904, %v3036
    %v3099 = vadd.f32 %v2905, %v3041
    %v3100 = vadd.f32 %v2906, %v3046
    %v3101 = vadd.f32 %v2907, %v3051
    %v3102 = vadd.f32 %v2908, %v3056
    %v3103 = vadd.f32 %v2909, %v3061
    %v3104 = vadd.f32 %v2910, %v3066
    %v3105 = vadd.f32 %v2911, %v3071
    %v3106 = vadd.f32 %v2912, %v3076
    %v3107 = vadd.f32 %v2913, %v3081
    %v3108 = vadd.f32 %v2914, %v3086
    %v3109 = vadd.f32 %v2915, %v3091
    %v3110 = vld [vmem:[%s1716 + $0x2] sm:$0xff]
    %v3111 = vld [vmem:[%s1716 + $0x12] sm:$0xff]
    %v3112 = vld [vmem:[%s1716 + $0x22] sm:$0xff]
    %v3113 = vld [vmem:[%s1716 + $0x32] sm:$0xff]
    %v3114 = vld [vmem:[%s1716 + $0x42] sm:$0xff]
    %v3115 = vld [vmem:[%s1716 + $0x52] sm:$0xff]
    %v3116 = vld [vmem:[%s1716 + $0x62] sm:$0xff]
    %v3117 = vld [vmem:[%s1716 + $0x72] sm:$0xff]
    %v3118 = vld [vmem:[%s1716 + $0xc2] sm:$0xff]
    %v3119 = vld [vmem:[%s1716 + $0xd2] sm:$0xff]
    %v3120 = vld [vmem:[%s1716 + $0xe2] sm:$0xff]
    %v3121 = vld [vmem:[%s1716 + $0xf2] sm:$0xff]
    %v3122 = vld [vmem:[%s1716 + $0x102] sm:$0xff]
    %v3123 = vld [vmem:[%s1716 + $0x112] sm:$0xff]
    %v3124 = vld [vmem:[%s1716 + $0x122] sm:$0xff]
    %v3125 = vld [vmem:[%s1716 + $0x132] sm:$0xff]
    %s3126 = scalar_lea.vmem %s3, 896
    %v3127 = vld [vmem:[%s3126] sm:$0xff]
    %v3128 = vld [vmem:[%s3126 + $0x8] sm:$0xff]
    %v3129 = vld [vmem:[%s3126 + $0x10] sm:$0xff]
    %v3130 = vld [vmem:[%s3126 + $0x18] sm:$0xff]
    %v3131 = vld [vmem:[%s3126 + $0x20] sm:$0xff]
    %v3132 = vld [vmem:[%s3126 + $0x28] sm:$0xff]
    %v3133 = vld [vmem:[%s3126 + $0x30] sm:$0xff]
    %v3134 = vld [vmem:[%s3126 + $0x38] sm:$0xff]
    %v3135 = vld [vmem:[%s3126 + $0x40] sm:$0xff]
    %v3136 = vld [vmem:[%s3126 + $0x48] sm:$0xff]
    %v3137 = vld [vmem:[%s3126 + $0x50] sm:$0xff]
    %v3138 = vld [vmem:[%s3126 + $0x58] sm:$0xff]
    %v3139 = vld [vmem:[%s3126 + $0x60] sm:$0xff]
    %v3140 = vld [vmem:[%s3126 + $0x68] sm:$0xff]
    %v3141 = vld [vmem:[%s3126 + $0x70] sm:$0xff]
    %v3142 = vld [vmem:[%s3126 + $0x78] sm:$0xff]
    %3143 = vmatprep.subr.mxu0 0.0
    %3144 = vmatpush1.msra.mxu0 %v3142
    %3145 = vmatprep.subr.mxu0 0.0
    %3146 = vmatpush1.msra.mxu0 %v3141
    %3147 = vmatprep.subr.mxu0 0.0
    %3148 = vmatpush1.msra.mxu0 %v3140
    %3149 = vmatprep.subr.mxu0 0.0
    %3150 = vmatpush1.msra.mxu0 %v3139
    %3151 = vmatprep.subr.mxu0 0.0
    %3152 = vmatpush1.msra.mxu0 %v3138
    %3153 = vmatprep.subr.mxu0 0.0
    %3154 = vmatpush1.msra.mxu0 %v3137
    %3155 = vmatprep.subr.mxu0 0.0
    %3156 = vmatpush1.msra.mxu0 %v3136
    %3157 = vmatprep.subr.mxu0 0.0
    %3158 = vmatpush1.msra.mxu0 %v3135
    %3159 = vmatprep.subr.mxu0 0.0
    %3160 = vmatpush1.msra.mxu0 %v3134
    %3161 = vmatprep.subr.mxu0 0.0
    %3162 = vmatpush1.msra.mxu0 %v3133
    %3163 = vmatprep.subr.mxu0 0.0
    %3164 = vmatpush1.msra.mxu0 %v3132
    %3165 = vmatprep.subr.mxu0 0.0
    %3166 = vmatpush1.msra.mxu0 %v3131
    %3167 = vmatprep.subr.mxu0 0.0
    %3168 = vmatpush1.msra.mxu0 %v3130
    %3169 = vmatprep.subr.mxu0 0.0
    %3170 = vmatpush1.msra.mxu0 %v3129
    %3171 = vmatprep.subr.mxu0 0.0
    %3172 = vmatpush1.msra.mxu0 %v3128
    %3173 = vmatprep.subr.mxu0 0.0
    %3174 = vmatpush1.msra.mxu0 %v3127
    %3175 = vmatprep.subr.mxu0 0.0
    %3176 = vmatpush2.msra.mxu0 0.0
    %3177 = vmatprep.subr.mxu0 0.0
    %3178 = vmatpush2.msra.mxu0 0.0
    %3179 = vmatprep.subr.mxu0 0.0
    %3180 = vmatpush2.msra.mxu0 0.0
    %3181 = vmatprep.subr.mxu0 0.0
    %3182 = vmatpush2.msra.mxu0 0.0
    %3183 = vmatprep.subr.mxu0 0.0
    %3184 = vmatpush2.msra.mxu0 0.0
    %3185 = vmatprep.subr.mxu0 0.0
    %3186 = vmatpush2.msra.mxu0 0.0
    %3187 = vmatprep.subr.mxu0 0.0
    %3188 = vmatpush2.msra.mxu0 0.0
    %3189 = vmatprep.subr.mxu0 0.0
    %3190 = vmatpush2.msra.mxu0 0.0
    %3191 = vmatprep.subr.mxu0 0.0
    %3192 = vmatpush2.msra.mxu0 0.0
    %3193 = vmatprep.subr.mxu0 0.0
    %3194 = vmatpush2.msra.mxu0 0.0
    %3195 = vmatprep.subr.mxu0 0.0
    %3196 = vmatpush2.msra.mxu0 0.0
    %3197 = vmatprep.subr.mxu0 0.0
    %3198 = vmatpush2.msra.mxu0 0.0
    %3199 = vmatprep.subr.mxu0 0.0
    %3200 = vmatpush2.msra.mxu0 0.0
    %3201 = vmatprep.subr.mxu0 0.0
    %3202 = vmatpush2.msra.mxu0 0.0
    %3203 = vmatprep.subr.mxu0 0.0
    %3204 = vmatpush2.msra.mxu0 0.0
    %3205 = vmatprep.subr.mxu0 0.0
    %3206 = vmatpush2.msra.mxu0 0.0
    %3207 = vmatprep.mubr.f32.mxu0 0.0
    %3208 = vmatmul.mubr.f32.gmra.mxu0 %v3110
    %v3209 = vpop.f32.mrf.mxu0
    %v3210 = vadd.f32 0.0, %v3209
    %v3211 = vpop.f32.mrf.mxu0
    %3212 = vmatprep.mubr.f32.mxu0 0.0
    %3213 = vmatmul.mubr.f32.gmra.mxu0 %v3111
    %v3214 = vpop.f32.mrf.mxu0
    %v3215 = vadd.f32 0.0, %v3214
    %v3216 = vpop.f32.mrf.mxu0
    %3217 = vmatprep.mubr.f32.mxu0 0.0
    %3218 = vmatmul.mubr.f32.gmra.mxu0 %v3112
    %v3219 = vpop.f32.mrf.mxu0
    %v3220 = vadd.f32 0.0, %v3219
    %v3221 = vpop.f32.mrf.mxu0
    %3222 = vmatprep.mubr.f32.mxu0 0.0
    %3223 = vmatmul.mubr.f32.gmra.mxu0 %v3113
    %v3224 = vpop.f32.mrf.mxu0
    %v3225 = vadd.f32 0.0, %v3224
    %v3226 = vpop.f32.mrf.mxu0
    %3227 = vmatprep.mubr.f32.mxu0 0.0
    %3228 = vmatmul.mubr.f32.gmra.mxu0 %v3114
    %v3229 = vpop.f32.mrf.mxu0
    %v3230 = vadd.f32 0.0, %v3229
    %v3231 = vpop.f32.mrf.mxu0
    %3232 = vmatprep.mubr.f32.mxu0 0.0
    %3233 = vmatmul.mubr.f32.gmra.mxu0 %v3115
    %v3234 = vpop.f32.mrf.mxu0
    %v3235 = vadd.f32 0.0, %v3234
    %v3236 = vpop.f32.mrf.mxu0
    %3237 = vmatprep.mubr.f32.mxu0 0.0
    %3238 = vmatmul.mubr.f32.gmra.mxu0 %v3116
    %v3239 = vpop.f32.mrf.mxu0
    %v3240 = vadd.f32 0.0, %v3239
    %v3241 = vpop.f32.mrf.mxu0
    %3242 = vmatprep.mubr.f32.mxu0 0.0
    %3243 = vmatmul.mubr.f32.gmra.mxu0 %v3117
    %v3244 = vpop.f32.mrf.mxu0
    %v3245 = vadd.f32 0.0, %v3244
    %v3246 = vpop.f32.mrf.mxu0
    %3247 = vmatprep.mubr.f32.mxu0 0.0
    %3248 = vmatmul.mubr.f32.gmra.mxu0 %v3118
    %v3249 = vpop.f32.mrf.mxu0
    %v3250 = vadd.f32 0.0, %v3249
    %v3251 = vpop.f32.mrf.mxu0
    %3252 = vmatprep.mubr.f32.mxu0 0.0
    %3253 = vmatmul.mubr.f32.gmra.mxu0 %v3119
    %v3254 = vpop.f32.mrf.mxu0
    %v3255 = vadd.f32 0.0, %v3254
    %v3256 = vpop.f32.mrf.mxu0
    %3257 = vmatprep.mubr.f32.mxu0 0.0
    %3258 = vmatmul.mubr.f32.gmra.mxu0 %v3120
    %v3259 = vpop.f32.mrf.mxu0
    %v3260 = vadd.f32 0.0, %v3259
    %v3261 = vpop.f32.mrf.mxu0
    %3262 = vmatprep.mubr.f32.mxu0 0.0
    %3263 = vmatmul.mubr.f32.gmra.mxu0 %v3121
    %v3264 = vpop.f32.mrf.mxu0
    %v3265 = vadd.f32 0.0, %v3264
    %v3266 = vpop.f32.mrf.mxu0
    %3267 = vmatprep.mubr.f32.mxu0 0.0
    %3268 = vmatmul.mubr.f32.gmra.mxu0 %v3122
    %v3269 = vpop.f32.mrf.mxu0
    %v3270 = vadd.f32 0.0, %v3269
    %v3271 = vpop.f32.mrf.mxu0
    %3272 = vmatprep.mubr.f32.mxu0 0.0
    %3273 = vmatmul.mubr.f32.gmra.mxu0 %v3123
    %v3274 = vpop.f32.mrf.mxu0
    %v3275 = vadd.f32 0.0, %v3274
    %v3276 = vpop.f32.mrf.mxu0
    %3277 = vmatprep.mubr.f32.mxu0 0.0
    %3278 = vmatmul.mubr.f32.gmra.mxu0 %v3124
    %v3279 = vpop.f32.mrf.mxu0
    %v3280 = vadd.f32 0.0, %v3279
    %v3281 = vpop.f32.mrf.mxu0
    %3282 = vmatprep.mubr.f32.mxu0 0.0
    %3283 = vmatmul.mubr.f32.gmra.mxu0 %v3125
    %v3284 = vpop.f32.mrf.mxu0
    %v3285 = vadd.f32 0.0, %v3284
    %v3286 = vpop.f32.mrf.mxu0
    %3287 = vdwg.mxu0
    %v3288 = vadd.f32 %v3094, %v3210
    %v3289 = vadd.f32 %v3095, %v3215
    %v3290 = vadd.f32 %v3096, %v3220
    %v3291 = vadd.f32 %v3097, %v3225
    %v3292 = vadd.f32 %v3098, %v3230
    %v3293 = vadd.f32 %v3099, %v3235
    %v3294 = vadd.f32 %v3100, %v3240
    %v3295 = vadd.f32 %v3101, %v3245
    %v3296 = vadd.f32 %v3102, %v3250
    %v3297 = vadd.f32 %v3103, %v3255
    %v3298 = vadd.f32 %v3104, %v3260
    %v3299 = vadd.f32 %v3105, %v3265
    %v3300 = vadd.f32 %v3106, %v3270
    %v3301 = vadd.f32 %v3107, %v3275
    %v3302 = vadd.f32 %v3108, %v3280
    %v3303 = vadd.f32 %v3109, %v3285
    %v3304 = vld [vmem:[%s1716 + $0x3] sm:$0xff]
    %v3305 = vld [vmem:[%s1716 + $0x13] sm:$0xff]
    %v3306 = vld [vmem:[%s1716 + $0x23] sm:$0xff]
    %v3307 = vld [vmem:[%s1716 + $0x33] sm:$0xff]
    %v3308 = vld [vmem:[%s1716 + $0x43] sm:$0xff]
    %v3309 = vld [vmem:[%s1716 + $0x53] sm:$0xff]
    %v3310 = vld [vmem:[%s1716 + $0x63] sm:$0xff]
    %v3311 = vld [vmem:[%s1716 + $0x73] sm:$0xff]
    %v3312 = vld [vmem:[%s1716 + $0xc3] sm:$0xff]
    %v3313 = vld [vmem:[%s1716 + $0xd3] sm:$0xff]
    %v3314 = vld [vmem:[%s1716 + $0xe3] sm:$0xff]
    %v3315 = vld [vmem:[%s1716 + $0xf3] sm:$0xff]
    %v3316 = vld [vmem:[%s1716 + $0x103] sm:$0xff]
    %v3317 = vld [vmem:[%s1716 + $0x113] sm:$0xff]
    %v3318 = vld [vmem:[%s1716 + $0x123] sm:$0xff]
    %v3319 = vld [vmem:[%s1716 + $0x133] sm:$0xff]
    %s3320 = scalar_lea.vmem %s3, 1024
    %v3321 = vld [vmem:[%s3320] sm:$0xff]
    %v3322 = vld [vmem:[%s3320 + $0x8] sm:$0xff]
    %v3323 = vld [vmem:[%s3320 + $0x10] sm:$0xff]
    %v3324 = vld [vmem:[%s3320 + $0x18] sm:$0xff]
    %v3325 = vld [vmem:[%s3320 + $0x20] sm:$0xff]
    %v3326 = vld [vmem:[%s3320 + $0x28] sm:$0xff]
    %v3327 = vld [vmem:[%s3320 + $0x30] sm:$0xff]
    %v3328 = vld [vmem:[%s3320 + $0x38] sm:$0xff]
    %v3329 = vld [vmem:[%s3320 + $0x40] sm:$0xff]
    %v3330 = vld [vmem:[%s3320 + $0x48] sm:$0xff]
    %v3331 = vld [vmem:[%s3320 + $0x50] sm:$0xff]
    %v3332 = vld [vmem:[%s3320 + $0x58] sm:$0xff]
    %v3333 = vld [vmem:[%s3320 + $0x60] sm:$0xff]
    %v3334 = vld [vmem:[%s3320 + $0x68] sm:$0xff]
    %v3335 = vld [vmem:[%s3320 + $0x70] sm:$0xff]
    %v3336 = vld [vmem:[%s3320 + $0x78] sm:$0xff]
    %3337 = vmatprep.subr.mxu0 0.0
    %3338 = vmatpush1.msra.mxu0 %v3336
    %3339 = vmatprep.subr.mxu0 0.0
    %3340 = vmatpush1.msra.mxu0 %v3335
    %3341 = vmatprep.subr.mxu0 0.0
    %3342 = vmatpush1.msra.mxu0 %v3334
    %3343 = vmatprep.subr.mxu0 0.0
    %3344 = vmatpush1.msra.mxu0 %v3333
    %3345 = vmatprep.subr.mxu0 0.0
    %3346 = vmatpush1.msra.mxu0 %v3332
    %3347 = vmatprep.subr.mxu0 0.0
    %3348 = vmatpush1.msra.mxu0 %v3331
    %3349 = vmatprep.subr.mxu0 0.0
    %3350 = vmatpush1.msra.mxu0 %v3330
    %3351 = vmatprep.subr.mxu0 0.0
    %3352 = vmatpush1.msra.mxu0 %v3329
    %3353 = vmatprep.subr.mxu0 0.0
    %3354 = vmatpush1.msra.mxu0 %v3328
    %3355 = vmatprep.subr.mxu0 0.0
    %3356 = vmatpush1.msra.mxu0 %v3327
    %3357 = vmatprep.subr.mxu0 0.0
    %3358 = vmatpush1.msra.mxu0 %v3326
    %3359 = vmatprep.subr.mxu0 0.0
    %3360 = vmatpush1.msra.mxu0 %v3325
    %3361 = vmatprep.subr.mxu0 0.0
    %3362 = vmatpush1.msra.mxu0 %v3324
    %3363 = vmatprep.subr.mxu0 0.0
    %3364 = vmatpush1.msra.mxu0 %v3323
    %3365 = vmatprep.subr.mxu0 0.0
    %3366 = vmatpush1.msra.mxu0 %v3322
    %3367 = vmatprep.subr.mxu0 0.0
    %3368 = vmatpush1.msra.mxu0 %v3321
    %3369 = vmatprep.subr.mxu0 0.0
    %3370 = vmatpush2.msra.mxu0 0.0
    %3371 = vmatprep.subr.mxu0 0.0
    %3372 = vmatpush2.msra.mxu0 0.0
    %3373 = vmatprep.subr.mxu0 0.0
    %3374 = vmatpush2.msra.mxu0 0.0
    %3375 = vmatprep.subr.mxu0 0.0
    %3376 = vmatpush2.msra.mxu0 0.0
    %3377 = vmatprep.subr.mxu0 0.0
    %3378 = vmatpush2.msra.mxu0 0.0
    %3379 = vmatprep.subr.mxu0 0.0
    %3380 = vmatpush2.msra.mxu0 0.0
    %3381 = vmatprep.subr.mxu0 0.0
    %3382 = vmatpush2.msra.mxu0 0.0
    %3383 = vmatprep.subr.mxu0 0.0
    %3384 = vmatpush2.msra.mxu0 0.0
    %3385 = vmatprep.subr.mxu0 0.0
    %3386 = vmatpush2.msra.mxu0 0.0
    %3387 = vmatprep.subr.mxu0 0.0
    %3388 = vmatpush2.msra.mxu0 0.0
    %3389 = vmatprep.subr.mxu0 0.0
    %3390 = vmatpush2.msra.mxu0 0.0
    %3391 = vmatprep.subr.mxu0 0.0
    %3392 = vmatpush2.msra.mxu0 0.0
    %3393 = vmatprep.subr.mxu0 0.0
    %3394 = vmatpush2.msra.mxu0 0.0
    %3395 = vmatprep.subr.mxu0 0.0
    %3396 = vmatpush2.msra.mxu0 0.0
    %3397 = vmatprep.subr.mxu0 0.0
    %3398 = vmatpush2.msra.mxu0 0.0
    %3399 = vmatprep.subr.mxu0 0.0
    %3400 = vmatpush2.msra.mxu0 0.0
    %3401 = vmatprep.mubr.f32.mxu0 0.0
    %3402 = vmatmul.mubr.f32.gmra.mxu0 %v3304
    %v3403 = vpop.f32.mrf.mxu0
    %v3404 = vadd.f32 0.0, %v3403
    %v3405 = vpop.f32.mrf.mxu0
    %3406 = vmatprep.mubr.f32.mxu0 0.0
    %3407 = vmatmul.mubr.f32.gmra.mxu0 %v3305
    %v3408 = vpop.f32.mrf.mxu0
    %v3409 = vadd.f32 0.0, %v3408
    %v3410 = vpop.f32.mrf.mxu0
    %3411 = vmatprep.mubr.f32.mxu0 0.0
    %3412 = vmatmul.mubr.f32.gmra.mxu0 %v3306
    %v3413 = vpop.f32.mrf.mxu0
    %v3414 = vadd.f32 0.0, %v3413
    %v3415 = vpop.f32.mrf.mxu0
    %3416 = vmatprep.mubr.f32.mxu0 0.0
    %3417 = vmatmul.mubr.f32.gmra.mxu0 %v3307
    %v3418 = vpop.f32.mrf.mxu0
    %v3419 = vadd.f32 0.0, %v3418
    %v3420 = vpop.f32.mrf.mxu0
    %3421 = vmatprep.mubr.f32.mxu0 0.0
    %3422 = vmatmul.mubr.f32.gmra.mxu0 %v3308
    %v3423 = vpop.f32.mrf.mxu0
    %v3424 = vadd.f32 0.0, %v3423
    %v3425 = vpop.f32.mrf.mxu0
    %3426 = vmatprep.mubr.f32.mxu0 0.0
    %3427 = vmatmul.mubr.f32.gmra.mxu0 %v3309
    %v3428 = vpop.f32.mrf.mxu0
    %v3429 = vadd.f32 0.0, %v3428
    %v3430 = vpop.f32.mrf.mxu0
    %3431 = vmatprep.mubr.f32.mxu0 0.0
    %3432 = vmatmul.mubr.f32.gmra.mxu0 %v3310
    %v3433 = vpop.f32.mrf.mxu0
    %v3434 = vadd.f32 0.0, %v3433
    %v3435 = vpop.f32.mrf.mxu0
    %3436 = vmatprep.mubr.f32.mxu0 0.0
    %3437 = vmatmul.mubr.f32.gmra.mxu0 %v3311
    %v3438 = vpop.f32.mrf.mxu0
    %v3439 = vadd.f32 0.0, %v3438
    %v3440 = vpop.f32.mrf.mxu0
    %3441 = vmatprep.mubr.f32.mxu0 0.0
    %3442 = vmatmul.mubr.f32.gmra.mxu0 %v3312
    %v3443 = vpop.f32.mrf.mxu0
    %v3444 = vadd.f32 0.0, %v3443
    %v3445 = vpop.f32.mrf.mxu0
    %3446 = vmatprep.mubr.f32.mxu0 0.0
    %3447 = vmatmul.mubr.f32.gmra.mxu0 %v3313
    %v3448 = vpop.f32.mrf.mxu0
    %v3449 = vadd.f32 0.0, %v3448
    %v3450 = vpop.f32.mrf.mxu0
    %3451 = vmatprep.mubr.f32.mxu0 0.0
    %3452 = vmatmul.mubr.f32.gmra.mxu0 %v3314
    %v3453 = vpop.f32.mrf.mxu0
    %v3454 = vadd.f32 0.0, %v3453
    %v3455 = vpop.f32.mrf.mxu0
    %3456 = vmatprep.mubr.f32.mxu0 0.0
    %3457 = vmatmul.mubr.f32.gmra.mxu0 %v3315
    %v3458 = vpop.f32.mrf.mxu0
    %v3459 = vadd.f32 0.0, %v3458
    %v3460 = vpop.f32.mrf.mxu0
    %3461 = vmatprep.mubr.f32.mxu0 0.0
    %3462 = vmatmul.mubr.f32.gmra.mxu0 %v3316
    %v3463 = vpop.f32.mrf.mxu0
    %v3464 = vadd.f32 0.0, %v3463
    %v3465 = vpop.f32.mrf.mxu0
    %3466 = vmatprep.mubr.f32.mxu0 0.0
    %3467 = vmatmul.mubr.f32.gmra.mxu0 %v3317
    %v3468 = vpop.f32.mrf.mxu0
    %v3469 = vadd.f32 0.0, %v3468
    %v3470 = vpop.f32.mrf.mxu0
    %3471 = vmatprep.mubr.f32.mxu0 0.0
    %3472 = vmatmul.mubr.f32.gmra.mxu0 %v3318
    %v3473 = vpop.f32.mrf.mxu0
    %v3474 = vadd.f32 0.0, %v3473
    %v3475 = vpop.f32.mrf.mxu0
    %3476 = vmatprep.mubr.f32.mxu0 0.0
    %3477 = vmatmul.mubr.f32.gmra.mxu0 %v3319
    %v3478 = vpop.f32.mrf.mxu0
    %v3479 = vadd.f32 0.0, %v3478
    %v3480 = vpop.f32.mrf.mxu0
    %3481 = vdwg.mxu0
    %v3482 = vadd.f32 %v3288, %v3404
    %v3483 = vadd.f32 %v3289, %v3409
    %v3484 = vadd.f32 %v3290, %v3414
    %v3485 = vadd.f32 %v3291, %v3419
    %v3486 = vadd.f32 %v3292, %v3424
    %v3487 = vadd.f32 %v3293, %v3429
    %v3488 = vadd.f32 %v3294, %v3434
    %v3489 = vadd.f32 %v3295, %v3439
    %v3490 = vadd.f32 %v3296, %v3444
    %v3491 = vadd.f32 %v3297, %v3449
    %v3492 = vadd.f32 %v3298, %v3454
    %v3493 = vadd.f32 %v3299, %v3459
    %v3494 = vadd.f32 %v3300, %v3464
    %v3495 = vadd.f32 %v3301, %v3469
    %v3496 = vadd.f32 %v3302, %v3474
    %v3497 = vadd.f32 %v3303, %v3479
    %v3498 = vld [vmem:[%s1716 + $0x4] sm:$0xff]
    %v3499 = vld [vmem:[%s1716 + $0x14] sm:$0xff]
    %v3500 = vld [vmem:[%s1716 + $0x24] sm:$0xff]
    %v3501 = vld [vmem:[%s1716 + $0x34] sm:$0xff]
    %v3502 = vld [vmem:[%s1716 + $0x44] sm:$0xff]
    %v3503 = vld [vmem:[%s1716 + $0x54] sm:$0xff]
    %v3504 = vld [vmem:[%s1716 + $0x64] sm:$0xff]
    %v3505 = vld [vmem:[%s1716 + $0x74] sm:$0xff]
    %v3506 = vld [vmem:[%s1716 + $0xc4] sm:$0xff]
    %v3507 = vld [vmem:[%s1716 + $0xd4] sm:$0xff]
    %v3508 = vld [vmem:[%s1716 + $0xe4] sm:$0xff]
    %v3509 = vld [vmem:[%s1716 + $0xf4] sm:$0xff]
    %v3510 = vld [vmem:[%s1716 + $0x104] sm:$0xff]
    %v3511 = vld [vmem:[%s1716 + $0x114] sm:$0xff]
    %v3512 = vld [vmem:[%s1716 + $0x124] sm:$0xff]
    %v3513 = vld [vmem:[%s1716 + $0x134] sm:$0xff]
    %s3514 = scalar_lea.vmem %s3, 1152
    %v3515 = vld [vmem:[%s3514] sm:$0xff]
    %v3516 = vld [vmem:[%s3514 + $0x8] sm:$0xff]
    %v3517 = vld [vmem:[%s3514 + $0x10] sm:$0xff]
    %v3518 = vld [vmem:[%s3514 + $0x18] sm:$0xff]
    %v3519 = vld [vmem:[%s3514 + $0x20] sm:$0xff]
    %v3520 = vld [vmem:[%s3514 + $0x28] sm:$0xff]
    %v3521 = vld [vmem:[%s3514 + $0x30] sm:$0xff]
    %v3522 = vld [vmem:[%s3514 + $0x38] sm:$0xff]
    %v3523 = vld [vmem:[%s3514 + $0x40] sm:$0xff]
    %v3524 = vld [vmem:[%s3514 + $0x48] sm:$0xff]
    %v3525 = vld [vmem:[%s3514 + $0x50] sm:$0xff]
    %v3526 = vld [vmem:[%s3514 + $0x58] sm:$0xff]
    %v3527 = vld [vmem:[%s3514 + $0x60] sm:$0xff]
    %v3528 = vld [vmem:[%s3514 + $0x68] sm:$0xff]
    %v3529 = vld [vmem:[%s3514 + $0x70] sm:$0xff]
    %v3530 = vld [vmem:[%s3514 + $0x78] sm:$0xff]
    %3531 = vmatprep.subr.mxu0 0.0
    %3532 = vmatpush1.msra.mxu0 %v3530
    %3533 = vmatprep.subr.mxu0 0.0
    %3534 = vmatpush1.msra.mxu0 %v3529
    %3535 = vmatprep.subr.mxu0 0.0
    %3536 = vmatpush1.msra.mxu0 %v3528
    %3537 = vmatprep.subr.mxu0 0.0
    %3538 = vmatpush1.msra.mxu0 %v3527
    %3539 = vmatprep.subr.mxu0 0.0
    %3540 = vmatpush1.msra.mxu0 %v3526
    %3541 = vmatprep.subr.mxu0 0.0
    %3542 = vmatpush1.msra.mxu0 %v3525
    %3543 = vmatprep.subr.mxu0 0.0
    %3544 = vmatpush1.msra.mxu0 %v3524
    %3545 = vmatprep.subr.mxu0 0.0
    %3546 = vmatpush1.msra.mxu0 %v3523
    %3547 = vmatprep.subr.mxu0 0.0
    %3548 = vmatpush1.msra.mxu0 %v3522
    %3549 = vmatprep.subr.mxu0 0.0
    %3550 = vmatpush1.msra.mxu0 %v3521
    %3551 = vmatprep.subr.mxu0 0.0
    %3552 = vmatpush1.msra.mxu0 %v3520
    %3553 = vmatprep.subr.mxu0 0.0
    %3554 = vmatpush1.msra.mxu0 %v3519
    %3555 = vmatprep.subr.mxu0 0.0
    %3556 = vmatpush1.msra.mxu0 %v3518
    %3557 = vmatprep.subr.mxu0 0.0
    %3558 = vmatpush1.msra.mxu0 %v3517
    %3559 = vmatprep.subr.mxu0 0.0
    %3560 = vmatpush1.msra.mxu0 %v3516
    %3561 = vmatprep.subr.mxu0 0.0
    %3562 = vmatpush1.msra.mxu0 %v3515
    %3563 = vmatprep.subr.mxu0 0.0
    %3564 = vmatpush2.msra.mxu0 0.0
    %3565 = vmatprep.subr.mxu0 0.0
    %3566 = vmatpush2.msra.mxu0 0.0
    %3567 = vmatprep.subr.mxu0 0.0
    %3568 = vmatpush2.msra.mxu0 0.0
    %3569 = vmatprep.subr.mxu0 0.0
    %3570 = vmatpush2.msra.mxu0 0.0
    %3571 = vmatprep.subr.mxu0 0.0
    %3572 = vmatpush2.msra.mxu0 0.0
    %3573 = vmatprep.subr.mxu0 0.0
    %3574 = vmatpush2.msra.mxu0 0.0
    %3575 = vmatprep.subr.mxu0 0.0
    %3576 = vmatpush2.msra.mxu0 0.0
    %3577 = vmatprep.subr.mxu0 0.0
    %3578 = vmatpush2.msra.mxu0 0.0
    %3579 = vmatprep.subr.mxu0 0.0
    %3580 = vmatpush2.msra.mxu0 0.0
    %3581 = vmatprep.subr.mxu0 0.0
    %3582 = vmatpush2.msra.mxu0 0.0
    %3583 = vmatprep.subr.mxu0 0.0
    %3584 = vmatpush2.msra.mxu0 0.0
    %3585 = vmatprep.subr.mxu0 0.0
    %3586 = vmatpush2.msra.mxu0 0.0
    %3587 = vmatprep.subr.mxu0 0.0
    %3588 = vmatpush2.msra.mxu0 0.0
    %3589 = vmatprep.subr.mxu0 0.0
    %3590 = vmatpush2.msra.mxu0 0.0
    %3591 = vmatprep.subr.mxu0 0.0
    %3592 = vmatpush2.msra.mxu0 0.0
    %3593 = vmatprep.subr.mxu0 0.0
    %3594 = vmatpush2.msra.mxu0 0.0
    %3595 = vmatprep.mubr.f32.mxu0 0.0
    %3596 = vmatmul.mubr.f32.gmra.mxu0 %v3498
    %v3597 = vpop.f32.mrf.mxu0
    %v3598 = vadd.f32 0.0, %v3597
    %v3599 = vpop.f32.mrf.mxu0
    %3600 = vmatprep.mubr.f32.mxu0 0.0
    %3601 = vmatmul.mubr.f32.gmra.mxu0 %v3499
    %v3602 = vpop.f32.mrf.mxu0
    %v3603 = vadd.f32 0.0, %v3602
    %v3604 = vpop.f32.mrf.mxu0
    %3605 = vmatprep.mubr.f32.mxu0 0.0
    %3606 = vmatmul.mubr.f32.gmra.mxu0 %v3500
    %v3607 = vpop.f32.mrf.mxu0
    %v3608 = vadd.f32 0.0, %v3607
    %v3609 = vpop.f32.mrf.mxu0
    %3610 = vmatprep.mubr.f32.mxu0 0.0
    %3611 = vmatmul.mubr.f32.gmra.mxu0 %v3501
    %v3612 = vpop.f32.mrf.mxu0
    %v3613 = vadd.f32 0.0, %v3612
    %v3614 = vpop.f32.mrf.mxu0
    %3615 = vmatprep.mubr.f32.mxu0 0.0
    %3616 = vmatmul.mubr.f32.gmra.mxu0 %v3502
    %v3617 = vpop.f32.mrf.mxu0
    %v3618 = vadd.f32 0.0, %v3617
    %v3619 = vpop.f32.mrf.mxu0
    %3620 = vmatprep.mubr.f32.mxu0 0.0
    %3621 = vmatmul.mubr.f32.gmra.mxu0 %v3503
    %v3622 = vpop.f32.mrf.mxu0
    %v3623 = vadd.f32 0.0, %v3622
    %v3624 = vpop.f32.mrf.mxu0
    %3625 = vmatprep.mubr.f32.mxu0 0.0
    %3626 = vmatmul.mubr.f32.gmra.mxu0 %v3504
    %v3627 = vpop.f32.mrf.mxu0
    %v3628 = vadd.f32 0.0, %v3627
    %v3629 = vpop.f32.mrf.mxu0
    %3630 = vmatprep.mubr.f32.mxu0 0.0
    %3631 = vmatmul.mubr.f32.gmra.mxu0 %v3505
    %v3632 = vpop.f32.mrf.mxu0
    %v3633 = vadd.f32 0.0, %v3632
    %v3634 = vpop.f32.mrf.mxu0
    %3635 = vmatprep.mubr.f32.mxu0 0.0
    %3636 = vmatmul.mubr.f32.gmra.mxu0 %v3506
    %v3637 = vpop.f32.mrf.mxu0
    %v3638 = vadd.f32 0.0, %v3637
    %v3639 = vpop.f32.mrf.mxu0
    %3640 = vmatprep.mubr.f32.mxu0 0.0
    %3641 = vmatmul.mubr.f32.gmra.mxu0 %v3507
    %v3642 = vpop.f32.mrf.mxu0
    %v3643 = vadd.f32 0.0, %v3642
    %v3644 = vpop.f32.mrf.mxu0
    %3645 = vmatprep.mubr.f32.mxu0 0.0
    %3646 = vmatmul.mubr.f32.gmra.mxu0 %v3508
    %v3647 = vpop.f32.mrf.mxu0
    %v3648 = vadd.f32 0.0, %v3647
    %v3649 = vpop.f32.mrf.mxu0
    %3650 = vmatprep.mubr.f32.mxu0 0.0
    %3651 = vmatmul.mubr.f32.gmra.mxu0 %v3509
    %v3652 = vpop.f32.mrf.mxu0
    %v3653 = vadd.f32 0.0, %v3652
    %v3654 = vpop.f32.mrf.mxu0
    %3655 = vmatprep.mubr.f32.mxu0 0.0
    %3656 = vmatmul.mubr.f32.gmra.mxu0 %v3510
    %v3657 = vpop.f32.mrf.mxu0
    %v3658 = vadd.f32 0.0, %v3657
    %v3659 = vpop.f32.mrf.mxu0
    %3660 = vmatprep.mubr.f32.mxu0 0.0
    %3661 = vmatmul.mubr.f32.gmra.mxu0 %v3511
    %v3662 = vpop.f32.mrf.mxu0
    %v3663 = vadd.f32 0.0, %v3662
    %v3664 = vpop.f32.mrf.mxu0
    %3665 = vmatprep.mubr.f32.mxu0 0.0
    %3666 = vmatmul.mubr.f32.gmra.mxu0 %v3512
    %v3667 = vpop.f32.mrf.mxu0
    %v3668 = vadd.f32 0.0, %v3667
    %v3669 = vpop.f32.mrf.mxu0
    %3670 = vmatprep.mubr.f32.mxu0 0.0
    %3671 = vmatmul.mubr.f32.gmra.mxu0 %v3513
    %v3672 = vpop.f32.mrf.mxu0
    %v3673 = vadd.f32 0.0, %v3672
    %v3674 = vpop.f32.mrf.mxu0
    %3675 = vdwg.mxu0
    %v3676 = vadd.f32 %v3482, %v3598
    %v3677 = vadd.f32 %v3483, %v3603
    %v3678 = vadd.f32 %v3484, %v3608
    %v3679 = vadd.f32 %v3485, %v3613
    %v3680 = vadd.f32 %v3486, %v3618
    %v3681 = vadd.f32 %v3487, %v3623
    %v3682 = vadd.f32 %v3488, %v3628
    %v3683 = vadd.f32 %v3489, %v3633
    %v3684 = vadd.f32 %v3490, %v3638
    %v3685 = vadd.f32 %v3491, %v3643
    %v3686 = vadd.f32 %v3492, %v3648
    %v3687 = vadd.f32 %v3493, %v3653
    %v3688 = vadd.f32 %v3494, %v3658
    %v3689 = vadd.f32 %v3495, %v3663
    %v3690 = vadd.f32 %v3496, %v3668
    %v3691 = vadd.f32 %v3497, %v3673
    %v3692 = vld [vmem:[%s1719] sm:$0xff]
    %v3693 = vld [vmem:[%s1719 + $0x10] sm:$0xff]
    %v3694 = vld [vmem:[%s1719 + $0x20] sm:$0xff]
    %v3695 = vld [vmem:[%s1719 + $0x30] sm:$0xff]
    %v3696 = vld [vmem:[%s1719 + $0x40] sm:$0xff]
    %v3697 = vld [vmem:[%s1719 + $0x50] sm:$0xff]
    %v3698 = vld [vmem:[%s1719 + $0x60] sm:$0xff]
    %v3699 = vld [vmem:[%s1719 + $0x70] sm:$0xff]
    %v3700 = vld [vmem:[%s1719 + $0xc0] sm:$0xff]
    %v3701 = vld [vmem:[%s1719 + $0xd0] sm:$0xff]
    %v3702 = vld [vmem:[%s1719 + $0xe0] sm:$0xff]
    %v3703 = vld [vmem:[%s1719 + $0xf0] sm:$0xff]
    %v3704 = vld [vmem:[%s1719 + $0x100] sm:$0xff]
    %v3705 = vld [vmem:[%s1719 + $0x110] sm:$0xff]
    %v3706 = vld [vmem:[%s1719 + $0x120] sm:$0xff]
    %v3707 = vld [vmem:[%s1719 + $0x130] sm:$0xff]
    %s3708 = scalar_lea.vmem %s3, 1280
    %v3709 = vld [vmem:[%s3708] sm:$0xff]
    %v3710 = vld [vmem:[%s3708 + $0x8] sm:$0xff]
    %v3711 = vld [vmem:[%s3708 + $0x10] sm:$0xff]
    %v3712 = vld [vmem:[%s3708 + $0x18] sm:$0xff]
    %v3713 = vld [vmem:[%s3708 + $0x20] sm:$0xff]
    %v3714 = vld [vmem:[%s3708 + $0x28] sm:$0xff]
    %v3715 = vld [vmem:[%s3708 + $0x30] sm:$0xff]
    %v3716 = vld [vmem:[%s3708 + $0x38] sm:$0xff]
    %v3717 = vld [vmem:[%s3708 + $0x40] sm:$0xff]
    %v3718 = vld [vmem:[%s3708 + $0x48] sm:$0xff]
    %v3719 = vld [vmem:[%s3708 + $0x50] sm:$0xff]
    %v3720 = vld [vmem:[%s3708 + $0x58] sm:$0xff]
    %v3721 = vld [vmem:[%s3708 + $0x60] sm:$0xff]
    %v3722 = vld [vmem:[%s3708 + $0x68] sm:$0xff]
    %v3723 = vld [vmem:[%s3708 + $0x70] sm:$0xff]
    %v3724 = vld [vmem:[%s3708 + $0x78] sm:$0xff]
    %3725 = vmatprep.subr.mxu0 0.0
    %3726 = vmatpush1.msra.mxu0 %v3724
    %3727 = vmatprep.subr.mxu0 0.0
    %3728 = vmatpush1.msra.mxu0 %v3723
    %3729 = vmatprep.subr.mxu0 0.0
    %3730 = vmatpush1.msra.mxu0 %v3722
    %3731 = vmatprep.subr.mxu0 0.0
    %3732 = vmatpush1.msra.mxu0 %v3721
    %3733 = vmatprep.subr.mxu0 0.0
    %3734 = vmatpush1.msra.mxu0 %v3720
    %3735 = vmatprep.subr.mxu0 0.0
    %3736 = vmatpush1.msra.mxu0 %v3719
    %3737 = vmatprep.subr.mxu0 0.0
    %3738 = vmatpush1.msra.mxu0 %v3718
    %3739 = vmatprep.subr.mxu0 0.0
    %3740 = vmatpush1.msra.mxu0 %v3717
    %3741 = vmatprep.subr.mxu0 0.0
    %3742 = vmatpush1.msra.mxu0 %v3716
    %3743 = vmatprep.subr.mxu0 0.0
    %3744 = vmatpush1.msra.mxu0 %v3715
    %3745 = vmatprep.subr.mxu0 0.0
    %3746 = vmatpush1.msra.mxu0 %v3714
    %3747 = vmatprep.subr.mxu0 0.0
    %3748 = vmatpush1.msra.mxu0 %v3713
    %3749 = vmatprep.subr.mxu0 0.0
    %3750 = vmatpush1.msra.mxu0 %v3712
    %3751 = vmatprep.subr.mxu0 0.0
    %3752 = vmatpush1.msra.mxu0 %v3711
    %3753 = vmatprep.subr.mxu0 0.0
    %3754 = vmatpush1.msra.mxu0 %v3710
    %3755 = vmatprep.subr.mxu0 0.0
    %3756 = vmatpush1.msra.mxu0 %v3709
    %3757 = vmatprep.subr.mxu0 0.0
    %3758 = vmatpush2.msra.mxu0 0.0
    %3759 = vmatprep.subr.mxu0 0.0
    %3760 = vmatpush2.msra.mxu0 0.0
    %3761 = vmatprep.subr.mxu0 0.0
    %3762 = vmatpush2.msra.mxu0 0.0
    %3763 = vmatprep.subr.mxu0 0.0
    %3764 = vmatpush2.msra.mxu0 0.0
    %3765 = vmatprep.subr.mxu0 0.0
    %3766 = vmatpush2.msra.mxu0 0.0
    %3767 = vmatprep.subr.mxu0 0.0
    %3768 = vmatpush2.msra.mxu0 0.0
    %3769 = vmatprep.subr.mxu0 0.0
    %3770 = vmatpush2.msra.mxu0 0.0
    %3771 = vmatprep.subr.mxu0 0.0
    %3772 = vmatpush2.msra.mxu0 0.0
    %3773 = vmatprep.subr.mxu0 0.0
    %3774 = vmatpush2.msra.mxu0 0.0
    %3775 = vmatprep.subr.mxu0 0.0
    %3776 = vmatpush2.msra.mxu0 0.0
    %3777 = vmatprep.subr.mxu0 0.0
    %3778 = vmatpush2.msra.mxu0 0.0
    %3779 = vmatprep.subr.mxu0 0.0
    %3780 = vmatpush2.msra.mxu0 0.0
    %3781 = vmatprep.subr.mxu0 0.0
    %3782 = vmatpush2.msra.mxu0 0.0
    %3783 = vmatprep.subr.mxu0 0.0
    %3784 = vmatpush2.msra.mxu0 0.0
    %3785 = vmatprep.subr.mxu0 0.0
    %3786 = vmatpush2.msra.mxu0 0.0
    %3787 = vmatprep.subr.mxu0 0.0
    %3788 = vmatpush2.msra.mxu0 0.0
    %3789 = vmatprep.mubr.f32.mxu0 0.0
    %3790 = vmatmul.mubr.f32.gmra.mxu0 %v3692
    %v3791 = vpop.f32.mrf.mxu0
    %v3792 = vadd.f32 0.0, %v3791
    %v3793 = vpop.f32.mrf.mxu0
    %3794 = vmatprep.mubr.f32.mxu0 0.0
    %3795 = vmatmul.mubr.f32.gmra.mxu0 %v3693
    %v3796 = vpop.f32.mrf.mxu0
    %v3797 = vadd.f32 0.0, %v3796
    %v3798 = vpop.f32.mrf.mxu0
    %3799 = vmatprep.mubr.f32.mxu0 0.0
    %3800 = vmatmul.mubr.f32.gmra.mxu0 %v3694
    %v3801 = vpop.f32.mrf.mxu0
    %v3802 = vadd.f32 0.0, %v3801
    %v3803 = vpop.f32.mrf.mxu0
    %3804 = vmatprep.mubr.f32.mxu0 0.0
    %3805 = vmatmul.mubr.f32.gmra.mxu0 %v3695
    %v3806 = vpop.f32.mrf.mxu0
    %v3807 = vadd.f32 0.0, %v3806
    %v3808 = vpop.f32.mrf.mxu0
    %3809 = vmatprep.mubr.f32.mxu0 0.0
    %3810 = vmatmul.mubr.f32.gmra.mxu0 %v3696
    %v3811 = vpop.f32.mrf.mxu0
    %v3812 = vadd.f32 0.0, %v3811
    %v3813 = vpop.f32.mrf.mxu0
    %3814 = vmatprep.mubr.f32.mxu0 0.0
    %3815 = vmatmul.mubr.f32.gmra.mxu0 %v3697
    %v3816 = vpop.f32.mrf.mxu0
    %v3817 = vadd.f32 0.0, %v3816
    %v3818 = vpop.f32.mrf.mxu0
    %3819 = vmatprep.mubr.f32.mxu0 0.0
    %3820 = vmatmul.mubr.f32.gmra.mxu0 %v3698
    %v3821 = vpop.f32.mrf.mxu0
    %v3822 = vadd.f32 0.0, %v3821
    %v3823 = vpop.f32.mrf.mxu0
    %3824 = vmatprep.mubr.f32.mxu0 0.0
    %3825 = vmatmul.mubr.f32.gmra.mxu0 %v3699
    %v3826 = vpop.f32.mrf.mxu0
    %v3827 = vadd.f32 0.0, %v3826
    %v3828 = vpop.f32.mrf.mxu0
    %3829 = vmatprep.mubr.f32.mxu0 0.0
    %3830 = vmatmul.mubr.f32.gmra.mxu0 %v3700
    %v3831 = vpop.f32.mrf.mxu0
    %v3832 = vadd.f32 0.0, %v3831
    %v3833 = vpop.f32.mrf.mxu0
    %3834 = vmatprep.mubr.f32.mxu0 0.0
    %3835 = vmatmul.mubr.f32.gmra.mxu0 %v3701
    %v3836 = vpop.f32.mrf.mxu0
    %v3837 = vadd.f32 0.0, %v3836
    %v3838 = vpop.f32.mrf.mxu0
    %3839 = vmatprep.mubr.f32.mxu0 0.0
    %3840 = vmatmul.mubr.f32.gmra.mxu0 %v3702
    %v3841 = vpop.f32.mrf.mxu0
    %v3842 = vadd.f32 0.0, %v3841
    %v3843 = vpop.f32.mrf.mxu0
    %3844 = vmatprep.mubr.f32.mxu0 0.0
    %3845 = vmatmul.mubr.f32.gmra.mxu0 %v3703
    %v3846 = vpop.f32.mrf.mxu0
    %v3847 = vadd.f32 0.0, %v3846
    %v3848 = vpop.f32.mrf.mxu0
    %3849 = vmatprep.mubr.f32.mxu0 0.0
    %3850 = vmatmul.mubr.f32.gmra.mxu0 %v3704
    %v3851 = vpop.f32.mrf.mxu0
    %v3852 = vadd.f32 0.0, %v3851
    %v3853 = vpop.f32.mrf.mxu0
    %3854 = vmatprep.mubr.f32.mxu0 0.0
    %3855 = vmatmul.mubr.f32.gmra.mxu0 %v3705
    %v3856 = vpop.f32.mrf.mxu0
    %v3857 = vadd.f32 0.0, %v3856
    %v3858 = vpop.f32.mrf.mxu0
    %3859 = vmatprep.mubr.f32.mxu0 0.0
    %3860 = vmatmul.mubr.f32.gmra.mxu0 %v3706
    %v3861 = vpop.f32.mrf.mxu0
    %v3862 = vadd.f32 0.0, %v3861
    %v3863 = vpop.f32.mrf.mxu0
    %3864 = vmatprep.mubr.f32.mxu0 0.0
    %3865 = vmatmul.mubr.f32.gmra.mxu0 %v3707
    %v3866 = vpop.f32.mrf.mxu0
    %v3867 = vadd.f32 0.0, %v3866
    %v3868 = vpop.f32.mrf.mxu0
    %3869 = vdwg.mxu0
    %v3870 = vadd.f32 %v3676, %v3792
    %v3871 = vadd.f32 %v3677, %v3797
    %v3872 = vadd.f32 %v3678, %v3802
    %v3873 = vadd.f32 %v3679, %v3807
    %v3874 = vadd.f32 %v3680, %v3812
    %v3875 = vadd.f32 %v3681, %v3817
    %v3876 = vadd.f32 %v3682, %v3822
    %v3877 = vadd.f32 %v3683, %v3827
    %v3878 = vadd.f32 %v3684, %v3832
    %v3879 = vadd.f32 %v3685, %v3837
    %v3880 = vadd.f32 %v3686, %v3842
    %v3881 = vadd.f32 %v3687, %v3847
    %v3882 = vadd.f32 %v3688, %v3852
    %v3883 = vadd.f32 %v3689, %v3857
    %v3884 = vadd.f32 %v3690, %v3862
    %v3885 = vadd.f32 %v3691, %v3867
    %v3886 = vld [vmem:[%s1719 + $0x1] sm:$0xff]
    %v3887 = vld [vmem:[%s1719 + $0x11] sm:$0xff]
    %v3888 = vld [vmem:[%s1719 + $0x21] sm:$0xff]
    %v3889 = vld [vmem:[%s1719 + $0x31] sm:$0xff]
    %v3890 = vld [vmem:[%s1719 + $0x41] sm:$0xff]
    %v3891 = vld [vmem:[%s1719 + $0x51] sm:$0xff]
    %v3892 = vld [vmem:[%s1719 + $0x61] sm:$0xff]
    %v3893 = vld [vmem:[%s1719 + $0x71] sm:$0xff]
    %v3894 = vld [vmem:[%s1719 + $0xc1] sm:$0xff]
    %v3895 = vld [vmem:[%s1719 + $0xd1] sm:$0xff]
    %v3896 = vld [vmem:[%s1719 + $0xe1] sm:$0xff]
    %v3897 = vld [vmem:[%s1719 + $0xf1] sm:$0xff]
    %v3898 = vld [vmem:[%s1719 + $0x101] sm:$0xff]
    %v3899 = vld [vmem:[%s1719 + $0x111] sm:$0xff]
    %v3900 = vld [vmem:[%s1719 + $0x121] sm:$0xff]
    %v3901 = vld [vmem:[%s1719 + $0x131] sm:$0xff]
    %s3902 = scalar_lea.vmem %s3, 1408
    %v3903 = vld [vmem:[%s3902] sm:$0xff]
    %v3904 = vld [vmem:[%s3902 + $0x8] sm:$0xff]
    %v3905 = vld [vmem:[%s3902 + $0x10] sm:$0xff]
    %v3906 = vld [vmem:[%s3902 + $0x18] sm:$0xff]
    %v3907 = vld [vmem:[%s3902 + $0x20] sm:$0xff]
    %v3908 = vld [vmem:[%s3902 + $0x28] sm:$0xff]
    %v3909 = vld [vmem:[%s3902 + $0x30] sm:$0xff]
    %v3910 = vld [vmem:[%s3902 + $0x38] sm:$0xff]
    %v3911 = vld [vmem:[%s3902 + $0x40] sm:$0xff]
    %v3912 = vld [vmem:[%s3902 + $0x48] sm:$0xff]
    %v3913 = vld [vmem:[%s3902 + $0x50] sm:$0xff]
    %v3914 = vld [vmem:[%s3902 + $0x58] sm:$0xff]
    %v3915 = vld [vmem:[%s3902 + $0x60] sm:$0xff]
    %v3916 = vld [vmem:[%s3902 + $0x68] sm:$0xff]
    %v3917 = vld [vmem:[%s3902 + $0x70] sm:$0xff]
    %v3918 = vld [vmem:[%s3902 + $0x78] sm:$0xff]
    %3919 = vmatprep.subr.mxu0 0.0
    %3920 = vmatpush1.msra.mxu0 %v3918
    %3921 = vmatprep.subr.mxu0 0.0
    %3922 = vmatpush1.msra.mxu0 %v3917
    %3923 = vmatprep.subr.mxu0 0.0
    %3924 = vmatpush1.msra.mxu0 %v3916
    %3925 = vmatprep.subr.mxu0 0.0
    %3926 = vmatpush1.msra.mxu0 %v3915
    %3927 = vmatprep.subr.mxu0 0.0
    %3928 = vmatpush1.msra.mxu0 %v3914
    %3929 = vmatprep.subr.mxu0 0.0
    %3930 = vmatpush1.msra.mxu0 %v3913
    %3931 = vmatprep.subr.mxu0 0.0
    %3932 = vmatpush1.msra.mxu0 %v3912
    %3933 = vmatprep.subr.mxu0 0.0
    %3934 = vmatpush1.msra.mxu0 %v3911
    %3935 = vmatprep.subr.mxu0 0.0
    %3936 = vmatpush1.msra.mxu0 %v3910
    %3937 = vmatprep.subr.mxu0 0.0
    %3938 = vmatpush1.msra.mxu0 %v3909
    %3939 = vmatprep.subr.mxu0 0.0
    %3940 = vmatpush1.msra.mxu0 %v3908
    %3941 = vmatprep.subr.mxu0 0.0
    %3942 = vmatpush1.msra.mxu0 %v3907
    %3943 = vmatprep.subr.mxu0 0.0
    %3944 = vmatpush1.msra.mxu0 %v3906
    %3945 = vmatprep.subr.mxu0 0.0
    %3946 = vmatpush1.msra.mxu0 %v3905
    %3947 = vmatprep.subr.mxu0 0.0
    %3948 = vmatpush1.msra.mxu0 %v3904
    %3949 = vmatprep.subr.mxu0 0.0
    %3950 = vmatpush1.msra.mxu0 %v3903
    %3951 = vmatprep.subr.mxu0 0.0
    %3952 = vmatpush2.msra.mxu0 0.0
    %3953 = vmatprep.subr.mxu0 0.0
    %3954 = vmatpush2.msra.mxu0 0.0
    %3955 = vmatprep.subr.mxu0 0.0
    %3956 = vmatpush2.msra.mxu0 0.0
    %3957 = vmatprep.subr.mxu0 0.0
    %3958 = vmatpush2.msra.mxu0 0.0
    %3959 = vmatprep.subr.mxu0 0.0
    %3960 = vmatpush2.msra.mxu0 0.0
    %3961 = vmatprep.subr.mxu0 0.0
    %3962 = vmatpush2.msra.mxu0 0.0
    %3963 = vmatprep.subr.mxu0 0.0
    %3964 = vmatpush2.msra.mxu0 0.0
    %3965 = vmatprep.subr.mxu0 0.0
    %3966 = vmatpush2.msra.mxu0 0.0
    %3967 = vmatprep.subr.mxu0 0.0
    %3968 = vmatpush2.msra.mxu0 0.0
    %3969 = vmatprep.subr.mxu0 0.0
    %3970 = vmatpush2.msra.mxu0 0.0
    %3971 = vmatprep.subr.mxu0 0.0
    %3972 = vmatpush2.msra.mxu0 0.0
    %3973 = vmatprep.subr.mxu0 0.0
    %3974 = vmatpush2.msra.mxu0 0.0
    %3975 = vmatprep.subr.mxu0 0.0
    %3976 = vmatpush2.msra.mxu0 0.0
    %3977 = vmatprep.subr.mxu0 0.0
    %3978 = vmatpush2.msra.mxu0 0.0
    %3979 = vmatprep.subr.mxu0 0.0
    %3980 = vmatpush2.msra.mxu0 0.0
    %3981 = vmatprep.subr.mxu0 0.0
    %3982 = vmatpush2.msra.mxu0 0.0
    %3983 = vmatprep.mubr.f32.mxu0 0.0
    %3984 = vmatmul.mubr.f32.gmra.mxu0 %v3886
    %v3985 = vpop.f32.mrf.mxu0
    %v3986 = vadd.f32 0.0, %v3985
    %v3987 = vpop.f32.mrf.mxu0
    %3988 = vmatprep.mubr.f32.mxu0 0.0
    %3989 = vmatmul.mubr.f32.gmra.mxu0 %v3887
    %v3990 = vpop.f32.mrf.mxu0
    %v3991 = vadd.f32 0.0, %v3990
    %v3992 = vpop.f32.mrf.mxu0
    %3993 = vmatprep.mubr.f32.mxu0 0.0
    %3994 = vmatmul.mubr.f32.gmra.mxu0 %v3888
    %v3995 = vpop.f32.mrf.mxu0
    %v3996 = vadd.f32 0.0, %v3995
    %v3997 = vpop.f32.mrf.mxu0
    %3998 = vmatprep.mubr.f32.mxu0 0.0
    %3999 = vmatmul.mubr.f32.gmra.mxu0 %v3889
    %v4000 = vpop.f32.mrf.mxu0
    %v4001 = vadd.f32 0.0, %v4000
    %v4002 = vpop.f32.mrf.mxu0
    %4003 = vmatprep.mubr.f32.mxu0 0.0
    %4004 = vmatmul.mubr.f32.gmra.mxu0 %v3890
    %v4005 = vpop.f32.mrf.mxu0
    %v4006 = vadd.f32 0.0, %v4005
    %v4007 = vpop.f32.mrf.mxu0
    %4008 = vmatprep.mubr.f32.mxu0 0.0
    %4009 = vmatmul.mubr.f32.gmra.mxu0 %v3891
    %v4010 = vpop.f32.mrf.mxu0
    %v4011 = vadd.f32 0.0, %v4010
    %v4012 = vpop.f32.mrf.mxu0
    %4013 = vmatprep.mubr.f32.mxu0 0.0
    %4014 = vmatmul.mubr.f32.gmra.mxu0 %v3892
    %v4015 = vpop.f32.mrf.mxu0
    %v4016 = vadd.f32 0.0, %v4015
    %v4017 = vpop.f32.mrf.mxu0
    %4018 = vmatprep.mubr.f32.mxu0 0.0
    %4019 = vmatmul.mubr.f32.gmra.mxu0 %v3893
    %v4020 = vpop.f32.mrf.mxu0
    %v4021 = vadd.f32 0.0, %v4020
    %v4022 = vpop.f32.mrf.mxu0
    %4023 = vmatprep.mubr.f32.mxu0 0.0
    %4024 = vmatmul.mubr.f32.gmra.mxu0 %v3894
    %v4025 = vpop.f32.mrf.mxu0
    %v4026 = vadd.f32 0.0, %v4025
    %v4027 = vpop.f32.mrf.mxu0
    %4028 = vmatprep.mubr.f32.mxu0 0.0
    %4029 = vmatmul.mubr.f32.gmra.mxu0 %v3895
    %v4030 = vpop.f32.mrf.mxu0
    %v4031 = vadd.f32 0.0, %v4030
    %v4032 = vpop.f32.mrf.mxu0
    %4033 = vmatprep.mubr.f32.mxu0 0.0
    %4034 = vmatmul.mubr.f32.gmra.mxu0 %v3896
    %v4035 = vpop.f32.mrf.mxu0
    %v4036 = vadd.f32 0.0, %v4035
    %v4037 = vpop.f32.mrf.mxu0
    %4038 = vmatprep.mubr.f32.mxu0 0.0
    %4039 = vmatmul.mubr.f32.gmra.mxu0 %v3897
    %v4040 = vpop.f32.mrf.mxu0
    %v4041 = vadd.f32 0.0, %v4040
    %v4042 = vpop.f32.mrf.mxu0
    %4043 = vmatprep.mubr.f32.mxu0 0.0
    %4044 = vmatmul.mubr.f32.gmra.mxu0 %v3898
    %v4045 = vpop.f32.mrf.mxu0
    %v4046 = vadd.f32 0.0, %v4045
    %v4047 = vpop.f32.mrf.mxu0
    %4048 = vmatprep.mubr.f32.mxu0 0.0
    %4049 = vmatmul.mubr.f32.gmra.mxu0 %v3899
    %v4050 = vpop.f32.mrf.mxu0
    %v4051 = vadd.f32 0.0, %v4050
    %v4052 = vpop.f32.mrf.mxu0
    %4053 = vmatprep.mubr.f32.mxu0 0.0
    %4054 = vmatmul.mubr.f32.gmra.mxu0 %v3900
    %v4055 = vpop.f32.mrf.mxu0
    %v4056 = vadd.f32 0.0, %v4055
    %v4057 = vpop.f32.mrf.mxu0
    %4058 = vmatprep.mubr.f32.mxu0 0.0
    %4059 = vmatmul.mubr.f32.gmra.mxu0 %v3901
    %v4060 = vpop.f32.mrf.mxu0
    %v4061 = vadd.f32 0.0, %v4060
    %v4062 = vpop.f32.mrf.mxu0
    %4063 = vdwg.mxu0
    %v4064 = vadd.f32 %v3870, %v3986
    %v4065 = vadd.f32 %v3871, %v3991
    %v4066 = vadd.f32 %v3872, %v3996
    %v4067 = vadd.f32 %v3873, %v4001
    %v4068 = vadd.f32 %v3874, %v4006
    %v4069 = vadd.f32 %v3875, %v4011
    %v4070 = vadd.f32 %v3876, %v4016
    %v4071 = vadd.f32 %v3877, %v4021
    %v4072 = vadd.f32 %v3878, %v4026
    %v4073 = vadd.f32 %v3879, %v4031
    %v4074 = vadd.f32 %v3880, %v4036
    %v4075 = vadd.f32 %v3881, %v4041
    %v4076 = vadd.f32 %v3882, %v4046
    %v4077 = vadd.f32 %v3883, %v4051
    %v4078 = vadd.f32 %v3884, %v4056
    %v4079 = vadd.f32 %v3885, %v4061
    %v4080 = vld [vmem:[%s1719 + $0x2] sm:$0xff]
    %v4081 = vld [vmem:[%s1719 + $0x12] sm:$0xff]
    %v4082 = vld [vmem:[%s1719 + $0x22] sm:$0xff]
    %v4083 = vld [vmem:[%s1719 + $0x32] sm:$0xff]
    %v4084 = vld [vmem:[%s1719 + $0x42] sm:$0xff]
    %v4085 = vld [vmem:[%s1719 + $0x52] sm:$0xff]
    %v4086 = vld [vmem:[%s1719 + $0x62] sm:$0xff]
    %v4087 = vld [vmem:[%s1719 + $0x72] sm:$0xff]
    %v4088 = vld [vmem:[%s1719 + $0xc2] sm:$0xff]
    %v4089 = vld [vmem:[%s1719 + $0xd2] sm:$0xff]
    %v4090 = vld [vmem:[%s1719 + $0xe2] sm:$0xff]
    %v4091 = vld [vmem:[%s1719 + $0xf2] sm:$0xff]
    %v4092 = vld [vmem:[%s1719 + $0x102] sm:$0xff]
    %v4093 = vld [vmem:[%s1719 + $0x112] sm:$0xff]
    %v4094 = vld [vmem:[%s1719 + $0x122] sm:$0xff]
    %v4095 = vld [vmem:[%s1719 + $0x132] sm:$0xff]
    %s4096 = scalar_lea.vmem %s3, 1536
    %v4097 = vld [vmem:[%s4096] sm:$0xff]
    %v4098 = vld [vmem:[%s4096 + $0x8] sm:$0xff]
    %v4099 = vld [vmem:[%s4096 + $0x10] sm:$0xff]
    %v4100 = vld [vmem:[%s4096 + $0x18] sm:$0xff]
    %v4101 = vld [vmem:[%s4096 + $0x20] sm:$0xff]
    %v4102 = vld [vmem:[%s4096 + $0x28] sm:$0xff]
    %v4103 = vld [vmem:[%s4096 + $0x30] sm:$0xff]
    %v4104 = vld [vmem:[%s4096 + $0x38] sm:$0xff]
    %v4105 = vld [vmem:[%s4096 + $0x40] sm:$0xff]
    %v4106 = vld [vmem:[%s4096 + $0x48] sm:$0xff]
    %v4107 = vld [vmem:[%s4096 + $0x50] sm:$0xff]
    %v4108 = vld [vmem:[%s4096 + $0x58] sm:$0xff]
    %v4109 = vld [vmem:[%s4096 + $0x60] sm:$0xff]
    %v4110 = vld [vmem:[%s4096 + $0x68] sm:$0xff]
    %v4111 = vld [vmem:[%s4096 + $0x70] sm:$0xff]
    %v4112 = vld [vmem:[%s4096 + $0x78] sm:$0xff]
    %4113 = vmatprep.subr.mxu0 0.0
    %4114 = vmatpush1.msra.mxu0 %v4112
    %4115 = vmatprep.subr.mxu0 0.0
    %4116 = vmatpush1.msra.mxu0 %v4111
    %4117 = vmatprep.subr.mxu0 0.0
    %4118 = vmatpush1.msra.mxu0 %v4110
    %4119 = vmatprep.subr.mxu0 0.0
    %4120 = vmatpush1.msra.mxu0 %v4109
    %4121 = vmatprep.subr.mxu0 0.0
    %4122 = vmatpush1.msra.mxu0 %v4108
    %4123 = vmatprep.subr.mxu0 0.0
    %4124 = vmatpush1.msra.mxu0 %v4107
    %4125 = vmatprep.subr.mxu0 0.0
    %4126 = vmatpush1.msra.mxu0 %v4106
    %4127 = vmatprep.subr.mxu0 0.0
    %4128 = vmatpush1.msra.mxu0 %v4105
    %4129 = vmatprep.subr.mxu0 0.0
    %4130 = vmatpush1.msra.mxu0 %v4104
    %4131 = vmatprep.subr.mxu0 0.0
    %4132 = vmatpush1.msra.mxu0 %v4103
    %4133 = vmatprep.subr.mxu0 0.0
    %4134 = vmatpush1.msra.mxu0 %v4102
    %4135 = vmatprep.subr.mxu0 0.0
    %4136 = vmatpush1.msra.mxu0 %v4101
    %4137 = vmatprep.subr.mxu0 0.0
    %4138 = vmatpush1.msra.mxu0 %v4100
    %4139 = vmatprep.subr.mxu0 0.0
    %4140 = vmatpush1.msra.mxu0 %v4099
    %4141 = vmatprep.subr.mxu0 0.0
    %4142 = vmatpush1.msra.mxu0 %v4098
    %4143 = vmatprep.subr.mxu0 0.0
    %4144 = vmatpush1.msra.mxu0 %v4097
    %4145 = vmatprep.subr.mxu0 0.0
    %4146 = vmatpush2.msra.mxu0 0.0
    %4147 = vmatprep.subr.mxu0 0.0
    %4148 = vmatpush2.msra.mxu0 0.0
    %4149 = vmatprep.subr.mxu0 0.0
    %4150 = vmatpush2.msra.mxu0 0.0
    %4151 = vmatprep.subr.mxu0 0.0
    %4152 = vmatpush2.msra.mxu0 0.0
    %4153 = vmatprep.subr.mxu0 0.0
    %4154 = vmatpush2.msra.mxu0 0.0
    %4155 = vmatprep.subr.mxu0 0.0
    %4156 = vmatpush2.msra.mxu0 0.0
    %4157 = vmatprep.subr.mxu0 0.0
    %4158 = vmatpush2.msra.mxu0 0.0
    %4159 = vmatprep.subr.mxu0 0.0
    %4160 = vmatpush2.msra.mxu0 0.0
    %4161 = vmatprep.subr.mxu0 0.0
    %4162 = vmatpush2.msra.mxu0 0.0
    %4163 = vmatprep.subr.mxu0 0.0
    %4164 = vmatpush2.msra.mxu0 0.0
    %4165 = vmatprep.subr.mxu0 0.0
    %4166 = vmatpush2.msra.mxu0 0.0
    %4167 = vmatprep.subr.mxu0 0.0
    %4168 = vmatpush2.msra.mxu0 0.0
    %4169 = vmatprep.subr.mxu0 0.0
    %4170 = vmatpush2.msra.mxu0 0.0
    %4171 = vmatprep.subr.mxu0 0.0
    %4172 = vmatpush2.msra.mxu0 0.0
    %4173 = vmatprep.subr.mxu0 0.0
    %4174 = vmatpush2.msra.mxu0 0.0
    %4175 = vmatprep.subr.mxu0 0.0
    %4176 = vmatpush2.msra.mxu0 0.0
    %4177 = vmatprep.mubr.f32.mxu0 0.0
    %4178 = vmatmul.mubr.f32.gmra.mxu0 %v4080
    %v4179 = vpop.f32.mrf.mxu0
    %v4180 = vadd.f32 0.0, %v4179
    %v4181 = vpop.f32.mrf.mxu0
    %4182 = vmatprep.mubr.f32.mxu0 0.0
    %4183 = vmatmul.mubr.f32.gmra.mxu0 %v4081
    %v4184 = vpop.f32.mrf.mxu0
    %v4185 = vadd.f32 0.0, %v4184
    %v4186 = vpop.f32.mrf.mxu0
    %4187 = vmatprep.mubr.f32.mxu0 0.0
    %4188 = vmatmul.mubr.f32.gmra.mxu0 %v4082
    %v4189 = vpop.f32.mrf.mxu0
    %v4190 = vadd.f32 0.0, %v4189
    %v4191 = vpop.f32.mrf.mxu0
    %4192 = vmatprep.mubr.f32.mxu0 0.0
    %4193 = vmatmul.mubr.f32.gmra.mxu0 %v4083
    %v4194 = vpop.f32.mrf.mxu0
    %v4195 = vadd.f32 0.0, %v4194
    %v4196 = vpop.f32.mrf.mxu0
    %4197 = vmatprep.mubr.f32.mxu0 0.0
    %4198 = vmatmul.mubr.f32.gmra.mxu0 %v4084
    %v4199 = vpop.f32.mrf.mxu0
    %v4200 = vadd.f32 0.0, %v4199
    %v4201 = vpop.f32.mrf.mxu0
    %4202 = vmatprep.mubr.f32.mxu0 0.0
    %4203 = vmatmul.mubr.f32.gmra.mxu0 %v4085
    %v4204 = vpop.f32.mrf.mxu0
    %v4205 = vadd.f32 0.0, %v4204
    %v4206 = vpop.f32.mrf.mxu0
    %4207 = vmatprep.mubr.f32.mxu0 0.0
    %4208 = vmatmul.mubr.f32.gmra.mxu0 %v4086
    %v4209 = vpop.f32.mrf.mxu0
    %v4210 = vadd.f32 0.0, %v4209
    %v4211 = vpop.f32.mrf.mxu0
    %4212 = vmatprep.mubr.f32.mxu0 0.0
    %4213 = vmatmul.mubr.f32.gmra.mxu0 %v4087
    %v4214 = vpop.f32.mrf.mxu0
    %v4215 = vadd.f32 0.0, %v4214
    %v4216 = vpop.f32.mrf.mxu0
    %4217 = vmatprep.mubr.f32.mxu0 0.0
    %4218 = vmatmul.mubr.f32.gmra.mxu0 %v4088
    %v4219 = vpop.f32.mrf.mxu0
    %v4220 = vadd.f32 0.0, %v4219
    %v4221 = vpop.f32.mrf.mxu0
    %4222 = vmatprep.mubr.f32.mxu0 0.0
    %4223 = vmatmul.mubr.f32.gmra.mxu0 %v4089
    %v4224 = vpop.f32.mrf.mxu0
    %v4225 = vadd.f32 0.0, %v4224
    %v4226 = vpop.f32.mrf.mxu0
    %4227 = vmatprep.mubr.f32.mxu0 0.0
    %4228 = vmatmul.mubr.f32.gmra.mxu0 %v4090
    %v4229 = vpop.f32.mrf.mxu0
    %v4230 = vadd.f32 0.0, %v4229
    %v4231 = vpop.f32.mrf.mxu0
    %4232 = vmatprep.mubr.f32.mxu0 0.0
    %4233 = vmatmul.mubr.f32.gmra.mxu0 %v4091
    %v4234 = vpop.f32.mrf.mxu0
    %v4235 = vadd.f32 0.0, %v4234
    %v4236 = vpop.f32.mrf.mxu0
    %4237 = vmatprep.mubr.f32.mxu0 0.0
    %4238 = vmatmul.mubr.f32.gmra.mxu0 %v4092
    %v4239 = vpop.f32.mrf.mxu0
    %v4240 = vadd.f32 0.0, %v4239
    %v4241 = vpop.f32.mrf.mxu0
    %4242 = vmatprep.mubr.f32.mxu0 0.0
    %4243 = vmatmul.mubr.f32.gmra.mxu0 %v4093
    %v4244 = vpop.f32.mrf.mxu0
    %v4245 = vadd.f32 0.0, %v4244
    %v4246 = vpop.f32.mrf.mxu0
    %4247 = vmatprep.mubr.f32.mxu0 0.0
    %4248 = vmatmul.mubr.f32.gmra.mxu0 %v4094
    %v4249 = vpop.f32.mrf.mxu0
    %v4250 = vadd.f32 0.0, %v4249
    %v4251 = vpop.f32.mrf.mxu0
    %4252 = vmatprep.mubr.f32.mxu0 0.0
    %4253 = vmatmul.mubr.f32.gmra.mxu0 %v4095
    %v4254 = vpop.f32.mrf.mxu0
    %v4255 = vadd.f32 0.0, %v4254
    %v4256 = vpop.f32.mrf.mxu0
    %4257 = vdwg.mxu0
    %v4258 = vadd.f32 %v4064, %v4180
    %v4259 = vadd.f32 %v4065, %v4185
    %v4260 = vadd.f32 %v4066, %v4190
    %v4261 = vadd.f32 %v4067, %v4195
    %v4262 = vadd.f32 %v4068, %v4200
    %v4263 = vadd.f32 %v4069, %v4205
    %v4264 = vadd.f32 %v4070, %v4210
    %v4265 = vadd.f32 %v4071, %v4215
    %v4266 = vadd.f32 %v4072, %v4220
    %v4267 = vadd.f32 %v4073, %v4225
    %v4268 = vadd.f32 %v4074, %v4230
    %v4269 = vadd.f32 %v4075, %v4235
    %v4270 = vadd.f32 %v4076, %v4240
    %v4271 = vadd.f32 %v4077, %v4245
    %v4272 = vadd.f32 %v4078, %v4250
    %v4273 = vadd.f32 %v4079, %v4255
    %v4274 = vld [vmem:[%s1719 + $0x3] sm:$0xff]
    %v4275 = vld [vmem:[%s1719 + $0x13] sm:$0xff]
    %v4276 = vld [vmem:[%s1719 + $0x23] sm:$0xff]
    %v4277 = vld [vmem:[%s1719 + $0x33] sm:$0xff]
    %v4278 = vld [vmem:[%s1719 + $0x43] sm:$0xff]
    %v4279 = vld [vmem:[%s1719 + $0x53] sm:$0xff]
    %v4280 = vld [vmem:[%s1719 + $0x63] sm:$0xff]
    %v4281 = vld [vmem:[%s1719 + $0x73] sm:$0xff]
    %v4282 = vld [vmem:[%s1719 + $0xc3] sm:$0xff]
    %v4283 = vld [vmem:[%s1719 + $0xd3] sm:$0xff]
    %v4284 = vld [vmem:[%s1719 + $0xe3] sm:$0xff]
    %v4285 = vld [vmem:[%s1719 + $0xf3] sm:$0xff]
    %v4286 = vld [vmem:[%s1719 + $0x103] sm:$0xff]
    %v4287 = vld [vmem:[%s1719 + $0x113] sm:$0xff]
    %v4288 = vld [vmem:[%s1719 + $0x123] sm:$0xff]
    %v4289 = vld [vmem:[%s1719 + $0x133] sm:$0xff]
    %s4290 = scalar_lea.vmem %s3, 1664
    %v4291 = vld [vmem:[%s4290] sm:$0xff]
    %v4292 = vld [vmem:[%s4290 + $0x8] sm:$0xff]
    %v4293 = vld [vmem:[%s4290 + $0x10] sm:$0xff]
    %v4294 = vld [vmem:[%s4290 + $0x18] sm:$0xff]
    %v4295 = vld [vmem:[%s4290 + $0x20] sm:$0xff]
    %v4296 = vld [vmem:[%s4290 + $0x28] sm:$0xff]
    %v4297 = vld [vmem:[%s4290 + $0x30] sm:$0xff]
    %v4298 = vld [vmem:[%s4290 + $0x38] sm:$0xff]
    %v4299 = vld [vmem:[%s4290 + $0x40] sm:$0xff]
    %v4300 = vld [vmem:[%s4290 + $0x48] sm:$0xff]
    %v4301 = vld [vmem:[%s4290 + $0x50] sm:$0xff]
    %v4302 = vld [vmem:[%s4290 + $0x58] sm:$0xff]
    %v4303 = vld [vmem:[%s4290 + $0x60] sm:$0xff]
    %v4304 = vld [vmem:[%s4290 + $0x68] sm:$0xff]
    %v4305 = vld [vmem:[%s4290 + $0x70] sm:$0xff]
    %v4306 = vld [vmem:[%s4290 + $0x78] sm:$0xff]
    %4307 = vmatprep.subr.mxu0 0.0
    %4308 = vmatpush1.msra.mxu0 %v4306
    %4309 = vmatprep.subr.mxu0 0.0
    %4310 = vmatpush1.msra.mxu0 %v4305
    %4311 = vmatprep.subr.mxu0 0.0
    %4312 = vmatpush1.msra.mxu0 %v4304
    %4313 = vmatprep.subr.mxu0 0.0
    %4314 = vmatpush1.msra.mxu0 %v4303
    %4315 = vmatprep.subr.mxu0 0.0
    %4316 = vmatpush1.msra.mxu0 %v4302
    %4317 = vmatprep.subr.mxu0 0.0
    %4318 = vmatpush1.msra.mxu0 %v4301
    %4319 = vmatprep.subr.mxu0 0.0
    %4320 = vmatpush1.msra.mxu0 %v4300
    %4321 = vmatprep.subr.mxu0 0.0
    %4322 = vmatpush1.msra.mxu0 %v4299
    %4323 = vmatprep.subr.mxu0 0.0
    %4324 = vmatpush1.msra.mxu0 %v4298
    %4325 = vmatprep.subr.mxu0 0.0
    %4326 = vmatpush1.msra.mxu0 %v4297
    %4327 = vmatprep.subr.mxu0 0.0
    %4328 = vmatpush1.msra.mxu0 %v4296
    %4329 = vmatprep.subr.mxu0 0.0
    %4330 = vmatpush1.msra.mxu0 %v4295
    %4331 = vmatprep.subr.mxu0 0.0
    %4332 = vmatpush1.msra.mxu0 %v4294
    %4333 = vmatprep.subr.mxu0 0.0
    %4334 = vmatpush1.msra.mxu0 %v4293
    %4335 = vmatprep.subr.mxu0 0.0
    %4336 = vmatpush1.msra.mxu0 %v4292
    %4337 = vmatprep.subr.mxu0 0.0
    %4338 = vmatpush1.msra.mxu0 %v4291
    %4339 = vmatprep.subr.mxu0 0.0
    %4340 = vmatpush2.msra.mxu0 0.0
    %4341 = vmatprep.subr.mxu0 0.0
    %4342 = vmatpush2.msra.mxu0 0.0
    %4343 = vmatprep.subr.mxu0 0.0
    %4344 = vmatpush2.msra.mxu0 0.0
    %4345 = vmatprep.subr.mxu0 0.0
    %4346 = vmatpush2.msra.mxu0 0.0
    %4347 = vmatprep.subr.mxu0 0.0
    %4348 = vmatpush2.msra.mxu0 0.0
    %4349 = vmatprep.subr.mxu0 0.0
    %4350 = vmatpush2.msra.mxu0 0.0
    %4351 = vmatprep.subr.mxu0 0.0
    %4352 = vmatpush2.msra.mxu0 0.0
    %4353 = vmatprep.subr.mxu0 0.0
    %4354 = vmatpush2.msra.mxu0 0.0
    %4355 = vmatprep.subr.mxu0 0.0
    %4356 = vmatpush2.msra.mxu0 0.0
    %4357 = vmatprep.subr.mxu0 0.0
    %4358 = vmatpush2.msra.mxu0 0.0
    %4359 = vmatprep.subr.mxu0 0.0
    %4360 = vmatpush2.msra.mxu0 0.0
    %4361 = vmatprep.subr.mxu0 0.0
    %4362 = vmatpush2.msra.mxu0 0.0
    %4363 = vmatprep.subr.mxu0 0.0
    %4364 = vmatpush2.msra.mxu0 0.0
    %4365 = vmatprep.subr.mxu0 0.0
    %4366 = vmatpush2.msra.mxu0 0.0
    %4367 = vmatprep.subr.mxu0 0.0
    %4368 = vmatpush2.msra.mxu0 0.0
    %4369 = vmatprep.subr.mxu0 0.0
    %4370 = vmatpush2.msra.mxu0 0.0
    %4371 = vmatprep.mubr.f32.mxu0 0.0
    %4372 = vmatmul.mubr.f32.gmra.mxu0 %v4274
    %v4373 = vpop.f32.mrf.mxu0
    %v4374 = vadd.f32 0.0, %v4373
    %v4375 = vpop.f32.mrf.mxu0
    %4376 = vmatprep.mubr.f32.mxu0 0.0
    %4377 = vmatmul.mubr.f32.gmra.mxu0 %v4275
    %v4378 = vpop.f32.mrf.mxu0
    %v4379 = vadd.f32 0.0, %v4378
    %v4380 = vpop.f32.mrf.mxu0
    %4381 = vmatprep.mubr.f32.mxu0 0.0
    %4382 = vmatmul.mubr.f32.gmra.mxu0 %v4276
    %v4383 = vpop.f32.mrf.mxu0
    %v4384 = vadd.f32 0.0, %v4383
    %v4385 = vpop.f32.mrf.mxu0
    %4386 = vmatprep.mubr.f32.mxu0 0.0
    %4387 = vmatmul.mubr.f32.gmra.mxu0 %v4277
    %v4388 = vpop.f32.mrf.mxu0
    %v4389 = vadd.f32 0.0, %v4388
    %v4390 = vpop.f32.mrf.mxu0
    %4391 = vmatprep.mubr.f32.mxu0 0.0
    %4392 = vmatmul.mubr.f32.gmra.mxu0 %v4278
    %v4393 = vpop.f32.mrf.mxu0
    %v4394 = vadd.f32 0.0, %v4393
    %v4395 = vpop.f32.mrf.mxu0
    %4396 = vmatprep.mubr.f32.mxu0 0.0
    %4397 = vmatmul.mubr.f32.gmra.mxu0 %v4279
    %v4398 = vpop.f32.mrf.mxu0
    %v4399 = vadd.f32 0.0, %v4398
    %v4400 = vpop.f32.mrf.mxu0
    %4401 = vmatprep.mubr.f32.mxu0 0.0
    %4402 = vmatmul.mubr.f32.gmra.mxu0 %v4280
    %v4403 = vpop.f32.mrf.mxu0
    %v4404 = vadd.f32 0.0, %v4403
    %v4405 = vpop.f32.mrf.mxu0
    %4406 = vmatprep.mubr.f32.mxu0 0.0
    %4407 = vmatmul.mubr.f32.gmra.mxu0 %v4281
    %v4408 = vpop.f32.mrf.mxu0
    %v4409 = vadd.f32 0.0, %v4408
    %v4410 = vpop.f32.mrf.mxu0
    %4411 = vmatprep.mubr.f32.mxu0 0.0
    %4412 = vmatmul.mubr.f32.gmra.mxu0 %v4282
    %v4413 = vpop.f32.mrf.mxu0
    %v4414 = vadd.f32 0.0, %v4413
    %v4415 = vpop.f32.mrf.mxu0
    %4416 = vmatprep.mubr.f32.mxu0 0.0
    %4417 = vmatmul.mubr.f32.gmra.mxu0 %v4283
    %v4418 = vpop.f32.mrf.mxu0
    %v4419 = vadd.f32 0.0, %v4418
    %v4420 = vpop.f32.mrf.mxu0
    %4421 = vmatprep.mubr.f32.mxu0 0.0
    %4422 = vmatmul.mubr.f32.gmra.mxu0 %v4284
    %v4423 = vpop.f32.mrf.mxu0
    %v4424 = vadd.f32 0.0, %v4423
    %v4425 = vpop.f32.mrf.mxu0
    %4426 = vmatprep.mubr.f32.mxu0 0.0
    %4427 = vmatmul.mubr.f32.gmra.mxu0 %v4285
    %v4428 = vpop.f32.mrf.mxu0
    %v4429 = vadd.f32 0.0, %v4428
    %v4430 = vpop.f32.mrf.mxu0
    %4431 = vmatprep.mubr.f32.mxu0 0.0
    %4432 = vmatmul.mubr.f32.gmra.mxu0 %v4286
    %v4433 = vpop.f32.mrf.mxu0
    %v4434 = vadd.f32 0.0, %v4433
    %v4435 = vpop.f32.mrf.mxu0
    %4436 = vmatprep.mubr.f32.mxu0 0.0
    %4437 = vmatmul.mubr.f32.gmra.mxu0 %v4287
    %v4438 = vpop.f32.mrf.mxu0
    %v4439 = vadd.f32 0.0, %v4438
    %v4440 = vpop.f32.mrf.mxu0
    %4441 = vmatprep.mubr.f32.mxu0 0.0
    %4442 = vmatmul.mubr.f32.gmra.mxu0 %v4288
    %v4443 = vpop.f32.mrf.mxu0
    %v4444 = vadd.f32 0.0, %v4443
    %v4445 = vpop.f32.mrf.mxu0
    %4446 = vmatprep.mubr.f32.mxu0 0.0
    %4447 = vmatmul.mubr.f32.gmra.mxu0 %v4289
    %v4448 = vpop.f32.mrf.mxu0
    %v4449 = vadd.f32 0.0, %v4448
    %v4450 = vpop.f32.mrf.mxu0
    %4451 = vdwg.mxu0
    %v4452 = vadd.f32 %v4258, %v4374
    %v4453 = vadd.f32 %v4259, %v4379
    %v4454 = vadd.f32 %v4260, %v4384
    %v4455 = vadd.f32 %v4261, %v4389
    %v4456 = vadd.f32 %v4262, %v4394
    %v4457 = vadd.f32 %v4263, %v4399
    %v4458 = vadd.f32 %v4264, %v4404
    %v4459 = vadd.f32 %v4265, %v4409
    %v4460 = vadd.f32 %v4266, %v4414
    %v4461 = vadd.f32 %v4267, %v4419
    %v4462 = vadd.f32 %v4268, %v4424
    %v4463 = vadd.f32 %v4269, %v4429
    %v4464 = vadd.f32 %v4270, %v4434
    %v4465 = vadd.f32 %v4271, %v4439
    %v4466 = vadd.f32 %v4272, %v4444
    %v4467 = vadd.f32 %v4273, %v4449
    %v4468 = vld [vmem:[%s1719 + $0x4] sm:$0xff]
    %v4469 = vld [vmem:[%s1719 + $0x14] sm:$0xff]
    %v4470 = vld [vmem:[%s1719 + $0x24] sm:$0xff]
    %v4471 = vld [vmem:[%s1719 + $0x34] sm:$0xff]
    %v4472 = vld [vmem:[%s1719 + $0x44] sm:$0xff]
    %v4473 = vld [vmem:[%s1719 + $0x54] sm:$0xff]
    %v4474 = vld [vmem:[%s1719 + $0x64] sm:$0xff]
    %v4475 = vld [vmem:[%s1719 + $0x74] sm:$0xff]
    %v4476 = vld [vmem:[%s1719 + $0xc4] sm:$0xff]
    %v4477 = vld [vmem:[%s1719 + $0xd4] sm:$0xff]
    %v4478 = vld [vmem:[%s1719 + $0xe4] sm:$0xff]
    %v4479 = vld [vmem:[%s1719 + $0xf4] sm:$0xff]
    %v4480 = vld [vmem:[%s1719 + $0x104] sm:$0xff]
    %v4481 = vld [vmem:[%s1719 + $0x114] sm:$0xff]
    %v4482 = vld [vmem:[%s1719 + $0x124] sm:$0xff]
    %v4483 = vld [vmem:[%s1719 + $0x134] sm:$0xff]
    %s4484 = scalar_lea.vmem %s3, 1792
    %v4485 = vld [vmem:[%s4484] sm:$0xff]
    %v4486 = vld [vmem:[%s4484 + $0x8] sm:$0xff]
    %v4487 = vld [vmem:[%s4484 + $0x10] sm:$0xff]
    %v4488 = vld [vmem:[%s4484 + $0x18] sm:$0xff]
    %v4489 = vld [vmem:[%s4484 + $0x20] sm:$0xff]
    %v4490 = vld [vmem:[%s4484 + $0x28] sm:$0xff]
    %v4491 = vld [vmem:[%s4484 + $0x30] sm:$0xff]
    %v4492 = vld [vmem:[%s4484 + $0x38] sm:$0xff]
    %v4493 = vld [vmem:[%s4484 + $0x40] sm:$0xff]
    %v4494 = vld [vmem:[%s4484 + $0x48] sm:$0xff]
    %v4495 = vld [vmem:[%s4484 + $0x50] sm:$0xff]
    %v4496 = vld [vmem:[%s4484 + $0x58] sm:$0xff]
    %v4497 = vld [vmem:[%s4484 + $0x60] sm:$0xff]
    %v4498 = vld [vmem:[%s4484 + $0x68] sm:$0xff]
    %v4499 = vld [vmem:[%s4484 + $0x70] sm:$0xff]
    %v4500 = vld [vmem:[%s4484 + $0x78] sm:$0xff]
    %4501 = vmatprep.subr.mxu0 0.0
    %4502 = vmatpush1.msra.mxu0 %v4500
    %4503 = vmatprep.subr.mxu0 0.0
    %4504 = vmatpush1.msra.mxu0 %v4499
    %4505 = vmatprep.subr.mxu0 0.0
    %4506 = vmatpush1.msra.mxu0 %v4498
    %4507 = vmatprep.subr.mxu0 0.0
    %4508 = vmatpush1.msra.mxu0 %v4497
    %4509 = vmatprep.subr.mxu0 0.0
    %4510 = vmatpush1.msra.mxu0 %v4496
    %4511 = vmatprep.subr.mxu0 0.0
    %4512 = vmatpush1.msra.mxu0 %v4495
    %4513 = vmatprep.subr.mxu0 0.0
    %4514 = vmatpush1.msra.mxu0 %v4494
    %4515 = vmatprep.subr.mxu0 0.0
    %4516 = vmatpush1.msra.mxu0 %v4493
    %4517 = vmatprep.subr.mxu0 0.0
    %4518 = vmatpush1.msra.mxu0 %v4492
    %4519 = vmatprep.subr.mxu0 0.0
    %4520 = vmatpush1.msra.mxu0 %v4491
    %4521 = vmatprep.subr.mxu0 0.0
    %4522 = vmatpush1.msra.mxu0 %v4490
    %4523 = vmatprep.subr.mxu0 0.0
    %4524 = vmatpush1.msra.mxu0 %v4489
    %4525 = vmatprep.subr.mxu0 0.0
    %4526 = vmatpush1.msra.mxu0 %v4488
    %4527 = vmatprep.subr.mxu0 0.0
    %4528 = vmatpush1.msra.mxu0 %v4487
    %4529 = vmatprep.subr.mxu0 0.0
    %4530 = vmatpush1.msra.mxu0 %v4486
    %4531 = vmatprep.subr.mxu0 0.0
    %4532 = vmatpush1.msra.mxu0 %v4485
    %4533 = vmatprep.subr.mxu0 0.0
    %4534 = vmatpush2.msra.mxu0 0.0
    %4535 = vmatprep.subr.mxu0 0.0
    %4536 = vmatpush2.msra.mxu0 0.0
    %4537 = vmatprep.subr.mxu0 0.0
    %4538 = vmatpush2.msra.mxu0 0.0
    %4539 = vmatprep.subr.mxu0 0.0
    %4540 = vmatpush2.msra.mxu0 0.0
    %4541 = vmatprep.subr.mxu0 0.0
    %4542 = vmatpush2.msra.mxu0 0.0
    %4543 = vmatprep.subr.mxu0 0.0
    %4544 = vmatpush2.msra.mxu0 0.0
    %4545 = vmatprep.subr.mxu0 0.0
    %4546 = vmatpush2.msra.mxu0 0.0
    %4547 = vmatprep.subr.mxu0 0.0
    %4548 = vmatpush2.msra.mxu0 0.0
    %4549 = vmatprep.subr.mxu0 0.0
    %4550 = vmatpush2.msra.mxu0 0.0
    %4551 = vmatprep.subr.mxu0 0.0
    %4552 = vmatpush2.msra.mxu0 0.0
    %4553 = vmatprep.subr.mxu0 0.0
    %4554 = vmatpush2.msra.mxu0 0.0
    %4555 = vmatprep.subr.mxu0 0.0
    %4556 = vmatpush2.msra.mxu0 0.0
    %4557 = vmatprep.subr.mxu0 0.0
    %4558 = vmatpush2.msra.mxu0 0.0
    %4559 = vmatprep.subr.mxu0 0.0
    %4560 = vmatpush2.msra.mxu0 0.0
    %4561 = vmatprep.subr.mxu0 0.0
    %4562 = vmatpush2.msra.mxu0 0.0
    %4563 = vmatprep.subr.mxu0 0.0
    %4564 = vmatpush2.msra.mxu0 0.0
    %4565 = vmatprep.mubr.f32.mxu0 0.0
    %4566 = vmatmul.mubr.f32.gmra.mxu0 %v4468
    %v4567 = vpop.f32.mrf.mxu0
    %v4568 = vadd.f32 0.0, %v4567
    %v4569 = vpop.f32.mrf.mxu0
    %4570 = vmatprep.mubr.f32.mxu0 0.0
    %4571 = vmatmul.mubr.f32.gmra.mxu0 %v4469
    %v4572 = vpop.f32.mrf.mxu0
    %v4573 = vadd.f32 0.0, %v4572
    %v4574 = vpop.f32.mrf.mxu0
    %4575 = vmatprep.mubr.f32.mxu0 0.0
    %4576 = vmatmul.mubr.f32.gmra.mxu0 %v4470
    %v4577 = vpop.f32.mrf.mxu0
    %v4578 = vadd.f32 0.0, %v4577
    %v4579 = vpop.f32.mrf.mxu0
    %4580 = vmatprep.mubr.f32.mxu0 0.0
    %4581 = vmatmul.mubr.f32.gmra.mxu0 %v4471
    %v4582 = vpop.f32.mrf.mxu0
    %v4583 = vadd.f32 0.0, %v4582
    %v4584 = vpop.f32.mrf.mxu0
    %4585 = vmatprep.mubr.f32.mxu0 0.0
    %4586 = vmatmul.mubr.f32.gmra.mxu0 %v4472
    %v4587 = vpop.f32.mrf.mxu0
    %v4588 = vadd.f32 0.0, %v4587
    %v4589 = vpop.f32.mrf.mxu0
    %4590 = vmatprep.mubr.f32.mxu0 0.0
    %4591 = vmatmul.mubr.f32.gmra.mxu0 %v4473
    %v4592 = vpop.f32.mrf.mxu0
    %v4593 = vadd.f32 0.0, %v4592
    %v4594 = vpop.f32.mrf.mxu0
    %4595 = vmatprep.mubr.f32.mxu0 0.0
    %4596 = vmatmul.mubr.f32.gmra.mxu0 %v4474
    %v4597 = vpop.f32.mrf.mxu0
    %v4598 = vadd.f32 0.0, %v4597
    %v4599 = vpop.f32.mrf.mxu0
    %4600 = vmatprep.mubr.f32.mxu0 0.0
    %4601 = vmatmul.mubr.f32.gmra.mxu0 %v4475
    %v4602 = vpop.f32.mrf.mxu0
    %v4603 = vadd.f32 0.0, %v4602
    %v4604 = vpop.f32.mrf.mxu0
    %4605 = vmatprep.mubr.f32.mxu0 0.0
    %4606 = vmatmul.mubr.f32.gmra.mxu0 %v4476
    %v4607 = vpop.f32.mrf.mxu0
    %v4608 = vadd.f32 0.0, %v4607
    %v4609 = vpop.f32.mrf.mxu0
    %4610 = vmatprep.mubr.f32.mxu0 0.0
    %4611 = vmatmul.mubr.f32.gmra.mxu0 %v4477
    %v4612 = vpop.f32.mrf.mxu0
    %v4613 = vadd.f32 0.0, %v4612
    %v4614 = vpop.f32.mrf.mxu0
    %4615 = vmatprep.mubr.f32.mxu0 0.0
    %4616 = vmatmul.mubr.f32.gmra.mxu0 %v4478
    %v4617 = vpop.f32.mrf.mxu0
    %v4618 = vadd.f32 0.0, %v4617
    %v4619 = vpop.f32.mrf.mxu0
    %4620 = vmatprep.mubr.f32.mxu0 0.0
    %4621 = vmatmul.mubr.f32.gmra.mxu0 %v4479
    %v4622 = vpop.f32.mrf.mxu0
    %v4623 = vadd.f32 0.0, %v4622
    %v4624 = vpop.f32.mrf.mxu0
    %4625 = vmatprep.mubr.f32.mxu0 0.0
    %4626 = vmatmul.mubr.f32.gmra.mxu0 %v4480
    %v4627 = vpop.f32.mrf.mxu0
    %v4628 = vadd.f32 0.0, %v4627
    %v4629 = vpop.f32.mrf.mxu0
    %4630 = vmatprep.mubr.f32.mxu0 0.0
    %4631 = vmatmul.mubr.f32.gmra.mxu0 %v4481
    %v4632 = vpop.f32.mrf.mxu0
    %v4633 = vadd.f32 0.0, %v4632
    %v4634 = vpop.f32.mrf.mxu0
    %4635 = vmatprep.mubr.f32.mxu0 0.0
    %4636 = vmatmul.mubr.f32.gmra.mxu0 %v4482
    %v4637 = vpop.f32.mrf.mxu0
    %v4638 = vadd.f32 0.0, %v4637
    %v4639 = vpop.f32.mrf.mxu0
    %4640 = vmatprep.mubr.f32.mxu0 0.0
    %4641 = vmatmul.mubr.f32.gmra.mxu0 %v4483
    %v4642 = vpop.f32.mrf.mxu0
    %v4643 = vadd.f32 0.0, %v4642
    %v4644 = vpop.f32.mrf.mxu0
    %4645 = vdwg.mxu0
    %v4646 = vadd.f32 %v4452, %v4568
    %v4647 = vadd.f32 %v4453, %v4573
    %v4648 = vadd.f32 %v4454, %v4578
    %v4649 = vadd.f32 %v4455, %v4583
    %v4650 = vadd.f32 %v4456, %v4588
    %v4651 = vadd.f32 %v4457, %v4593
    %v4652 = vadd.f32 %v4458, %v4598
    %v4653 = vadd.f32 %v4459, %v4603
    %v4654 = vadd.f32 %v4460, %v4608
    %v4655 = vadd.f32 %v4461, %v4613
    %v4656 = vadd.f32 %v4462, %v4618
    %v4657 = vadd.f32 %v4463, %v4623
    %v4658 = vadd.f32 %v4464, %v4628
    %v4659 = vadd.f32 %v4465, %v4633
    %v4660 = vadd.f32 %v4466, %v4638
    %v4661 = vadd.f32 %v4467, %v4643
    %v4662 = vld [vmem:[%s1722] sm:$0xff]
    %v4663 = vld [vmem:[%s1722 + $0x10] sm:$0xff]
    %v4664 = vld [vmem:[%s1722 + $0x20] sm:$0xff]
    %v4665 = vld [vmem:[%s1722 + $0x30] sm:$0xff]
    %v4666 = vld [vmem:[%s1722 + $0x40] sm:$0xff]
    %v4667 = vld [vmem:[%s1722 + $0x50] sm:$0xff]
    %v4668 = vld [vmem:[%s1722 + $0x60] sm:$0xff]
    %v4669 = vld [vmem:[%s1722 + $0x70] sm:$0xff]
    %v4670 = vld [vmem:[%s1722 + $0xc0] sm:$0xff]
    %v4671 = vld [vmem:[%s1722 + $0xd0] sm:$0xff]
    %v4672 = vld [vmem:[%s1722 + $0xe0] sm:$0xff]
    %v4673 = vld [vmem:[%s1722 + $0xf0] sm:$0xff]
    %v4674 = vld [vmem:[%s1722 + $0x100] sm:$0xff]
    %v4675 = vld [vmem:[%s1722 + $0x110] sm:$0xff]
    %v4676 = vld [vmem:[%s1722 + $0x120] sm:$0xff]
    %v4677 = vld [vmem:[%s1722 + $0x130] sm:$0xff]
    %s4678 = scalar_lea.vmem %s3, 1920
    %v4679 = vld [vmem:[%s4678] sm:$0xff]
    %v4680 = vld [vmem:[%s4678 + $0x8] sm:$0xff]
    %v4681 = vld [vmem:[%s4678 + $0x10] sm:$0xff]
    %v4682 = vld [vmem:[%s4678 + $0x18] sm:$0xff]
    %v4683 = vld [vmem:[%s4678 + $0x20] sm:$0xff]
    %v4684 = vld [vmem:[%s4678 + $0x28] sm:$0xff]
    %v4685 = vld [vmem:[%s4678 + $0x30] sm:$0xff]
    %v4686 = vld [vmem:[%s4678 + $0x38] sm:$0xff]
    %v4687 = vld [vmem:[%s4678 + $0x40] sm:$0xff]
    %v4688 = vld [vmem:[%s4678 + $0x48] sm:$0xff]
    %v4689 = vld [vmem:[%s4678 + $0x50] sm:$0xff]
    %v4690 = vld [vmem:[%s4678 + $0x58] sm:$0xff]
    %v4691 = vld [vmem:[%s4678 + $0x60] sm:$0xff]
    %v4692 = vld [vmem:[%s4678 + $0x68] sm:$0xff]
    %v4693 = vld [vmem:[%s4678 + $0x70] sm:$0xff]
    %v4694 = vld [vmem:[%s4678 + $0x78] sm:$0xff]
    %4695 = vmatprep.subr.mxu0 0.0
    %4696 = vmatpush1.msra.mxu0 %v4694
    %4697 = vmatprep.subr.mxu0 0.0
    %4698 = vmatpush1.msra.mxu0 %v4693
    %4699 = vmatprep.subr.mxu0 0.0
    %4700 = vmatpush1.msra.mxu0 %v4692
    %4701 = vmatprep.subr.mxu0 0.0
    %4702 = vmatpush1.msra.mxu0 %v4691
    %4703 = vmatprep.subr.mxu0 0.0
    %4704 = vmatpush1.msra.mxu0 %v4690
    %4705 = vmatprep.subr.mxu0 0.0
    %4706 = vmatpush1.msra.mxu0 %v4689
    %4707 = vmatprep.subr.mxu0 0.0
    %4708 = vmatpush1.msra.mxu0 %v4688
    %4709 = vmatprep.subr.mxu0 0.0
    %4710 = vmatpush1.msra.mxu0 %v4687
    %4711 = vmatprep.subr.mxu0 0.0
    %4712 = vmatpush1.msra.mxu0 %v4686
    %4713 = vmatprep.subr.mxu0 0.0
    %4714 = vmatpush1.msra.mxu0 %v4685
    %4715 = vmatprep.subr.mxu0 0.0
    %4716 = vmatpush1.msra.mxu0 %v4684
    %4717 = vmatprep.subr.mxu0 0.0
    %4718 = vmatpush1.msra.mxu0 %v4683
    %4719 = vmatprep.subr.mxu0 0.0
    %4720 = vmatpush1.msra.mxu0 %v4682
    %4721 = vmatprep.subr.mxu0 0.0
    %4722 = vmatpush1.msra.mxu0 %v4681
    %4723 = vmatprep.subr.mxu0 0.0
    %4724 = vmatpush1.msra.mxu0 %v4680
    %4725 = vmatprep.subr.mxu0 0.0
    %4726 = vmatpush1.msra.mxu0 %v4679
    %4727 = vmatprep.subr.mxu0 0.0
    %4728 = vmatpush2.msra.mxu0 0.0
    %4729 = vmatprep.subr.mxu0 0.0
    %4730 = vmatpush2.msra.mxu0 0.0
    %4731 = vmatprep.subr.mxu0 0.0
    %4732 = vmatpush2.msra.mxu0 0.0
    %4733 = vmatprep.subr.mxu0 0.0
    %4734 = vmatpush2.msra.mxu0 0.0
    %4735 = vmatprep.subr.mxu0 0.0
    %4736 = vmatpush2.msra.mxu0 0.0
    %4737 = vmatprep.subr.mxu0 0.0
    %4738 = vmatpush2.msra.mxu0 0.0
    %4739 = vmatprep.subr.mxu0 0.0
    %4740 = vmatpush2.msra.mxu0 0.0
    %4741 = vmatprep.subr.mxu0 0.0
    %4742 = vmatpush2.msra.mxu0 0.0
    %4743 = vmatprep.subr.mxu0 0.0
    %4744 = vmatpush2.msra.mxu0 0.0
    %4745 = vmatprep.subr.mxu0 0.0
    %4746 = vmatpush2.msra.mxu0 0.0
    %4747 = vmatprep.subr.mxu0 0.0
    %4748 = vmatpush2.msra.mxu0 0.0
    %4749 = vmatprep.subr.mxu0 0.0
    %4750 = vmatpush2.msra.mxu0 0.0
    %4751 = vmatprep.subr.mxu0 0.0
    %4752 = vmatpush2.msra.mxu0 0.0
    %4753 = vmatprep.subr.mxu0 0.0
    %4754 = vmatpush2.msra.mxu0 0.0
    %4755 = vmatprep.subr.mxu0 0.0
    %4756 = vmatpush2.msra.mxu0 0.0
    %4757 = vmatprep.subr.mxu0 0.0
    %4758 = vmatpush2.msra.mxu0 0.0
    %4759 = vmatprep.mubr.f32.mxu0 0.0
    %4760 = vmatmul.mubr.f32.gmra.mxu0 %v4662
    %v4761 = vpop.f32.mrf.mxu0
    %v4762 = vadd.f32 0.0, %v4761
    %v4763 = vpop.f32.mrf.mxu0
    %4764 = vmatprep.mubr.f32.mxu0 0.0
    %4765 = vmatmul.mubr.f32.gmra.mxu0 %v4663
    %v4766 = vpop.f32.mrf.mxu0
    %v4767 = vadd.f32 0.0, %v4766
    %v4768 = vpop.f32.mrf.mxu0
    %4769 = vmatprep.mubr.f32.mxu0 0.0
    %4770 = vmatmul.mubr.f32.gmra.mxu0 %v4664
    %v4771 = vpop.f32.mrf.mxu0
    %v4772 = vadd.f32 0.0, %v4771
    %v4773 = vpop.f32.mrf.mxu0
    %4774 = vmatprep.mubr.f32.mxu0 0.0
    %4775 = vmatmul.mubr.f32.gmra.mxu0 %v4665
    %v4776 = vpop.f32.mrf.mxu0
    %v4777 = vadd.f32 0.0, %v4776
    %v4778 = vpop.f32.mrf.mxu0
    %4779 = vmatprep.mubr.f32.mxu0 0.0
    %4780 = vmatmul.mubr.f32.gmra.mxu0 %v4666
    %v4781 = vpop.f32.mrf.mxu0
    %v4782 = vadd.f32 0.0, %v4781
    %v4783 = vpop.f32.mrf.mxu0
    %4784 = vmatprep.mubr.f32.mxu0 0.0
    %4785 = vmatmul.mubr.f32.gmra.mxu0 %v4667
    %v4786 = vpop.f32.mrf.mxu0
    %v4787 = vadd.f32 0.0, %v4786
    %v4788 = vpop.f32.mrf.mxu0
    %4789 = vmatprep.mubr.f32.mxu0 0.0
    %4790 = vmatmul.mubr.f32.gmra.mxu0 %v4668
    %v4791 = vpop.f32.mrf.mxu0
    %v4792 = vadd.f32 0.0, %v4791
    %v4793 = vpop.f32.mrf.mxu0
    %4794 = vmatprep.mubr.f32.mxu0 0.0
    %4795 = vmatmul.mubr.f32.gmra.mxu0 %v4669
    %v4796 = vpop.f32.mrf.mxu0
    %v4797 = vadd.f32 0.0, %v4796
    %v4798 = vpop.f32.mrf.mxu0
    %4799 = vmatprep.mubr.f32.mxu0 0.0
    %4800 = vmatmul.mubr.f32.gmra.mxu0 %v4670
    %v4801 = vpop.f32.mrf.mxu0
    %v4802 = vadd.f32 0.0, %v4801
    %v4803 = vpop.f32.mrf.mxu0
    %4804 = vmatprep.mubr.f32.mxu0 0.0
    %4805 = vmatmul.mubr.f32.gmra.mxu0 %v4671
    %v4806 = vpop.f32.mrf.mxu0
    %v4807 = vadd.f32 0.0, %v4806
    %v4808 = vpop.f32.mrf.mxu0
    %4809 = vmatprep.mubr.f32.mxu0 0.0
    %4810 = vmatmul.mubr.f32.gmra.mxu0 %v4672
    %v4811 = vpop.f32.mrf.mxu0
    %v4812 = vadd.f32 0.0, %v4811
    %v4813 = vpop.f32.mrf.mxu0
    %4814 = vmatprep.mubr.f32.mxu0 0.0
    %4815 = vmatmul.mubr.f32.gmra.mxu0 %v4673
    %v4816 = vpop.f32.mrf.mxu0
    %v4817 = vadd.f32 0.0, %v4816
    %v4818 = vpop.f32.mrf.mxu0
    %4819 = vmatprep.mubr.f32.mxu0 0.0
    %4820 = vmatmul.mubr.f32.gmra.mxu0 %v4674
    %v4821 = vpop.f32.mrf.mxu0
    %v4822 = vadd.f32 0.0, %v4821
    %v4823 = vpop.f32.mrf.mxu0
    %4824 = vmatprep.mubr.f32.mxu0 0.0
    %4825 = vmatmul.mubr.f32.gmra.mxu0 %v4675
    %v4826 = vpop.f32.mrf.mxu0
    %v4827 = vadd.f32 0.0, %v4826
    %v4828 = vpop.f32.mrf.mxu0
    %4829 = vmatprep.mubr.f32.mxu0 0.0
    %4830 = vmatmul.mubr.f32.gmra.mxu0 %v4676
    %v4831 = vpop.f32.mrf.mxu0
    %v4832 = vadd.f32 0.0, %v4831
    %v4833 = vpop.f32.mrf.mxu0
    %4834 = vmatprep.mubr.f32.mxu0 0.0
    %4835 = vmatmul.mubr.f32.gmra.mxu0 %v4677
    %v4836 = vpop.f32.mrf.mxu0
    %v4837 = vadd.f32 0.0, %v4836
    %v4838 = vpop.f32.mrf.mxu0
    %4839 = vdwg.mxu0
    %v4840 = vadd.f32 %v4646, %v4762
    %v4841 = vadd.f32 %v4647, %v4767
    %v4842 = vadd.f32 %v4648, %v4772
    %v4843 = vadd.f32 %v4649, %v4777
    %v4844 = vadd.f32 %v4650, %v4782
    %v4845 = vadd.f32 %v4651, %v4787
    %v4846 = vadd.f32 %v4652, %v4792
    %v4847 = vadd.f32 %v4653, %v4797
    %v4848 = vadd.f32 %v4654, %v4802
    %v4849 = vadd.f32 %v4655, %v4807
    %v4850 = vadd.f32 %v4656, %v4812
    %v4851 = vadd.f32 %v4657, %v4817
    %v4852 = vadd.f32 %v4658, %v4822
    %v4853 = vadd.f32 %v4659, %v4827
    %v4854 = vadd.f32 %v4660, %v4832
    %v4855 = vadd.f32 %v4661, %v4837
    %v4856 = vld [vmem:[%s1722 + $0x1] sm:$0xff]
    %v4857 = vld [vmem:[%s1722 + $0x11] sm:$0xff]
    %v4858 = vld [vmem:[%s1722 + $0x21] sm:$0xff]
    %v4859 = vld [vmem:[%s1722 + $0x31] sm:$0xff]
    %v4860 = vld [vmem:[%s1722 + $0x41] sm:$0xff]
    %v4861 = vld [vmem:[%s1722 + $0x51] sm:$0xff]
    %v4862 = vld [vmem:[%s1722 + $0x61] sm:$0xff]
    %v4863 = vld [vmem:[%s1722 + $0x71] sm:$0xff]
    %v4864 = vld [vmem:[%s1722 + $0xc1] sm:$0xff]
    %v4865 = vld [vmem:[%s1722 + $0xd1] sm:$0xff]
    %v4866 = vld [vmem:[%s1722 + $0xe1] sm:$0xff]
    %v4867 = vld [vmem:[%s1722 + $0xf1] sm:$0xff]
    %v4868 = vld [vmem:[%s1722 + $0x101] sm:$0xff]
    %v4869 = vld [vmem:[%s1722 + $0x111] sm:$0xff]
    %v4870 = vld [vmem:[%s1722 + $0x121] sm:$0xff]
    %v4871 = vld [vmem:[%s1722 + $0x131] sm:$0xff]
    %s4872 = scalar_lea.vmem %s3, 2048
    %v4873 = vld [vmem:[%s4872] sm:$0xff]
    %v4874 = vld [vmem:[%s4872 + $0x8] sm:$0xff]
    %v4875 = vld [vmem:[%s4872 + $0x10] sm:$0xff]
    %v4876 = vld [vmem:[%s4872 + $0x18] sm:$0xff]
    %v4877 = vld [vmem:[%s4872 + $0x20] sm:$0xff]
    %v4878 = vld [vmem:[%s4872 + $0x28] sm:$0xff]
    %v4879 = vld [vmem:[%s4872 + $0x30] sm:$0xff]
    %v4880 = vld [vmem:[%s4872 + $0x38] sm:$0xff]
    %v4881 = vld [vmem:[%s4872 + $0x40] sm:$0xff]
    %v4882 = vld [vmem:[%s4872 + $0x48] sm:$0xff]
    %v4883 = vld [vmem:[%s4872 + $0x50] sm:$0xff]
    %v4884 = vld [vmem:[%s4872 + $0x58] sm:$0xff]
    %v4885 = vld [vmem:[%s4872 + $0x60] sm:$0xff]
    %v4886 = vld [vmem:[%s4872 + $0x68] sm:$0xff]
    %v4887 = vld [vmem:[%s4872 + $0x70] sm:$0xff]
    %v4888 = vld [vmem:[%s4872 + $0x78] sm:$0xff]
    %4889 = vmatprep.subr.mxu0 0.0
    %4890 = vmatpush1.msra.mxu0 %v4888
    %4891 = vmatprep.subr.mxu0 0.0
    %4892 = vmatpush1.msra.mxu0 %v4887
    %4893 = vmatprep.subr.mxu0 0.0
    %4894 = vmatpush1.msra.mxu0 %v4886
    %4895 = vmatprep.subr.mxu0 0.0
    %4896 = vmatpush1.msra.mxu0 %v4885
    %4897 = vmatprep.subr.mxu0 0.0
    %4898 = vmatpush1.msra.mxu0 %v4884
    %4899 = vmatprep.subr.mxu0 0.0
    %4900 = vmatpush1.msra.mxu0 %v4883
    %4901 = vmatprep.subr.mxu0 0.0
    %4902 = vmatpush1.msra.mxu0 %v4882
    %4903 = vmatprep.subr.mxu0 0.0
    %4904 = vmatpush1.msra.mxu0 %v4881
    %4905 = vmatprep.subr.mxu0 0.0
    %4906 = vmatpush1.msra.mxu0 %v4880
    %4907 = vmatprep.subr.mxu0 0.0
    %4908 = vmatpush1.msra.mxu0 %v4879
    %4909 = vmatprep.subr.mxu0 0.0
    %4910 = vmatpush1.msra.mxu0 %v4878
    %4911 = vmatprep.subr.mxu0 0.0
    %4912 = vmatpush1.msra.mxu0 %v4877
    %4913 = vmatprep.subr.mxu0 0.0
    %4914 = vmatpush1.msra.mxu0 %v4876
    %4915 = vmatprep.subr.mxu0 0.0
    %4916 = vmatpush1.msra.mxu0 %v4875
    %4917 = vmatprep.subr.mxu0 0.0
    %4918 = vmatpush1.msra.mxu0 %v4874
    %4919 = vmatprep.subr.mxu0 0.0
    %4920 = vmatpush1.msra.mxu0 %v4873
    %4921 = vmatprep.subr.mxu0 0.0
    %4922 = vmatpush2.msra.mxu0 0.0
    %4923 = vmatprep.subr.mxu0 0.0
    %4924 = vmatpush2.msra.mxu0 0.0
    %4925 = vmatprep.subr.mxu0 0.0
    %4926 = vmatpush2.msra.mxu0 0.0
    %4927 = vmatprep.subr.mxu0 0.0
    %4928 = vmatpush2.msra.mxu0 0.0
    %4929 = vmatprep.subr.mxu0 0.0
    %4930 = vmatpush2.msra.mxu0 0.0
    %4931 = vmatprep.subr.mxu0 0.0
    %4932 = vmatpush2.msra.mxu0 0.0
    %4933 = vmatprep.subr.mxu0 0.0
    %4934 = vmatpush2.msra.mxu0 0.0
    %4935 = vmatprep.subr.mxu0 0.0
    %4936 = vmatpush2.msra.mxu0 0.0
    %4937 = vmatprep.subr.mxu0 0.0
    %4938 = vmatpush2.msra.mxu0 0.0
    %4939 = vmatprep.subr.mxu0 0.0
    %4940 = vmatpush2.msra.mxu0 0.0
    %4941 = vmatprep.subr.mxu0 0.0
    %4942 = vmatpush2.msra.mxu0 0.0
    %4943 = vmatprep.subr.mxu0 0.0
    %4944 = vmatpush2.msra.mxu0 0.0
    %4945 = vmatprep.subr.mxu0 0.0
    %4946 = vmatpush2.msra.mxu0 0.0
    %4947 = vmatprep.subr.mxu0 0.0
    %4948 = vmatpush2.msra.mxu0 0.0
    %4949 = vmatprep.subr.mxu0 0.0
    %4950 = vmatpush2.msra.mxu0 0.0
    %4951 = vmatprep.subr.mxu0 0.0
    %4952 = vmatpush2.msra.mxu0 0.0
    %4953 = vmatprep.mubr.f32.mxu0 0.0
    %4954 = vmatmul.mubr.f32.gmra.mxu0 %v4856
    %v4955 = vpop.f32.mrf.mxu0
    %v4956 = vadd.f32 0.0, %v4955
    %v4957 = vpop.f32.mrf.mxu0
    %4958 = vmatprep.mubr.f32.mxu0 0.0
    %4959 = vmatmul.mubr.f32.gmra.mxu0 %v4857
    %v4960 = vpop.f32.mrf.mxu0
    %v4961 = vadd.f32 0.0, %v4960
    %v4962 = vpop.f32.mrf.mxu0
    %4963 = vmatprep.mubr.f32.mxu0 0.0
    %4964 = vmatmul.mubr.f32.gmra.mxu0 %v4858
    %v4965 = vpop.f32.mrf.mxu0
    %v4966 = vadd.f32 0.0, %v4965
    %v4967 = vpop.f32.mrf.mxu0
    %4968 = vmatprep.mubr.f32.mxu0 0.0
    %4969 = vmatmul.mubr.f32.gmra.mxu0 %v4859
    %v4970 = vpop.f32.mrf.mxu0
    %v4971 = vadd.f32 0.0, %v4970
    %v4972 = vpop.f32.mrf.mxu0
    %4973 = vmatprep.mubr.f32.mxu0 0.0
    %4974 = vmatmul.mubr.f32.gmra.mxu0 %v4860
    %v4975 = vpop.f32.mrf.mxu0
    %v4976 = vadd.f32 0.0, %v4975
    %v4977 = vpop.f32.mrf.mxu0
    %4978 = vmatprep.mubr.f32.mxu0 0.0
    %4979 = vmatmul.mubr.f32.gmra.mxu0 %v4861
    %v4980 = vpop.f32.mrf.mxu0
    %v4981 = vadd.f32 0.0, %v4980
    %v4982 = vpop.f32.mrf.mxu0
    %4983 = vmatprep.mubr.f32.mxu0 0.0
    %4984 = vmatmul.mubr.f32.gmra.mxu0 %v4862
    %v4985 = vpop.f32.mrf.mxu0
    %v4986 = vadd.f32 0.0, %v4985
    %v4987 = vpop.f32.mrf.mxu0
    %4988 = vmatprep.mubr.f32.mxu0 0.0
    %4989 = vmatmul.mubr.f32.gmra.mxu0 %v4863
    %v4990 = vpop.f32.mrf.mxu0
    %v4991 = vadd.f32 0.0, %v4990
    %v4992 = vpop.f32.mrf.mxu0
    %4993 = vmatprep.mubr.f32.mxu0 0.0
    %4994 = vmatmul.mubr.f32.gmra.mxu0 %v4864
    %v4995 = vpop.f32.mrf.mxu0
    %v4996 = vadd.f32 0.0, %v4995
    %v4997 = vpop.f32.mrf.mxu0
    %4998 = vmatprep.mubr.f32.mxu0 0.0
    %4999 = vmatmul.mubr.f32.gmra.mxu0 %v4865
    %v5000 = vpop.f32.mrf.mxu0
    %v5001 = vadd.f32 0.0, %v5000
    %v5002 = vpop.f32.mrf.mxu0
    %5003 = vmatprep.mubr.f32.mxu0 0.0
    %5004 = vmatmul.mubr.f32.gmra.mxu0 %v4866
    %v5005 = vpop.f32.mrf.mxu0
    %v5006 = vadd.f32 0.0, %v5005
    %v5007 = vpop.f32.mrf.mxu0
    %5008 = vmatprep.mubr.f32.mxu0 0.0
    %5009 = vmatmul.mubr.f32.gmra.mxu0 %v4867
    %v5010 = vpop.f32.mrf.mxu0
    %v5011 = vadd.f32 0.0, %v5010
    %v5012 = vpop.f32.mrf.mxu0
    %5013 = vmatprep.mubr.f32.mxu0 0.0
    %5014 = vmatmul.mubr.f32.gmra.mxu0 %v4868
    %v5015 = vpop.f32.mrf.mxu0
    %v5016 = vadd.f32 0.0, %v5015
    %v5017 = vpop.f32.mrf.mxu0
    %5018 = vmatprep.mubr.f32.mxu0 0.0
    %5019 = vmatmul.mubr.f32.gmra.mxu0 %v4869
    %v5020 = vpop.f32.mrf.mxu0
    %v5021 = vadd.f32 0.0, %v5020
    %v5022 = vpop.f32.mrf.mxu0
    %5023 = vmatprep.mubr.f32.mxu0 0.0
    %5024 = vmatmul.mubr.f32.gmra.mxu0 %v4870
    %v5025 = vpop.f32.mrf.mxu0
    %v5026 = vadd.f32 0.0, %v5025
    %v5027 = vpop.f32.mrf.mxu0
    %5028 = vmatprep.mubr.f32.mxu0 0.0
    %5029 = vmatmul.mubr.f32.gmra.mxu0 %v4871
    %v5030 = vpop.f32.mrf.mxu0
    %v5031 = vadd.f32 0.0, %v5030
    %v5032 = vpop.f32.mrf.mxu0
    %5033 = vdwg.mxu0
    %v5034 = vadd.f32 %v4840, %v4956
    %v5035 = vadd.f32 %v4841, %v4961
    %v5036 = vadd.f32 %v4842, %v4966
    %v5037 = vadd.f32 %v4843, %v4971
    %v5038 = vadd.f32 %v4844, %v4976
    %v5039 = vadd.f32 %v4845, %v4981
    %v5040 = vadd.f32 %v4846, %v4986
    %v5041 = vadd.f32 %v4847, %v4991
    %v5042 = vadd.f32 %v4848, %v4996
    %v5043 = vadd.f32 %v4849, %v5001
    %v5044 = vadd.f32 %v4850, %v5006
    %v5045 = vadd.f32 %v4851, %v5011
    %v5046 = vadd.f32 %v4852, %v5016
    %v5047 = vadd.f32 %v4853, %v5021
    %v5048 = vadd.f32 %v4854, %v5026
    %v5049 = vadd.f32 %v4855, %v5031
    %v5050 = vld [vmem:[%s1722 + $0x2] sm:$0xff]
    %v5051 = vld [vmem:[%s1722 + $0x12] sm:$0xff]
    %v5052 = vld [vmem:[%s1722 + $0x22] sm:$0xff]
    %v5053 = vld [vmem:[%s1722 + $0x32] sm:$0xff]
    %v5054 = vld [vmem:[%s1722 + $0x42] sm:$0xff]
    %v5055 = vld [vmem:[%s1722 + $0x52] sm:$0xff]
    %v5056 = vld [vmem:[%s1722 + $0x62] sm:$0xff]
    %v5057 = vld [vmem:[%s1722 + $0x72] sm:$0xff]
    %v5058 = vld [vmem:[%s1722 + $0xc2] sm:$0xff]
    %v5059 = vld [vmem:[%s1722 + $0xd2] sm:$0xff]
    %v5060 = vld [vmem:[%s1722 + $0xe2] sm:$0xff]
    %v5061 = vld [vmem:[%s1722 + $0xf2] sm:$0xff]
    %v5062 = vld [vmem:[%s1722 + $0x102] sm:$0xff]
    %v5063 = vld [vmem:[%s1722 + $0x112] sm:$0xff]
    %v5064 = vld [vmem:[%s1722 + $0x122] sm:$0xff]
    %v5065 = vld [vmem:[%s1722 + $0x132] sm:$0xff]
    %s5066 = scalar_lea.vmem %s3, 2176
    %v5067 = vld [vmem:[%s5066] sm:$0xff]
    %v5068 = vld [vmem:[%s5066 + $0x8] sm:$0xff]
    %v5069 = vld [vmem:[%s5066 + $0x10] sm:$0xff]
    %v5070 = vld [vmem:[%s5066 + $0x18] sm:$0xff]
    %v5071 = vld [vmem:[%s5066 + $0x20] sm:$0xff]
    %v5072 = vld [vmem:[%s5066 + $0x28] sm:$0xff]
    %v5073 = vld [vmem:[%s5066 + $0x30] sm:$0xff]
    %v5074 = vld [vmem:[%s5066 + $0x38] sm:$0xff]
    %v5075 = vld [vmem:[%s5066 + $0x40] sm:$0xff]
    %v5076 = vld [vmem:[%s5066 + $0x48] sm:$0xff]
    %v5077 = vld [vmem:[%s5066 + $0x50] sm:$0xff]
    %v5078 = vld [vmem:[%s5066 + $0x58] sm:$0xff]
    %v5079 = vld [vmem:[%s5066 + $0x60] sm:$0xff]
    %v5080 = vld [vmem:[%s5066 + $0x68] sm:$0xff]
    %v5081 = vld [vmem:[%s5066 + $0x70] sm:$0xff]
    %v5082 = vld [vmem:[%s5066 + $0x78] sm:$0xff]
    %5083 = vmatprep.subr.mxu0 0.0
    %5084 = vmatpush1.msra.mxu0 %v5082
    %5085 = vmatprep.subr.mxu0 0.0
    %5086 = vmatpush1.msra.mxu0 %v5081
    %5087 = vmatprep.subr.mxu0 0.0
    %5088 = vmatpush1.msra.mxu0 %v5080
    %5089 = vmatprep.subr.mxu0 0.0
    %5090 = vmatpush1.msra.mxu0 %v5079
    %5091 = vmatprep.subr.mxu0 0.0
    %5092 = vmatpush1.msra.mxu0 %v5078
    %5093 = vmatprep.subr.mxu0 0.0
    %5094 = vmatpush1.msra.mxu0 %v5077
    %5095 = vmatprep.subr.mxu0 0.0
    %5096 = vmatpush1.msra.mxu0 %v5076
    %5097 = vmatprep.subr.mxu0 0.0
    %5098 = vmatpush1.msra.mxu0 %v5075
    %5099 = vmatprep.subr.mxu0 0.0
    %5100 = vmatpush1.msra.mxu0 %v5074
    %5101 = vmatprep.subr.mxu0 0.0
    %5102 = vmatpush1.msra.mxu0 %v5073
    %5103 = vmatprep.subr.mxu0 0.0
    %5104 = vmatpush1.msra.mxu0 %v5072
    %5105 = vmatprep.subr.mxu0 0.0
    %5106 = vmatpush1.msra.mxu0 %v5071
    %5107 = vmatprep.subr.mxu0 0.0
    %5108 = vmatpush1.msra.mxu0 %v5070
    %5109 = vmatprep.subr.mxu0 0.0
    %5110 = vmatpush1.msra.mxu0 %v5069
    %5111 = vmatprep.subr.mxu0 0.0
    %5112 = vmatpush1.msra.mxu0 %v5068
    %5113 = vmatprep.subr.mxu0 0.0
    %5114 = vmatpush1.msra.mxu0 %v5067
    %5115 = vmatprep.subr.mxu0 0.0
    %5116 = vmatpush2.msra.mxu0 0.0
    %5117 = vmatprep.subr.mxu0 0.0
    %5118 = vmatpush2.msra.mxu0 0.0
    %5119 = vmatprep.subr.mxu0 0.0
    %5120 = vmatpush2.msra.mxu0 0.0
    %5121 = vmatprep.subr.mxu0 0.0
    %5122 = vmatpush2.msra.mxu0 0.0
    %5123 = vmatprep.subr.mxu0 0.0
    %5124 = vmatpush2.msra.mxu0 0.0
    %5125 = vmatprep.subr.mxu0 0.0
    %5126 = vmatpush2.msra.mxu0 0.0
    %5127 = vmatprep.subr.mxu0 0.0
    %5128 = vmatpush2.msra.mxu0 0.0
    %5129 = vmatprep.subr.mxu0 0.0
    %5130 = vmatpush2.msra.mxu0 0.0
    %5131 = vmatprep.subr.mxu0 0.0
    %5132 = vmatpush2.msra.mxu0 0.0
    %5133 = vmatprep.subr.mxu0 0.0
    %5134 = vmatpush2.msra.mxu0 0.0
    %5135 = vmatprep.subr.mxu0 0.0
    %5136 = vmatpush2.msra.mxu0 0.0
    %5137 = vmatprep.subr.mxu0 0.0
    %5138 = vmatpush2.msra.mxu0 0.0
    %5139 = vmatprep.subr.mxu0 0.0
    %5140 = vmatpush2.msra.mxu0 0.0
    %5141 = vmatprep.subr.mxu0 0.0
    %5142 = vmatpush2.msra.mxu0 0.0
    %5143 = vmatprep.subr.mxu0 0.0
    %5144 = vmatpush2.msra.mxu0 0.0
    %5145 = vmatprep.subr.mxu0 0.0
    %5146 = vmatpush2.msra.mxu0 0.0
    %5147 = vmatprep.mubr.f32.mxu0 0.0
    %5148 = vmatmul.mubr.f32.gmra.mxu0 %v5050
    %v5149 = vpop.f32.mrf.mxu0
    %v5150 = vadd.f32 0.0, %v5149
    %v5151 = vpop.f32.mrf.mxu0
    %5152 = vmatprep.mubr.f32.mxu0 0.0
    %5153 = vmatmul.mubr.f32.gmra.mxu0 %v5051
    %v5154 = vpop.f32.mrf.mxu0
    %v5155 = vadd.f32 0.0, %v5154
    %v5156 = vpop.f32.mrf.mxu0
    %5157 = vmatprep.mubr.f32.mxu0 0.0
    %5158 = vmatmul.mubr.f32.gmra.mxu0 %v5052
    %v5159 = vpop.f32.mrf.mxu0
    %v5160 = vadd.f32 0.0, %v5159
    %v5161 = vpop.f32.mrf.mxu0
    %5162 = vmatprep.mubr.f32.mxu0 0.0
    %5163 = vmatmul.mubr.f32.gmra.mxu0 %v5053
    %v5164 = vpop.f32.mrf.mxu0
    %v5165 = vadd.f32 0.0, %v5164
    %v5166 = vpop.f32.mrf.mxu0
    %5167 = vmatprep.mubr.f32.mxu0 0.0
    %5168 = vmatmul.mubr.f32.gmra.mxu0 %v5054
    %v5169 = vpop.f32.mrf.mxu0
    %v5170 = vadd.f32 0.0, %v5169
    %v5171 = vpop.f32.mrf.mxu0
    %5172 = vmatprep.mubr.f32.mxu0 0.0
    %5173 = vmatmul.mubr.f32.gmra.mxu0 %v5055
    %v5174 = vpop.f32.mrf.mxu0
    %v5175 = vadd.f32 0.0, %v5174
    %v5176 = vpop.f32.mrf.mxu0
    %5177 = vmatprep.mubr.f32.mxu0 0.0
    %5178 = vmatmul.mubr.f32.gmra.mxu0 %v5056
    %v5179 = vpop.f32.mrf.mxu0
    %v5180 = vadd.f32 0.0, %v5179
    %v5181 = vpop.f32.mrf.mxu0
    %5182 = vmatprep.mubr.f32.mxu0 0.0
    %5183 = vmatmul.mubr.f32.gmra.mxu0 %v5057
    %v5184 = vpop.f32.mrf.mxu0
    %v5185 = vadd.f32 0.0, %v5184
    %v5186 = vpop.f32.mrf.mxu0
    %5187 = vmatprep.mubr.f32.mxu0 0.0
    %5188 = vmatmul.mubr.f32.gmra.mxu0 %v5058
    %v5189 = vpop.f32.mrf.mxu0
    %v5190 = vadd.f32 0.0, %v5189
    %v5191 = vpop.f32.mrf.mxu0
    %5192 = vmatprep.mubr.f32.mxu0 0.0
    %5193 = vmatmul.mubr.f32.gmra.mxu0 %v5059
    %v5194 = vpop.f32.mrf.mxu0
    %v5195 = vadd.f32 0.0, %v5194
    %v5196 = vpop.f32.mrf.mxu0
    %5197 = vmatprep.mubr.f32.mxu0 0.0
    %5198 = vmatmul.mubr.f32.gmra.mxu0 %v5060
    %v5199 = vpop.f32.mrf.mxu0
    %v5200 = vadd.f32 0.0, %v5199
    %v5201 = vpop.f32.mrf.mxu0
    %5202 = vmatprep.mubr.f32.mxu0 0.0
    %5203 = vmatmul.mubr.f32.gmra.mxu0 %v5061
    %v5204 = vpop.f32.mrf.mxu0
    %v5205 = vadd.f32 0.0, %v5204
    %v5206 = vpop.f32.mrf.mxu0
    %5207 = vmatprep.mubr.f32.mxu0 0.0
    %5208 = vmatmul.mubr.f32.gmra.mxu0 %v5062
    %v5209 = vpop.f32.mrf.mxu0
    %v5210 = vadd.f32 0.0, %v5209
    %v5211 = vpop.f32.mrf.mxu0
    %5212 = vmatprep.mubr.f32.mxu0 0.0
    %5213 = vmatmul.mubr.f32.gmra.mxu0 %v5063
    %v5214 = vpop.f32.mrf.mxu0
    %v5215 = vadd.f32 0.0, %v5214
    %v5216 = vpop.f32.mrf.mxu0
    %5217 = vmatprep.mubr.f32.mxu0 0.0
    %5218 = vmatmul.mubr.f32.gmra.mxu0 %v5064
    %v5219 = vpop.f32.mrf.mxu0
    %v5220 = vadd.f32 0.0, %v5219
    %v5221 = vpop.f32.mrf.mxu0
    %5222 = vmatprep.mubr.f32.mxu0 0.0
    %5223 = vmatmul.mubr.f32.gmra.mxu0 %v5065
    %v5224 = vpop.f32.mrf.mxu0
    %v5225 = vadd.f32 0.0, %v5224
    %v5226 = vpop.f32.mrf.mxu0
    %5227 = vdwg.mxu0
    %v5228 = vadd.f32 %v5034, %v5150
    %v5229 = vadd.f32 %v5035, %v5155
    %v5230 = vadd.f32 %v5036, %v5160
    %v5231 = vadd.f32 %v5037, %v5165
    %v5232 = vadd.f32 %v5038, %v5170
    %v5233 = vadd.f32 %v5039, %v5175
    %v5234 = vadd.f32 %v5040, %v5180
    %v5235 = vadd.f32 %v5041, %v5185
    %v5236 = vadd.f32 %v5042, %v5190
    %v5237 = vadd.f32 %v5043, %v5195
    %v5238 = vadd.f32 %v5044, %v5200
    %v5239 = vadd.f32 %v5045, %v5205
    %v5240 = vadd.f32 %v5046, %v5210
    %v5241 = vadd.f32 %v5047, %v5215
    %v5242 = vadd.f32 %v5048, %v5220
    %v5243 = vadd.f32 %v5049, %v5225
    %v5244 = vld [vmem:[%s1722 + $0x3] sm:$0xff]
    %v5245 = vld [vmem:[%s1722 + $0x13] sm:$0xff]
    %v5246 = vld [vmem:[%s1722 + $0x23] sm:$0xff]
    %v5247 = vld [vmem:[%s1722 + $0x33] sm:$0xff]
    %v5248 = vld [vmem:[%s1722 + $0x43] sm:$0xff]
    %v5249 = vld [vmem:[%s1722 + $0x53] sm:$0xff]
    %v5250 = vld [vmem:[%s1722 + $0x63] sm:$0xff]
    %v5251 = vld [vmem:[%s1722 + $0x73] sm:$0xff]
    %v5252 = vld [vmem:[%s1722 + $0xc3] sm:$0xff]
    %v5253 = vld [vmem:[%s1722 + $0xd3] sm:$0xff]
    %v5254 = vld [vmem:[%s1722 + $0xe3] sm:$0xff]
    %v5255 = vld [vmem:[%s1722 + $0xf3] sm:$0xff]
    %v5256 = vld [vmem:[%s1722 + $0x103] sm:$0xff]
    %v5257 = vld [vmem:[%s1722 + $0x113] sm:$0xff]
    %v5258 = vld [vmem:[%s1722 + $0x123] sm:$0xff]
    %v5259 = vld [vmem:[%s1722 + $0x133] sm:$0xff]
    %s5260 = scalar_lea.vmem %s3, 2304
    %v5261 = vld [vmem:[%s5260] sm:$0xff]
    %v5262 = vld [vmem:[%s5260 + $0x8] sm:$0xff]
    %v5263 = vld [vmem:[%s5260 + $0x10] sm:$0xff]
    %v5264 = vld [vmem:[%s5260 + $0x18] sm:$0xff]
    %v5265 = vld [vmem:[%s5260 + $0x20] sm:$0xff]
    %v5266 = vld [vmem:[%s5260 + $0x28] sm:$0xff]
    %v5267 = vld [vmem:[%s5260 + $0x30] sm:$0xff]
    %v5268 = vld [vmem:[%s5260 + $0x38] sm:$0xff]
    %v5269 = vld [vmem:[%s5260 + $0x40] sm:$0xff]
    %v5270 = vld [vmem:[%s5260 + $0x48] sm:$0xff]
    %v5271 = vld [vmem:[%s5260 + $0x50] sm:$0xff]
    %v5272 = vld [vmem:[%s5260 + $0x58] sm:$0xff]
    %v5273 = vld [vmem:[%s5260 + $0x60] sm:$0xff]
    %v5274 = vld [vmem:[%s5260 + $0x68] sm:$0xff]
    %v5275 = vld [vmem:[%s5260 + $0x70] sm:$0xff]
    %v5276 = vld [vmem:[%s5260 + $0x78] sm:$0xff]
    %5277 = vmatprep.subr.mxu0 0.0
    %5278 = vmatpush1.msra.mxu0 %v5276
    %5279 = vmatprep.subr.mxu0 0.0
    %5280 = vmatpush1.msra.mxu0 %v5275
    %5281 = vmatprep.subr.mxu0 0.0
    %5282 = vmatpush1.msra.mxu0 %v5274
    %5283 = vmatprep.subr.mxu0 0.0
    %5284 = vmatpush1.msra.mxu0 %v5273
    %5285 = vmatprep.subr.mxu0 0.0
    %5286 = vmatpush1.msra.mxu0 %v5272
    %5287 = vmatprep.subr.mxu0 0.0
    %5288 = vmatpush1.msra.mxu0 %v5271
    %5289 = vmatprep.subr.mxu0 0.0
    %5290 = vmatpush1.msra.mxu0 %v5270
    %5291 = vmatprep.subr.mxu0 0.0
    %5292 = vmatpush1.msra.mxu0 %v5269
    %5293 = vmatprep.subr.mxu0 0.0
    %5294 = vmatpush1.msra.mxu0 %v5268
    %5295 = vmatprep.subr.mxu0 0.0
    %5296 = vmatpush1.msra.mxu0 %v5267
    %5297 = vmatprep.subr.mxu0 0.0
    %5298 = vmatpush1.msra.mxu0 %v5266
    %5299 = vmatprep.subr.mxu0 0.0
    %5300 = vmatpush1.msra.mxu0 %v5265
    %5301 = vmatprep.subr.mxu0 0.0
    %5302 = vmatpush1.msra.mxu0 %v5264
    %5303 = vmatprep.subr.mxu0 0.0
    %5304 = vmatpush1.msra.mxu0 %v5263
    %5305 = vmatprep.subr.mxu0 0.0
    %5306 = vmatpush1.msra.mxu0 %v5262
    %5307 = vmatprep.subr.mxu0 0.0
    %5308 = vmatpush1.msra.mxu0 %v5261
    %5309 = vmatprep.subr.mxu0 0.0
    %5310 = vmatpush2.msra.mxu0 0.0
    %5311 = vmatprep.subr.mxu0 0.0
    %5312 = vmatpush2.msra.mxu0 0.0
    %5313 = vmatprep.subr.mxu0 0.0
    %5314 = vmatpush2.msra.mxu0 0.0
    %5315 = vmatprep.subr.mxu0 0.0
    %5316 = vmatpush2.msra.mxu0 0.0
    %5317 = vmatprep.subr.mxu0 0.0
    %5318 = vmatpush2.msra.mxu0 0.0
    %5319 = vmatprep.subr.mxu0 0.0
    %5320 = vmatpush2.msra.mxu0 0.0
    %5321 = vmatprep.subr.mxu0 0.0
    %5322 = vmatpush2.msra.mxu0 0.0
    %5323 = vmatprep.subr.mxu0 0.0
    %5324 = vmatpush2.msra.mxu0 0.0
    %5325 = vmatprep.subr.mxu0 0.0
    %5326 = vmatpush2.msra.mxu0 0.0
    %5327 = vmatprep.subr.mxu0 0.0
    %5328 = vmatpush2.msra.mxu0 0.0
    %5329 = vmatprep.subr.mxu0 0.0
    %5330 = vmatpush2.msra.mxu0 0.0
    %5331 = vmatprep.subr.mxu0 0.0
    %5332 = vmatpush2.msra.mxu0 0.0
    %5333 = vmatprep.subr.mxu0 0.0
    %5334 = vmatpush2.msra.mxu0 0.0
    %5335 = vmatprep.subr.mxu0 0.0
    %5336 = vmatpush2.msra.mxu0 0.0
    %5337 = vmatprep.subr.mxu0 0.0
    %5338 = vmatpush2.msra.mxu0 0.0
    %5339 = vmatprep.subr.mxu0 0.0
    %5340 = vmatpush2.msra.mxu0 0.0
    %5341 = vmatprep.mubr.f32.mxu0 0.0
    %5342 = vmatmul.mubr.f32.gmra.mxu0 %v5244
    %v5343 = vpop.f32.mrf.mxu0
    %v5344 = vadd.f32 0.0, %v5343
    %v5345 = vpop.f32.mrf.mxu0
    %5346 = vmatprep.mubr.f32.mxu0 0.0
    %5347 = vmatmul.mubr.f32.gmra.mxu0 %v5245
    %v5348 = vpop.f32.mrf.mxu0
    %v5349 = vadd.f32 0.0, %v5348
    %v5350 = vpop.f32.mrf.mxu0
    %5351 = vmatprep.mubr.f32.mxu0 0.0
    %5352 = vmatmul.mubr.f32.gmra.mxu0 %v5246
    %v5353 = vpop.f32.mrf.mxu0
    %v5354 = vadd.f32 0.0, %v5353
    %v5355 = vpop.f32.mrf.mxu0
    %5356 = vmatprep.mubr.f32.mxu0 0.0
    %5357 = vmatmul.mubr.f32.gmra.mxu0 %v5247
    %v5358 = vpop.f32.mrf.mxu0
    %v5359 = vadd.f32 0.0, %v5358
    %v5360 = vpop.f32.mrf.mxu0
    %5361 = vmatprep.mubr.f32.mxu0 0.0
    %5362 = vmatmul.mubr.f32.gmra.mxu0 %v5248
    %v5363 = vpop.f32.mrf.mxu0
    %v5364 = vadd.f32 0.0, %v5363
    %v5365 = vpop.f32.mrf.mxu0
    %5366 = vmatprep.mubr.f32.mxu0 0.0
    %5367 = vmatmul.mubr.f32.gmra.mxu0 %v5249
    %v5368 = vpop.f32.mrf.mxu0
    %v5369 = vadd.f32 0.0, %v5368
    %v5370 = vpop.f32.mrf.mxu0
    %5371 = vmatprep.mubr.f32.mxu0 0.0
    %5372 = vmatmul.mubr.f32.gmra.mxu0 %v5250
    %v5373 = vpop.f32.mrf.mxu0
    %v5374 = vadd.f32 0.0, %v5373
    %v5375 = vpop.f32.mrf.mxu0
    %5376 = vmatprep.mubr.f32.mxu0 0.0
    %5377 = vmatmul.mubr.f32.gmra.mxu0 %v5251
    %v5378 = vpop.f32.mrf.mxu0
    %v5379 = vadd.f32 0.0, %v5378
    %v5380 = vpop.f32.mrf.mxu0
    %5381 = vmatprep.mubr.f32.mxu0 0.0
    %5382 = vmatmul.mubr.f32.gmra.mxu0 %v5252
    %v5383 = vpop.f32.mrf.mxu0
    %v5384 = vadd.f32 0.0, %v5383
    %v5385 = vpop.f32.mrf.mxu0
    %5386 = vmatprep.mubr.f32.mxu0 0.0
    %5387 = vmatmul.mubr.f32.gmra.mxu0 %v5253
    %v5388 = vpop.f32.mrf.mxu0
    %v5389 = vadd.f32 0.0, %v5388
    %v5390 = vpop.f32.mrf.mxu0
    %5391 = vmatprep.mubr.f32.mxu0 0.0
    %5392 = vmatmul.mubr.f32.gmra.mxu0 %v5254
    %v5393 = vpop.f32.mrf.mxu0
    %v5394 = vadd.f32 0.0, %v5393
    %v5395 = vpop.f32.mrf.mxu0
    %5396 = vmatprep.mubr.f32.mxu0 0.0
    %5397 = vmatmul.mubr.f32.gmra.mxu0 %v5255
    %v5398 = vpop.f32.mrf.mxu0
    %v5399 = vadd.f32 0.0, %v5398
    %v5400 = vpop.f32.mrf.mxu0
    %5401 = vmatprep.mubr.f32.mxu0 0.0
    %5402 = vmatmul.mubr.f32.gmra.mxu0 %v5256
    %v5403 = vpop.f32.mrf.mxu0
    %v5404 = vadd.f32 0.0, %v5403
    %v5405 = vpop.f32.mrf.mxu0
    %5406 = vmatprep.mubr.f32.mxu0 0.0
    %5407 = vmatmul.mubr.f32.gmra.mxu0 %v5257
    %v5408 = vpop.f32.mrf.mxu0
    %v5409 = vadd.f32 0.0, %v5408
    %v5410 = vpop.f32.mrf.mxu0
    %5411 = vmatprep.mubr.f32.mxu0 0.0
    %5412 = vmatmul.mubr.f32.gmra.mxu0 %v5258
    %v5413 = vpop.f32.mrf.mxu0
    %v5414 = vadd.f32 0.0, %v5413
    %v5415 = vpop.f32.mrf.mxu0
    %5416 = vmatprep.mubr.f32.mxu0 0.0
    %5417 = vmatmul.mubr.f32.gmra.mxu0 %v5259
    %v5418 = vpop.f32.mrf.mxu0
    %v5419 = vadd.f32 0.0, %v5418
    %v5420 = vpop.f32.mrf.mxu0
    %5421 = vdwg.mxu0
    %v5422 = vadd.f32 %v5228, %v5344
    %v5423 = vadd.f32 %v5229, %v5349
    %v5424 = vadd.f32 %v5230, %v5354
    %v5425 = vadd.f32 %v5231, %v5359
    %v5426 = vadd.f32 %v5232, %v5364
    %v5427 = vadd.f32 %v5233, %v5369
    %v5428 = vadd.f32 %v5234, %v5374
    %v5429 = vadd.f32 %v5235, %v5379
    %v5430 = vadd.f32 %v5236, %v5384
    %v5431 = vadd.f32 %v5237, %v5389
    %v5432 = vadd.f32 %v5238, %v5394
    %v5433 = vadd.f32 %v5239, %v5399
    %v5434 = vadd.f32 %v5240, %v5404
    %v5435 = vadd.f32 %v5241, %v5409
    %v5436 = vadd.f32 %v5242, %v5414
    %v5437 = vadd.f32 %v5243, %v5419
    %v5438 = vld [vmem:[%s1722 + $0x4] sm:$0xff]
    %v5439 = vld [vmem:[%s1722 + $0x14] sm:$0xff]
    %v5440 = vld [vmem:[%s1722 + $0x24] sm:$0xff]
    %v5441 = vld [vmem:[%s1722 + $0x34] sm:$0xff]
    %v5442 = vld [vmem:[%s1722 + $0x44] sm:$0xff]
    %v5443 = vld [vmem:[%s1722 + $0x54] sm:$0xff]
    %v5444 = vld [vmem:[%s1722 + $0x64] sm:$0xff]
    %v5445 = vld [vmem:[%s1722 + $0x74] sm:$0xff]
    %v5446 = vld [vmem:[%s1722 + $0xc4] sm:$0xff]
    %v5447 = vld [vmem:[%s1722 + $0xd4] sm:$0xff]
    %v5448 = vld [vmem:[%s1722 + $0xe4] sm:$0xff]
    %v5449 = vld [vmem:[%s1722 + $0xf4] sm:$0xff]
    %v5450 = vld [vmem:[%s1722 + $0x104] sm:$0xff]
    %v5451 = vld [vmem:[%s1722 + $0x114] sm:$0xff]
    %v5452 = vld [vmem:[%s1722 + $0x124] sm:$0xff]
    %v5453 = vld [vmem:[%s1722 + $0x134] sm:$0xff]
    %s5454 = scalar_lea.vmem %s3, 2432
    %v5455 = vld [vmem:[%s5454] sm:$0xff]
    %v5456 = vld [vmem:[%s5454 + $0x8] sm:$0xff]
    %v5457 = vld [vmem:[%s5454 + $0x10] sm:$0xff]
    %v5458 = vld [vmem:[%s5454 + $0x18] sm:$0xff]
    %v5459 = vld [vmem:[%s5454 + $0x20] sm:$0xff]
    %v5460 = vld [vmem:[%s5454 + $0x28] sm:$0xff]
    %v5461 = vld [vmem:[%s5454 + $0x30] sm:$0xff]
    %v5462 = vld [vmem:[%s5454 + $0x38] sm:$0xff]
    %v5463 = vld [vmem:[%s5454 + $0x40] sm:$0xff]
    %v5464 = vld [vmem:[%s5454 + $0x48] sm:$0xff]
    %v5465 = vld [vmem:[%s5454 + $0x50] sm:$0xff]
    %v5466 = vld [vmem:[%s5454 + $0x58] sm:$0xff]
    %v5467 = vld [vmem:[%s5454 + $0x60] sm:$0xff]
    %v5468 = vld [vmem:[%s5454 + $0x68] sm:$0xff]
    %v5469 = vld [vmem:[%s5454 + $0x70] sm:$0xff]
    %v5470 = vld [vmem:[%s5454 + $0x78] sm:$0xff]
    %5471 = vmatprep.subr.mxu0 0.0
    %5472 = vmatpush1.msra.mxu0 %v5470
    %5473 = vmatprep.subr.mxu0 0.0
    %5474 = vmatpush1.msra.mxu0 %v5469
    %5475 = vmatprep.subr.mxu0 0.0
    %5476 = vmatpush1.msra.mxu0 %v5468
    %5477 = vmatprep.subr.mxu0 0.0
    %5478 = vmatpush1.msra.mxu0 %v5467
    %5479 = vmatprep.subr.mxu0 0.0
    %5480 = vmatpush1.msra.mxu0 %v5466
    %5481 = vmatprep.subr.mxu0 0.0
    %5482 = vmatpush1.msra.mxu0 %v5465
    %5483 = vmatprep.subr.mxu0 0.0
    %5484 = vmatpush1.msra.mxu0 %v5464
    %5485 = vmatprep.subr.mxu0 0.0
    %5486 = vmatpush1.msra.mxu0 %v5463
    %5487 = vmatprep.subr.mxu0 0.0
    %5488 = vmatpush1.msra.mxu0 %v5462
    %5489 = vmatprep.subr.mxu0 0.0
    %5490 = vmatpush1.msra.mxu0 %v5461
    %5491 = vmatprep.subr.mxu0 0.0
    %5492 = vmatpush1.msra.mxu0 %v5460
    %5493 = vmatprep.subr.mxu0 0.0
    %5494 = vmatpush1.msra.mxu0 %v5459
    %5495 = vmatprep.subr.mxu0 0.0
    %5496 = vmatpush1.msra.mxu0 %v5458
    %5497 = vmatprep.subr.mxu0 0.0
    %5498 = vmatpush1.msra.mxu0 %v5457
    %5499 = vmatprep.subr.mxu0 0.0
    %5500 = vmatpush1.msra.mxu0 %v5456
    %5501 = vmatprep.subr.mxu0 0.0
    %5502 = vmatpush1.msra.mxu0 %v5455
    %5503 = vmatprep.subr.mxu0 0.0
    %5504 = vmatpush2.msra.mxu0 0.0
    %5505 = vmatprep.subr.mxu0 0.0
    %5506 = vmatpush2.msra.mxu0 0.0
    %5507 = vmatprep.subr.mxu0 0.0
    %5508 = vmatpush2.msra.mxu0 0.0
    %5509 = vmatprep.subr.mxu0 0.0
    %5510 = vmatpush2.msra.mxu0 0.0
    %5511 = vmatprep.subr.mxu0 0.0
    %5512 = vmatpush2.msra.mxu0 0.0
    %5513 = vmatprep.subr.mxu0 0.0
    %5514 = vmatpush2.msra.mxu0 0.0
    %5515 = vmatprep.subr.mxu0 0.0
    %5516 = vmatpush2.msra.mxu0 0.0
    %5517 = vmatprep.subr.mxu0 0.0
    %5518 = vmatpush2.msra.mxu0 0.0
    %5519 = vmatprep.subr.mxu0 0.0
    %5520 = vmatpush2.msra.mxu0 0.0
    %5521 = vmatprep.subr.mxu0 0.0
    %5522 = vmatpush2.msra.mxu0 0.0
    %5523 = vmatprep.subr.mxu0 0.0
    %5524 = vmatpush2.msra.mxu0 0.0
    %5525 = vmatprep.subr.mxu0 0.0
    %5526 = vmatpush2.msra.mxu0 0.0
    %5527 = vmatprep.subr.mxu0 0.0
    %5528 = vmatpush2.msra.mxu0 0.0
    %5529 = vmatprep.subr.mxu0 0.0
    %5530 = vmatpush2.msra.mxu0 0.0
    %5531 = vmatprep.subr.mxu0 0.0
    %5532 = vmatpush2.msra.mxu0 0.0
    %5533 = vmatprep.subr.mxu0 0.0
    %5534 = vmatpush2.msra.mxu0 0.0
    %5535 = vmatprep.mubr.f32.mxu0 0.0
    %5536 = vmatmul.mubr.f32.gmra.mxu0 %v5438
    %v5537 = vpop.f32.mrf.mxu0
    %v5538 = vadd.f32 0.0, %v5537
    %v5539 = vpop.f32.mrf.mxu0
    %5540 = vmatprep.mubr.f32.mxu0 0.0
    %5541 = vmatmul.mubr.f32.gmra.mxu0 %v5439
    %v5542 = vpop.f32.mrf.mxu0
    %v5543 = vadd.f32 0.0, %v5542
    %v5544 = vpop.f32.mrf.mxu0
    %5545 = vmatprep.mubr.f32.mxu0 0.0
    %5546 = vmatmul.mubr.f32.gmra.mxu0 %v5440
    %v5547 = vpop.f32.mrf.mxu0
    %v5548 = vadd.f32 0.0, %v5547
    %v5549 = vpop.f32.mrf.mxu0
    %5550 = vmatprep.mubr.f32.mxu0 0.0
    %5551 = vmatmul.mubr.f32.gmra.mxu0 %v5441
    %v5552 = vpop.f32.mrf.mxu0
    %v5553 = vadd.f32 0.0, %v5552
    %v5554 = vpop.f32.mrf.mxu0
    %5555 = vmatprep.mubr.f32.mxu0 0.0
    %5556 = vmatmul.mubr.f32.gmra.mxu0 %v5442
    %v5557 = vpop.f32.mrf.mxu0
    %v5558 = vadd.f32 0.0, %v5557
    %v5559 = vpop.f32.mrf.mxu0
    %5560 = vmatprep.mubr.f32.mxu0 0.0
    %5561 = vmatmul.mubr.f32.gmra.mxu0 %v5443
    %v5562 = vpop.f32.mrf.mxu0
    %v5563 = vadd.f32 0.0, %v5562
    %v5564 = vpop.f32.mrf.mxu0
    %5565 = vmatprep.mubr.f32.mxu0 0.0
    %5566 = vmatmul.mubr.f32.gmra.mxu0 %v5444
    %v5567 = vpop.f32.mrf.mxu0
    %v5568 = vadd.f32 0.0, %v5567
    %v5569 = vpop.f32.mrf.mxu0
    %5570 = vmatprep.mubr.f32.mxu0 0.0
    %5571 = vmatmul.mubr.f32.gmra.mxu0 %v5445
    %v5572 = vpop.f32.mrf.mxu0
    %v5573 = vadd.f32 0.0, %v5572
    %v5574 = vpop.f32.mrf.mxu0
    %5575 = vmatprep.mubr.f32.mxu0 0.0
    %5576 = vmatmul.mubr.f32.gmra.mxu0 %v5446
    %v5577 = vpop.f32.mrf.mxu0
    %v5578 = vadd.f32 0.0, %v5577
    %v5579 = vpop.f32.mrf.mxu0
    %5580 = vmatprep.mubr.f32.mxu0 0.0
    %5581 = vmatmul.mubr.f32.gmra.mxu0 %v5447
    %v5582 = vpop.f32.mrf.mxu0
    %v5583 = vadd.f32 0.0, %v5582
    %v5584 = vpop.f32.mrf.mxu0
    %5585 = vmatprep.mubr.f32.mxu0 0.0
    %5586 = vmatmul.mubr.f32.gmra.mxu0 %v5448
    %v5587 = vpop.f32.mrf.mxu0
    %v5588 = vadd.f32 0.0, %v5587
    %v5589 = vpop.f32.mrf.mxu0
    %5590 = vmatprep.mubr.f32.mxu0 0.0
    %5591 = vmatmul.mubr.f32.gmra.mxu0 %v5449
    %v5592 = vpop.f32.mrf.mxu0
    %v5593 = vadd.f32 0.0, %v5592
    %v5594 = vpop.f32.mrf.mxu0
    %5595 = vmatprep.mubr.f32.mxu0 0.0
    %5596 = vmatmul.mubr.f32.gmra.mxu0 %v5450
    %v5597 = vpop.f32.mrf.mxu0
    %v5598 = vadd.f32 0.0, %v5597
    %v5599 = vpop.f32.mrf.mxu0
    %5600 = vmatprep.mubr.f32.mxu0 0.0
    %5601 = vmatmul.mubr.f32.gmra.mxu0 %v5451
    %v5602 = vpop.f32.mrf.mxu0
    %v5603 = vadd.f32 0.0, %v5602
    %v5604 = vpop.f32.mrf.mxu0
    %5605 = vmatprep.mubr.f32.mxu0 0.0
    %5606 = vmatmul.mubr.f32.gmra.mxu0 %v5452
    %v5607 = vpop.f32.mrf.mxu0
    %v5608 = vadd.f32 0.0, %v5607
    %v5609 = vpop.f32.mrf.mxu0
    %5610 = vmatprep.mubr.f32.mxu0 0.0
    %5611 = vmatmul.mubr.f32.gmra.mxu0 %v5453
    %v5612 = vpop.f32.mrf.mxu0
    %v5613 = vadd.f32 0.0, %v5612
    %v5614 = vpop.f32.mrf.mxu0
    %5615 = vdwg.mxu0
    %v5616 = vadd.f32 %v5422, %v5538
    %v5617 = vadd.f32 %v5423, %v5543
    %v5618 = vadd.f32 %v5424, %v5548
    %v5619 = vadd.f32 %v5425, %v5553
    %v5620 = vadd.f32 %v5426, %v5558
    %v5621 = vadd.f32 %v5427, %v5563
    %v5622 = vadd.f32 %v5428, %v5568
    %v5623 = vadd.f32 %v5429, %v5573
    %v5624 = vadd.f32 %v5430, %v5578
    %v5625 = vadd.f32 %v5431, %v5583
    %v5626 = vadd.f32 %v5432, %v5588
    %v5627 = vadd.f32 %v5433, %v5593
    %v5628 = vadd.f32 %v5434, %v5598
    %v5629 = vadd.f32 %v5435, %v5603
    %v5630 = vadd.f32 %v5436, %v5608
    %v5631 = vadd.f32 %v5437, %v5613
    %v5632 = vld [vmem:[%s1725] sm:$0xff]
    %v5633 = vld [vmem:[%s1725 + $0x10] sm:$0xff]
    %v5634 = vld [vmem:[%s1725 + $0x20] sm:$0xff]
    %v5635 = vld [vmem:[%s1725 + $0x30] sm:$0xff]
    %v5636 = vld [vmem:[%s1725 + $0x40] sm:$0xff]
    %v5637 = vld [vmem:[%s1725 + $0x50] sm:$0xff]
    %v5638 = vld [vmem:[%s1725 + $0x60] sm:$0xff]
    %v5639 = vld [vmem:[%s1725 + $0x70] sm:$0xff]
    %v5640 = vld [vmem:[%s1725 + $0xc0] sm:$0xff]
    %v5641 = vld [vmem:[%s1725 + $0xd0] sm:$0xff]
    %v5642 = vld [vmem:[%s1725 + $0xe0] sm:$0xff]
    %v5643 = vld [vmem:[%s1725 + $0xf0] sm:$0xff]
    %v5644 = vld [vmem:[%s1725 + $0x100] sm:$0xff]
    %v5645 = vld [vmem:[%s1725 + $0x110] sm:$0xff]
    %v5646 = vld [vmem:[%s1725 + $0x120] sm:$0xff]
    %v5647 = vld [vmem:[%s1725 + $0x130] sm:$0xff]
    %s5648 = scalar_lea.vmem %s3, 2560
    %v5649 = vld [vmem:[%s5648] sm:$0xff]
    %v5650 = vld [vmem:[%s5648 + $0x8] sm:$0xff]
    %v5651 = vld [vmem:[%s5648 + $0x10] sm:$0xff]
    %v5652 = vld [vmem:[%s5648 + $0x18] sm:$0xff]
    %v5653 = vld [vmem:[%s5648 + $0x20] sm:$0xff]
    %v5654 = vld [vmem:[%s5648 + $0x28] sm:$0xff]
    %v5655 = vld [vmem:[%s5648 + $0x30] sm:$0xff]
    %v5656 = vld [vmem:[%s5648 + $0x38] sm:$0xff]
    %v5657 = vld [vmem:[%s5648 + $0x40] sm:$0xff]
    %v5658 = vld [vmem:[%s5648 + $0x48] sm:$0xff]
    %v5659 = vld [vmem:[%s5648 + $0x50] sm:$0xff]
    %v5660 = vld [vmem:[%s5648 + $0x58] sm:$0xff]
    %v5661 = vld [vmem:[%s5648 + $0x60] sm:$0xff]
    %v5662 = vld [vmem:[%s5648 + $0x68] sm:$0xff]
    %v5663 = vld [vmem:[%s5648 + $0x70] sm:$0xff]
    %v5664 = vld [vmem:[%s5648 + $0x78] sm:$0xff]
    %5665 = vmatprep.subr.mxu0 0.0
    %5666 = vmatpush1.msra.mxu0 %v5664
    %5667 = vmatprep.subr.mxu0 0.0
    %5668 = vmatpush1.msra.mxu0 %v5663
    %5669 = vmatprep.subr.mxu0 0.0
    %5670 = vmatpush1.msra.mxu0 %v5662
    %5671 = vmatprep.subr.mxu0 0.0
    %5672 = vmatpush1.msra.mxu0 %v5661
    %5673 = vmatprep.subr.mxu0 0.0
    %5674 = vmatpush1.msra.mxu0 %v5660
    %5675 = vmatprep.subr.mxu0 0.0
    %5676 = vmatpush1.msra.mxu0 %v5659
    %5677 = vmatprep.subr.mxu0 0.0
    %5678 = vmatpush1.msra.mxu0 %v5658
    %5679 = vmatprep.subr.mxu0 0.0
    %5680 = vmatpush1.msra.mxu0 %v5657
    %5681 = vmatprep.subr.mxu0 0.0
    %5682 = vmatpush1.msra.mxu0 %v5656
    %5683 = vmatprep.subr.mxu0 0.0
    %5684 = vmatpush1.msra.mxu0 %v5655
    %5685 = vmatprep.subr.mxu0 0.0
    %5686 = vmatpush1.msra.mxu0 %v5654
    %5687 = vmatprep.subr.mxu0 0.0
    %5688 = vmatpush1.msra.mxu0 %v5653
    %5689 = vmatprep.subr.mxu0 0.0
    %5690 = vmatpush1.msra.mxu0 %v5652
    %5691 = vmatprep.subr.mxu0 0.0
    %5692 = vmatpush1.msra.mxu0 %v5651
    %5693 = vmatprep.subr.mxu0 0.0
    %5694 = vmatpush1.msra.mxu0 %v5650
    %5695 = vmatprep.subr.mxu0 0.0
    %5696 = vmatpush1.msra.mxu0 %v5649
    %5697 = vmatprep.subr.mxu0 0.0
    %5698 = vmatpush2.msra.mxu0 0.0
    %5699 = vmatprep.subr.mxu0 0.0
    %5700 = vmatpush2.msra.mxu0 0.0
    %5701 = vmatprep.subr.mxu0 0.0
    %5702 = vmatpush2.msra.mxu0 0.0
    %5703 = vmatprep.subr.mxu0 0.0
    %5704 = vmatpush2.msra.mxu0 0.0
    %5705 = vmatprep.subr.mxu0 0.0
    %5706 = vmatpush2.msra.mxu0 0.0
    %5707 = vmatprep.subr.mxu0 0.0
    %5708 = vmatpush2.msra.mxu0 0.0
    %5709 = vmatprep.subr.mxu0 0.0
    %5710 = vmatpush2.msra.mxu0 0.0
    %5711 = vmatprep.subr.mxu0 0.0
    %5712 = vmatpush2.msra.mxu0 0.0
    %5713 = vmatprep.subr.mxu0 0.0
    %5714 = vmatpush2.msra.mxu0 0.0
    %5715 = vmatprep.subr.mxu0 0.0
    %5716 = vmatpush2.msra.mxu0 0.0
    %5717 = vmatprep.subr.mxu0 0.0
    %5718 = vmatpush2.msra.mxu0 0.0
    %5719 = vmatprep.subr.mxu0 0.0
    %5720 = vmatpush2.msra.mxu0 0.0
    %5721 = vmatprep.subr.mxu0 0.0
    %5722 = vmatpush2.msra.mxu0 0.0
    %5723 = vmatprep.subr.mxu0 0.0
    %5724 = vmatpush2.msra.mxu0 0.0
    %5725 = vmatprep.subr.mxu0 0.0
    %5726 = vmatpush2.msra.mxu0 0.0
    %5727 = vmatprep.subr.mxu0 0.0
    %5728 = vmatpush2.msra.mxu0 0.0
    %5729 = vmatprep.mubr.f32.mxu0 0.0
    %5730 = vmatmul.mubr.f32.gmra.mxu0 %v5632
    %v5731 = vpop.f32.mrf.mxu0
    %v5732 = vadd.f32 0.0, %v5731
    %v5733 = vpop.f32.mrf.mxu0
    %5734 = vmatprep.mubr.f32.mxu0 0.0
    %5735 = vmatmul.mubr.f32.gmra.mxu0 %v5633
    %v5736 = vpop.f32.mrf.mxu0
    %v5737 = vadd.f32 0.0, %v5736
    %v5738 = vpop.f32.mrf.mxu0
    %5739 = vmatprep.mubr.f32.mxu0 0.0
    %5740 = vmatmul.mubr.f32.gmra.mxu0 %v5634
    %v5741 = vpop.f32.mrf.mxu0
    %v5742 = vadd.f32 0.0, %v5741
    %v5743 = vpop.f32.mrf.mxu0
    %5744 = vmatprep.mubr.f32.mxu0 0.0
    %5745 = vmatmul.mubr.f32.gmra.mxu0 %v5635
    %v5746 = vpop.f32.mrf.mxu0
    %v5747 = vadd.f32 0.0, %v5746
    %v5748 = vpop.f32.mrf.mxu0
    %5749 = vmatprep.mubr.f32.mxu0 0.0
    %5750 = vmatmul.mubr.f32.gmra.mxu0 %v5636
    %v5751 = vpop.f32.mrf.mxu0
    %v5752 = vadd.f32 0.0, %v5751
    %v5753 = vpop.f32.mrf.mxu0
    %5754 = vmatprep.mubr.f32.mxu0 0.0
    %5755 = vmatmul.mubr.f32.gmra.mxu0 %v5637
    %v5756 = vpop.f32.mrf.mxu0
    %v5757 = vadd.f32 0.0, %v5756
    %v5758 = vpop.f32.mrf.mxu0
    %5759 = vmatprep.mubr.f32.mxu0 0.0
    %5760 = vmatmul.mubr.f32.gmra.mxu0 %v5638
    %v5761 = vpop.f32.mrf.mxu0
    %v5762 = vadd.f32 0.0, %v5761
    %v5763 = vpop.f32.mrf.mxu0
    %5764 = vmatprep.mubr.f32.mxu0 0.0
    %5765 = vmatmul.mubr.f32.gmra.mxu0 %v5639
    %v5766 = vpop.f32.mrf.mxu0
    %v5767 = vadd.f32 0.0, %v5766
    %v5768 = vpop.f32.mrf.mxu0
    %5769 = vmatprep.mubr.f32.mxu0 0.0
    %5770 = vmatmul.mubr.f32.gmra.mxu0 %v5640
    %v5771 = vpop.f32.mrf.mxu0
    %v5772 = vadd.f32 0.0, %v5771
    %v5773 = vpop.f32.mrf.mxu0
    %5774 = vmatprep.mubr.f32.mxu0 0.0
    %5775 = vmatmul.mubr.f32.gmra.mxu0 %v5641
    %v5776 = vpop.f32.mrf.mxu0
    %v5777 = vadd.f32 0.0, %v5776
    %v5778 = vpop.f32.mrf.mxu0
    %5779 = vmatprep.mubr.f32.mxu0 0.0
    %5780 = vmatmul.mubr.f32.gmra.mxu0 %v5642
    %v5781 = vpop.f32.mrf.mxu0
    %v5782 = vadd.f32 0.0, %v5781
    %v5783 = vpop.f32.mrf.mxu0
    %5784 = vmatprep.mubr.f32.mxu0 0.0
    %5785 = vmatmul.mubr.f32.gmra.mxu0 %v5643
    %v5786 = vpop.f32.mrf.mxu0
    %v5787 = vadd.f32 0.0, %v5786
    %v5788 = vpop.f32.mrf.mxu0
    %5789 = vmatprep.mubr.f32.mxu0 0.0
    %5790 = vmatmul.mubr.f32.gmra.mxu0 %v5644
    %v5791 = vpop.f32.mrf.mxu0
    %v5792 = vadd.f32 0.0, %v5791
    %v5793 = vpop.f32.mrf.mxu0
    %5794 = vmatprep.mubr.f32.mxu0 0.0
    %5795 = vmatmul.mubr.f32.gmra.mxu0 %v5645
    %v5796 = vpop.f32.mrf.mxu0
    %v5797 = vadd.f32 0.0, %v5796
    %v5798 = vpop.f32.mrf.mxu0
    %5799 = vmatprep.mubr.f32.mxu0 0.0
    %5800 = vmatmul.mubr.f32.gmra.mxu0 %v5646
    %v5801 = vpop.f32.mrf.mxu0
    %v5802 = vadd.f32 0.0, %v5801
    %v5803 = vpop.f32.mrf.mxu0
    %5804 = vmatprep.mubr.f32.mxu0 0.0
    %5805 = vmatmul.mubr.f32.gmra.mxu0 %v5647
    %v5806 = vpop.f32.mrf.mxu0
    %v5807 = vadd.f32 0.0, %v5806
    %v5808 = vpop.f32.mrf.mxu0
    %5809 = vdwg.mxu0
    %v5810 = vadd.f32 %v5616, %v5732
    %v5811 = vadd.f32 %v5617, %v5737
    %v5812 = vadd.f32 %v5618, %v5742
    %v5813 = vadd.f32 %v5619, %v5747
    %v5814 = vadd.f32 %v5620, %v5752
    %v5815 = vadd.f32 %v5621, %v5757
    %v5816 = vadd.f32 %v5622, %v5762
    %v5817 = vadd.f32 %v5623, %v5767
    %v5818 = vadd.f32 %v5624, %v5772
    %v5819 = vadd.f32 %v5625, %v5777
    %v5820 = vadd.f32 %v5626, %v5782
    %v5821 = vadd.f32 %v5627, %v5787
    %v5822 = vadd.f32 %v5628, %v5792
    %v5823 = vadd.f32 %v5629, %v5797
    %v5824 = vadd.f32 %v5630, %v5802
    %v5825 = vadd.f32 %v5631, %v5807
    %v5826 = vld [vmem:[%s1725 + $0x1] sm:$0xff]
    %v5827 = vld [vmem:[%s1725 + $0x11] sm:$0xff]
    %v5828 = vld [vmem:[%s1725 + $0x21] sm:$0xff]
    %v5829 = vld [vmem:[%s1725 + $0x31] sm:$0xff]
    %v5830 = vld [vmem:[%s1725 + $0x41] sm:$0xff]
    %v5831 = vld [vmem:[%s1725 + $0x51] sm:$0xff]
    %v5832 = vld [vmem:[%s1725 + $0x61] sm:$0xff]
    %v5833 = vld [vmem:[%s1725 + $0x71] sm:$0xff]
    %v5834 = vld [vmem:[%s1725 + $0xc1] sm:$0xff]
    %v5835 = vld [vmem:[%s1725 + $0xd1] sm:$0xff]
    %v5836 = vld [vmem:[%s1725 + $0xe1] sm:$0xff]
    %v5837 = vld [vmem:[%s1725 + $0xf1] sm:$0xff]
    %v5838 = vld [vmem:[%s1725 + $0x101] sm:$0xff]
    %v5839 = vld [vmem:[%s1725 + $0x111] sm:$0xff]
    %v5840 = vld [vmem:[%s1725 + $0x121] sm:$0xff]
    %v5841 = vld [vmem:[%s1725 + $0x131] sm:$0xff]
    %s5842 = scalar_lea.vmem %s3, 2688
    %v5843 = vld [vmem:[%s5842] sm:$0xff]
    %v5844 = vld [vmem:[%s5842 + $0x8] sm:$0xff]
    %v5845 = vld [vmem:[%s5842 + $0x10] sm:$0xff]
    %v5846 = vld [vmem:[%s5842 + $0x18] sm:$0xff]
    %v5847 = vld [vmem:[%s5842 + $0x20] sm:$0xff]
    %v5848 = vld [vmem:[%s5842 + $0x28] sm:$0xff]
    %v5849 = vld [vmem:[%s5842 + $0x30] sm:$0xff]
    %v5850 = vld [vmem:[%s5842 + $0x38] sm:$0xff]
    %v5851 = vld [vmem:[%s5842 + $0x40] sm:$0xff]
    %v5852 = vld [vmem:[%s5842 + $0x48] sm:$0xff]
    %v5853 = vld [vmem:[%s5842 + $0x50] sm:$0xff]
    %v5854 = vld [vmem:[%s5842 + $0x58] sm:$0xff]
    %v5855 = vld [vmem:[%s5842 + $0x60] sm:$0xff]
    %v5856 = vld [vmem:[%s5842 + $0x68] sm:$0xff]
    %v5857 = vld [vmem:[%s5842 + $0x70] sm:$0xff]
    %v5858 = vld [vmem:[%s5842 + $0x78] sm:$0xff]
    %5859 = vmatprep.subr.mxu0 0.0
    %5860 = vmatpush1.msra.mxu0 %v5858
    %5861 = vmatprep.subr.mxu0 0.0
    %5862 = vmatpush1.msra.mxu0 %v5857
    %5863 = vmatprep.subr.mxu0 0.0
    %5864 = vmatpush1.msra.mxu0 %v5856
    %5865 = vmatprep.subr.mxu0 0.0
    %5866 = vmatpush1.msra.mxu0 %v5855
    %5867 = vmatprep.subr.mxu0 0.0
    %5868 = vmatpush1.msra.mxu0 %v5854
    %5869 = vmatprep.subr.mxu0 0.0
    %5870 = vmatpush1.msra.mxu0 %v5853
    %5871 = vmatprep.subr.mxu0 0.0
    %5872 = vmatpush1.msra.mxu0 %v5852
    %5873 = vmatprep.subr.mxu0 0.0
    %5874 = vmatpush1.msra.mxu0 %v5851
    %5875 = vmatprep.subr.mxu0 0.0
    %5876 = vmatpush1.msra.mxu0 %v5850
    %5877 = vmatprep.subr.mxu0 0.0
    %5878 = vmatpush1.msra.mxu0 %v5849
    %5879 = vmatprep.subr.mxu0 0.0
    %5880 = vmatpush1.msra.mxu0 %v5848
    %5881 = vmatprep.subr.mxu0 0.0
    %5882 = vmatpush1.msra.mxu0 %v5847
    %5883 = vmatprep.subr.mxu0 0.0
    %5884 = vmatpush1.msra.mxu0 %v5846
    %5885 = vmatprep.subr.mxu0 0.0
    %5886 = vmatpush1.msra.mxu0 %v5845
    %5887 = vmatprep.subr.mxu0 0.0
    %5888 = vmatpush1.msra.mxu0 %v5844
    %5889 = vmatprep.subr.mxu0 0.0
    %5890 = vmatpush1.msra.mxu0 %v5843
    %5891 = vmatprep.subr.mxu0 0.0
    %5892 = vmatpush2.msra.mxu0 0.0
    %5893 = vmatprep.subr.mxu0 0.0
    %5894 = vmatpush2.msra.mxu0 0.0
    %5895 = vmatprep.subr.mxu0 0.0
    %5896 = vmatpush2.msra.mxu0 0.0
    %5897 = vmatprep.subr.mxu0 0.0
    %5898 = vmatpush2.msra.mxu0 0.0
    %5899 = vmatprep.subr.mxu0 0.0
    %5900 = vmatpush2.msra.mxu0 0.0
    %5901 = vmatprep.subr.mxu0 0.0
    %5902 = vmatpush2.msra.mxu0 0.0
    %5903 = vmatprep.subr.mxu0 0.0
    %5904 = vmatpush2.msra.mxu0 0.0
    %5905 = vmatprep.subr.mxu0 0.0
    %5906 = vmatpush2.msra.mxu0 0.0
    %5907 = vmatprep.subr.mxu0 0.0
    %5908 = vmatpush2.msra.mxu0 0.0
    %5909 = vmatprep.subr.mxu0 0.0
    %5910 = vmatpush2.msra.mxu0 0.0
    %5911 = vmatprep.subr.mxu0 0.0
    %5912 = vmatpush2.msra.mxu0 0.0
    %5913 = vmatprep.subr.mxu0 0.0
    %5914 = vmatpush2.msra.mxu0 0.0
    %5915 = vmatprep.subr.mxu0 0.0
    %5916 = vmatpush2.msra.mxu0 0.0
    %5917 = vmatprep.subr.mxu0 0.0
    %5918 = vmatpush2.msra.mxu0 0.0
    %5919 = vmatprep.subr.mxu0 0.0
    %5920 = vmatpush2.msra.mxu0 0.0
    %5921 = vmatprep.subr.mxu0 0.0
    %5922 = vmatpush2.msra.mxu0 0.0
    %5923 = vmatprep.mubr.f32.mxu0 0.0
    %5924 = vmatmul.mubr.f32.gmra.mxu0 %v5826
    %v5925 = vpop.f32.mrf.mxu0
    %v5926 = vadd.f32 0.0, %v5925
    %v5927 = vpop.f32.mrf.mxu0
    %5928 = vmatprep.mubr.f32.mxu0 0.0
    %5929 = vmatmul.mubr.f32.gmra.mxu0 %v5827
    %v5930 = vpop.f32.mrf.mxu0
    %v5931 = vadd.f32 0.0, %v5930
    %v5932 = vpop.f32.mrf.mxu0
    %5933 = vmatprep.mubr.f32.mxu0 0.0
    %5934 = vmatmul.mubr.f32.gmra.mxu0 %v5828
    %v5935 = vpop.f32.mrf.mxu0
    %v5936 = vadd.f32 0.0, %v5935
    %v5937 = vpop.f32.mrf.mxu0
    %5938 = vmatprep.mubr.f32.mxu0 0.0
    %5939 = vmatmul.mubr.f32.gmra.mxu0 %v5829
    %v5940 = vpop.f32.mrf.mxu0
    %v5941 = vadd.f32 0.0, %v5940
    %v5942 = vpop.f32.mrf.mxu0
    %5943 = vmatprep.mubr.f32.mxu0 0.0
    %5944 = vmatmul.mubr.f32.gmra.mxu0 %v5830
    %v5945 = vpop.f32.mrf.mxu0
    %v5946 = vadd.f32 0.0, %v5945
    %v5947 = vpop.f32.mrf.mxu0
    %5948 = vmatprep.mubr.f32.mxu0 0.0
    %5949 = vmatmul.mubr.f32.gmra.mxu0 %v5831
    %v5950 = vpop.f32.mrf.mxu0
    %v5951 = vadd.f32 0.0, %v5950
    %v5952 = vpop.f32.mrf.mxu0
    %5953 = vmatprep.mubr.f32.mxu0 0.0
    %5954 = vmatmul.mubr.f32.gmra.mxu0 %v5832
    %v5955 = vpop.f32.mrf.mxu0
    %v5956 = vadd.f32 0.0, %v5955
    %v5957 = vpop.f32.mrf.mxu0
    %5958 = vmatprep.mubr.f32.mxu0 0.0
    %5959 = vmatmul.mubr.f32.gmra.mxu0 %v5833
    %v5960 = vpop.f32.mrf.mxu0
    %v5961 = vadd.f32 0.0, %v5960
    %v5962 = vpop.f32.mrf.mxu0
    %5963 = vmatprep.mubr.f32.mxu0 0.0
    %5964 = vmatmul.mubr.f32.gmra.mxu0 %v5834
    %v5965 = vpop.f32.mrf.mxu0
    %v5966 = vadd.f32 0.0, %v5965
    %v5967 = vpop.f32.mrf.mxu0
    %5968 = vmatprep.mubr.f32.mxu0 0.0
    %5969 = vmatmul.mubr.f32.gmra.mxu0 %v5835
    %v5970 = vpop.f32.mrf.mxu0
    %v5971 = vadd.f32 0.0, %v5970
    %v5972 = vpop.f32.mrf.mxu0
    %5973 = vmatprep.mubr.f32.mxu0 0.0
    %5974 = vmatmul.mubr.f32.gmra.mxu0 %v5836
    %v5975 = vpop.f32.mrf.mxu0
    %v5976 = vadd.f32 0.0, %v5975
    %v5977 = vpop.f32.mrf.mxu0
    %5978 = vmatprep.mubr.f32.mxu0 0.0
    %5979 = vmatmul.mubr.f32.gmra.mxu0 %v5837
    %v5980 = vpop.f32.mrf.mxu0
    %v5981 = vadd.f32 0.0, %v5980
    %v5982 = vpop.f32.mrf.mxu0
    %5983 = vmatprep.mubr.f32.mxu0 0.0
    %5984 = vmatmul.mubr.f32.gmra.mxu0 %v5838
    %v5985 = vpop.f32.mrf.mxu0
    %v5986 = vadd.f32 0.0, %v5985
    %v5987 = vpop.f32.mrf.mxu0
    %5988 = vmatprep.mubr.f32.mxu0 0.0
    %5989 = vmatmul.mubr.f32.gmra.mxu0 %v5839
    %v5990 = vpop.f32.mrf.mxu0
    %v5991 = vadd.f32 0.0, %v5990
    %v5992 = vpop.f32.mrf.mxu0
    %5993 = vmatprep.mubr.f32.mxu0 0.0
    %5994 = vmatmul.mubr.f32.gmra.mxu0 %v5840
    %v5995 = vpop.f32.mrf.mxu0
    %v5996 = vadd.f32 0.0, %v5995
    %v5997 = vpop.f32.mrf.mxu0
    %5998 = vmatprep.mubr.f32.mxu0 0.0
    %5999 = vmatmul.mubr.f32.gmra.mxu0 %v5841
    %v6000 = vpop.f32.mrf.mxu0
    %v6001 = vadd.f32 0.0, %v6000
    %v6002 = vpop.f32.mrf.mxu0
    %6003 = vdwg.mxu0
    %v6004 = vadd.f32 %v5810, %v5926
    %v6005 = vadd.f32 %v5811, %v5931
    %v6006 = vadd.f32 %v5812, %v5936
    %v6007 = vadd.f32 %v5813, %v5941
    %v6008 = vadd.f32 %v5814, %v5946
    %v6009 = vadd.f32 %v5815, %v5951
    %v6010 = vadd.f32 %v5816, %v5956
    %v6011 = vadd.f32 %v5817, %v5961
    %v6012 = vadd.f32 %v5818, %v5966
    %v6013 = vadd.f32 %v5819, %v5971
    %v6014 = vadd.f32 %v5820, %v5976
    %v6015 = vadd.f32 %v5821, %v5981
    %v6016 = vadd.f32 %v5822, %v5986
    %v6017 = vadd.f32 %v5823, %v5991
    %v6018 = vadd.f32 %v5824, %v5996
    %v6019 = vadd.f32 %v5825, %v6001
    %v6020 = vld [vmem:[%s1725 + $0x2] sm:$0xff]
    %v6021 = vld [vmem:[%s1725 + $0x12] sm:$0xff]
    %v6022 = vld [vmem:[%s1725 + $0x22] sm:$0xff]
    %v6023 = vld [vmem:[%s1725 + $0x32] sm:$0xff]
    %v6024 = vld [vmem:[%s1725 + $0x42] sm:$0xff]
    %v6025 = vld [vmem:[%s1725 + $0x52] sm:$0xff]
    %v6026 = vld [vmem:[%s1725 + $0x62] sm:$0xff]
    %v6027 = vld [vmem:[%s1725 + $0x72] sm:$0xff]
    %v6028 = vld [vmem:[%s1725 + $0xc2] sm:$0xff]
    %v6029 = vld [vmem:[%s1725 + $0xd2] sm:$0xff]
    %v6030 = vld [vmem:[%s1725 + $0xe2] sm:$0xff]
    %v6031 = vld [vmem:[%s1725 + $0xf2] sm:$0xff]
    %v6032 = vld [vmem:[%s1725 + $0x102] sm:$0xff]
    %v6033 = vld [vmem:[%s1725 + $0x112] sm:$0xff]
    %v6034 = vld [vmem:[%s1725 + $0x122] sm:$0xff]
    %v6035 = vld [vmem:[%s1725 + $0x132] sm:$0xff]
    %s6036 = scalar_lea.vmem %s3, 2816
    %v6037 = vld [vmem:[%s6036] sm:$0xff]
    %v6038 = vld [vmem:[%s6036 + $0x8] sm:$0xff]
    %v6039 = vld [vmem:[%s6036 + $0x10] sm:$0xff]
    %v6040 = vld [vmem:[%s6036 + $0x18] sm:$0xff]
    %v6041 = vld [vmem:[%s6036 + $0x20] sm:$0xff]
    %v6042 = vld [vmem:[%s6036 + $0x28] sm:$0xff]
    %v6043 = vld [vmem:[%s6036 + $0x30] sm:$0xff]
    %v6044 = vld [vmem:[%s6036 + $0x38] sm:$0xff]
    %v6045 = vld [vmem:[%s6036 + $0x40] sm:$0xff]
    %v6046 = vld [vmem:[%s6036 + $0x48] sm:$0xff]
    %v6047 = vld [vmem:[%s6036 + $0x50] sm:$0xff]
    %v6048 = vld [vmem:[%s6036 + $0x58] sm:$0xff]
    %v6049 = vld [vmem:[%s6036 + $0x60] sm:$0xff]
    %v6050 = vld [vmem:[%s6036 + $0x68] sm:$0xff]
    %v6051 = vld [vmem:[%s6036 + $0x70] sm:$0xff]
    %v6052 = vld [vmem:[%s6036 + $0x78] sm:$0xff]
    %6053 = vmatprep.subr.mxu0 0.0
    %6054 = vmatpush1.msra.mxu0 %v6052
    %6055 = vmatprep.subr.mxu0 0.0
    %6056 = vmatpush1.msra.mxu0 %v6051
    %6057 = vmatprep.subr.mxu0 0.0
    %6058 = vmatpush1.msra.mxu0 %v6050
    %6059 = vmatprep.subr.mxu0 0.0
    %6060 = vmatpush1.msra.mxu0 %v6049
    %6061 = vmatprep.subr.mxu0 0.0
    %6062 = vmatpush1.msra.mxu0 %v6048
    %6063 = vmatprep.subr.mxu0 0.0
    %6064 = vmatpush1.msra.mxu0 %v6047
    %6065 = vmatprep.subr.mxu0 0.0
    %6066 = vmatpush1.msra.mxu0 %v6046
    %6067 = vmatprep.subr.mxu0 0.0
    %6068 = vmatpush1.msra.mxu0 %v6045
    %6069 = vmatprep.subr.mxu0 0.0
    %6070 = vmatpush1.msra.mxu0 %v6044
    %6071 = vmatprep.subr.mxu0 0.0
    %6072 = vmatpush1.msra.mxu0 %v6043
    %6073 = vmatprep.subr.mxu0 0.0
    %6074 = vmatpush1.msra.mxu0 %v6042
    %6075 = vmatprep.subr.mxu0 0.0
    %6076 = vmatpush1.msra.mxu0 %v6041
    %6077 = vmatprep.subr.mxu0 0.0
    %6078 = vmatpush1.msra.mxu0 %v6040
    %6079 = vmatprep.subr.mxu0 0.0
    %6080 = vmatpush1.msra.mxu0 %v6039
    %6081 = vmatprep.subr.mxu0 0.0
    %6082 = vmatpush1.msra.mxu0 %v6038
    %6083 = vmatprep.subr.mxu0 0.0
    %6084 = vmatpush1.msra.mxu0 %v6037
    %6085 = vmatprep.subr.mxu0 0.0
    %6086 = vmatpush2.msra.mxu0 0.0
    %6087 = vmatprep.subr.mxu0 0.0
    %6088 = vmatpush2.msra.mxu0 0.0
    %6089 = vmatprep.subr.mxu0 0.0
    %6090 = vmatpush2.msra.mxu0 0.0
    %6091 = vmatprep.subr.mxu0 0.0
    %6092 = vmatpush2.msra.mxu0 0.0
    %6093 = vmatprep.subr.mxu0 0.0
    %6094 = vmatpush2.msra.mxu0 0.0
    %6095 = vmatprep.subr.mxu0 0.0
    %6096 = vmatpush2.msra.mxu0 0.0
    %6097 = vmatprep.subr.mxu0 0.0
    %6098 = vmatpush2.msra.mxu0 0.0
    %6099 = vmatprep.subr.mxu0 0.0
    %6100 = vmatpush2.msra.mxu0 0.0
    %6101 = vmatprep.subr.mxu0 0.0
    %6102 = vmatpush2.msra.mxu0 0.0
    %6103 = vmatprep.subr.mxu0 0.0
    %6104 = vmatpush2.msra.mxu0 0.0
    %6105 = vmatprep.subr.mxu0 0.0
    %6106 = vmatpush2.msra.mxu0 0.0
    %6107 = vmatprep.subr.mxu0 0.0
    %6108 = vmatpush2.msra.mxu0 0.0
    %6109 = vmatprep.subr.mxu0 0.0
    %6110 = vmatpush2.msra.mxu0 0.0
    %6111 = vmatprep.subr.mxu0 0.0
    %6112 = vmatpush2.msra.mxu0 0.0
    %6113 = vmatprep.subr.mxu0 0.0
    %6114 = vmatpush2.msra.mxu0 0.0
    %6115 = vmatprep.subr.mxu0 0.0
    %6116 = vmatpush2.msra.mxu0 0.0
    %6117 = vmatprep.mubr.f32.mxu0 0.0
    %6118 = vmatmul.mubr.f32.gmra.mxu0 %v6020
    %v6119 = vpop.f32.mrf.mxu0
    %v6120 = vadd.f32 0.0, %v6119
    %v6121 = vpop.f32.mrf.mxu0
    %6122 = vmatprep.mubr.f32.mxu0 0.0
    %6123 = vmatmul.mubr.f32.gmra.mxu0 %v6021
    %v6124 = vpop.f32.mrf.mxu0
    %v6125 = vadd.f32 0.0, %v6124
    %v6126 = vpop.f32.mrf.mxu0
    %6127 = vmatprep.mubr.f32.mxu0 0.0
    %6128 = vmatmul.mubr.f32.gmra.mxu0 %v6022
    %v6129 = vpop.f32.mrf.mxu0
    %v6130 = vadd.f32 0.0, %v6129
    %v6131 = vpop.f32.mrf.mxu0
    %6132 = vmatprep.mubr.f32.mxu0 0.0
    %6133 = vmatmul.mubr.f32.gmra.mxu0 %v6023
    %v6134 = vpop.f32.mrf.mxu0
    %v6135 = vadd.f32 0.0, %v6134
    %v6136 = vpop.f32.mrf.mxu0
    %6137 = vmatprep.mubr.f32.mxu0 0.0
    %6138 = vmatmul.mubr.f32.gmra.mxu0 %v6024
    %v6139 = vpop.f32.mrf.mxu0
    %v6140 = vadd.f32 0.0, %v6139
    %v6141 = vpop.f32.mrf.mxu0
    %6142 = vmatprep.mubr.f32.mxu0 0.0
    %6143 = vmatmul.mubr.f32.gmra.mxu0 %v6025
    %v6144 = vpop.f32.mrf.mxu0
    %v6145 = vadd.f32 0.0, %v6144
    %v6146 = vpop.f32.mrf.mxu0
    %6147 = vmatprep.mubr.f32.mxu0 0.0
    %6148 = vmatmul.mubr.f32.gmra.mxu0 %v6026
    %v6149 = vpop.f32.mrf.mxu0
    %v6150 = vadd.f32 0.0, %v6149
    %v6151 = vpop.f32.mrf.mxu0
    %6152 = vmatprep.mubr.f32.mxu0 0.0
    %6153 = vmatmul.mubr.f32.gmra.mxu0 %v6027
    %v6154 = vpop.f32.mrf.mxu0
    %v6155 = vadd.f32 0.0, %v6154
    %v6156 = vpop.f32.mrf.mxu0
    %6157 = vmatprep.mubr.f32.mxu0 0.0
    %6158 = vmatmul.mubr.f32.gmra.mxu0 %v6028
    %v6159 = vpop.f32.mrf.mxu0
    %v6160 = vadd.f32 0.0, %v6159
    %v6161 = vpop.f32.mrf.mxu0
    %6162 = vmatprep.mubr.f32.mxu0 0.0
    %6163 = vmatmul.mubr.f32.gmra.mxu0 %v6029
    %v6164 = vpop.f32.mrf.mxu0
    %v6165 = vadd.f32 0.0, %v6164
    %v6166 = vpop.f32.mrf.mxu0
    %6167 = vmatprep.mubr.f32.mxu0 0.0
    %6168 = vmatmul.mubr.f32.gmra.mxu0 %v6030
    %v6169 = vpop.f32.mrf.mxu0
    %v6170 = vadd.f32 0.0, %v6169
    %v6171 = vpop.f32.mrf.mxu0
    %6172 = vmatprep.mubr.f32.mxu0 0.0
    %6173 = vmatmul.mubr.f32.gmra.mxu0 %v6031
    %v6174 = vpop.f32.mrf.mxu0
    %v6175 = vadd.f32 0.0, %v6174
    %v6176 = vpop.f32.mrf.mxu0
    %6177 = vmatprep.mubr.f32.mxu0 0.0
    %6178 = vmatmul.mubr.f32.gmra.mxu0 %v6032
    %v6179 = vpop.f32.mrf.mxu0
    %v6180 = vadd.f32 0.0, %v6179
    %v6181 = vpop.f32.mrf.mxu0
    %6182 = vmatprep.mubr.f32.mxu0 0.0
    %6183 = vmatmul.mubr.f32.gmra.mxu0 %v6033
    %v6184 = vpop.f32.mrf.mxu0
    %v6185 = vadd.f32 0.0, %v6184
    %v6186 = vpop.f32.mrf.mxu0
    %6187 = vmatprep.mubr.f32.mxu0 0.0
    %6188 = vmatmul.mubr.f32.gmra.mxu0 %v6034
    %v6189 = vpop.f32.mrf.mxu0
    %v6190 = vadd.f32 0.0, %v6189
    %v6191 = vpop.f32.mrf.mxu0
    %6192 = vmatprep.mubr.f32.mxu0 0.0
    %6193 = vmatmul.mubr.f32.gmra.mxu0 %v6035
    %v6194 = vpop.f32.mrf.mxu0
    %v6195 = vadd.f32 0.0, %v6194
    %v6196 = vpop.f32.mrf.mxu0
    %6197 = vdwg.mxu0
    %v6198 = vadd.f32 %v6004, %v6120
    %v6199 = vadd.f32 %v6005, %v6125
    %v6200 = vadd.f32 %v6006, %v6130
    %v6201 = vadd.f32 %v6007, %v6135
    %v6202 = vadd.f32 %v6008, %v6140
    %v6203 = vadd.f32 %v6009, %v6145
    %v6204 = vadd.f32 %v6010, %v6150
    %v6205 = vadd.f32 %v6011, %v6155
    %v6206 = vadd.f32 %v6012, %v6160
    %v6207 = vadd.f32 %v6013, %v6165
    %v6208 = vadd.f32 %v6014, %v6170
    %v6209 = vadd.f32 %v6015, %v6175
    %v6210 = vadd.f32 %v6016, %v6180
    %v6211 = vadd.f32 %v6017, %v6185
    %v6212 = vadd.f32 %v6018, %v6190
    %v6213 = vadd.f32 %v6019, %v6195
    %v6214 = vld [vmem:[%s1725 + $0x3] sm:$0xff]
    %v6215 = vld [vmem:[%s1725 + $0x13] sm:$0xff]
    %v6216 = vld [vmem:[%s1725 + $0x23] sm:$0xff]
    %v6217 = vld [vmem:[%s1725 + $0x33] sm:$0xff]
    %v6218 = vld [vmem:[%s1725 + $0x43] sm:$0xff]
    %v6219 = vld [vmem:[%s1725 + $0x53] sm:$0xff]
    %v6220 = vld [vmem:[%s1725 + $0x63] sm:$0xff]
    %v6221 = vld [vmem:[%s1725 + $0x73] sm:$0xff]
    %v6222 = vld [vmem:[%s1725 + $0xc3] sm:$0xff]
    %v6223 = vld [vmem:[%s1725 + $0xd3] sm:$0xff]
    %v6224 = vld [vmem:[%s1725 + $0xe3] sm:$0xff]
    %v6225 = vld [vmem:[%s1725 + $0xf3] sm:$0xff]
    %v6226 = vld [vmem:[%s1725 + $0x103] sm:$0xff]
    %v6227 = vld [vmem:[%s1725 + $0x113] sm:$0xff]
    %v6228 = vld [vmem:[%s1725 + $0x123] sm:$0xff]
    %v6229 = vld [vmem:[%s1725 + $0x133] sm:$0xff]
    %s6230 = scalar_lea.vmem %s3, 2944
    %v6231 = vld [vmem:[%s6230] sm:$0xff]
    %v6232 = vld [vmem:[%s6230 + $0x8] sm:$0xff]
    %v6233 = vld [vmem:[%s6230 + $0x10] sm:$0xff]
    %v6234 = vld [vmem:[%s6230 + $0x18] sm:$0xff]
    %v6235 = vld [vmem:[%s6230 + $0x20] sm:$0xff]
    %v6236 = vld [vmem:[%s6230 + $0x28] sm:$0xff]
    %v6237 = vld [vmem:[%s6230 + $0x30] sm:$0xff]
    %v6238 = vld [vmem:[%s6230 + $0x38] sm:$0xff]
    %v6239 = vld [vmem:[%s6230 + $0x40] sm:$0xff]
    %v6240 = vld [vmem:[%s6230 + $0x48] sm:$0xff]
    %v6241 = vld [vmem:[%s6230 + $0x50] sm:$0xff]
    %v6242 = vld [vmem:[%s6230 + $0x58] sm:$0xff]
    %v6243 = vld [vmem:[%s6230 + $0x60] sm:$0xff]
    %v6244 = vld [vmem:[%s6230 + $0x68] sm:$0xff]
    %v6245 = vld [vmem:[%s6230 + $0x70] sm:$0xff]
    %v6246 = vld [vmem:[%s6230 + $0x78] sm:$0xff]
    %6247 = vmatprep.subr.mxu0 0.0
    %6248 = vmatpush1.msra.mxu0 %v6246
    %6249 = vmatprep.subr.mxu0 0.0
    %6250 = vmatpush1.msra.mxu0 %v6245
    %6251 = vmatprep.subr.mxu0 0.0
    %6252 = vmatpush1.msra.mxu0 %v6244
    %6253 = vmatprep.subr.mxu0 0.0
    %6254 = vmatpush1.msra.mxu0 %v6243
    %6255 = vmatprep.subr.mxu0 0.0
    %6256 = vmatpush1.msra.mxu0 %v6242
    %6257 = vmatprep.subr.mxu0 0.0
    %6258 = vmatpush1.msra.mxu0 %v6241
    %6259 = vmatprep.subr.mxu0 0.0
    %6260 = vmatpush1.msra.mxu0 %v6240
    %6261 = vmatprep.subr.mxu0 0.0
    %6262 = vmatpush1.msra.mxu0 %v6239
    %6263 = vmatprep.subr.mxu0 0.0
    %6264 = vmatpush1.msra.mxu0 %v6238
    %6265 = vmatprep.subr.mxu0 0.0
    %6266 = vmatpush1.msra.mxu0 %v6237
    %6267 = vmatprep.subr.mxu0 0.0
    %6268 = vmatpush1.msra.mxu0 %v6236
    %6269 = vmatprep.subr.mxu0 0.0
    %6270 = vmatpush1.msra.mxu0 %v6235
    %6271 = vmatprep.subr.mxu0 0.0
    %6272 = vmatpush1.msra.mxu0 %v6234
    %6273 = vmatprep.subr.mxu0 0.0
    %6274 = vmatpush1.msra.mxu0 %v6233
    %6275 = vmatprep.subr.mxu0 0.0
    %6276 = vmatpush1.msra.mxu0 %v6232
    %6277 = vmatprep.subr.mxu0 0.0
    %6278 = vmatpush1.msra.mxu0 %v6231
    %6279 = vmatprep.subr.mxu0 0.0
    %6280 = vmatpush2.msra.mxu0 0.0
    %6281 = vmatprep.subr.mxu0 0.0
    %6282 = vmatpush2.msra.mxu0 0.0
    %6283 = vmatprep.subr.mxu0 0.0
    %6284 = vmatpush2.msra.mxu0 0.0
    %6285 = vmatprep.subr.mxu0 0.0
    %6286 = vmatpush2.msra.mxu0 0.0
    %6287 = vmatprep.subr.mxu0 0.0
    %6288 = vmatpush2.msra.mxu0 0.0
    %6289 = vmatprep.subr.mxu0 0.0
    %6290 = vmatpush2.msra.mxu0 0.0
    %6291 = vmatprep.subr.mxu0 0.0
    %6292 = vmatpush2.msra.mxu0 0.0
    %6293 = vmatprep.subr.mxu0 0.0
    %6294 = vmatpush2.msra.mxu0 0.0
    %6295 = vmatprep.subr.mxu0 0.0
    %6296 = vmatpush2.msra.mxu0 0.0
    %6297 = vmatprep.subr.mxu0 0.0
    %6298 = vmatpush2.msra.mxu0 0.0
    %6299 = vmatprep.subr.mxu0 0.0
    %6300 = vmatpush2.msra.mxu0 0.0
    %6301 = vmatprep.subr.mxu0 0.0
    %6302 = vmatpush2.msra.mxu0 0.0
    %6303 = vmatprep.subr.mxu0 0.0
    %6304 = vmatpush2.msra.mxu0 0.0
    %6305 = vmatprep.subr.mxu0 0.0
    %6306 = vmatpush2.msra.mxu0 0.0
    %6307 = vmatprep.subr.mxu0 0.0
    %6308 = vmatpush2.msra.mxu0 0.0
    %6309 = vmatprep.subr.mxu0 0.0
    %6310 = vmatpush2.msra.mxu0 0.0
    %6311 = vmatprep.mubr.f32.mxu0 0.0
    %6312 = vmatmul.mubr.f32.gmra.mxu0 %v6214
    %v6313 = vpop.f32.mrf.mxu0
    %v6314 = vadd.f32 0.0, %v6313
    %v6315 = vpop.f32.mrf.mxu0
    %6316 = vmatprep.mubr.f32.mxu0 0.0
    %6317 = vmatmul.mubr.f32.gmra.mxu0 %v6215
    %v6318 = vpop.f32.mrf.mxu0
    %v6319 = vadd.f32 0.0, %v6318
    %v6320 = vpop.f32.mrf.mxu0
    %6321 = vmatprep.mubr.f32.mxu0 0.0
    %6322 = vmatmul.mubr.f32.gmra.mxu0 %v6216
    %v6323 = vpop.f32.mrf.mxu0
    %v6324 = vadd.f32 0.0, %v6323
    %v6325 = vpop.f32.mrf.mxu0
    %6326 = vmatprep.mubr.f32.mxu0 0.0
    %6327 = vmatmul.mubr.f32.gmra.mxu0 %v6217
    %v6328 = vpop.f32.mrf.mxu0
    %v6329 = vadd.f32 0.0, %v6328
    %v6330 = vpop.f32.mrf.mxu0
    %6331 = vmatprep.mubr.f32.mxu0 0.0
    %6332 = vmatmul.mubr.f32.gmra.mxu0 %v6218
    %v6333 = vpop.f32.mrf.mxu0
    %v6334 = vadd.f32 0.0, %v6333
    %v6335 = vpop.f32.mrf.mxu0
    %6336 = vmatprep.mubr.f32.mxu0 0.0
    %6337 = vmatmul.mubr.f32.gmra.mxu0 %v6219
    %v6338 = vpop.f32.mrf.mxu0
    %v6339 = vadd.f32 0.0, %v6338
    %v6340 = vpop.f32.mrf.mxu0
    %6341 = vmatprep.mubr.f32.mxu0 0.0
    %6342 = vmatmul.mubr.f32.gmra.mxu0 %v6220
    %v6343 = vpop.f32.mrf.mxu0
    %v6344 = vadd.f32 0.0, %v6343
    %v6345 = vpop.f32.mrf.mxu0
    %6346 = vmatprep.mubr.f32.mxu0 0.0
    %6347 = vmatmul.mubr.f32.gmra.mxu0 %v6221
    %v6348 = vpop.f32.mrf.mxu0
    %v6349 = vadd.f32 0.0, %v6348
    %v6350 = vpop.f32.mrf.mxu0
    %6351 = vmatprep.mubr.f32.mxu0 0.0
    %6352 = vmatmul.mubr.f32.gmra.mxu0 %v6222
    %v6353 = vpop.f32.mrf.mxu0
    %v6354 = vadd.f32 0.0, %v6353
    %v6355 = vpop.f32.mrf.mxu0
    %6356 = vmatprep.mubr.f32.mxu0 0.0
    %6357 = vmatmul.mubr.f32.gmra.mxu0 %v6223
    %v6358 = vpop.f32.mrf.mxu0
    %v6359 = vadd.f32 0.0, %v6358
    %v6360 = vpop.f32.mrf.mxu0
    %6361 = vmatprep.mubr.f32.mxu0 0.0
    %6362 = vmatmul.mubr.f32.gmra.mxu0 %v6224
    %v6363 = vpop.f32.mrf.mxu0
    %v6364 = vadd.f32 0.0, %v6363
    %v6365 = vpop.f32.mrf.mxu0
    %6366 = vmatprep.mubr.f32.mxu0 0.0
    %6367 = vmatmul.mubr.f32.gmra.mxu0 %v6225
    %v6368 = vpop.f32.mrf.mxu0
    %v6369 = vadd.f32 0.0, %v6368
    %v6370 = vpop.f32.mrf.mxu0
    %6371 = vmatprep.mubr.f32.mxu0 0.0
    %6372 = vmatmul.mubr.f32.gmra.mxu0 %v6226
    %v6373 = vpop.f32.mrf.mxu0
    %v6374 = vadd.f32 0.0, %v6373
    %v6375 = vpop.f32.mrf.mxu0
    %6376 = vmatprep.mubr.f32.mxu0 0.0
    %6377 = vmatmul.mubr.f32.gmra.mxu0 %v6227
    %v6378 = vpop.f32.mrf.mxu0
    %v6379 = vadd.f32 0.0, %v6378
    %v6380 = vpop.f32.mrf.mxu0
    %6381 = vmatprep.mubr.f32.mxu0 0.0
    %6382 = vmatmul.mubr.f32.gmra.mxu0 %v6228
    %v6383 = vpop.f32.mrf.mxu0
    %v6384 = vadd.f32 0.0, %v6383
    %v6385 = vpop.f32.mrf.mxu0
    %6386 = vmatprep.mubr.f32.mxu0 0.0
    %6387 = vmatmul.mubr.f32.gmra.mxu0 %v6229
    %v6388 = vpop.f32.mrf.mxu0
    %v6389 = vadd.f32 0.0, %v6388
    %v6390 = vpop.f32.mrf.mxu0
    %6391 = vdwg.mxu0
    %v6392 = vadd.f32 %v6198, %v6314
    %v6393 = vadd.f32 %v6199, %v6319
    %v6394 = vadd.f32 %v6200, %v6324
    %v6395 = vadd.f32 %v6201, %v6329
    %v6396 = vadd.f32 %v6202, %v6334
    %v6397 = vadd.f32 %v6203, %v6339
    %v6398 = vadd.f32 %v6204, %v6344
    %v6399 = vadd.f32 %v6205, %v6349
    %v6400 = vadd.f32 %v6206, %v6354
    %v6401 = vadd.f32 %v6207, %v6359
    %v6402 = vadd.f32 %v6208, %v6364
    %v6403 = vadd.f32 %v6209, %v6369
    %v6404 = vadd.f32 %v6210, %v6374
    %v6405 = vadd.f32 %v6211, %v6379
    %v6406 = vadd.f32 %v6212, %v6384
    %v6407 = vadd.f32 %v6213, %v6389
    %v6408 = vld [vmem:[%s1725 + $0x4] sm:$0xff]
    %v6409 = vld [vmem:[%s1725 + $0x14] sm:$0xff]
    %v6410 = vld [vmem:[%s1725 + $0x24] sm:$0xff]
    %v6411 = vld [vmem:[%s1725 + $0x34] sm:$0xff]
    %v6412 = vld [vmem:[%s1725 + $0x44] sm:$0xff]
    %v6413 = vld [vmem:[%s1725 + $0x54] sm:$0xff]
    %v6414 = vld [vmem:[%s1725 + $0x64] sm:$0xff]
    %v6415 = vld [vmem:[%s1725 + $0x74] sm:$0xff]
    %v6416 = vld [vmem:[%s1725 + $0xc4] sm:$0xff]
    %v6417 = vld [vmem:[%s1725 + $0xd4] sm:$0xff]
    %v6418 = vld [vmem:[%s1725 + $0xe4] sm:$0xff]
    %v6419 = vld [vmem:[%s1725 + $0xf4] sm:$0xff]
    %v6420 = vld [vmem:[%s1725 + $0x104] sm:$0xff]
    %v6421 = vld [vmem:[%s1725 + $0x114] sm:$0xff]
    %v6422 = vld [vmem:[%s1725 + $0x124] sm:$0xff]
    %v6423 = vld [vmem:[%s1725 + $0x134] sm:$0xff]
    %s6424 = scalar_lea.vmem %s3, 3072
    %v6425 = vld [vmem:[%s6424] sm:$0xff]
    %v6426 = vld [vmem:[%s6424 + $0x8] sm:$0xff]
    %v6427 = vld [vmem:[%s6424 + $0x10] sm:$0xff]
    %v6428 = vld [vmem:[%s6424 + $0x18] sm:$0xff]
    %v6429 = vld [vmem:[%s6424 + $0x20] sm:$0xff]
    %v6430 = vld [vmem:[%s6424 + $0x28] sm:$0xff]
    %v6431 = vld [vmem:[%s6424 + $0x30] sm:$0xff]
    %v6432 = vld [vmem:[%s6424 + $0x38] sm:$0xff]
    %v6433 = vld [vmem:[%s6424 + $0x40] sm:$0xff]
    %v6434 = vld [vmem:[%s6424 + $0x48] sm:$0xff]
    %v6435 = vld [vmem:[%s6424 + $0x50] sm:$0xff]
    %v6436 = vld [vmem:[%s6424 + $0x58] sm:$0xff]
    %v6437 = vld [vmem:[%s6424 + $0x60] sm:$0xff]
    %v6438 = vld [vmem:[%s6424 + $0x68] sm:$0xff]
    %v6439 = vld [vmem:[%s6424 + $0x70] sm:$0xff]
    %v6440 = vld [vmem:[%s6424 + $0x78] sm:$0xff]
    %6441 = vmatprep.subr.mxu0 0.0
    %6442 = vmatpush1.msra.mxu0 %v6440
    %6443 = vmatprep.subr.mxu0 0.0
    %6444 = vmatpush1.msra.mxu0 %v6439
    %6445 = vmatprep.subr.mxu0 0.0
    %6446 = vmatpush1.msra.mxu0 %v6438
    %6447 = vmatprep.subr.mxu0 0.0
    %6448 = vmatpush1.msra.mxu0 %v6437
    %6449 = vmatprep.subr.mxu0 0.0
    %6450 = vmatpush1.msra.mxu0 %v6436
    %6451 = vmatprep.subr.mxu0 0.0
    %6452 = vmatpush1.msra.mxu0 %v6435
    %6453 = vmatprep.subr.mxu0 0.0
    %6454 = vmatpush1.msra.mxu0 %v6434
    %6455 = vmatprep.subr.mxu0 0.0
    %6456 = vmatpush1.msra.mxu0 %v6433
    %6457 = vmatprep.subr.mxu0 0.0
    %6458 = vmatpush1.msra.mxu0 %v6432
    %6459 = vmatprep.subr.mxu0 0.0
    %6460 = vmatpush1.msra.mxu0 %v6431
    %6461 = vmatprep.subr.mxu0 0.0
    %6462 = vmatpush1.msra.mxu0 %v6430
    %6463 = vmatprep.subr.mxu0 0.0
    %6464 = vmatpush1.msra.mxu0 %v6429
    %6465 = vmatprep.subr.mxu0 0.0
    %6466 = vmatpush1.msra.mxu0 %v6428
    %6467 = vmatprep.subr.mxu0 0.0
    %6468 = vmatpush1.msra.mxu0 %v6427
    %6469 = vmatprep.subr.mxu0 0.0
    %6470 = vmatpush1.msra.mxu0 %v6426
    %6471 = vmatprep.subr.mxu0 0.0
    %6472 = vmatpush1.msra.mxu0 %v6425
    %6473 = vmatprep.subr.mxu0 0.0
    %6474 = vmatpush2.msra.mxu0 0.0
    %6475 = vmatprep.subr.mxu0 0.0
    %6476 = vmatpush2.msra.mxu0 0.0
    %6477 = vmatprep.subr.mxu0 0.0
    %6478 = vmatpush2.msra.mxu0 0.0
    %6479 = vmatprep.subr.mxu0 0.0
    %6480 = vmatpush2.msra.mxu0 0.0
    %6481 = vmatprep.subr.mxu0 0.0
    %6482 = vmatpush2.msra.mxu0 0.0
    %6483 = vmatprep.subr.mxu0 0.0
    %6484 = vmatpush2.msra.mxu0 0.0
    %6485 = vmatprep.subr.mxu0 0.0
    %6486 = vmatpush2.msra.mxu0 0.0
    %6487 = vmatprep.subr.mxu0 0.0
    %6488 = vmatpush2.msra.mxu0 0.0
    %6489 = vmatprep.subr.mxu0 0.0
    %6490 = vmatpush2.msra.mxu0 0.0
    %6491 = vmatprep.subr.mxu0 0.0
    %6492 = vmatpush2.msra.mxu0 0.0
    %6493 = vmatprep.subr.mxu0 0.0
    %6494 = vmatpush2.msra.mxu0 0.0
    %6495 = vmatprep.subr.mxu0 0.0
    %6496 = vmatpush2.msra.mxu0 0.0
    %6497 = vmatprep.subr.mxu0 0.0
    %6498 = vmatpush2.msra.mxu0 0.0
    %6499 = vmatprep.subr.mxu0 0.0
    %6500 = vmatpush2.msra.mxu0 0.0
    %6501 = vmatprep.subr.mxu0 0.0
    %6502 = vmatpush2.msra.mxu0 0.0
    %6503 = vmatprep.subr.mxu0 0.0
    %6504 = vmatpush2.msra.mxu0 0.0
    %6505 = vmatprep.mubr.f32.mxu0 0.0
    %6506 = vmatmul.mubr.f32.gmra.mxu0 %v6408
    %v6507 = vpop.f32.mrf.mxu0
    %v6508 = vadd.f32 0.0, %v6507
    %v6509 = vpop.f32.mrf.mxu0
    %6510 = vmatprep.mubr.f32.mxu0 0.0
    %6511 = vmatmul.mubr.f32.gmra.mxu0 %v6409
    %v6512 = vpop.f32.mrf.mxu0
    %v6513 = vadd.f32 0.0, %v6512
    %v6514 = vpop.f32.mrf.mxu0
    %6515 = vmatprep.mubr.f32.mxu0 0.0
    %6516 = vmatmul.mubr.f32.gmra.mxu0 %v6410
    %v6517 = vpop.f32.mrf.mxu0
    %v6518 = vadd.f32 0.0, %v6517
    %v6519 = vpop.f32.mrf.mxu0
    %6520 = vmatprep.mubr.f32.mxu0 0.0
    %6521 = vmatmul.mubr.f32.gmra.mxu0 %v6411
    %v6522 = vpop.f32.mrf.mxu0
    %v6523 = vadd.f32 0.0, %v6522
    %v6524 = vpop.f32.mrf.mxu0
    %6525 = vmatprep.mubr.f32.mxu0 0.0
    %6526 = vmatmul.mubr.f32.gmra.mxu0 %v6412
    %v6527 = vpop.f32.mrf.mxu0
    %v6528 = vadd.f32 0.0, %v6527
    %v6529 = vpop.f32.mrf.mxu0
    %6530 = vmatprep.mubr.f32.mxu0 0.0
    %6531 = vmatmul.mubr.f32.gmra.mxu0 %v6413
    %v6532 = vpop.f32.mrf.mxu0
    %v6533 = vadd.f32 0.0, %v6532
    %v6534 = vpop.f32.mrf.mxu0
    %6535 = vmatprep.mubr.f32.mxu0 0.0
    %6536 = vmatmul.mubr.f32.gmra.mxu0 %v6414
    %v6537 = vpop.f32.mrf.mxu0
    %v6538 = vadd.f32 0.0, %v6537
    %v6539 = vpop.f32.mrf.mxu0
    %6540 = vmatprep.mubr.f32.mxu0 0.0
    %6541 = vmatmul.mubr.f32.gmra.mxu0 %v6415
    %v6542 = vpop.f32.mrf.mxu0
    %v6543 = vadd.f32 0.0, %v6542
    %v6544 = vpop.f32.mrf.mxu0
    %6545 = vmatprep.mubr.f32.mxu0 0.0
    %6546 = vmatmul.mubr.f32.gmra.mxu0 %v6416
    %v6547 = vpop.f32.mrf.mxu0
    %v6548 = vadd.f32 0.0, %v6547
    %v6549 = vpop.f32.mrf.mxu0
    %6550 = vmatprep.mubr.f32.mxu0 0.0
    %6551 = vmatmul.mubr.f32.gmra.mxu0 %v6417
    %v6552 = vpop.f32.mrf.mxu0
    %v6553 = vadd.f32 0.0, %v6552
    %v6554 = vpop.f32.mrf.mxu0
    %6555 = vmatprep.mubr.f32.mxu0 0.0
    %6556 = vmatmul.mubr.f32.gmra.mxu0 %v6418
    %v6557 = vpop.f32.mrf.mxu0
    %v6558 = vadd.f32 0.0, %v6557
    %v6559 = vpop.f32.mrf.mxu0
    %6560 = vmatprep.mubr.f32.mxu0 0.0
    %6561 = vmatmul.mubr.f32.gmra.mxu0 %v6419
    %v6562 = vpop.f32.mrf.mxu0
    %v6563 = vadd.f32 0.0, %v6562
    %v6564 = vpop.f32.mrf.mxu0
    %6565 = vmatprep.mubr.f32.mxu0 0.0
    %6566 = vmatmul.mubr.f32.gmra.mxu0 %v6420
    %v6567 = vpop.f32.mrf.mxu0
    %v6568 = vadd.f32 0.0, %v6567
    %v6569 = vpop.f32.mrf.mxu0
    %6570 = vmatprep.mubr.f32.mxu0 0.0
    %6571 = vmatmul.mubr.f32.gmra.mxu0 %v6421
    %v6572 = vpop.f32.mrf.mxu0
    %v6573 = vadd.f32 0.0, %v6572
    %v6574 = vpop.f32.mrf.mxu0
    %6575 = vmatprep.mubr.f32.mxu0 0.0
    %6576 = vmatmul.mubr.f32.gmra.mxu0 %v6422
    %v6577 = vpop.f32.mrf.mxu0
    %v6578 = vadd.f32 0.0, %v6577
    %v6579 = vpop.f32.mrf.mxu0
    %6580 = vmatprep.mubr.f32.mxu0 0.0
    %6581 = vmatmul.mubr.f32.gmra.mxu0 %v6423
    %v6582 = vpop.f32.mrf.mxu0
    %v6583 = vadd.f32 0.0, %v6582
    %v6584 = vpop.f32.mrf.mxu0
    %6585 = vdwg.mxu0
    %v6586 = vadd.f32 %v6392, %v6508
    %v6587 = vadd.f32 %v6393, %v6513
    %v6588 = vadd.f32 %v6394, %v6518
    %v6589 = vadd.f32 %v6395, %v6523
    %v6590 = vadd.f32 %v6396, %v6528
    %v6591 = vadd.f32 %v6397, %v6533
    %v6592 = vadd.f32 %v6398, %v6538
    %v6593 = vadd.f32 %v6399, %v6543
    %v6594 = vadd.f32 %v6400, %v6548
    %v6595 = vadd.f32 %v6401, %v6553
    %v6596 = vadd.f32 %v6402, %v6558
    %v6597 = vadd.f32 %v6403, %v6563
    %v6598 = vadd.f32 %v6404, %v6568
    %v6599 = vadd.f32 %v6405, %v6573
    %v6600 = vadd.f32 %v6406, %v6578
    %v6601 = vadd.f32 %v6407, %v6583
    %v6602 = vld [vmem:[%s4] sm:$0x1]
    %v6604 = vlaneseq
    %v6605 = vshrl.u32 %v6604, 7
    %v6606 = vsub.s32 0, %v6605
    %v6607 = vrot.slane %v6602, %v6606
    %v6609 = vadd.f32 %v6586, %v6607
    %v6610 = vadd.f32 %v6587, %v6607
    %v6611 = vadd.f32 %v6588, %v6607
    %v6612 = vadd.f32 %v6589, %v6607
    %v6613 = vadd.f32 %v6590, %v6607
    %v6614 = vadd.f32 %v6591, %v6607
    %v6615 = vadd.f32 %v6592, %v6607
    %v6616 = vadd.f32 %v6593, %v6607
    %v6617 = vadd.f32 %v6594, %v6607
    %v6618 = vadd.f32 %v6595, %v6607
    %v6619 = vadd.f32 %v6596, %v6607
    %v6620 = vadd.f32 %v6597, %v6607
    %v6621 = vadd.f32 %v6598, %v6607
    %v6622 = vadd.f32 %v6599, %v6607
    %v6623 = vadd.f32 %v6600, %v6607
    %v6624 = vadd.f32 %v6601, %v6607
    %v6625 = vmax.f32 %v6609, 0.0
    %v6626 = vmax.f32 %v6610, 0.0
    %v6627 = vmax.f32 %v6611, 0.0
    %v6628 = vmax.f32 %v6612, 0.0
    %v6629 = vmax.f32 %v6613, 0.0
    %v6630 = vmax.f32 %v6614, 0.0
    %v6631 = vmax.f32 %v6615, 0.0
    %v6632 = vmax.f32 %v6616, 0.0
    %v6633 = vmax.f32 %v6617, 0.0
    %v6634 = vmax.f32 %v6618, 0.0
    %v6635 = vmax.f32 %v6619, 0.0
    %v6636 = vmax.f32 %v6620, 0.0
    %v6637 = vmax.f32 %v6621, 0.0
    %v6638 = vmax.f32 %v6622, 0.0
    %v6639 = vmax.f32 %v6623, 0.0
    %v6640 = vmax.f32 %v6624, 0.0
    %6641 = vst [vmem:[#allocation3] sm:$0xff] %v6625
    %s6642 = scalar_lea.vmem [#allocation3], 8
    %6643 = vst [vmem:[%s6642] sm:$0xff] %v6626
    %s6644 = scalar_lea.vmem [#allocation3], 16
    %6645 = vst [vmem:[%s6644] sm:$0xff] %v6627
    %s6646 = scalar_lea.vmem [#allocation3], 24
    %6647 = vst [vmem:[%s6646] sm:$0xff] %v6628
    %s6648 = scalar_lea.vmem [#allocation3], 32
    %6649 = vst [vmem:[%s6648] sm:$0xff] %v6629
    %s6650 = scalar_lea.vmem [#allocation3], 40
    %6651 = vst [vmem:[%s6650] sm:$0xff] %v6630
    %s6652 = scalar_lea.vmem [#allocation3], 48
    %6653 = vst [vmem:[%s6652] sm:$0xff] %v6631
    %s6654 = scalar_lea.vmem [#allocation3], 56
    %6655 = vst [vmem:[%s6654] sm:$0xff] %v6632
    %s6656 = scalar_lea.vmem [#allocation3], 64
    %6657 = vst [vmem:[%s6656] sm:$0xff] %v6633
    %s6658 = scalar_lea.vmem [#allocation3], 72
    %6659 = vst [vmem:[%s6658] sm:$0xff] %v6634
    %s6660 = scalar_lea.vmem [#allocation3], 80
    %6661 = vst [vmem:[%s6660] sm:$0xff] %v6635
    %s6662 = scalar_lea.vmem [#allocation3], 88
    %6663 = vst [vmem:[%s6662] sm:$0xff] %v6636
    %s6664 = scalar_lea.vmem [#allocation3], 96
    %6665 = vst [vmem:[%s6664] sm:$0xff] %v6637
    %s6666 = scalar_lea.vmem [#allocation3], 104
    %6667 = vst [vmem:[%s6666] sm:$0xff] %v6638
    %s6668 = scalar_lea.vmem [#allocation3], 112
    %6669 = vst [vmem:[%s6668] sm:$0xff] %v6639
    %s6670 = scalar_lea.vmem [#allocation3], 120
    %6671 = vst [vmem:[%s6670] sm:$0xff] %v6640
    %v6672 = vld [vmem:[#allocation3] sm:$0xff]
    %v6673 = vld [vmem:[#allocation3 + $0x40] sm:$0xff]
    %v6674 = vld [vmem:[%s6642] sm:$0xff]
    %v6675 = vld [vmem:[%s6642 + $0x40] sm:$0xff]
    %v6676 = vmax.f32 %v6672, %v6674
    %v6677 = vmax.f32 %v6673, %v6675
    %v6680 = vrot.slane %v6676, 1
    %v6681 = vrot.slane %v6677, 1
    %v6684 = vmax.f32 %v6676, %v6680
    %v6685 = vmax.f32 %v6677, %v6681
    %v6686 = vld [vmem:[%s5] sm:$0xff]
    %v6687 = vld [vmem:[%s5 + $0x8] sm:$0xff]
    %v6688 = vld [vmem:[%s5 + $0x10] sm:$0xff]
    %v6689 = vld [vmem:[%s5 + $0x18] sm:$0xff]
    %v6690 = vld [vmem:[%s5 + $0x20] sm:$0xff]
    %v6691 = vld [vmem:[%s5 + $0x28] sm:$0xff]
    %v6692 = vld [vmem:[%s5 + $0x30] sm:$0xff]
    %v6693 = vld [vmem:[%s5 + $0x38] sm:$0xff]
    %v6694 = vld [vmem:[%s5 + $0x40] sm:$0xff]
    %v6695 = vld [vmem:[%s5 + $0x48] sm:$0xff]
    %v6696 = vld [vmem:[%s5 + $0x50] sm:$0xff]
    %v6697 = vld [vmem:[%s5 + $0x58] sm:$0xff]
    %v6698 = vld [vmem:[%s5 + $0x60] sm:$0xff]
    %v6699 = vld [vmem:[%s5 + $0x68] sm:$0xff]
    %v6700 = vld [vmem:[%s5 + $0x70] sm:$0xff]
    %v6701 = vld [vmem:[%s5 + $0x78] sm:$0xff]
    %s6702 = scalar_lea.vmem %s5, 128
    %v6703 = vld [vmem:[%s6702] sm:$0xff]
    %v6704 = vld [vmem:[%s6702 + $0x8] sm:$0xff]
    %v6705 = vld [vmem:[%s6702 + $0x10] sm:$0xff]
    %v6706 = vld [vmem:[%s6702 + $0x18] sm:$0xff]
    %v6707 = vld [vmem:[%s6702 + $0x20] sm:$0xff]
    %v6708 = vld [vmem:[%s6702 + $0x28] sm:$0xff]
    %v6709 = vld [vmem:[%s6702 + $0x30] sm:$0xff]
    %v6710 = vld [vmem:[%s6702 + $0x38] sm:$0xff]
    %v6711 = vld [vmem:[%s6702 + $0x40] sm:$0xff]
    %v6712 = vld [vmem:[%s6702 + $0x48] sm:$0xff]
    %v6713 = vld [vmem:[%s6702 + $0x50] sm:$0xff]
    %v6714 = vld [vmem:[%s6702 + $0x58] sm:$0xff]
    %v6715 = vld [vmem:[%s6702 + $0x60] sm:$0xff]
    %v6716 = vld [vmem:[%s6702 + $0x68] sm:$0xff]
    %v6717 = vld [vmem:[%s6702 + $0x70] sm:$0xff]
    %v6718 = vld [vmem:[%s6702 + $0x78] sm:$0xff]
    %v6721 = vrot.slane %v6684, 2
    %v6722 = vrot.slane %v6685, 1
    %vm6723 = vcmask 1041409
    %v6724 = vsel %vm6723, %v6722, %v6721
    %6726 = vmatprep.subr.mxu0 0.0
    %6727 = vmatpush1.msra.mxu0 %v6718
    %6728 = vmatprep.subr.mxu0 0.0
    %6729 = vmatpush1.msra.mxu0 %v6717
    %6730 = vmatprep.subr.mxu0 0.0
    %6731 = vmatpush1.msra.mxu0 %v6716
    %6732 = vmatprep.subr.mxu0 0.0
    %6733 = vmatpush1.msra.mxu0 %v6715
    %6734 = vmatprep.subr.mxu0 0.0
    %6735 = vmatpush1.msra.mxu0 %v6714
    %6736 = vmatprep.subr.mxu0 0.0
    %6737 = vmatpush1.msra.mxu0 %v6713
    %6738 = vmatprep.subr.mxu0 0.0
    %6739 = vmatpush1.msra.mxu0 %v6712
    %6740 = vmatprep.subr.mxu0 0.0
    %6741 = vmatpush1.msra.mxu0 %v6711
    %6742 = vmatprep.subr.mxu0 0.0
    %6743 = vmatpush1.msra.mxu0 %v6710
    %6744 = vmatprep.subr.mxu0 0.0
    %6745 = vmatpush1.msra.mxu0 %v6709
    %6746 = vmatprep.subr.mxu0 0.0
    %6747 = vmatpush1.msra.mxu0 %v6708
    %6748 = vmatprep.subr.mxu0 0.0
    %6749 = vmatpush1.msra.mxu0 %v6707
    %6750 = vmatprep.subr.mxu0 0.0
    %6751 = vmatpush1.msra.mxu0 %v6706
    %6752 = vmatprep.subr.mxu0 0.0
    %6753 = vmatpush1.msra.mxu0 %v6705
    %6754 = vmatprep.subr.mxu0 0.0
    %6755 = vmatpush1.msra.mxu0 %v6704
    %6756 = vmatprep.subr.mxu0 0.0
    %6757 = vmatpush1.msra.mxu0 %v6703
    %6758 = vmatprep.subr.mxu0 0.0
    %6759 = vmatpush2.msra.mxu0 0.0
    %6760 = vmatprep.subr.mxu0 0.0
    %6761 = vmatpush2.msra.mxu0 0.0
    %6762 = vmatprep.subr.mxu0 0.0
    %6763 = vmatpush2.msra.mxu0 0.0
    %6764 = vmatprep.subr.mxu0 0.0
    %6765 = vmatpush2.msra.mxu0 0.0
    %6766 = vmatprep.subr.mxu0 0.0
    %6767 = vmatpush2.msra.mxu0 0.0
    %6768 = vmatprep.subr.mxu0 0.0
    %6769 = vmatpush2.msra.mxu0 0.0
    %6770 = vmatprep.subr.mxu0 0.0
    %6771 = vmatpush2.msra.mxu0 0.0
    %6772 = vmatprep.subr.mxu0 0.0
    %6773 = vmatpush2.msra.mxu0 0.0
    %6774 = vmatprep.subr.mxu0 0.0
    %6775 = vmatpush2.msra.mxu0 0.0
    %6776 = vmatprep.subr.mxu0 0.0
    %6777 = vmatpush2.msra.mxu0 0.0
    %6778 = vmatprep.subr.mxu0 0.0
    %6779 = vmatpush2.msra.mxu0 0.0
    %6780 = vmatprep.subr.mxu0 0.0
    %6781 = vmatpush2.msra.mxu0 0.0
    %6782 = vmatprep.subr.mxu0 0.0
    %6783 = vmatpush2.msra.mxu0 0.0
    %6784 = vmatprep.subr.mxu0 0.0
    %6785 = vmatpush2.msra.mxu0 0.0
    %6786 = vmatprep.subr.mxu0 0.0
    %6787 = vmatpush2.msra.mxu0 0.0
    %6788 = vmatprep.subr.mxu0 0.0
    %6789 = vmatpush2.msra.mxu0 0.0
    %6790 = vmatprep.mubr.f32.mxu0 0.0
    %6791 = vmatmul.mubr.f32.gmra.mxu0 %v6724
    %v6792 = vpop.f32.mrf.mxu0
    %v6793 = vadd.f32 0.0, %v6792
    %v6794 = vpop.f32.mrf.mxu0
    %6795 = vdwg.mxu0
    %v6796 = vrot.slane %v6685, 7
    %v6797 = vsel %vm6723, %v6796, %v6684
    %6799 = vmatprep.subr.mxu0 0.0
    %6800 = vmatpush1.msra.mxu0 %v6701
    %6801 = vmatprep.subr.mxu0 0.0
    %6802 = vmatpush1.msra.mxu0 %v6700
    %6803 = vmatprep.subr.mxu0 0.0
    %6804 = vmatpush1.msra.mxu0 %v6699
    %6805 = vmatprep.subr.mxu0 0.0
    %6806 = vmatpush1.msra.mxu0 %v6698
    %6807 = vmatprep.subr.mxu0 0.0
    %6808 = vmatpush1.msra.mxu0 %v6697
    %6809 = vmatprep.subr.mxu0 0.0
    %6810 = vmatpush1.msra.mxu0 %v6696
    %6811 = vmatprep.subr.mxu0 0.0
    %6812 = vmatpush1.msra.mxu0 %v6695
    %6813 = vmatprep.subr.mxu0 0.0
    %6814 = vmatpush1.msra.mxu0 %v6694
    %6815 = vmatprep.subr.mxu0 0.0
    %6816 = vmatpush1.msra.mxu0 %v6693
    %6817 = vmatprep.subr.mxu0 0.0
    %6818 = vmatpush1.msra.mxu0 %v6692
    %6819 = vmatprep.subr.mxu0 0.0
    %6820 = vmatpush1.msra.mxu0 %v6691
    %6821 = vmatprep.subr.mxu0 0.0
    %6822 = vmatpush1.msra.mxu0 %v6690
    %6823 = vmatprep.subr.mxu0 0.0
    %6824 = vmatpush1.msra.mxu0 %v6689
    %6825 = vmatprep.subr.mxu0 0.0
    %6826 = vmatpush1.msra.mxu0 %v6688
    %6827 = vmatprep.subr.mxu0 0.0
    %6828 = vmatpush1.msra.mxu0 %v6687
    %6829 = vmatprep.subr.mxu0 0.0
    %6830 = vmatpush1.msra.mxu0 %v6686
    %6831 = vmatprep.subr.mxu0 0.0
    %6832 = vmatpush2.msra.mxu0 0.0
    %6833 = vmatprep.subr.mxu0 0.0
    %6834 = vmatpush2.msra.mxu0 0.0
    %6835 = vmatprep.subr.mxu0 0.0
    %6836 = vmatpush2.msra.mxu0 0.0
    %6837 = vmatprep.subr.mxu0 0.0
    %6838 = vmatpush2.msra.mxu0 0.0
    %6839 = vmatprep.subr.mxu0 0.0
    %6840 = vmatpush2.msra.mxu0 0.0
    %6841 = vmatprep.subr.mxu0 0.0
    %6842 = vmatpush2.msra.mxu0 0.0
    %6843 = vmatprep.subr.mxu0 0.0
    %6844 = vmatpush2.msra.mxu0 0.0
    %6845 = vmatprep.subr.mxu0 0.0
    %6846 = vmatpush2.msra.mxu0 0.0
    %6847 = vmatprep.subr.mxu0 0.0
    %6848 = vmatpush2.msra.mxu0 0.0
    %6849 = vmatprep.subr.mxu0 0.0
    %6850 = vmatpush2.msra.mxu0 0.0
    %6851 = vmatprep.subr.mxu0 0.0
    %6852 = vmatpush2.msra.mxu0 0.0
    %6853 = vmatprep.subr.mxu0 0.0
    %6854 = vmatpush2.msra.mxu0 0.0
    %6855 = vmatprep.subr.mxu0 0.0
    %6856 = vmatpush2.msra.mxu0 0.0
    %6857 = vmatprep.subr.mxu0 0.0
    %6858 = vmatpush2.msra.mxu0 0.0
    %6859 = vmatprep.subr.mxu0 0.0
    %6860 = vmatpush2.msra.mxu0 0.0
    %6861 = vmatprep.subr.mxu0 0.0
    %6862 = vmatpush2.msra.mxu0 0.0
    %6863 = vmatprep.mubr.f32.mxu0 0.0
    %6864 = vmatmul.mubr.f32.gmra.mxu0 %v6797
    %v6865 = vpop.f32.mrf.mxu0
    %v6866 = vadd.f32 %v6793, %v6865
    %v6867 = vpop.f32.mrf.mxu0
    %6868 = vdwg.mxu0
    %s6869 = scalar_lea.vmem %s5, 256
    %v6870 = vld [vmem:[%s6869] sm:$0xff]
    %v6871 = vld [vmem:[%s6869 + $0x8] sm:$0xff]
    %v6872 = vld [vmem:[%s6869 + $0x10] sm:$0xff]
    %v6873 = vld [vmem:[%s6869 + $0x18] sm:$0xff]
    %v6874 = vld [vmem:[%s6869 + $0x20] sm:$0xff]
    %v6875 = vld [vmem:[%s6869 + $0x28] sm:$0xff]
    %v6876 = vld [vmem:[%s6869 + $0x30] sm:$0xff]
    %v6877 = vld [vmem:[%s6869 + $0x38] sm:$0xff]
    %v6878 = vld [vmem:[%s6869 + $0x40] sm:$0xff]
    %v6879 = vld [vmem:[%s6869 + $0x48] sm:$0xff]
    %v6880 = vld [vmem:[%s6869 + $0x50] sm:$0xff]
    %v6881 = vld [vmem:[%s6869 + $0x58] sm:$0xff]
    %v6882 = vld [vmem:[%s6869 + $0x60] sm:$0xff]
    %v6883 = vld [vmem:[%s6869 + $0x68] sm:$0xff]
    %v6884 = vld [vmem:[%s6869 + $0x70] sm:$0xff]
    %v6885 = vld [vmem:[%s6869 + $0x78] sm:$0xff]
    %v6886 = vrot.slane %v6684, 4
    %v6887 = vrot.slane %v6685, 3
    %v6888 = vsel %vm6723, %v6887, %v6886
    %6890 = vmatprep.subr.mxu0 0.0
    %6891 = vmatpush1.msra.mxu0 %v6885
    %6892 = vmatprep.subr.mxu0 0.0
    %6893 = vmatpush1.msra.mxu0 %v6884
    %6894 = vmatprep.subr.mxu0 0.0
    %6895 = vmatpush1.msra.mxu0 %v6883
    %6896 = vmatprep.subr.mxu0 0.0
    %6897 = vmatpush1.msra.mxu0 %v6882
    %6898 = vmatprep.subr.mxu0 0.0
    %6899 = vmatpush1.msra.mxu0 %v6881
    %6900 = vmatprep.subr.mxu0 0.0
    %6901 = vmatpush1.msra.mxu0 %v6880
    %6902 = vmatprep.subr.mxu0 0.0
    %6903 = vmatpush1.msra.mxu0 %v6879
    %6904 = vmatprep.subr.mxu0 0.0
    %6905 = vmatpush1.msra.mxu0 %v6878
    %6906 = vmatprep.subr.mxu0 0.0
    %6907 = vmatpush1.msra.mxu0 %v6877
    %6908 = vmatprep.subr.mxu0 0.0
    %6909 = vmatpush1.msra.mxu0 %v6876
    %6910 = vmatprep.subr.mxu0 0.0
    %6911 = vmatpush1.msra.mxu0 %v6875
    %6912 = vmatprep.subr.mxu0 0.0
    %6913 = vmatpush1.msra.mxu0 %v6874
    %6914 = vmatprep.subr.mxu0 0.0
    %6915 = vmatpush1.msra.mxu0 %v6873
    %6916 = vmatprep.subr.mxu0 0.0
    %6917 = vmatpush1.msra.mxu0 %v6872
    %6918 = vmatprep.subr.mxu0 0.0
    %6919 = vmatpush1.msra.mxu0 %v6871
    %6920 = vmatprep.subr.mxu0 0.0
    %6921 = vmatpush1.msra.mxu0 %v6870
    %6922 = vmatprep.subr.mxu0 0.0
    %6923 = vmatpush2.msra.mxu0 0.0
    %6924 = vmatprep.subr.mxu0 0.0
    %6925 = vmatpush2.msra.mxu0 0.0
    %6926 = vmatprep.subr.mxu0 0.0
    %6927 = vmatpush2.msra.mxu0 0.0
    %6928 = vmatprep.subr.mxu0 0.0
    %6929 = vmatpush2.msra.mxu0 0.0
    %6930 = vmatprep.subr.mxu0 0.0
    %6931 = vmatpush2.msra.mxu0 0.0
    %6932 = vmatprep.subr.mxu0 0.0
    %6933 = vmatpush2.msra.mxu0 0.0
    %6934 = vmatprep.subr.mxu0 0.0
    %6935 = vmatpush2.msra.mxu0 0.0
    %6936 = vmatprep.subr.mxu0 0.0
    %6937 = vmatpush2.msra.mxu0 0.0
    %6938 = vmatprep.subr.mxu0 0.0
    %6939 = vmatpush2.msra.mxu0 0.0
    %6940 = vmatprep.subr.mxu0 0.0
    %6941 = vmatpush2.msra.mxu0 0.0
    %6942 = vmatprep.subr.mxu0 0.0
    %6943 = vmatpush2.msra.mxu0 0.0
    %6944 = vmatprep.subr.mxu0 0.0
    %6945 = vmatpush2.msra.mxu0 0.0
    %6946 = vmatprep.subr.mxu0 0.0
    %6947 = vmatpush2.msra.mxu0 0.0
    %6948 = vmatprep.subr.mxu0 0.0
    %6949 = vmatpush2.msra.mxu0 0.0
    %6950 = vmatprep.subr.mxu0 0.0
    %6951 = vmatpush2.msra.mxu0 0.0
    %6952 = vmatprep.subr.mxu0 0.0
    %6953 = vmatpush2.msra.mxu0 0.0
    %6954 = vmatprep.mubr.f32.mxu0 0.0
    %6955 = vmatmul.mubr.f32.gmra.mxu0 %v6888
    %v6956 = vpop.f32.mrf.mxu0
    %v6957 = vadd.f32 0.0, %v6956
    %v6958 = vpop.f32.mrf.mxu0
    %6959 = vdwg.mxu0
    %v6960 = vadd.f32 %v6866, %v6957
    %s6961 = scalar_lea.vmem %s5, 384
    %v6962 = vld [vmem:[%s6961] sm:$0xff]
    %v6963 = vld [vmem:[%s6961 + $0x8] sm:$0xff]
    %v6964 = vld [vmem:[%s6961 + $0x10] sm:$0xff]
    %v6965 = vld [vmem:[%s6961 + $0x18] sm:$0xff]
    %v6966 = vld [vmem:[%s6961 + $0x20] sm:$0xff]
    %v6967 = vld [vmem:[%s6961 + $0x28] sm:$0xff]
    %v6968 = vld [vmem:[%s6961 + $0x30] sm:$0xff]
    %v6969 = vld [vmem:[%s6961 + $0x38] sm:$0xff]
    %v6970 = vld [vmem:[%s6961 + $0x40] sm:$0xff]
    %v6971 = vld [vmem:[%s6961 + $0x48] sm:$0xff]
    %v6972 = vld [vmem:[%s6961 + $0x50] sm:$0xff]
    %v6973 = vld [vmem:[%s6961 + $0x58] sm:$0xff]
    %v6974 = vld [vmem:[%s6961 + $0x60] sm:$0xff]
    %v6975 = vld [vmem:[%s6961 + $0x68] sm:$0xff]
    %v6976 = vld [vmem:[%s6961 + $0x70] sm:$0xff]
    %v6977 = vld [vmem:[%s6961 + $0x78] sm:$0xff]
    %v6978 = vrot.slane %v6684, 6
    %v6979 = vrot.slane %v6685, 5
    %v6980 = vsel %vm6723, %v6979, %v6978
    %6982 = vmatprep.subr.mxu0 0.0
    %6983 = vmatpush1.msra.mxu0 %v6977
    %6984 = vmatprep.subr.mxu0 0.0
    %6985 = vmatpush1.msra.mxu0 %v6976
    %6986 = vmatprep.subr.mxu0 0.0
    %6987 = vmatpush1.msra.mxu0 %v6975
    %6988 = vmatprep.subr.mxu0 0.0
    %6989 = vmatpush1.msra.mxu0 %v6974
    %6990 = vmatprep.subr.mxu0 0.0
    %6991 = vmatpush1.msra.mxu0 %v6973
    %6992 = vmatprep.subr.mxu0 0.0
    %6993 = vmatpush1.msra.mxu0 %v6972
    %6994 = vmatprep.subr.mxu0 0.0
    %6995 = vmatpush1.msra.mxu0 %v6971
    %6996 = vmatprep.subr.mxu0 0.0
    %6997 = vmatpush1.msra.mxu0 %v6970
    %6998 = vmatprep.subr.mxu0 0.0
    %6999 = vmatpush1.msra.mxu0 %v6969
    %7000 = vmatprep.subr.mxu0 0.0
    %7001 = vmatpush1.msra.mxu0 %v6968
    %7002 = vmatprep.subr.mxu0 0.0
    %7003 = vmatpush1.msra.mxu0 %v6967
    %7004 = vmatprep.subr.mxu0 0.0
    %7005 = vmatpush1.msra.mxu0 %v6966
    %7006 = vmatprep.subr.mxu0 0.0
    %7007 = vmatpush1.msra.mxu0 %v6965
    %7008 = vmatprep.subr.mxu0 0.0
    %7009 = vmatpush1.msra.mxu0 %v6964
    %7010 = vmatprep.subr.mxu0 0.0
    %7011 = vmatpush1.msra.mxu0 %v6963
    %7012 = vmatprep.subr.mxu0 0.0
    %7013 = vmatpush1.msra.mxu0 %v6962
    %7014 = vmatprep.subr.mxu0 0.0
    %7015 = vmatpush2.msra.mxu0 0.0
    %7016 = vmatprep.subr.mxu0 0.0
    %7017 = vmatpush2.msra.mxu0 0.0
    %7018 = vmatprep.subr.mxu0 0.0
    %7019 = vmatpush2.msra.mxu0 0.0
    %7020 = vmatprep.subr.mxu0 0.0
    %7021 = vmatpush2.msra.mxu0 0.0
    %7022 = vmatprep.subr.mxu0 0.0
    %7023 = vmatpush2.msra.mxu0 0.0
    %7024 = vmatprep.subr.mxu0 0.0
    %7025 = vmatpush2.msra.mxu0 0.0
    %7026 = vmatprep.subr.mxu0 0.0
    %7027 = vmatpush2.msra.mxu0 0.0
    %7028 = vmatprep.subr.mxu0 0.0
    %7029 = vmatpush2.msra.mxu0 0.0
    %7030 = vmatprep.subr.mxu0 0.0
    %7031 = vmatpush2.msra.mxu0 0.0
    %7032 = vmatprep.subr.mxu0 0.0
    %7033 = vmatpush2.msra.mxu0 0.0
    %7034 = vmatprep.subr.mxu0 0.0
    %7035 = vmatpush2.msra.mxu0 0.0
    %7036 = vmatprep.subr.mxu0 0.0
    %7037 = vmatpush2.msra.mxu0 0.0
    %7038 = vmatprep.subr.mxu0 0.0
    %7039 = vmatpush2.msra.mxu0 0.0
    %7040 = vmatprep.subr.mxu0 0.0
    %7041 = vmatpush2.msra.mxu0 0.0
    %7042 = vmatprep.subr.mxu0 0.0
    %7043 = vmatpush2.msra.mxu0 0.0
    %7044 = vmatprep.subr.mxu0 0.0
    %7045 = vmatpush2.msra.mxu0 0.0
    %7046 = vmatprep.mubr.f32.mxu0 0.0
    %7047 = vmatmul.mubr.f32.gmra.mxu0 %v6980
    %v7048 = vpop.f32.mrf.mxu0
    %v7049 = vadd.f32 0.0, %v7048
    %v7050 = vpop.f32.mrf.mxu0
    %7051 = vdwg.mxu0
    %v7052 = vadd.f32 %v6960, %v7049
    %v7053 = vld [vmem:[%s6644] sm:$0xff]
    %v7054 = vld [vmem:[%s6644 + $0x40] sm:$0xff]
    %v7055 = vld [vmem:[%s6646] sm:$0xff]
    %v7056 = vld [vmem:[%s6646 + $0x40] sm:$0xff]
    %v7057 = vmax.f32 %v7053, %v7055
    %v7058 = vmax.f32 %v7054, %v7056
    %v7061 = vrot.slane %v7057, 1
    %v7062 = vrot.slane %v7058, 1
    %v7065 = vmax.f32 %v7057, %v7061
    %v7066 = vmax.f32 %v7058, %v7062
    %s7067 = scalar_lea.vmem %s5, 512
    %v7068 = vld [vmem:[%s7067] sm:$0xff]
    %v7069 = vld [vmem:[%s7067 + $0x8] sm:$0xff]
    %v7070 = vld [vmem:[%s7067 + $0x10] sm:$0xff]
    %v7071 = vld [vmem:[%s7067 + $0x18] sm:$0xff]
    %v7072 = vld [vmem:[%s7067 + $0x20] sm:$0xff]
    %v7073 = vld [vmem:[%s7067 + $0x28] sm:$0xff]
    %v7074 = vld [vmem:[%s7067 + $0x30] sm:$0xff]
    %v7075 = vld [vmem:[%s7067 + $0x38] sm:$0xff]
    %v7076 = vld [vmem:[%s7067 + $0x40] sm:$0xff]
    %v7077 = vld [vmem:[%s7067 + $0x48] sm:$0xff]
    %v7078 = vld [vmem:[%s7067 + $0x50] sm:$0xff]
    %v7079 = vld [vmem:[%s7067 + $0x58] sm:$0xff]
    %v7080 = vld [vmem:[%s7067 + $0x60] sm:$0xff]
    %v7081 = vld [vmem:[%s7067 + $0x68] sm:$0xff]
    %v7082 = vld [vmem:[%s7067 + $0x70] sm:$0xff]
    %v7083 = vld [vmem:[%s7067 + $0x78] sm:$0xff]
    %v7086 = vrot.slane %v7066, 7
    %v7087 = vsel %vm6723, %v7086, %v7065
    %7089 = vmatprep.subr.mxu0 0.0
    %7090 = vmatpush1.msra.mxu0 %v7083
    %7091 = vmatprep.subr.mxu0 0.0
    %7092 = vmatpush1.msra.mxu0 %v7082
    %7093 = vmatprep.subr.mxu0 0.0
    %7094 = vmatpush1.msra.mxu0 %v7081
    %7095 = vmatprep.subr.mxu0 0.0
    %7096 = vmatpush1.msra.mxu0 %v7080
    %7097 = vmatprep.subr.mxu0 0.0
    %7098 = vmatpush1.msra.mxu0 %v7079
    %7099 = vmatprep.subr.mxu0 0.0
    %7100 = vmatpush1.msra.mxu0 %v7078
    %7101 = vmatprep.subr.mxu0 0.0
    %7102 = vmatpush1.msra.mxu0 %v7077
    %7103 = vmatprep.subr.mxu0 0.0
    %7104 = vmatpush1.msra.mxu0 %v7076
    %7105 = vmatprep.subr.mxu0 0.0
    %7106 = vmatpush1.msra.mxu0 %v7075
    %7107 = vmatprep.subr.mxu0 0.0
    %7108 = vmatpush1.msra.mxu0 %v7074
    %7109 = vmatprep.subr.mxu0 0.0
    %7110 = vmatpush1.msra.mxu0 %v7073
    %7111 = vmatprep.subr.mxu0 0.0
    %7112 = vmatpush1.msra.mxu0 %v7072
    %7113 = vmatprep.subr.mxu0 0.0
    %7114 = vmatpush1.msra.mxu0 %v7071
    %7115 = vmatprep.subr.mxu0 0.0
    %7116 = vmatpush1.msra.mxu0 %v7070
    %7117 = vmatprep.subr.mxu0 0.0
    %7118 = vmatpush1.msra.mxu0 %v7069
    %7119 = vmatprep.subr.mxu0 0.0
    %7120 = vmatpush1.msra.mxu0 %v7068
    %7121 = vmatprep.subr.mxu0 0.0
    %7122 = vmatpush2.msra.mxu0 0.0
    %7123 = vmatprep.subr.mxu0 0.0
    %7124 = vmatpush2.msra.mxu0 0.0
    %7125 = vmatprep.subr.mxu0 0.0
    %7126 = vmatpush2.msra.mxu0 0.0
    %7127 = vmatprep.subr.mxu0 0.0
    %7128 = vmatpush2.msra.mxu0 0.0
    %7129 = vmatprep.subr.mxu0 0.0
    %7130 = vmatpush2.msra.mxu0 0.0
    %7131 = vmatprep.subr.mxu0 0.0
    %7132 = vmatpush2.msra.mxu0 0.0
    %7133 = vmatprep.subr.mxu0 0.0
    %7134 = vmatpush2.msra.mxu0 0.0
    %7135 = vmatprep.subr.mxu0 0.0
    %7136 = vmatpush2.msra.mxu0 0.0
    %7137 = vmatprep.subr.mxu0 0.0
    %7138 = vmatpush2.msra.mxu0 0.0
    %7139 = vmatprep.subr.mxu0 0.0
    %7140 = vmatpush2.msra.mxu0 0.0
    %7141 = vmatprep.subr.mxu0 0.0
    %7142 = vmatpush2.msra.mxu0 0.0
    %7143 = vmatprep.subr.mxu0 0.0
    %7144 = vmatpush2.msra.mxu0 0.0
    %7145 = vmatprep.subr.mxu0 0.0
    %7146 = vmatpush2.msra.mxu0 0.0
    %7147 = vmatprep.subr.mxu0 0.0
    %7148 = vmatpush2.msra.mxu0 0.0
    %7149 = vmatprep.subr.mxu0 0.0
    %7150 = vmatpush2.msra.mxu0 0.0
    %7151 = vmatprep.subr.mxu0 0.0
    %7152 = vmatpush2.msra.mxu0 0.0
    %7153 = vmatprep.mubr.f32.mxu0 0.0
    %7154 = vmatmul.mubr.f32.gmra.mxu0 %v7087
    %v7155 = vpop.f32.mrf.mxu0
    %v7156 = vadd.f32 0.0, %v7155
    %v7157 = vpop.f32.mrf.mxu0
    %7158 = vdwg.mxu0
    %v7159 = vadd.f32 %v7052, %v7156
    %s7160 = scalar_lea.vmem %s5, 640
    %v7161 = vld [vmem:[%s7160] sm:$0xff]
    %v7162 = vld [vmem:[%s7160 + $0x8] sm:$0xff]
    %v7163 = vld [vmem:[%s7160 + $0x10] sm:$0xff]
    %v7164 = vld [vmem:[%s7160 + $0x18] sm:$0xff]
    %v7165 = vld [vmem:[%s7160 + $0x20] sm:$0xff]
    %v7166 = vld [vmem:[%s7160 + $0x28] sm:$0xff]
    %v7167 = vld [vmem:[%s7160 + $0x30] sm:$0xff]
    %v7168 = vld [vmem:[%s7160 + $0x38] sm:$0xff]
    %v7169 = vld [vmem:[%s7160 + $0x40] sm:$0xff]
    %v7170 = vld [vmem:[%s7160 + $0x48] sm:$0xff]
    %v7171 = vld [vmem:[%s7160 + $0x50] sm:$0xff]
    %v7172 = vld [vmem:[%s7160 + $0x58] sm:$0xff]
    %v7173 = vld [vmem:[%s7160 + $0x60] sm:$0xff]
    %v7174 = vld [vmem:[%s7160 + $0x68] sm:$0xff]
    %v7175 = vld [vmem:[%s7160 + $0x70] sm:$0xff]
    %v7176 = vld [vmem:[%s7160 + $0x78] sm:$0xff]
    %v7177 = vrot.slane %v7065, 2
    %v7178 = vrot.slane %v7066, 1
    %v7179 = vsel %vm6723, %v7178, %v7177
    %7181 = vmatprep.subr.mxu0 0.0
    %7182 = vmatpush1.msra.mxu0 %v7176
    %7183 = vmatprep.subr.mxu0 0.0
    %7184 = vmatpush1.msra.mxu0 %v7175
    %7185 = vmatprep.subr.mxu0 0.0
    %7186 = vmatpush1.msra.mxu0 %v7174
    %7187 = vmatprep.subr.mxu0 0.0
    %7188 = vmatpush1.msra.mxu0 %v7173
    %7189 = vmatprep.subr.mxu0 0.0
    %7190 = vmatpush1.msra.mxu0 %v7172
    %7191 = vmatprep.subr.mxu0 0.0
    %7192 = vmatpush1.msra.mxu0 %v7171
    %7193 = vmatprep.subr.mxu0 0.0
    %7194 = vmatpush1.msra.mxu0 %v7170
    %7195 = vmatprep.subr.mxu0 0.0
    %7196 = vmatpush1.msra.mxu0 %v7169
    %7197 = vmatprep.subr.mxu0 0.0
    %7198 = vmatpush1.msra.mxu0 %v7168
    %7199 = vmatprep.subr.mxu0 0.0
    %7200 = vmatpush1.msra.mxu0 %v7167
    %7201 = vmatprep.subr.mxu0 0.0
    %7202 = vmatpush1.msra.mxu0 %v7166
    %7203 = vmatprep.subr.mxu0 0.0
    %7204 = vmatpush1.msra.mxu0 %v7165
    %7205 = vmatprep.subr.mxu0 0.0
    %7206 = vmatpush1.msra.mxu0 %v7164
    %7207 = vmatprep.subr.mxu0 0.0
    %7208 = vmatpush1.msra.mxu0 %v7163
    %7209 = vmatprep.subr.mxu0 0.0
    %7210 = vmatpush1.msra.mxu0 %v7162
    %7211 = vmatprep.subr.mxu0 0.0
    %7212 = vmatpush1.msra.mxu0 %v7161
    %7213 = vmatprep.subr.mxu0 0.0
    %7214 = vmatpush2.msra.mxu0 0.0
    %7215 = vmatprep.subr.mxu0 0.0
    %7216 = vmatpush2.msra.mxu0 0.0
    %7217 = vmatprep.subr.mxu0 0.0
    %7218 = vmatpush2.msra.mxu0 0.0
    %7219 = vmatprep.subr.mxu0 0.0
    %7220 = vmatpush2.msra.mxu0 0.0
    %7221 = vmatprep.subr.mxu0 0.0
    %7222 = vmatpush2.msra.mxu0 0.0
    %7223 = vmatprep.subr.mxu0 0.0
    %7224 = vmatpush2.msra.mxu0 0.0
    %7225 = vmatprep.subr.mxu0 0.0
    %7226 = vmatpush2.msra.mxu0 0.0
    %7227 = vmatprep.subr.mxu0 0.0
    %7228 = vmatpush2.msra.mxu0 0.0
    %7229 = vmatprep.subr.mxu0 0.0
    %7230 = vmatpush2.msra.mxu0 0.0
    %7231 = vmatprep.subr.mxu0 0.0
    %7232 = vmatpush2.msra.mxu0 0.0
    %7233 = vmatprep.subr.mxu0 0.0
    %7234 = vmatpush2.msra.mxu0 0.0
    %7235 = vmatprep.subr.mxu0 0.0
    %7236 = vmatpush2.msra.mxu0 0.0
    %7237 = vmatprep.subr.mxu0 0.0
    %7238 = vmatpush2.msra.mxu0 0.0
    %7239 = vmatprep.subr.mxu0 0.0
    %7240 = vmatpush2.msra.mxu0 0.0
    %7241 = vmatprep.subr.mxu0 0.0
    %7242 = vmatpush2.msra.mxu0 0.0
    %7243 = vmatprep.subr.mxu0 0.0
    %7244 = vmatpush2.msra.mxu0 0.0
    %7245 = vmatprep.mubr.f32.mxu0 0.0
    %7246 = vmatmul.mubr.f32.gmra.mxu0 %v7179
    %v7247 = vpop.f32.mrf.mxu0
    %v7248 = vadd.f32 0.0, %v7247
    %v7249 = vpop.f32.mrf.mxu0
    %7250 = vdwg.mxu0
    %v7251 = vadd.f32 %v7159, %v7248
    %s7252 = scalar_lea.vmem %s5, 768
    %v7253 = vld [vmem:[%s7252] sm:$0xff]
    %v7254 = vld [vmem:[%s7252 + $0x8] sm:$0xff]
    %v7255 = vld [vmem:[%s7252 + $0x10] sm:$0xff]
    %v7256 = vld [vmem:[%s7252 + $0x18] sm:$0xff]
    %v7257 = vld [vmem:[%s7252 + $0x20] sm:$0xff]
    %v7258 = vld [vmem:[%s7252 + $0x28] sm:$0xff]
    %v7259 = vld [vmem:[%s7252 + $0x30] sm:$0xff]
    %v7260 = vld [vmem:[%s7252 + $0x38] sm:$0xff]
    %v7261 = vld [vmem:[%s7252 + $0x40] sm:$0xff]
    %v7262 = vld [vmem:[%s7252 + $0x48] sm:$0xff]
    %v7263 = vld [vmem:[%s7252 + $0x50] sm:$0xff]
    %v7264 = vld [vmem:[%s7252 + $0x58] sm:$0xff]
    %v7265 = vld [vmem:[%s7252 + $0x60] sm:$0xff]
    %v7266 = vld [vmem:[%s7252 + $0x68] sm:$0xff]
    %v7267 = vld [vmem:[%s7252 + $0x70] sm:$0xff]
    %v7268 = vld [vmem:[%s7252 + $0x78] sm:$0xff]
    %v7269 = vrot.slane %v7065, 4
    %v7270 = vrot.slane %v7066, 3
    %v7271 = vsel %vm6723, %v7270, %v7269
    %7273 = vmatprep.subr.mxu0 0.0
    %7274 = vmatpush1.msra.mxu0 %v7268
    %7275 = vmatprep.subr.mxu0 0.0
    %7276 = vmatpush1.msra.mxu0 %v7267
    %7277 = vmatprep.subr.mxu0 0.0
    %7278 = vmatpush1.msra.mxu0 %v7266
    %7279 = vmatprep.subr.mxu0 0.0
    %7280 = vmatpush1.msra.mxu0 %v7265
    %7281 = vmatprep.subr.mxu0 0.0
    %7282 = vmatpush1.msra.mxu0 %v7264
    %7283 = vmatprep.subr.mxu0 0.0
    %7284 = vmatpush1.msra.mxu0 %v7263
    %7285 = vmatprep.subr.mxu0 0.0
    %7286 = vmatpush1.msra.mxu0 %v7262
    %7287 = vmatprep.subr.mxu0 0.0
    %7288 = vmatpush1.msra.mxu0 %v7261
    %7289 = vmatprep.subr.mxu0 0.0
    %7290 = vmatpush1.msra.mxu0 %v7260
    %7291 = vmatprep.subr.mxu0 0.0
    %7292 = vmatpush1.msra.mxu0 %v7259
    %7293 = vmatprep.subr.mxu0 0.0
    %7294 = vmatpush1.msra.mxu0 %v7258
    %7295 = vmatprep.subr.mxu0 0.0
    %7296 = vmatpush1.msra.mxu0 %v7257
    %7297 = vmatprep.subr.mxu0 0.0
    %7298 = vmatpush1.msra.mxu0 %v7256
    %7299 = vmatprep.subr.mxu0 0.0
    %7300 = vmatpush1.msra.mxu0 %v7255
    %7301 = vmatprep.subr.mxu0 0.0
    %7302 = vmatpush1.msra.mxu0 %v7254
    %7303 = vmatprep.subr.mxu0 0.0
    %7304 = vmatpush1.msra.mxu0 %v7253
    %7305 = vmatprep.subr.mxu0 0.0
    %7306 = vmatpush2.msra.mxu0 0.0
    %7307 = vmatprep.subr.mxu0 0.0
    %7308 = vmatpush2.msra.mxu0 0.0
    %7309 = vmatprep.subr.mxu0 0.0
    %7310 = vmatpush2.msra.mxu0 0.0
    %7311 = vmatprep.subr.mxu0 0.0
    %7312 = vmatpush2.msra.mxu0 0.0
    %7313 = vmatprep.subr.mxu0 0.0
    %7314 = vmatpush2.msra.mxu0 0.0
    %7315 = vmatprep.subr.mxu0 0.0
    %7316 = vmatpush2.msra.mxu0 0.0
    %7317 = vmatprep.subr.mxu0 0.0
    %7318 = vmatpush2.msra.mxu0 0.0
    %7319 = vmatprep.subr.mxu0 0.0
    %7320 = vmatpush2.msra.mxu0 0.0
    %7321 = vmatprep.subr.mxu0 0.0
    %7322 = vmatpush2.msra.mxu0 0.0
    %7323 = vmatprep.subr.mxu0 0.0
    %7324 = vmatpush2.msra.mxu0 0.0
    %7325 = vmatprep.subr.mxu0 0.0
    %7326 = vmatpush2.msra.mxu0 0.0
    %7327 = vmatprep.subr.mxu0 0.0
    %7328 = vmatpush2.msra.mxu0 0.0
    %7329 = vmatprep.subr.mxu0 0.0
    %7330 = vmatpush2.msra.mxu0 0.0
    %7331 = vmatprep.subr.mxu0 0.0
    %7332 = vmatpush2.msra.mxu0 0.0
    %7333 = vmatprep.subr.mxu0 0.0
    %7334 = vmatpush2.msra.mxu0 0.0
    %7335 = vmatprep.subr.mxu0 0.0
    %7336 = vmatpush2.msra.mxu0 0.0
    %7337 = vmatprep.mubr.f32.mxu0 0.0
    %7338 = vmatmul.mubr.f32.gmra.mxu0 %v7271
    %v7339 = vpop.f32.mrf.mxu0
    %v7340 = vadd.f32 0.0, %v7339
    %v7341 = vpop.f32.mrf.mxu0
    %7342 = vdwg.mxu0
    %v7343 = vadd.f32 %v7251, %v7340
    %s7344 = scalar_lea.vmem %s5, 896
    %v7345 = vld [vmem:[%s7344] sm:$0xff]
    %v7346 = vld [vmem:[%s7344 + $0x8] sm:$0xff]
    %v7347 = vld [vmem:[%s7344 + $0x10] sm:$0xff]
    %v7348 = vld [vmem:[%s7344 + $0x18] sm:$0xff]
    %v7349 = vld [vmem:[%s7344 + $0x20] sm:$0xff]
    %v7350 = vld [vmem:[%s7344 + $0x28] sm:$0xff]
    %v7351 = vld [vmem:[%s7344 + $0x30] sm:$0xff]
    %v7352 = vld [vmem:[%s7344 + $0x38] sm:$0xff]
    %v7353 = vld [vmem:[%s7344 + $0x40] sm:$0xff]
    %v7354 = vld [vmem:[%s7344 + $0x48] sm:$0xff]
    %v7355 = vld [vmem:[%s7344 + $0x50] sm:$0xff]
    %v7356 = vld [vmem:[%s7344 + $0x58] sm:$0xff]
    %v7357 = vld [vmem:[%s7344 + $0x60] sm:$0xff]
    %v7358 = vld [vmem:[%s7344 + $0x68] sm:$0xff]
    %v7359 = vld [vmem:[%s7344 + $0x70] sm:$0xff]
    %v7360 = vld [vmem:[%s7344 + $0x78] sm:$0xff]
    %v7361 = vrot.slane %v7065, 6
    %v7362 = vrot.slane %v7066, 5
    %v7363 = vsel %vm6723, %v7362, %v7361
    %7365 = vmatprep.subr.mxu0 0.0
    %7366 = vmatpush1.msra.mxu0 %v7360
    %7367 = vmatprep.subr.mxu0 0.0
    %7368 = vmatpush1.msra.mxu0 %v7359
    %7369 = vmatprep.subr.mxu0 0.0
    %7370 = vmatpush1.msra.mxu0 %v7358
    %7371 = vmatprep.subr.mxu0 0.0
    %7372 = vmatpush1.msra.mxu0 %v7357
    %7373 = vmatprep.subr.mxu0 0.0
    %7374 = vmatpush1.msra.mxu0 %v7356
    %7375 = vmatprep.subr.mxu0 0.0
    %7376 = vmatpush1.msra.mxu0 %v7355
    %7377 = vmatprep.subr.mxu0 0.0
    %7378 = vmatpush1.msra.mxu0 %v7354
    %7379 = vmatprep.subr.mxu0 0.0
    %7380 = vmatpush1.msra.mxu0 %v7353
    %7381 = vmatprep.subr.mxu0 0.0
    %7382 = vmatpush1.msra.mxu0 %v7352
    %7383 = vmatprep.subr.mxu0 0.0
    %7384 = vmatpush1.msra.mxu0 %v7351
    %7385 = vmatprep.subr.mxu0 0.0
    %7386 = vmatpush1.msra.mxu0 %v7350
    %7387 = vmatprep.subr.mxu0 0.0
    %7388 = vmatpush1.msra.mxu0 %v7349
    %7389 = vmatprep.subr.mxu0 0.0
    %7390 = vmatpush1.msra.mxu0 %v7348
    %7391 = vmatprep.subr.mxu0 0.0
    %7392 = vmatpush1.msra.mxu0 %v7347
    %7393 = vmatprep.subr.mxu0 0.0
    %7394 = vmatpush1.msra.mxu0 %v7346
    %7395 = vmatprep.subr.mxu0 0.0
    %7396 = vmatpush1.msra.mxu0 %v7345
    %7397 = vmatprep.subr.mxu0 0.0
    %7398 = vmatpush2.msra.mxu0 0.0
    %7399 = vmatprep.subr.mxu0 0.0
    %7400 = vmatpush2.msra.mxu0 0.0
    %7401 = vmatprep.subr.mxu0 0.0
    %7402 = vmatpush2.msra.mxu0 0.0
    %7403 = vmatprep.subr.mxu0 0.0
    %7404 = vmatpush2.msra.mxu0 0.0
    %7405 = vmatprep.subr.mxu0 0.0
    %7406 = vmatpush2.msra.mxu0 0.0
    %7407 = vmatprep.subr.mxu0 0.0
    %7408 = vmatpush2.msra.mxu0 0.0
    %7409 = vmatprep.subr.mxu0 0.0
    %7410 = vmatpush2.msra.mxu0 0.0
    %7411 = vmatprep.subr.mxu0 0.0
    %7412 = vmatpush2.msra.mxu0 0.0
    %7413 = vmatprep.subr.mxu0 0.0
    %7414 = vmatpush2.msra.mxu0 0.0
    %7415 = vmatprep.subr.mxu0 0.0
    %7416 = vmatpush2.msra.mxu0 0.0
    %7417 = vmatprep.subr.mxu0 0.0
    %7418 = vmatpush2.msra.mxu0 0.0
    %7419 = vmatprep.subr.mxu0 0.0
    %7420 = vmatpush2.msra.mxu0 0.0
    %7421 = vmatprep.subr.mxu0 0.0
    %7422 = vmatpush2.msra.mxu0 0.0
    %7423 = vmatprep.subr.mxu0 0.0
    %7424 = vmatpush2.msra.mxu0 0.0
    %7425 = vmatprep.subr.mxu0 0.0
    %7426 = vmatpush2.msra.mxu0 0.0
    %7427 = vmatprep.subr.mxu0 0.0
    %7428 = vmatpush2.msra.mxu0 0.0
    %7429 = vmatprep.mubr.f32.mxu0 0.0
    %7430 = vmatmul.mubr.f32.gmra.mxu0 %v7363
    %v7431 = vpop.f32.mrf.mxu0
    %v7432 = vadd.f32 0.0, %v7431
    %v7433 = vpop.f32.mrf.mxu0
    %7434 = vdwg.mxu0
    %v7435 = vadd.f32 %v7343, %v7432
    %v7436 = vld [vmem:[%s6648] sm:$0xff]
    %v7437 = vld [vmem:[%s6648 + $0x40] sm:$0xff]
    %v7438 = vld [vmem:[%s6650] sm:$0xff]
    %v7439 = vld [vmem:[%s6650 + $0x40] sm:$0xff]
    %v7440 = vmax.f32 %v7436, %v7438
    %v7441 = vmax.f32 %v7437, %v7439
    %v7444 = vrot.slane %v7440, 1
    %v7445 = vrot.slane %v7441, 1
    %v7448 = vmax.f32 %v7440, %v7444
    %v7449 = vmax.f32 %v7441, %v7445
    %s7450 = scalar_lea.vmem %s5, 1024
    %v7451 = vld [vmem:[%s7450] sm:$0xff]
    %v7452 = vld [vmem:[%s7450 + $0x8] sm:$0xff]
    %v7453 = vld [vmem:[%s7450 + $0x10] sm:$0xff]
    %v7454 = vld [vmem:[%s7450 + $0x18] sm:$0xff]
    %v7455 = vld [vmem:[%s7450 + $0x20] sm:$0xff]
    %v7456 = vld [vmem:[%s7450 + $0x28] sm:$0xff]
    %v7457 = vld [vmem:[%s7450 + $0x30] sm:$0xff]
    %v7458 = vld [vmem:[%s7450 + $0x38] sm:$0xff]
    %v7459 = vld [vmem:[%s7450 + $0x40] sm:$0xff]
    %v7460 = vld [vmem:[%s7450 + $0x48] sm:$0xff]
    %v7461 = vld [vmem:[%s7450 + $0x50] sm:$0xff]
    %v7462 = vld [vmem:[%s7450 + $0x58] sm:$0xff]
    %v7463 = vld [vmem:[%s7450 + $0x60] sm:$0xff]
    %v7464 = vld [vmem:[%s7450 + $0x68] sm:$0xff]
    %v7465 = vld [vmem:[%s7450 + $0x70] sm:$0xff]
    %v7466 = vld [vmem:[%s7450 + $0x78] sm:$0xff]
    %v7469 = vrot.slane %v7449, 7
    %v7470 = vsel %vm6723, %v7469, %v7448
    %7472 = vmatprep.subr.mxu0 0.0
    %7473 = vmatpush1.msra.mxu0 %v7466
    %7474 = vmatprep.subr.mxu0 0.0
    %7475 = vmatpush1.msra.mxu0 %v7465
    %7476 = vmatprep.subr.mxu0 0.0
    %7477 = vmatpush1.msra.mxu0 %v7464
    %7478 = vmatprep.subr.mxu0 0.0
    %7479 = vmatpush1.msra.mxu0 %v7463
    %7480 = vmatprep.subr.mxu0 0.0
    %7481 = vmatpush1.msra.mxu0 %v7462
    %7482 = vmatprep.subr.mxu0 0.0
    %7483 = vmatpush1.msra.mxu0 %v7461
    %7484 = vmatprep.subr.mxu0 0.0
    %7485 = vmatpush1.msra.mxu0 %v7460
    %7486 = vmatprep.subr.mxu0 0.0
    %7487 = vmatpush1.msra.mxu0 %v7459
    %7488 = vmatprep.subr.mxu0 0.0
    %7489 = vmatpush1.msra.mxu0 %v7458
    %7490 = vmatprep.subr.mxu0 0.0
    %7491 = vmatpush1.msra.mxu0 %v7457
    %7492 = vmatprep.subr.mxu0 0.0
    %7493 = vmatpush1.msra.mxu0 %v7456
    %7494 = vmatprep.subr.mxu0 0.0
    %7495 = vmatpush1.msra.mxu0 %v7455
    %7496 = vmatprep.subr.mxu0 0.0
    %7497 = vmatpush1.msra.mxu0 %v7454
    %7498 = vmatprep.subr.mxu0 0.0
    %7499 = vmatpush1.msra.mxu0 %v7453
    %7500 = vmatprep.subr.mxu0 0.0
    %7501 = vmatpush1.msra.mxu0 %v7452
    %7502 = vmatprep.subr.mxu0 0.0
    %7503 = vmatpush1.msra.mxu0 %v7451
    %7504 = vmatprep.subr.mxu0 0.0
    %7505 = vmatpush2.msra.mxu0 0.0
    %7506 = vmatprep.subr.mxu0 0.0
    %7507 = vmatpush2.msra.mxu0 0.0
    %7508 = vmatprep.subr.mxu0 0.0
    %7509 = vmatpush2.msra.mxu0 0.0
    %7510 = vmatprep.subr.mxu0 0.0
    %7511 = vmatpush2.msra.mxu0 0.0
    %7512 = vmatprep.subr.mxu0 0.0
    %7513 = vmatpush2.msra.mxu0 0.0
    %7514 = vmatprep.subr.mxu0 0.0
    %7515 = vmatpush2.msra.mxu0 0.0
    %7516 = vmatprep.subr.mxu0 0.0
    %7517 = vmatpush2.msra.mxu0 0.0
    %7518 = vmatprep.subr.mxu0 0.0
    %7519 = vmatpush2.msra.mxu0 0.0
    %7520 = vmatprep.subr.mxu0 0.0
    %7521 = vmatpush2.msra.mxu0 0.0
    %7522 = vmatprep.subr.mxu0 0.0
    %7523 = vmatpush2.msra.mxu0 0.0
    %7524 = vmatprep.subr.mxu0 0.0
    %7525 = vmatpush2.msra.mxu0 0.0
    %7526 = vmatprep.subr.mxu0 0.0
    %7527 = vmatpush2.msra.mxu0 0.0
    %7528 = vmatprep.subr.mxu0 0.0
    %7529 = vmatpush2.msra.mxu0 0.0
    %7530 = vmatprep.subr.mxu0 0.0
    %7531 = vmatpush2.msra.mxu0 0.0
    %7532 = vmatprep.subr.mxu0 0.0
    %7533 = vmatpush2.msra.mxu0 0.0
    %7534 = vmatprep.subr.mxu0 0.0
    %7535 = vmatpush2.msra.mxu0 0.0
    %7536 = vmatprep.mubr.f32.mxu0 0.0
    %7537 = vmatmul.mubr.f32.gmra.mxu0 %v7470
    %v7538 = vpop.f32.mrf.mxu0
    %v7539 = vadd.f32 0.0, %v7538
    %v7540 = vpop.f32.mrf.mxu0
    %7541 = vdwg.mxu0
    %v7542 = vadd.f32 %v7435, %v7539
    %s7543 = scalar_lea.vmem %s5, 1152
    %v7544 = vld [vmem:[%s7543] sm:$0xff]
    %v7545 = vld [vmem:[%s7543 + $0x8] sm:$0xff]
    %v7546 = vld [vmem:[%s7543 + $0x10] sm:$0xff]
    %v7547 = vld [vmem:[%s7543 + $0x18] sm:$0xff]
    %v7548 = vld [vmem:[%s7543 + $0x20] sm:$0xff]
    %v7549 = vld [vmem:[%s7543 + $0x28] sm:$0xff]
    %v7550 = vld [vmem:[%s7543 + $0x30] sm:$0xff]
    %v7551 = vld [vmem:[%s7543 + $0x38] sm:$0xff]
    %v7552 = vld [vmem:[%s7543 + $0x40] sm:$0xff]
    %v7553 = vld [vmem:[%s7543 + $0x48] sm:$0xff]
    %v7554 = vld [vmem:[%s7543 + $0x50] sm:$0xff]
    %v7555 = vld [vmem:[%s7543 + $0x58] sm:$0xff]
    %v7556 = vld [vmem:[%s7543 + $0x60] sm:$0xff]
    %v7557 = vld [vmem:[%s7543 + $0x68] sm:$0xff]
    %v7558 = vld [vmem:[%s7543 + $0x70] sm:$0xff]
    %v7559 = vld [vmem:[%s7543 + $0x78] sm:$0xff]
    %v7560 = vrot.slane %v7448, 2
    %v7561 = vrot.slane %v7449, 1
    %v7562 = vsel %vm6723, %v7561, %v7560
    %7564 = vmatprep.subr.mxu0 0.0
    %7565 = vmatpush1.msra.mxu0 %v7559
    %7566 = vmatprep.subr.mxu0 0.0
    %7567 = vmatpush1.msra.mxu0 %v7558
    %7568 = vmatprep.subr.mxu0 0.0
    %7569 = vmatpush1.msra.mxu0 %v7557
    %7570 = vmatprep.subr.mxu0 0.0
    %7571 = vmatpush1.msra.mxu0 %v7556
    %7572 = vmatprep.subr.mxu0 0.0
    %7573 = vmatpush1.msra.mxu0 %v7555
    %7574 = vmatprep.subr.mxu0 0.0
    %7575 = vmatpush1.msra.mxu0 %v7554
    %7576 = vmatprep.subr.mxu0 0.0
    %7577 = vmatpush1.msra.mxu0 %v7553
    %7578 = vmatprep.subr.mxu0 0.0
    %7579 = vmatpush1.msra.mxu0 %v7552
    %7580 = vmatprep.subr.mxu0 0.0
    %7581 = vmatpush1.msra.mxu0 %v7551
    %7582 = vmatprep.subr.mxu0 0.0
    %7583 = vmatpush1.msra.mxu0 %v7550
    %7584 = vmatprep.subr.mxu0 0.0
    %7585 = vmatpush1.msra.mxu0 %v7549
    %7586 = vmatprep.subr.mxu0 0.0
    %7587 = vmatpush1.msra.mxu0 %v7548
    %7588 = vmatprep.subr.mxu0 0.0
    %7589 = vmatpush1.msra.mxu0 %v7547
    %7590 = vmatprep.subr.mxu0 0.0
    %7591 = vmatpush1.msra.mxu0 %v7546
    %7592 = vmatprep.subr.mxu0 0.0
    %7593 = vmatpush1.msra.mxu0 %v7545
    %7594 = vmatprep.subr.mxu0 0.0
    %7595 = vmatpush1.msra.mxu0 %v7544
    %7596 = vmatprep.subr.mxu0 0.0
    %7597 = vmatpush2.msra.mxu0 0.0
    %7598 = vmatprep.subr.mxu0 0.0
    %7599 = vmatpush2.msra.mxu0 0.0
    %7600 = vmatprep.subr.mxu0 0.0
    %7601 = vmatpush2.msra.mxu0 0.0
    %7602 = vmatprep.subr.mxu0 0.0
    %7603 = vmatpush2.msra.mxu0 0.0
    %7604 = vmatprep.subr.mxu0 0.0
    %7605 = vmatpush2.msra.mxu0 0.0
    %7606 = vmatprep.subr.mxu0 0.0
    %7607 = vmatpush2.msra.mxu0 0.0
    %7608 = vmatprep.subr.mxu0 0.0
    %7609 = vmatpush2.msra.mxu0 0.0
    %7610 = vmatprep.subr.mxu0 0.0
    %7611 = vmatpush2.msra.mxu0 0.0
    %7612 = vmatprep.subr.mxu0 0.0
    %7613 = vmatpush2.msra.mxu0 0.0
    %7614 = vmatprep.subr.mxu0 0.0
    %7615 = vmatpush2.msra.mxu0 0.0
    %7616 = vmatprep.subr.mxu0 0.0
    %7617 = vmatpush2.msra.mxu0 0.0
    %7618 = vmatprep.subr.mxu0 0.0
    %7619 = vmatpush2.msra.mxu0 0.0
    %7620 = vmatprep.subr.mxu0 0.0
    %7621 = vmatpush2.msra.mxu0 0.0
    %7622 = vmatprep.subr.mxu0 0.0
    %7623 = vmatpush2.msra.mxu0 0.0
    %7624 = vmatprep.subr.mxu0 0.0
    %7625 = vmatpush2.msra.mxu0 0.0
    %7626 = vmatprep.subr.mxu0 0.0
    %7627 = vmatpush2.msra.mxu0 0.0
    %7628 = vmatprep.mubr.f32.mxu0 0.0
    %7629 = vmatmul.mubr.f32.gmra.mxu0 %v7562
    %v7630 = vpop.f32.mrf.mxu0
    %v7631 = vadd.f32 0.0, %v7630
    %v7632 = vpop.f32.mrf.mxu0
    %7633 = vdwg.mxu0
    %v7634 = vadd.f32 %v7542, %v7631
    %s7635 = scalar_lea.vmem %s5, 1280
    %v7636 = vld [vmem:[%s7635] sm:$0xff]
    %v7637 = vld [vmem:[%s7635 + $0x8] sm:$0xff]
    %v7638 = vld [vmem:[%s7635 + $0x10] sm:$0xff]
    %v7639 = vld [vmem:[%s7635 + $0x18] sm:$0xff]
    %v7640 = vld [vmem:[%s7635 + $0x20] sm:$0xff]
    %v7641 = vld [vmem:[%s7635 + $0x28] sm:$0xff]
    %v7642 = vld [vmem:[%s7635 + $0x30] sm:$0xff]
    %v7643 = vld [vmem:[%s7635 + $0x38] sm:$0xff]
    %v7644 = vld [vmem:[%s7635 + $0x40] sm:$0xff]
    %v7645 = vld [vmem:[%s7635 + $0x48] sm:$0xff]
    %v7646 = vld [vmem:[%s7635 + $0x50] sm:$0xff]
    %v7647 = vld [vmem:[%s7635 + $0x58] sm:$0xff]
    %v7648 = vld [vmem:[%s7635 + $0x60] sm:$0xff]
    %v7649 = vld [vmem:[%s7635 + $0x68] sm:$0xff]
    %v7650 = vld [vmem:[%s7635 + $0x70] sm:$0xff]
    %v7651 = vld [vmem:[%s7635 + $0x78] sm:$0xff]
    %v7652 = vrot.slane %v7448, 4
    %v7653 = vrot.slane %v7449, 3
    %v7654 = vsel %vm6723, %v7653, %v7652
    %7656 = vmatprep.subr.mxu0 0.0
    %7657 = vmatpush1.msra.mxu0 %v7651
    %7658 = vmatprep.subr.mxu0 0.0
    %7659 = vmatpush1.msra.mxu0 %v7650
    %7660 = vmatprep.subr.mxu0 0.0
    %7661 = vmatpush1.msra.mxu0 %v7649
    %7662 = vmatprep.subr.mxu0 0.0
    %7663 = vmatpush1.msra.mxu0 %v7648
    %7664 = vmatprep.subr.mxu0 0.0
    %7665 = vmatpush1.msra.mxu0 %v7647
    %7666 = vmatprep.subr.mxu0 0.0
    %7667 = vmatpush1.msra.mxu0 %v7646
    %7668 = vmatprep.subr.mxu0 0.0
    %7669 = vmatpush1.msra.mxu0 %v7645
    %7670 = vmatprep.subr.mxu0 0.0
    %7671 = vmatpush1.msra.mxu0 %v7644
    %7672 = vmatprep.subr.mxu0 0.0
    %7673 = vmatpush1.msra.mxu0 %v7643
    %7674 = vmatprep.subr.mxu0 0.0
    %7675 = vmatpush1.msra.mxu0 %v7642
    %7676 = vmatprep.subr.mxu0 0.0
    %7677 = vmatpush1.msra.mxu0 %v7641
    %7678 = vmatprep.subr.mxu0 0.0
    %7679 = vmatpush1.msra.mxu0 %v7640
    %7680 = vmatprep.subr.mxu0 0.0
    %7681 = vmatpush1.msra.mxu0 %v7639
    %7682 = vmatprep.subr.mxu0 0.0
    %7683 = vmatpush1.msra.mxu0 %v7638
    %7684 = vmatprep.subr.mxu0 0.0
    %7685 = vmatpush1.msra.mxu0 %v7637
    %7686 = vmatprep.subr.mxu0 0.0
    %7687 = vmatpush1.msra.mxu0 %v7636
    %7688 = vmatprep.subr.mxu0 0.0
    %7689 = vmatpush2.msra.mxu0 0.0
    %7690 = vmatprep.subr.mxu0 0.0
    %7691 = vmatpush2.msra.mxu0 0.0
    %7692 = vmatprep.subr.mxu0 0.0
    %7693 = vmatpush2.msra.mxu0 0.0
    %7694 = vmatprep.subr.mxu0 0.0
    %7695 = vmatpush2.msra.mxu0 0.0
    %7696 = vmatprep.subr.mxu0 0.0
    %7697 = vmatpush2.msra.mxu0 0.0
    %7698 = vmatprep.subr.mxu0 0.0
    %7699 = vmatpush2.msra.mxu0 0.0
    %7700 = vmatprep.subr.mxu0 0.0
    %7701 = vmatpush2.msra.mxu0 0.0
    %7702 = vmatprep.subr.mxu0 0.0
    %7703 = vmatpush2.msra.mxu0 0.0
    %7704 = vmatprep.subr.mxu0 0.0
    %7705 = vmatpush2.msra.mxu0 0.0
    %7706 = vmatprep.subr.mxu0 0.0
    %7707 = vmatpush2.msra.mxu0 0.0
    %7708 = vmatprep.subr.mxu0 0.0
    %7709 = vmatpush2.msra.mxu0 0.0
    %7710 = vmatprep.subr.mxu0 0.0
    %7711 = vmatpush2.msra.mxu0 0.0
    %7712 = vmatprep.subr.mxu0 0.0
    %7713 = vmatpush2.msra.mxu0 0.0
    %7714 = vmatprep.subr.mxu0 0.0
    %7715 = vmatpush2.msra.mxu0 0.0
    %7716 = vmatprep.subr.mxu0 0.0
    %7717 = vmatpush2.msra.mxu0 0.0
    %7718 = vmatprep.subr.mxu0 0.0
    %7719 = vmatpush2.msra.mxu0 0.0
    %7720 = vmatprep.mubr.f32.mxu0 0.0
    %7721 = vmatmul.mubr.f32.gmra.mxu0 %v7654
    %v7722 = vpop.f32.mrf.mxu0
    %v7723 = vadd.f32 0.0, %v7722
    %v7724 = vpop.f32.mrf.mxu0
    %7725 = vdwg.mxu0
    %v7726 = vadd.f32 %v7634, %v7723
    %s7727 = scalar_lea.vmem %s5, 1408
    %v7728 = vld [vmem:[%s7727] sm:$0xff]
    %v7729 = vld [vmem:[%s7727 + $0x8] sm:$0xff]
    %v7730 = vld [vmem:[%s7727 + $0x10] sm:$0xff]
    %v7731 = vld [vmem:[%s7727 + $0x18] sm:$0xff]
    %v7732 = vld [vmem:[%s7727 + $0x20] sm:$0xff]
    %v7733 = vld [vmem:[%s7727 + $0x28] sm:$0xff]
    %v7734 = vld [vmem:[%s7727 + $0x30] sm:$0xff]
    %v7735 = vld [vmem:[%s7727 + $0x38] sm:$0xff]
    %v7736 = vld [vmem:[%s7727 + $0x40] sm:$0xff]
    %v7737 = vld [vmem:[%s7727 + $0x48] sm:$0xff]
    %v7738 = vld [vmem:[%s7727 + $0x50] sm:$0xff]
    %v7739 = vld [vmem:[%s7727 + $0x58] sm:$0xff]
    %v7740 = vld [vmem:[%s7727 + $0x60] sm:$0xff]
    %v7741 = vld [vmem:[%s7727 + $0x68] sm:$0xff]
    %v7742 = vld [vmem:[%s7727 + $0x70] sm:$0xff]
    %v7743 = vld [vmem:[%s7727 + $0x78] sm:$0xff]
    %v7744 = vrot.slane %v7448, 6
    %v7745 = vrot.slane %v7449, 5
    %v7746 = vsel %vm6723, %v7745, %v7744
    %7748 = vmatprep.subr.mxu0 0.0
    %7749 = vmatpush1.msra.mxu0 %v7743
    %7750 = vmatprep.subr.mxu0 0.0
    %7751 = vmatpush1.msra.mxu0 %v7742
    %7752 = vmatprep.subr.mxu0 0.0
    %7753 = vmatpush1.msra.mxu0 %v7741
    %7754 = vmatprep.subr.mxu0 0.0
    %7755 = vmatpush1.msra.mxu0 %v7740
    %7756 = vmatprep.subr.mxu0 0.0
    %7757 = vmatpush1.msra.mxu0 %v7739
    %7758 = vmatprep.subr.mxu0 0.0
    %7759 = vmatpush1.msra.mxu0 %v7738
    %7760 = vmatprep.subr.mxu0 0.0
    %7761 = vmatpush1.msra.mxu0 %v7737
    %7762 = vmatprep.subr.mxu0 0.0
    %7763 = vmatpush1.msra.mxu0 %v7736
    %7764 = vmatprep.subr.mxu0 0.0
    %7765 = vmatpush1.msra.mxu0 %v7735
    %7766 = vmatprep.subr.mxu0 0.0
    %7767 = vmatpush1.msra.mxu0 %v7734
    %7768 = vmatprep.subr.mxu0 0.0
    %7769 = vmatpush1.msra.mxu0 %v7733
    %7770 = vmatprep.subr.mxu0 0.0
    %7771 = vmatpush1.msra.mxu0 %v7732
    %7772 = vmatprep.subr.mxu0 0.0
    %7773 = vmatpush1.msra.mxu0 %v7731
    %7774 = vmatprep.subr.mxu0 0.0
    %7775 = vmatpush1.msra.mxu0 %v7730
    %7776 = vmatprep.subr.mxu0 0.0
    %7777 = vmatpush1.msra.mxu0 %v7729
    %7778 = vmatprep.subr.mxu0 0.0
    %7779 = vmatpush1.msra.mxu0 %v7728
    %7780 = vmatprep.subr.mxu0 0.0
    %7781 = vmatpush2.msra.mxu0 0.0
    %7782 = vmatprep.subr.mxu0 0.0
    %7783 = vmatpush2.msra.mxu0 0.0
    %7784 = vmatprep.subr.mxu0 0.0
    %7785 = vmatpush2.msra.mxu0 0.0
    %7786 = vmatprep.subr.mxu0 0.0
    %7787 = vmatpush2.msra.mxu0 0.0
    %7788 = vmatprep.subr.mxu0 0.0
    %7789 = vmatpush2.msra.mxu0 0.0
    %7790 = vmatprep.subr.mxu0 0.0
    %7791 = vmatpush2.msra.mxu0 0.0
    %7792 = vmatprep.subr.mxu0 0.0
    %7793 = vmatpush2.msra.mxu0 0.0
    %7794 = vmatprep.subr.mxu0 0.0
    %7795 = vmatpush2.msra.mxu0 0.0
    %7796 = vmatprep.subr.mxu0 0.0
    %7797 = vmatpush2.msra.mxu0 0.0
    %7798 = vmatprep.subr.mxu0 0.0
    %7799 = vmatpush2.msra.mxu0 0.0
    %7800 = vmatprep.subr.mxu0 0.0
    %7801 = vmatpush2.msra.mxu0 0.0
    %7802 = vmatprep.subr.mxu0 0.0
    %7803 = vmatpush2.msra.mxu0 0.0
    %7804 = vmatprep.subr.mxu0 0.0
    %7805 = vmatpush2.msra.mxu0 0.0
    %7806 = vmatprep.subr.mxu0 0.0
    %7807 = vmatpush2.msra.mxu0 0.0
    %7808 = vmatprep.subr.mxu0 0.0
    %7809 = vmatpush2.msra.mxu0 0.0
    %7810 = vmatprep.subr.mxu0 0.0
    %7811 = vmatpush2.msra.mxu0 0.0
    %7812 = vmatprep.mubr.f32.mxu0 0.0
    %7813 = vmatmul.mubr.f32.gmra.mxu0 %v7746
    %v7814 = vpop.f32.mrf.mxu0
    %v7815 = vadd.f32 0.0, %v7814
    %v7816 = vpop.f32.mrf.mxu0
    %7817 = vdwg.mxu0
    %v7818 = vadd.f32 %v7726, %v7815
    %v7819 = vld [vmem:[%s6652] sm:$0xff]
    %v7820 = vld [vmem:[%s6652 + $0x40] sm:$0xff]
    %v7821 = vld [vmem:[%s6654] sm:$0xff]
    %v7822 = vld [vmem:[%s6654 + $0x40] sm:$0xff]
    %v7823 = vmax.f32 %v7819, %v7821
    %v7824 = vmax.f32 %v7820, %v7822
    %v7827 = vrot.slane %v7823, 1
    %v7828 = vrot.slane %v7824, 1
    %v7831 = vmax.f32 %v7823, %v7827
    %v7832 = vmax.f32 %v7824, %v7828
    %s7833 = scalar_lea.vmem %s5, 1536
    %v7834 = vld [vmem:[%s7833] sm:$0xff]
    %v7835 = vld [vmem:[%s7833 + $0x8] sm:$0xff]
    %v7836 = vld [vmem:[%s7833 + $0x10] sm:$0xff]
    %v7837 = vld [vmem:[%s7833 + $0x18] sm:$0xff]
    %v7838 = vld [vmem:[%s7833 + $0x20] sm:$0xff]
    %v7839 = vld [vmem:[%s7833 + $0x28] sm:$0xff]
    %v7840 = vld [vmem:[%s7833 + $0x30] sm:$0xff]
    %v7841 = vld [vmem:[%s7833 + $0x38] sm:$0xff]
    %v7842 = vld [vmem:[%s7833 + $0x40] sm:$0xff]
    %v7843 = vld [vmem:[%s7833 + $0x48] sm:$0xff]
    %v7844 = vld [vmem:[%s7833 + $0x50] sm:$0xff]
    %v7845 = vld [vmem:[%s7833 + $0x58] sm:$0xff]
    %v7846 = vld [vmem:[%s7833 + $0x60] sm:$0xff]
    %v7847 = vld [vmem:[%s7833 + $0x68] sm:$0xff]
    %v7848 = vld [vmem:[%s7833 + $0x70] sm:$0xff]
    %v7849 = vld [vmem:[%s7833 + $0x78] sm:$0xff]
    %v7852 = vrot.slane %v7832, 7
    %v7853 = vsel %vm6723, %v7852, %v7831
    %7855 = vmatprep.subr.mxu0 0.0
    %7856 = vmatpush1.msra.mxu0 %v7849
    %7857 = vmatprep.subr.mxu0 0.0
    %7858 = vmatpush1.msra.mxu0 %v7848
    %7859 = vmatprep.subr.mxu0 0.0
    %7860 = vmatpush1.msra.mxu0 %v7847
    %7861 = vmatprep.subr.mxu0 0.0
    %7862 = vmatpush1.msra.mxu0 %v7846
    %7863 = vmatprep.subr.mxu0 0.0
    %7864 = vmatpush1.msra.mxu0 %v7845
    %7865 = vmatprep.subr.mxu0 0.0
    %7866 = vmatpush1.msra.mxu0 %v7844
    %7867 = vmatprep.subr.mxu0 0.0
    %7868 = vmatpush1.msra.mxu0 %v7843
    %7869 = vmatprep.subr.mxu0 0.0
    %7870 = vmatpush1.msra.mxu0 %v7842
    %7871 = vmatprep.subr.mxu0 0.0
    %7872 = vmatpush1.msra.mxu0 %v7841
    %7873 = vmatprep.subr.mxu0 0.0
    %7874 = vmatpush1.msra.mxu0 %v7840
    %7875 = vmatprep.subr.mxu0 0.0
    %7876 = vmatpush1.msra.mxu0 %v7839
    %7877 = vmatprep.subr.mxu0 0.0
    %7878 = vmatpush1.msra.mxu0 %v7838
    %7879 = vmatprep.subr.mxu0 0.0
    %7880 = vmatpush1.msra.mxu0 %v7837
    %7881 = vmatprep.subr.mxu0 0.0
    %7882 = vmatpush1.msra.mxu0 %v7836
    %7883 = vmatprep.subr.mxu0 0.0
    %7884 = vmatpush1.msra.mxu0 %v7835
    %7885 = vmatprep.subr.mxu0 0.0
    %7886 = vmatpush1.msra.mxu0 %v7834
    %7887 = vmatprep.subr.mxu0 0.0
    %7888 = vmatpush2.msra.mxu0 0.0
    %7889 = vmatprep.subr.mxu0 0.0
    %7890 = vmatpush2.msra.mxu0 0.0
    %7891 = vmatprep.subr.mxu0 0.0
    %7892 = vmatpush2.msra.mxu0 0.0
    %7893 = vmatprep.subr.mxu0 0.0
    %7894 = vmatpush2.msra.mxu0 0.0
    %7895 = vmatprep.subr.mxu0 0.0
    %7896 = vmatpush2.msra.mxu0 0.0
    %7897 = vmatprep.subr.mxu0 0.0
    %7898 = vmatpush2.msra.mxu0 0.0
    %7899 = vmatprep.subr.mxu0 0.0
    %7900 = vmatpush2.msra.mxu0 0.0
    %7901 = vmatprep.subr.mxu0 0.0
    %7902 = vmatpush2.msra.mxu0 0.0
    %7903 = vmatprep.subr.mxu0 0.0
    %7904 = vmatpush2.msra.mxu0 0.0
    %7905 = vmatprep.subr.mxu0 0.0
    %7906 = vmatpush2.msra.mxu0 0.0
    %7907 = vmatprep.subr.mxu0 0.0
    %7908 = vmatpush2.msra.mxu0 0.0
    %7909 = vmatprep.subr.mxu0 0.0
    %7910 = vmatpush2.msra.mxu0 0.0
    %7911 = vmatprep.subr.mxu0 0.0
    %7912 = vmatpush2.msra.mxu0 0.0
    %7913 = vmatprep.subr.mxu0 0.0
    %7914 = vmatpush2.msra.mxu0 0.0
    %7915 = vmatprep.subr.mxu0 0.0
    %7916 = vmatpush2.msra.mxu0 0.0
    %7917 = vmatprep.subr.mxu0 0.0
    %7918 = vmatpush2.msra.mxu0 0.0
    %7919 = vmatprep.mubr.f32.mxu0 0.0
    %7920 = vmatmul.mubr.f32.gmra.mxu0 %v7853
    %v7921 = vpop.f32.mrf.mxu0
    %v7922 = vadd.f32 0.0, %v7921
    %v7923 = vpop.f32.mrf.mxu0
    %7924 = vdwg.mxu0
    %v7925 = vadd.f32 %v7818, %v7922
    %s7926 = scalar_lea.vmem %s5, 1664
    %v7927 = vld [vmem:[%s7926] sm:$0xff]
    %v7928 = vld [vmem:[%s7926 + $0x8] sm:$0xff]
    %v7929 = vld [vmem:[%s7926 + $0x10] sm:$0xff]
    %v7930 = vld [vmem:[%s7926 + $0x18] sm:$0xff]
    %v7931 = vld [vmem:[%s7926 + $0x20] sm:$0xff]
    %v7932 = vld [vmem:[%s7926 + $0x28] sm:$0xff]
    %v7933 = vld [vmem:[%s7926 + $0x30] sm:$0xff]
    %v7934 = vld [vmem:[%s7926 + $0x38] sm:$0xff]
    %v7935 = vld [vmem:[%s7926 + $0x40] sm:$0xff]
    %v7936 = vld [vmem:[%s7926 + $0x48] sm:$0xff]
    %v7937 = vld [vmem:[%s7926 + $0x50] sm:$0xff]
    %v7938 = vld [vmem:[%s7926 + $0x58] sm:$0xff]
    %v7939 = vld [vmem:[%s7926 + $0x60] sm:$0xff]
    %v7940 = vld [vmem:[%s7926 + $0x68] sm:$0xff]
    %v7941 = vld [vmem:[%s7926 + $0x70] sm:$0xff]
    %v7942 = vld [vmem:[%s7926 + $0x78] sm:$0xff]
    %v7943 = vrot.slane %v7831, 2
    %v7944 = vrot.slane %v7832, 1
    %v7945 = vsel %vm6723, %v7944, %v7943
    %7947 = vmatprep.subr.mxu0 0.0
    %7948 = vmatpush1.msra.mxu0 %v7942
    %7949 = vmatprep.subr.mxu0 0.0
    %7950 = vmatpush1.msra.mxu0 %v7941
    %7951 = vmatprep.subr.mxu0 0.0
    %7952 = vmatpush1.msra.mxu0 %v7940
    %7953 = vmatprep.subr.mxu0 0.0
    %7954 = vmatpush1.msra.mxu0 %v7939
    %7955 = vmatprep.subr.mxu0 0.0
    %7956 = vmatpush1.msra.mxu0 %v7938
    %7957 = vmatprep.subr.mxu0 0.0
    %7958 = vmatpush1.msra.mxu0 %v7937
    %7959 = vmatprep.subr.mxu0 0.0
    %7960 = vmatpush1.msra.mxu0 %v7936
    %7961 = vmatprep.subr.mxu0 0.0
    %7962 = vmatpush1.msra.mxu0 %v7935
    %7963 = vmatprep.subr.mxu0 0.0
    %7964 = vmatpush1.msra.mxu0 %v7934
    %7965 = vmatprep.subr.mxu0 0.0
    %7966 = vmatpush1.msra.mxu0 %v7933
    %7967 = vmatprep.subr.mxu0 0.0
    %7968 = vmatpush1.msra.mxu0 %v7932
    %7969 = vmatprep.subr.mxu0 0.0
    %7970 = vmatpush1.msra.mxu0 %v7931
    %7971 = vmatprep.subr.mxu0 0.0
    %7972 = vmatpush1.msra.mxu0 %v7930
    %7973 = vmatprep.subr.mxu0 0.0
    %7974 = vmatpush1.msra.mxu0 %v7929
    %7975 = vmatprep.subr.mxu0 0.0
    %7976 = vmatpush1.msra.mxu0 %v7928
    %7977 = vmatprep.subr.mxu0 0.0
    %7978 = vmatpush1.msra.mxu0 %v7927
    %7979 = vmatprep.subr.mxu0 0.0
    %7980 = vmatpush2.msra.mxu0 0.0
    %7981 = vmatprep.subr.mxu0 0.0
    %7982 = vmatpush2.msra.mxu0 0.0
    %7983 = vmatprep.subr.mxu0 0.0
    %7984 = vmatpush2.msra.mxu0 0.0
    %7985 = vmatprep.subr.mxu0 0.0
    %7986 = vmatpush2.msra.mxu0 0.0
    %7987 = vmatprep.subr.mxu0 0.0
    %7988 = vmatpush2.msra.mxu0 0.0
    %7989 = vmatprep.subr.mxu0 0.0
    %7990 = vmatpush2.msra.mxu0 0.0
    %7991 = vmatprep.subr.mxu0 0.0
    %7992 = vmatpush2.msra.mxu0 0.0
    %7993 = vmatprep.subr.mxu0 0.0
    %7994 = vmatpush2.msra.mxu0 0.0
    %7995 = vmatprep.subr.mxu0 0.0
    %7996 = vmatpush2.msra.mxu0 0.0
    %7997 = vmatprep.subr.mxu0 0.0
    %7998 = vmatpush2.msra.mxu0 0.0
    %7999 = vmatprep.subr.mxu0 0.0
    %8000 = vmatpush2.msra.mxu0 0.0
    %8001 = vmatprep.subr.mxu0 0.0
    %8002 = vmatpush2.msra.mxu0 0.0
    %8003 = vmatprep.subr.mxu0 0.0
    %8004 = vmatpush2.msra.mxu0 0.0
    %8005 = vmatprep.subr.mxu0 0.0
    %8006 = vmatpush2.msra.mxu0 0.0
    %8007 = vmatprep.subr.mxu0 0.0
    %8008 = vmatpush2.msra.mxu0 0.0
    %8009 = vmatprep.subr.mxu0 0.0
    %8010 = vmatpush2.msra.mxu0 0.0
    %8011 = vmatprep.mubr.f32.mxu0 0.0
    %8012 = vmatmul.mubr.f32.gmra.mxu0 %v7945
    %v8013 = vpop.f32.mrf.mxu0
    %v8014 = vadd.f32 0.0, %v8013
    %v8015 = vpop.f32.mrf.mxu0
    %8016 = vdwg.mxu0
    %v8017 = vadd.f32 %v7925, %v8014
    %s8018 = scalar_lea.vmem %s5, 1792
    %v8019 = vld [vmem:[%s8018] sm:$0xff]
    %v8020 = vld [vmem:[%s8018 + $0x8] sm:$0xff]
    %v8021 = vld [vmem:[%s8018 + $0x10] sm:$0xff]
    %v8022 = vld [vmem:[%s8018 + $0x18] sm:$0xff]
    %v8023 = vld [vmem:[%s8018 + $0x20] sm:$0xff]
    %v8024 = vld [vmem:[%s8018 + $0x28] sm:$0xff]
    %v8025 = vld [vmem:[%s8018 + $0x30] sm:$0xff]
    %v8026 = vld [vmem:[%s8018 + $0x38] sm:$0xff]
    %v8027 = vld [vmem:[%s8018 + $0x40] sm:$0xff]
    %v8028 = vld [vmem:[%s8018 + $0x48] sm:$0xff]
    %v8029 = vld [vmem:[%s8018 + $0x50] sm:$0xff]
    %v8030 = vld [vmem:[%s8018 + $0x58] sm:$0xff]
    %v8031 = vld [vmem:[%s8018 + $0x60] sm:$0xff]
    %v8032 = vld [vmem:[%s8018 + $0x68] sm:$0xff]
    %v8033 = vld [vmem:[%s8018 + $0x70] sm:$0xff]
    %v8034 = vld [vmem:[%s8018 + $0x78] sm:$0xff]
    %v8035 = vrot.slane %v7831, 4
    %v8036 = vrot.slane %v7832, 3
    %v8037 = vsel %vm6723, %v8036, %v8035
    %8039 = vmatprep.subr.mxu0 0.0
    %8040 = vmatpush1.msra.mxu0 %v8034
    %8041 = vmatprep.subr.mxu0 0.0
    %8042 = vmatpush1.msra.mxu0 %v8033
    %8043 = vmatprep.subr.mxu0 0.0
    %8044 = vmatpush1.msra.mxu0 %v8032
    %8045 = vmatprep.subr.mxu0 0.0
    %8046 = vmatpush1.msra.mxu0 %v8031
    %8047 = vmatprep.subr.mxu0 0.0
    %8048 = vmatpush1.msra.mxu0 %v8030
    %8049 = vmatprep.subr.mxu0 0.0
    %8050 = vmatpush1.msra.mxu0 %v8029
    %8051 = vmatprep.subr.mxu0 0.0
    %8052 = vmatpush1.msra.mxu0 %v8028
    %8053 = vmatprep.subr.mxu0 0.0
    %8054 = vmatpush1.msra.mxu0 %v8027
    %8055 = vmatprep.subr.mxu0 0.0
    %8056 = vmatpush1.msra.mxu0 %v8026
    %8057 = vmatprep.subr.mxu0 0.0
    %8058 = vmatpush1.msra.mxu0 %v8025
    %8059 = vmatprep.subr.mxu0 0.0
    %8060 = vmatpush1.msra.mxu0 %v8024
    %8061 = vmatprep.subr.mxu0 0.0
    %8062 = vmatpush1.msra.mxu0 %v8023
    %8063 = vmatprep.subr.mxu0 0.0
    %8064 = vmatpush1.msra.mxu0 %v8022
    %8065 = vmatprep.subr.mxu0 0.0
    %8066 = vmatpush1.msra.mxu0 %v8021
    %8067 = vmatprep.subr.mxu0 0.0
    %8068 = vmatpush1.msra.mxu0 %v8020
    %8069 = vmatprep.subr.mxu0 0.0
    %8070 = vmatpush1.msra.mxu0 %v8019
    %8071 = vmatprep.subr.mxu0 0.0
    %8072 = vmatpush2.msra.mxu0 0.0
    %8073 = vmatprep.subr.mxu0 0.0
    %8074 = vmatpush2.msra.mxu0 0.0
    %8075 = vmatprep.subr.mxu0 0.0
    %8076 = vmatpush2.msra.mxu0 0.0
    %8077 = vmatprep.subr.mxu0 0.0
    %8078 = vmatpush2.msra.mxu0 0.0
    %8079 = vmatprep.subr.mxu0 0.0
    %8080 = vmatpush2.msra.mxu0 0.0
    %8081 = vmatprep.subr.mxu0 0.0
    %8082 = vmatpush2.msra.mxu0 0.0
    %8083 = vmatprep.subr.mxu0 0.0
    %8084 = vmatpush2.msra.mxu0 0.0
    %8085 = vmatprep.subr.mxu0 0.0
    %8086 = vmatpush2.msra.mxu0 0.0
    %8087 = vmatprep.subr.mxu0 0.0
    %8088 = vmatpush2.msra.mxu0 0.0
    %8089 = vmatprep.subr.mxu0 0.0
    %8090 = vmatpush2.msra.mxu0 0.0
    %8091 = vmatprep.subr.mxu0 0.0
    %8092 = vmatpush2.msra.mxu0 0.0
    %8093 = vmatprep.subr.mxu0 0.0
    %8094 = vmatpush2.msra.mxu0 0.0
    %8095 = vmatprep.subr.mxu0 0.0
    %8096 = vmatpush2.msra.mxu0 0.0
    %8097 = vmatprep.subr.mxu0 0.0
    %8098 = vmatpush2.msra.mxu0 0.0
    %8099 = vmatprep.subr.mxu0 0.0
    %8100 = vmatpush2.msra.mxu0 0.0
    %8101 = vmatprep.subr.mxu0 0.0
    %8102 = vmatpush2.msra.mxu0 0.0
    %8103 = vmatprep.mubr.f32.mxu0 0.0
    %8104 = vmatmul.mubr.f32.gmra.mxu0 %v8037
    %v8105 = vpop.f32.mrf.mxu0
    %v8106 = vadd.f32 0.0, %v8105
    %v8107 = vpop.f32.mrf.mxu0
    %8108 = vdwg.mxu0
    %v8109 = vadd.f32 %v8017, %v8106
    %s8110 = scalar_lea.vmem %s5, 1920
    %v8111 = vld [vmem:[%s8110] sm:$0xff]
    %v8112 = vld [vmem:[%s8110 + $0x8] sm:$0xff]
    %v8113 = vld [vmem:[%s8110 + $0x10] sm:$0xff]
    %v8114 = vld [vmem:[%s8110 + $0x18] sm:$0xff]
    %v8115 = vld [vmem:[%s8110 + $0x20] sm:$0xff]
    %v8116 = vld [vmem:[%s8110 + $0x28] sm:$0xff]
    %v8117 = vld [vmem:[%s8110 + $0x30] sm:$0xff]
    %v8118 = vld [vmem:[%s8110 + $0x38] sm:$0xff]
    %v8119 = vld [vmem:[%s8110 + $0x40] sm:$0xff]
    %v8120 = vld [vmem:[%s8110 + $0x48] sm:$0xff]
    %v8121 = vld [vmem:[%s8110 + $0x50] sm:$0xff]
    %v8122 = vld [vmem:[%s8110 + $0x58] sm:$0xff]
    %v8123 = vld [vmem:[%s8110 + $0x60] sm:$0xff]
    %v8124 = vld [vmem:[%s8110 + $0x68] sm:$0xff]
    %v8125 = vld [vmem:[%s8110 + $0x70] sm:$0xff]
    %v8126 = vld [vmem:[%s8110 + $0x78] sm:$0xff]
    %v8127 = vrot.slane %v7831, 6
    %v8128 = vrot.slane %v7832, 5
    %v8129 = vsel %vm6723, %v8128, %v8127
    %8131 = vmatprep.subr.mxu0 0.0
    %8132 = vmatpush1.msra.mxu0 %v8126
    %8133 = vmatprep.subr.mxu0 0.0
    %8134 = vmatpush1.msra.mxu0 %v8125
    %8135 = vmatprep.subr.mxu0 0.0
    %8136 = vmatpush1.msra.mxu0 %v8124
    %8137 = vmatprep.subr.mxu0 0.0
    %8138 = vmatpush1.msra.mxu0 %v8123
    %8139 = vmatprep.subr.mxu0 0.0
    %8140 = vmatpush1.msra.mxu0 %v8122
    %8141 = vmatprep.subr.mxu0 0.0
    %8142 = vmatpush1.msra.mxu0 %v8121
    %8143 = vmatprep.subr.mxu0 0.0
    %8144 = vmatpush1.msra.mxu0 %v8120
    %8145 = vmatprep.subr.mxu0 0.0
    %8146 = vmatpush1.msra.mxu0 %v8119
    %8147 = vmatprep.subr.mxu0 0.0
    %8148 = vmatpush1.msra.mxu0 %v8118
    %8149 = vmatprep.subr.mxu0 0.0
    %8150 = vmatpush1.msra.mxu0 %v8117
    %8151 = vmatprep.subr.mxu0 0.0
    %8152 = vmatpush1.msra.mxu0 %v8116
    %8153 = vmatprep.subr.mxu0 0.0
    %8154 = vmatpush1.msra.mxu0 %v8115
    %8155 = vmatprep.subr.mxu0 0.0
    %8156 = vmatpush1.msra.mxu0 %v8114
    %8157 = vmatprep.subr.mxu0 0.0
    %8158 = vmatpush1.msra.mxu0 %v8113
    %8159 = vmatprep.subr.mxu0 0.0
    %8160 = vmatpush1.msra.mxu0 %v8112
    %8161 = vmatprep.subr.mxu0 0.0
    %8162 = vmatpush1.msra.mxu0 %v8111
    %8163 = vmatprep.subr.mxu0 0.0
    %8164 = vmatpush2.msra.mxu0 0.0
    %8165 = vmatprep.subr.mxu0 0.0
    %8166 = vmatpush2.msra.mxu0 0.0
    %8167 = vmatprep.subr.mxu0 0.0
    %8168 = vmatpush2.msra.mxu0 0.0
    %8169 = vmatprep.subr.mxu0 0.0
    %8170 = vmatpush2.msra.mxu0 0.0
    %8171 = vmatprep.subr.mxu0 0.0
    %8172 = vmatpush2.msra.mxu0 0.0
    %8173 = vmatprep.subr.mxu0 0.0
    %8174 = vmatpush2.msra.mxu0 0.0
    %8175 = vmatprep.subr.mxu0 0.0
    %8176 = vmatpush2.msra.mxu0 0.0
    %8177 = vmatprep.subr.mxu0 0.0
    %8178 = vmatpush2.msra.mxu0 0.0
    %8179 = vmatprep.subr.mxu0 0.0
    %8180 = vmatpush2.msra.mxu0 0.0
    %8181 = vmatprep.subr.mxu0 0.0
    %8182 = vmatpush2.msra.mxu0 0.0
    %8183 = vmatprep.subr.mxu0 0.0
    %8184 = vmatpush2.msra.mxu0 0.0
    %8185 = vmatprep.subr.mxu0 0.0
    %8186 = vmatpush2.msra.mxu0 0.0
    %8187 = vmatprep.subr.mxu0 0.0
    %8188 = vmatpush2.msra.mxu0 0.0
    %8189 = vmatprep.subr.mxu0 0.0
    %8190 = vmatpush2.msra.mxu0 0.0
    %8191 = vmatprep.subr.mxu0 0.0
    %8192 = vmatpush2.msra.mxu0 0.0
    %8193 = vmatprep.subr.mxu0 0.0
    %8194 = vmatpush2.msra.mxu0 0.0
    %8195 = vmatprep.mubr.f32.mxu0 0.0
    %8196 = vmatmul.mubr.f32.gmra.mxu0 %v8129
    %v8197 = vpop.f32.mrf.mxu0
    %v8198 = vadd.f32 0.0, %v8197
    %v8199 = vpop.f32.mrf.mxu0
    %8200 = vdwg.mxu0
    %v8201 = vadd.f32 %v8109, %v8198
    %v8202 = vld [vmem:[%s6] sm:$0x1]
    %v8204 = vlaneseq
    %v8205 = vshrl.u32 %v8204, 7
    %v8206 = vsub.s32 0, %v8205
    %v8207 = vrot.slane %v8202, %v8206
    %v8209 = vadd.f32 %v8201, %v8207
    %v8210 = vmax.f32 %v8209, 0.0
    %v8211 = vld [vmem:[%s7] sm:$0xff]
    %v8212 = vld [vmem:[%s7 + $0x8] sm:$0xff]
    %v8213 = vld [vmem:[%s7 + $0x10] sm:$0xff]
    %v8214 = vld [vmem:[%s7 + $0x18] sm:$0xff]
    %v8215 = vld [vmem:[%s7 + $0x20] sm:$0xff]
    %v8216 = vld [vmem:[%s7 + $0x28] sm:$0xff]
    %v8217 = vld [vmem:[%s7 + $0x30] sm:$0xff]
    %v8218 = vld [vmem:[%s7 + $0x38] sm:$0xff]
    %v8219 = vld [vmem:[%s7 + $0x40] sm:$0xff]
    %v8220 = vld [vmem:[%s7 + $0x48] sm:$0xff]
    %v8221 = vld [vmem:[%s7 + $0x50] sm:$0xff]
    %v8222 = vld [vmem:[%s7 + $0x58] sm:$0xff]
    %v8223 = vld [vmem:[%s7 + $0x60] sm:$0xff]
    %v8224 = vld [vmem:[%s7 + $0x68] sm:$0xff]
    %v8225 = vld [vmem:[%s7 + $0x70] sm:$0xff]
    %v8226 = vld [vmem:[%s7 + $0x78] sm:$0xff]
    %v8227 = vld [vmem:[%s8] sm:$0x1]
    %v8229 = vlaneseq
    %v8230 = vshrl.u32 %v8229, 7
    %v8231 = vsub.s32 0, %v8230
    %v8232 = vrot.slane %v8227, %v8231
    %8234 = vmatprep.subr.mxu0 0.0
    %8235 = vmatpush1.msra.mxu0 %v8226
    %8236 = vmatprep.subr.mxu0 0.0
    %8237 = vmatpush1.msra.mxu0 %v8225
    %8238 = vmatprep.subr.mxu0 0.0
    %8239 = vmatpush1.msra.mxu0 %v8224
    %8240 = vmatprep.subr.mxu0 0.0
    %8241 = vmatpush1.msra.mxu0 %v8223
    %8242 = vmatprep.subr.mxu0 0.0
    %8243 = vmatpush1.msra.mxu0 %v8222
    %8244 = vmatprep.subr.mxu0 0.0
    %8245 = vmatpush1.msra.mxu0 %v8221
    %8246 = vmatprep.subr.mxu0 0.0
    %8247 = vmatpush1.msra.mxu0 %v8220
    %8248 = vmatprep.subr.mxu0 0.0
    %8249 = vmatpush1.msra.mxu0 %v8219
    %8250 = vmatprep.subr.mxu0 0.0
    %8251 = vmatpush1.msra.mxu0 %v8218
    %8252 = vmatprep.subr.mxu0 0.0
    %8253 = vmatpush1.msra.mxu0 %v8217
    %8254 = vmatprep.subr.mxu0 0.0
    %8255 = vmatpush1.msra.mxu0 %v8216
    %8256 = vmatprep.subr.mxu0 0.0
    %8257 = vmatpush1.msra.mxu0 %v8215
    %8258 = vmatprep.subr.mxu0 0.0
    %8259 = vmatpush1.msra.mxu0 %v8214
    %8260 = vmatprep.subr.mxu0 0.0
    %8261 = vmatpush1.msra.mxu0 %v8213
    %8262 = vmatprep.subr.mxu0 0.0
    %8263 = vmatpush1.msra.mxu0 %v8212
    %8264 = vmatprep.subr.mxu0 0.0
    %8265 = vmatpush1.msra.mxu0 %v8211
    %8266 = vmatprep.subr.mxu0 0.0
    %8267 = vmatpush2.msra.mxu0 0.0
    %8268 = vmatprep.subr.mxu0 0.0
    %8269 = vmatpush2.msra.mxu0 0.0
    %8270 = vmatprep.subr.mxu0 0.0
    %8271 = vmatpush2.msra.mxu0 0.0
    %8272 = vmatprep.subr.mxu0 0.0
    %8273 = vmatpush2.msra.mxu0 0.0
    %8274 = vmatprep.subr.mxu0 0.0
    %8275 = vmatpush2.msra.mxu0 0.0
    %8276 = vmatprep.subr.mxu0 0.0
    %8277 = vmatpush2.msra.mxu0 0.0
    %8278 = vmatprep.subr.mxu0 0.0
    %8279 = vmatpush2.msra.mxu0 0.0
    %8280 = vmatprep.subr.mxu0 0.0
    %8281 = vmatpush2.msra.mxu0 0.0
    %8282 = vmatprep.subr.mxu0 0.0
    %8283 = vmatpush2.msra.mxu0 0.0
    %8284 = vmatprep.subr.mxu0 0.0
    %8285 = vmatpush2.msra.mxu0 0.0
    %8286 = vmatprep.subr.mxu0 0.0
    %8287 = vmatpush2.msra.mxu0 0.0
    %8288 = vmatprep.subr.mxu0 0.0
    %8289 = vmatpush2.msra.mxu0 0.0
    %8290 = vmatprep.subr.mxu0 0.0
    %8291 = vmatpush2.msra.mxu0 0.0
    %8292 = vmatprep.subr.mxu0 0.0
    %8293 = vmatpush2.msra.mxu0 0.0
    %8294 = vmatprep.subr.mxu0 0.0
    %8295 = vmatpush2.msra.mxu0 0.0
    %8296 = vmatprep.subr.mxu0 0.0
    %8297 = vmatpush2.msra.mxu0 0.0
    %8298 = vmatprep.mubr.f32.mxu0 0.0
    %8299 = vmatmul.mubr.f32.gmra.mxu0 %v8210
    %v8300 = vpop.f32.mrf.mxu0
    %v8301 = vadd.f32 %v8232, %v8300
    %v8302 = vpop.f32.mrf.mxu0
    %8303 = vdwg.mxu0
    %v8304 = vmax.f32 %v8301, 0.0
    %v8305 = vld [vmem:[%s9] sm:$0xff]
    %v8306 = vld [vmem:[%s9 + $0x8] sm:$0xff]
    %v8307 = vld [vmem:[%s9 + $0x10] sm:$0xff]
    %v8308 = vld [vmem:[%s9 + $0x18] sm:$0xff]
    %v8309 = vld [vmem:[%s9 + $0x20] sm:$0xff]
    %v8310 = vld [vmem:[%s9 + $0x28] sm:$0xff]
    %v8311 = vld [vmem:[%s9 + $0x30] sm:$0xff]
    %v8312 = vld [vmem:[%s9 + $0x38] sm:$0xff]
    %v8313 = vld [vmem:[%s9 + $0x40] sm:$0xff]
    %v8314 = vld [vmem:[%s9 + $0x48] sm:$0xff]
    %v8315 = vld [vmem:[%s9 + $0x50] sm:$0xff]
    %v8316 = vld [vmem:[%s9 + $0x58] sm:$0xff]
    %v8317 = vld [vmem:[%s9 + $0x60] sm:$0xff]
    %v8318 = vld [vmem:[%s9 + $0x68] sm:$0xff]
    %v8319 = vld [vmem:[%s9 + $0x70] sm:$0xff]
    %v8320 = vld [vmem:[%s9 + $0x78] sm:$0xff]
    %v8321 = vld [vmem:[%s10] sm:$0x1]
    %v8323 = vlaneseq
    %v8324 = vshrl.u32 %v8323, 7
    %v8325 = vsub.s32 0, %v8324
    %v8326 = vrot.slane %v8321, %v8325
    %8328 = vmatprep.subr.mxu0 0.0
    %8329 = vmatpush1.msra.mxu0 %v8320
    %8330 = vmatprep.subr.mxu0 0.0
    %8331 = vmatpush1.msra.mxu0 %v8319
    %8332 = vmatprep.subr.mxu0 0.0
    %8333 = vmatpush1.msra.mxu0 %v8318
    %8334 = vmatprep.subr.mxu0 0.0
    %8335 = vmatpush1.msra.mxu0 %v8317
    %8336 = vmatprep.subr.mxu0 0.0
    %8337 = vmatpush1.msra.mxu0 %v8316
    %8338 = vmatprep.subr.mxu0 0.0
    %8339 = vmatpush1.msra.mxu0 %v8315
    %8340 = vmatprep.subr.mxu0 0.0
    %8341 = vmatpush1.msra.mxu0 %v8314
    %8342 = vmatprep.subr.mxu0 0.0
    %8343 = vmatpush1.msra.mxu0 %v8313
    %8344 = vmatprep.subr.mxu0 0.0
    %8345 = vmatpush1.msra.mxu0 %v8312
    %8346 = vmatprep.subr.mxu0 0.0
    %8347 = vmatpush1.msra.mxu0 %v8311
    %8348 = vmatprep.subr.mxu0 0.0
    %8349 = vmatpush1.msra.mxu0 %v8310
    %8350 = vmatprep.subr.mxu0 0.0
    %8351 = vmatpush1.msra.mxu0 %v8309
    %8352 = vmatprep.subr.mxu0 0.0
    %8353 = vmatpush1.msra.mxu0 %v8308
    %8354 = vmatprep.subr.mxu0 0.0
    %8355 = vmatpush1.msra.mxu0 %v8307
    %8356 = vmatprep.subr.mxu0 0.0
    %8357 = vmatpush1.msra.mxu0 %v8306
    %8358 = vmatprep.subr.mxu0 0.0
    %8359 = vmatpush1.msra.mxu0 %v8305
    %8360 = vmatprep.subr.mxu0 0.0
    %8361 = vmatpush2.msra.mxu0 0.0
    %8362 = vmatprep.subr.mxu0 0.0
    %8363 = vmatpush2.msra.mxu0 0.0
    %8364 = vmatprep.subr.mxu0 0.0
    %8365 = vmatpush2.msra.mxu0 0.0
    %8366 = vmatprep.subr.mxu0 0.0
    %8367 = vmatpush2.msra.mxu0 0.0
    %8368 = vmatprep.subr.mxu0 0.0
    %8369 = vmatpush2.msra.mxu0 0.0
    %8370 = vmatprep.subr.mxu0 0.0
    %8371 = vmatpush2.msra.mxu0 0.0
    %8372 = vmatprep.subr.mxu0 0.0
    %8373 = vmatpush2.msra.mxu0 0.0
    %8374 = vmatprep.subr.mxu0 0.0
    %8375 = vmatpush2.msra.mxu0 0.0
    %8376 = vmatprep.subr.mxu0 0.0
    %8377 = vmatpush2.msra.mxu0 0.0
    %8378 = vmatprep.subr.mxu0 0.0
    %8379 = vmatpush2.msra.mxu0 0.0
    %8380 = vmatprep.subr.mxu0 0.0
    %8381 = vmatpush2.msra.mxu0 0.0
    %8382 = vmatprep.subr.mxu0 0.0
    %8383 = vmatpush2.msra.mxu0 0.0
    %8384 = vmatprep.subr.mxu0 0.0
    %8385 = vmatpush2.msra.mxu0 0.0
    %8386 = vmatprep.subr.mxu0 0.0
    %8387 = vmatpush2.msra.mxu0 0.0
    %8388 = vmatprep.subr.mxu0 0.0
    %8389 = vmatpush2.msra.mxu0 0.0
    %8390 = vmatprep.subr.mxu0 0.0
    %8391 = vmatpush2.msra.mxu0 0.0
    %8392 = vmatprep.mubr.f32.mxu0 0.0
    %8393 = vmatmul.mubr.f32.gmra.mxu0 %v8304
    %v8394 = vpop.f32.mrf.mxu0
    %v8395 = vadd.f32 %v8326, %v8394
    %v8396 = vpop.f32.mrf.mxu0
    %8397 = vdwg.mxu0
    %8398 = vst [vmem:[#allocation4] sm:$0x3] %v8395
    // Predicated region
    $region46: #{network_forward.1} parent=1 // pred_check
      _
    $region47: #{network_forward.1} parent=1 // pred_check_branch
      %8400 = sbr.rel (0) target = $region49
    $region48: #{network_forward.1} parent=1 // pred_region
      %s8402 = ssub.s32 32, 32
      %8403 = vsyncadd [#allocation5], %s8402
      %s8405 = sshll.u32 [#allocation4], 4
      %s8406 = int_to_ptr.vmem [resolvable:$true] %s8405
      %8408 = dma.vmem_to_hbm [thread:$0]  %s8406, 32, %s11, [#allocation5]
    $region49: #{network_forward.1} parent=1 // pred_fallthru
      _
    // Predicated region
    $region50: #{network_forward.1} parent=1 // pred_check
      _
    $region51: #{network_forward.1} parent=1 // pred_check_branch
      %8410 = sbr.rel (0) target = $region53
    $region52: #{network_forward.1} parent=1 // pred_region
      %8411 = dma.done [#allocation5], 32
    $region53: #{network_forward.1} parent=1 // pred_fallthru
      _
    %8412 = vsyncpa [#allocation5], 1

</llo_original>
